<compile_context>
chip_gen: v6e
topology: v6e:2x2x1
jax: 0.10.0
libtpu: 0.0.40
codegen_flags: <defaults>
</compile_context>

<pallas_src>
import functools
import math

import jax
import jax.numpy as jnp
from jax.experimental import pallas as pl
from jax.experimental.pallas import tpu as pltpu


def _round_up(x, m):
    return ((x + m - 1) // m) * m


_LAYER_STACKED = frozenset([
    "w_qkv", "b_qkv", "wo_sa", "bo_sa", "wq_ca", "bq_ca", "wkv_ca", "bkv_ca",
    "wo_ca", "bo_ca", "ln", "w1", "b1", "w2", "b2",
])

_WEIGHT_NAMES = [
    "w_qkv", "b_qkv", "wo_sa", "bo_sa",
    "wq_ca", "bq_ca", "wkv_ca", "bkv_ca", "wo_ca", "bo_ca",
    "ln", "w1", "b1", "w2", "b2",
    "out_norm", "w_head", "b_head",
]


# ---------------------------------------------------------------------------
# Fused kernel body: one decoder layer per grid step (layer axis = grid dim 1),
# final LayerNorm + class/box heads on the last layer step.
# ---------------------------------------------------------------------------

def _agent_detection_kernel(
    q_ref, mem_ref,
    wqkv_ref, bqkv_ref, wo_sa_ref, bo_sa_ref,
    wq_ca_ref, bq_ca_ref, wkv_ca_ref, bkv_ca_ref, wo_ca_ref, bo_ca_ref,
    ln_ref, w1_ref, b1_ref, w2_ref, b2_ref,
    onorm_ref, whead_ref, bhead_ref,
    feat_ref, head_ref,
    x_sc,
    *, nhead, num_classes, eps, mm_dtype,
):
    layer = pl.program_id(1)
    num_layers = pl.num_programs(1)

    Bt, S, D = mem_ref.shape
    Na = q_ref.shape[1]
    R = Bt * Na
    dh = D // nhead

    def cast(v):
        # matmul-operand dtype only; accumulation stays f32 via preferred_element_type
        return v.astype(mm_dtype)

    def layer_norm(v, g, b):
        mu = jnp.mean(v, axis=-1, keepdims=True)
        var = jnp.mean((v - mu) ** 2, axis=-1, keepdims=True)
        return (v - mu) * jax.lax.rsqrt(var + eps) * g + b

    def matmul(a, w_ref, b_ref):
        # stacked-rows (rows, K) @ (K, N) on the MXU, f32 accumulation
        return (jnp.dot(cast(a), w_ref[0], preferred_element_type=jnp.float32)
                + b_ref[0].astype(jnp.float32))

    def mha(q3, k3, v3, wo_ref, bo_ref):
        # q3: (Bt, Lq, D); k3/v3: (Bt, Lk, D); heads packed along lanes.
        # The 1/sqrt(dh) scale is pre-folded into the Q projection weights.
        lane = jax.lax.broadcasted_iota(jnp.int32, v3.shape, 2)
        o3 = None
        for h in range(nhead):
            sl = slice(h * dh, (h + 1) * dh)
            s = jnp.einsum("bqd,bkd->bqk", cast(q3[:, :, sl]), cast(k3[:, :, sl]),
                           preferred_element_type=jnp.float32)
            s = s - jnp.max(s, axis=-1, keepdims=True)
            p = jnp.exp(s)
            p = p * pl.reciprocal(jnp.sum(p, axis=-1, keepdims=True), approx=True)
            # Lane-mask V so this head's PV product lands directly in its own lanes of
            # a (Bt, Lq, D) output (same MXU pushes as an N=dh matmul for D <= 128).
            # This avoids unaligned lane concatenation / offset stores for the merge.
            vh = jnp.where((lane >= h * dh) & (lane < (h + 1) * dh), v3, 0.0)
            oh = jnp.einsum("bqk,bkd->bqd", cast(p), cast(vh),
                            preferred_element_type=jnp.float32)
            o3 = oh if o3 is None else o3 + oh
        # ONE (rows, D) @ (D, D) output projection instead of nhead K=dh partials.
        o = o3.reshape(Bt * q3.shape[1], D)
        return (jnp.dot(cast(o), wo_ref[0], preferred_element_type=jnp.float32)
                + bo_ref[0].astype(jnp.float32))

    # ---- layer 0: materialize the (Bt*Na, D) shared-query slab for this batch tile
    @pl.when(layer == 0)
    def _():
        q0 = q_ref[0].astype(jnp.float32)          # (Na, D)
        for b in range(Bt):                        # sublane-aligned static stores
            x_sc[b * Na:(b + 1) * Na, :] = q0

    x = x_sc[...]                                                # (R, D) f32
    mem2 = mem_ref[...].astype(jnp.float32).reshape(Bt * S, D)   # stacked memory rows
    ln_w = ln_ref[0].astype(jnp.float32)                         # (6, D)

    # --- self-attention (packed QKV projection over all Bt*Na rows) ---
    qkv = matmul(x, wqkv_ref, bqkv_ref)                          # (R, 3D)
    a = mha(qkv[:, 0:D].reshape(Bt, Na, D),
            qkv[:, D:2 * D].reshape(Bt, Na, D),
            qkv[:, 2 * D:3 * D].reshape(Bt, Na, D),
            wo_sa_ref, bo_sa_ref)
    x = layer_norm(x + a, ln_w[0:1, :], ln_w[1:2, :])

    # --- cross-attention (packed KV projection of the stacked memory rows) ---
    qc = matmul(x, wq_ca_ref, bq_ca_ref).reshape(Bt, Na, D)
    kv = matmul(mem2, wkv_ca_ref, bkv_ca_ref).reshape(Bt, S, 2 * D)
    a = mha(qc, kv[:, :, 0:D], kv[:, :, D:2 * D], wo_ca_ref, bo_ca_ref)
    x = layer_norm(x + a, ln_w[2:3, :], ln_w[3:4, :])

    # --- feed-forward ---
    # TODO(synk): PyTorch F.gelu default is exact erf; tanh-approx GELU used for
    # Mosaic-safe lowering (small parity drift vs torch).
    h = jax.nn.gelu(matmul(x, w1_ref, b1_ref), approximate=True)
    x = layer_norm(x + matmul(h, w2_ref, b2_ref), ln_w[4:5, :], ln_w[5:6, :])

    x_sc[...] = x                                                # carry to next layer

    # ---- last layer: lane-dense feature store + output LayerNorm + fused heads ----
    @pl.when(layer == num_layers - 1)
    def _():
        x3 = x.reshape(Bt, Na, D)
        # feat block is 128-lane padded; only the first D lanes are meaningful, the
        # padding lanes are don't-care and get sliced off in the wrapper (the HBM
        # writeback itself is a dense 128-lane slab).
        feat_ref[:, :, 0:D] = x3.astype(feat_ref.dtype)

        onorm = onorm_ref[...].astype(jnp.float32)               # (2, D)
        xn = layer_norm(x, onorm[0:1, :], onorm[1:2, :])
        y = (jnp.dot(cast(xn), whead_ref[...], preferred_element_type=jnp.float32)
             + bhead_ref[...].astype(jnp.float32))               # (R, Cpad)
        col = jax.lax.broadcasted_iota(jnp.int32, y.shape, 1)
        box_cols = (col >= num_classes) & (col < num_classes + 5)
        y = jnp.where(box_cols, jax.nn.sigmoid(y), y)
        head_ref[...] = y.reshape(Bt, Na, -1).astype(head_ref.dtype)


# ---------------------------------------------------------------------------
# Wrapper: weight prep (scale folding, head fusion, matmul dtype) + pallas_call
# ---------------------------------------------------------------------------

def _pick_batch_tile(B, Na, target_rows):
    """Largest divisor of B with Bt*Na <= target_rows, keeping >=2 grid steps if possible."""
    divs = [d for d in range(1, B + 1) if B % d == 0]
    ok = [d for d in divs if d * Na <= target_rows] or [1]
    multi = [d for d in ok if B // d >= 2]
    return max(multi) if multi else max(ok)


def _prepare_kernel_weights(params, *, nhead, matmul_dtype):
    """Fold 1/sqrt(dh) into Q projections, fuse class+box heads into a 128-lane slab,
    and cast matmul weight matrices to matmul_dtype (biases / norms stay f32)."""
    D = params["agent_queries"].shape[-1]
    dh = D // nhead
    sc = 1.0 / math.sqrt(dh)

    qcol = jnp.concatenate([jnp.full((D,), sc, jnp.float32),
                            jnp.ones((2 * D,), jnp.float32)])
    w_qkv = params["w_qkv"] * qcol
    b_qkv = params["b_qkv"] * qcol
    wq_ca = params["wq_ca"] * sc
    bq_ca = params["bq_ca"] * sc

    C = params["w_cls"].shape[1]
    Cpad = _round_up(C + 5, 128)
    w_head = (jnp.zeros((D, Cpad), jnp.float32)
              .at[:, :C].set(params["w_cls"]).at[:, C:C + 5].set(params["w_box"]))
    b_head = (jnp.zeros((1, Cpad), jnp.float32)
              .at[:, :C].set(params["b_cls"]).at[:, C:C + 5].set(params["b_box"]))

    md = matmul_dtype
    weights = dict(
        w_qkv=w_qkv.astype(md), b_qkv=b_qkv,
        wo_sa=params["wo_sa"].astype(md), bo_sa=params["bo_sa"],
        wq_ca=wq_ca.astype(md), bq_ca=bq_ca,
        wkv_ca=params["wkv_ca"].astype(md), bkv_ca=params["bkv_ca"],
        wo_ca=params["wo_ca"].astype(md), bo_ca=params["bo_ca"],
        ln=params["ln"],
        w1=params["w1"].astype(md), b1=params["b1"],
        w2=params["w2"].astype(md), b2=params["b2"],
        out_norm=params["out_norm"],
        w_head=w_head.astype(md), b_head=b_head,
    )
    return weights, Cpad


def agent_detection_head(params, latent_world_model, *, nhead, num_classes,
                         matmul_dtype=jnp.float32, target_rows=256):
    B, S, D = latent_world_model.shape
    Na = params["agent_queries"].shape[1]
    L = params["w_qkv"].shape[0]
    assert D % nhead == 0
    Dpad = _round_up(D, 128)

    Bt = _pick_batch_tile(B, Na, target_rows)
    nb = B // Bt

    weights, Cpad = _prepare_kernel_weights(params, nhead=nhead, matmul_dtype=matmul_dtype)
    warrs = [weights[n] for n in _WEIGHT_NAMES]

    def wspec(name, arr):
        nd = arr.ndim
        if name in _LAYER_STACKED:
            # stream one layer's block per layer grid step (double-buffered by pipeline)
            return pl.BlockSpec((1,) + arr.shape[1:],
                                lambda i, l, _nd=nd: (l,) + (0,) * (_nd - 1))
        return pl.BlockSpec(arr.shape, lambda i, l, _nd=nd: (0,) * _nd)

    in_specs = (
        [pl.BlockSpec((1, Na, D), lambda i, l: (0, 0, 0)),      # shared queries (no tile)
         pl.BlockSpec((Bt, S, D), lambda i, l: (i, 0, 0))]      # Bt-batch memory tile
        + [wspec(n, a) for n, a in zip(_WEIGHT_NAMES, warrs)]
    )
    out_specs = (pl.BlockSpec((Bt, Na, Dpad), lambda i, l: (i, 0, 0)),
                 pl.BlockSpec((Bt, Na, Cpad), lambda i, l: (i, 0, 0)))
    out_shape = (jax.ShapeDtypeStruct((B, Na, Dpad), jnp.float32),
                 jax.ShapeDtypeStruct((B, Na, Cpad), jnp.float32))
    scratch_shapes = [pltpu.VMEM((Bt * Na, D), jnp.float32)]    # carried decoder state

    # VMEM limit sized from the real per-step footprint (double-buffered blocks),
    # never below the 32 MiB default, never above the 128 MiB physical.
    def _nbytes(shape, dtype):
        return int(math.prod(shape)) * jnp.dtype(dtype).itemsize

    blk = _nbytes((1, Na, D), params["agent_queries"].dtype)
    blk += _nbytes((Bt, S, D), latent_world_model.dtype)
    for n, a in zip(_WEIGHT_NAMES, warrs):
        bs = (1,) + a.shape[1:] if n in _LAYER_STACKED else a.shape
        blk += _nbytes(bs, a.dtype)
    blk += _nbytes((Bt, Na, Dpad), jnp.float32) + _nbytes((Bt, Na, Cpad), jnp.float32)
    scratch_bytes = _nbytes((Bt * Na, D), jnp.float32)
    vmem_limit = int(min(128 << 20, max(32 << 20, 2 * blk + scratch_bytes + (4 << 20))))

    feats, head = pl.pallas_call(
        functools.partial(_agent_detection_kernel, nhead=nhead,
                          num_classes=num_classes, eps=1e-5, mm_dtype=matmul_dtype),
        grid=(nb, L),
        in_specs=in_specs,
        out_specs=out_specs,
        out_shape=out_shape,
        scratch_shapes=scratch_shapes,
        compiler_params=pltpu.CompilerParams(
            dimension_semantics=("parallel", "arbitrary"),
            vmem_limit_bytes=vmem_limit),
    )(params["agent_queries"], latent_world_model, *warrs)

    return {
        "pred_logits": head[:, :, :num_classes],
        "pred_boxes": head[:, :, num_classes:num_classes + 5],
        "decoder_features": feats[:, :, :D],
    }


# ---------------------------------------------------------------------------
# Deterministic parameter initialization (natural, stacked per-layer tensors)
# ---------------------------------------------------------------------------

def init_params(key, *, d_model, nhead, num_decoder_layers, dim_feedforward,
                max_agents, num_agent_classes):
    D, F, L, C = d_model, dim_feedforward, num_decoder_layers, num_agent_classes
    keys = iter(jax.random.split(key, 128))

    def nrm(shape, scale=0.02):
        return (scale * jax.random.normal(next(keys), shape)).astype(jnp.float32)

    def stack(shape, scale=0.02):
        return jnp.stack([nrm(shape, scale) for _ in range(L)], axis=0)

    ln_one = jnp.stack([jnp.ones(D, jnp.float32), jnp.zeros(D, jnp.float32)] * 3, axis=0)

    return dict(
        agent_queries=nrm((1, max_agents, D), 1.0),
        w_qkv=stack((D, 3 * D)), b_qkv=stack((1, 3 * D)),
        wo_sa=stack((D, D)), bo_sa=stack((1, D)),
        wq_ca=stack((D, D)), bq_ca=stack((1, D)),
        wkv_ca=stack((D, 2 * D)), bkv_ca=stack((1, 2 * D)),
        wo_ca=stack((D, D)), bo_ca=stack((1, D)),
        # rows: [ln1_g, ln1_b, ln2_g, ln2_b, ln3_g, ln3_b]
        ln=jnp.stack([ln_one] * L, axis=0),
        w1=stack((D, F)), b1=stack((1, F)),
        w2=stack((F, D)), b2=stack((1, D)),
        out_norm=jnp.stack([jnp.ones(D, jnp.float32), jnp.zeros(D, jnp.float32)], axis=0),
        w_cls=nrm((D, C)), b_cls=nrm((1, C)),
        w_box=nrm((D, 5)), b_box=nrm((1, 5)),
    )


# ---------------------------------------------------------------------------
# Pure-JAX reference (natural weights, explicit 1/sqrt(dh) scale) for parity
# ---------------------------------------------------------------------------

def reference_forward(params, latent, *, nhead, num_classes):
    B, S, D = latent.shape
    Na = params["agent_queries"].shape[1]
    L = params["w_qkv"].shape[0]
    dh = D // nhead
    scale = 1.0 / math.sqrt(dh)

    def ln(v, g, b, eps=1e-5):
        mu = v.mean(-1, keepdims=True)
        var = ((v - mu) ** 2).mean(-1, keepdims=True)
        return (v - mu) / jnp.sqrt(var + eps) * g + b

    def mha(q, k, v, wo, bo):
        def split(t):
            return t.reshape(t.shape[0], t.shape[1], nhead, dh).transpose(0, 2, 1, 3)
        qh, kh, vh = split(q), split(k), split(v)
        s = jnp.einsum("bhqd,bhkd->bhqk", qh, kh) * scale
        p = jax.nn.softmax(s, axis=-1)
        o = jnp.einsum("bhqk,bhkd->bhqd", p, vh)
        o = o.transpose(0, 2, 1, 3).reshape(q.shape[0], q.shape[1], D)
        return o @ wo + bo

    x = jnp.broadcast_to(params["agent_queries"], (B, Na, D))
    mem = latent
    for l in range(L):
        lnp = params["ln"][l]
        qkv = x @ params["w_qkv"][l] + params["b_qkv"][l]
        a = mha(qkv[..., 0:D], qkv[..., D:2 * D], qkv[..., 2 * D:],
                params["wo_sa"][l], params["bo_sa"][l])
        x = ln(x + a, lnp[0], lnp[1])
        qc = x @ params["wq_ca"][l] + params["bq_ca"][l]
        kv = mem @ params["wkv_ca"][l] + params["bkv_ca"][l]
        a = mha(qc, kv[..., 0:D], kv[..., D:], params["wo_ca"][l], params["bo_ca"][l])
        x = ln(x + a, lnp[2], lnp[3])
        h = jax.nn.gelu(x @ params["w1"][l] + params["b1"][l], approximate=True)
        x = ln(x + (h @ params["w2"][l] + params["b2"][l]), lnp[4], lnp[5])
    feats = x
    xn = ln(x, params["out_norm"][0], params["out_norm"][1])
    logits = xn @ params["w_cls"] + params["b_cls"]
    boxes = jax.nn.sigmoid(xn @ params["w_box"] + params["b_box"])
    return {"pred_logits": logits, "pred_boxes": boxes, "decoder_features": feats}


# ---------------------------------------------------------------------------
# Main
# ---------------------------------------------------------------------------

if __name__ == "__main__":
    cfg = dict(d_model=64, nhead=4, num_decoder_layers=2, dim_feedforward=256,
               max_agents=16, num_agent_classes=4)
    B, S = 4, 32

    key = jax.random.PRNGKey(0)
    pkey, xkey = jax.random.split(key)
    params = init_params(pkey, **cfg)
    latent_world_model = jax.random.normal(xkey, (B, S, cfg["d_model"]), dtype=jnp.float32)

    ref = reference_forward(params, latent_world_model,
                            nhead=cfg["nhead"], num_classes=cfg["num_agent_classes"])

    # f32 matmul-operand path (tight parity check)
    out = agent_detection_head(params, latent_world_model,
                               nhead=cfg["nhead"], num_classes=cfg["num_agent_classes"])
    jax.block_until_ready(out)
    assert out["pred_logits"].shape == (B, cfg["max_agents"], cfg["num_agent_classes"])
    assert out["pred_boxes"].shape == (B, cfg["max_agents"], 5)
    assert out["decoder_features"].shape == (B, cfg["max_agents"], cfg["d_model"])
    for name in ("pred_logits", "pred_boxes", "decoder_features"):
        assert bool(jnp.isfinite(out[name]).all()), name
        err = float(jnp.max(jnp.abs(out[name] - ref[name])))
        assert err < 5e-2, (name, err)

    # bf16 matmul-operand path (v6e/v7x feedback: bf16 operands, f32 accumulation,
    # f32 LayerNorm/softmax/GELU) -- loose sanity check against the f32 reference.
    out_bf16 = agent_detection_head(params, latent_world_model,
                                    nhead=cfg["nhead"],
                                    num_classes=cfg["num_agent_classes"],
                                    matmul_dtype=jnp.bfloat16)
    jax.block_until_ready(out_bf16)
    bf16_tol = {"pred_logits": 0.15, "pred_boxes": 0.1, "decoder_features": 0.5}
    for name, tol in bf16_tol.items():
        assert bool(jnp.isfinite(out_bf16[name]).all()), name
        err = float(jnp.max(jnp.abs(out_bf16[name] - ref[name])))
        assert err < tol, (name, err)

    print("KERNEL_OK")
</pallas_src>

<mosaic_0001>
module attributes {stable_mosaic.version = 11 : i64} {
  func.func @_agent_detection_kernel(%arg0: i32, %arg1: i32, %arg2: memref<1x16x64xf32, #tpu.memory_space<vmem>>, %arg3: memref<2x32x64xf32, #tpu.memory_space<vmem>>, %arg4: memref<1x64x192xf32, #tpu.memory_space<vmem>>, %arg5: memref<1x1x192xf32, #tpu.memory_space<vmem>>, %arg6: memref<1x64x64xf32, #tpu.memory_space<vmem>>, %arg7: memref<1x1x64xf32, #tpu.memory_space<vmem>>, %arg8: memref<1x64x64xf32, #tpu.memory_space<vmem>>, %arg9: memref<1x1x64xf32, #tpu.memory_space<vmem>>, %arg10: memref<1x64x128xf32, #tpu.memory_space<vmem>>, %arg11: memref<1x1x128xf32, #tpu.memory_space<vmem>>, %arg12: memref<1x64x64xf32, #tpu.memory_space<vmem>>, %arg13: memref<1x1x64xf32, #tpu.memory_space<vmem>>, %arg14: memref<1x6x64xf32, #tpu.memory_space<vmem>>, %arg15: memref<1x64x256xf32, #tpu.memory_space<vmem>>, %arg16: memref<1x1x256xf32, #tpu.memory_space<vmem>>, %arg17: memref<1x256x64xf32, #tpu.memory_space<vmem>>, %arg18: memref<1x1x64xf32, #tpu.memory_space<vmem>>, %arg19: memref<2x64xf32, #tpu.memory_space<vmem>>, %arg20: memref<64x128xf32, #tpu.memory_space<vmem>>, %arg21: memref<1x128xf32, #tpu.memory_space<vmem>>, %arg22: memref<2x16x128xf32, #tpu.memory_space<vmem>>, %arg23: memref<2x16x128xf32, #tpu.memory_space<vmem>>, %arg24: memref<32x64xf32, #tpu.memory_space<vmem>>) attributes {dimension_semantics = [#tpu.dimension_semantics<parallel>, #tpu.dimension_semantics<arbitrary>], iteration_bounds = array<i64: 2, 2>, scalar_prefetch = 0 : i64, scratch_operands = 1 : i64, tpu.core_type = #tpu.core_type<tc>, window_params = [{pipeline_mode = #tpu.pipeline_mode<synchronous>, transform_indices = @transform_0, window_bounds = array<i64: 1, 16, 64>}, {transform_indices = @transform_1, window_bounds = array<i64: 2, 32, 64>}, {transform_indices = @transform_2, window_bounds = array<i64: 1, 64, 192>}, {transform_indices = @transform_3, window_bounds = array<i64: 1, 1, 192>}, {transform_indices = @transform_4, window_bounds = array<i64: 1, 64, 64>}, {transform_indices = @transform_5, window_bounds = array<i64: 1, 1, 64>}, {transform_indices = @transform_6, window_bounds = array<i64: 1, 64, 64>}, {transform_indices = @transform_7, window_bounds = array<i64: 1, 1, 64>}, {transform_indices = @transform_8, window_bounds = array<i64: 1, 64, 128>}, {transform_indices = @transform_9, window_bounds = array<i64: 1, 1, 128>}, {transform_indices = @transform_10, window_bounds = array<i64: 1, 64, 64>}, {transform_indices = @transform_11, window_bounds = array<i64: 1, 1, 64>}, {transform_indices = @transform_12, window_bounds = array<i64: 1, 6, 64>}, {transform_indices = @transform_13, window_bounds = array<i64: 1, 64, 256>}, {transform_indices = @transform_14, window_bounds = array<i64: 1, 1, 256>}, {transform_indices = @transform_15, window_bounds = array<i64: 1, 256, 64>}, {transform_indices = @transform_16, window_bounds = array<i64: 1, 1, 64>}, {pipeline_mode = #tpu.pipeline_mode<synchronous>, transform_indices = @transform_17, window_bounds = array<i64: 2, 64>}, {pipeline_mode = #tpu.pipeline_mode<synchronous>, transform_indices = @transform_18, window_bounds = array<i64: 64, 128>}, {pipeline_mode = #tpu.pipeline_mode<synchronous>, transform_indices = @transform_19, window_bounds = array<i64: 1, 128>}, {transform_indices = @transform_20, window_bounds = array<i64: 2, 16, 128>}, {transform_indices = @transform_21, window_bounds = array<i64: 2, 16, 128>}]} {
    %c0_i32 = arith.constant 0 : i32
    %0 = arith.cmpi eq, %arg1, %c0_i32 : i32
    %1 = arith.extui %0 : i1 to i32
    %c0_i32_0 = arith.constant 0 : i32
    %2 = arith.cmpi ne, %1, %c0_i32_0 : i32
    scf.if %2 {
      %c0_130 = arith.constant 0 : index
      %c0_131 = arith.constant 0 : index
      %c0_132 = arith.constant 0 : index
      %337 = vector.load %arg2[%c0_130, %c0_131, %c0_132] : memref<1x16x64xf32, #tpu.memory_space<vmem>>, vector<1x16x64xf32>
      %338 = vector.shape_cast %337 : vector<1x16x64xf32> to vector<16x64xf32>
      %c0_133 = arith.constant 0 : index
      %c0_134 = arith.constant 0 : index
      %339 = vector.load %arg24[%c0_133, %c0_134] : memref<32x64xf32, #tpu.memory_space<vmem>>, vector<16x64xf32>
      tpu.vector_store %arg24[%c0_133, %c0_134], %338 {strides = array<i32>} : memref<32x64xf32, #tpu.memory_space<vmem>>, vector<16x64xf32>,
      %c16 = arith.constant 16 : index
      %c0_135 = arith.constant 0 : index
      %340 = vector.load %arg24[%c16, %c0_135] : memref<32x64xf32, #tpu.memory_space<vmem>>, vector<16x64xf32>
      tpu.vector_store %arg24[%c16, %c0_135], %338 {strides = array<i32>} : memref<32x64xf32, #tpu.memory_space<vmem>>, vector<16x64xf32>,
    } else {
    }
    %c0 = arith.constant 0 : index
    %c0_1 = arith.constant 0 : index
    %3 = vector.load %arg24[%c0, %c0_1] : memref<32x64xf32, #tpu.memory_space<vmem>>, vector<32x64xf32>
    %c0_2 = arith.constant 0 : index
    %c0_3 = arith.constant 0 : index
    %c0_4 = arith.constant 0 : index
    %4 = vector.load %arg3[%c0_2, %c0_3, %c0_4] : memref<2x32x64xf32, #tpu.memory_space<vmem>>, vector<2x32x64xf32>
    %5 = vector.shape_cast %4 : vector<2x32x64xf32> to vector<64x64xf32>
    %c0_5 = arith.constant 0 : index
    %c0_6 = arith.constant 0 : index
    %c0_7 = arith.constant 0 : index
    %6 = vector.load %arg14[%c0_5, %c0_6, %c0_7] : memref<1x6x64xf32, #tpu.memory_space<vmem>>, vector<1x6x64xf32>
    %7 = vector.shape_cast %6 : vector<1x6x64xf32> to vector<6x64xf32>
    %c0_8 = arith.constant 0 : index
    %c0_9 = arith.constant 0 : index
    %c0_10 = arith.constant 0 : index
    %8 = vector.load %arg4[%c0_8, %c0_9, %c0_10] : memref<1x64x192xf32, #tpu.memory_space<vmem>>, vector<1x64x192xf32>
    %9 = vector.shape_cast %8 : vector<1x64x192xf32> to vector<64x192xf32>
    %cst = arith.constant dense<0.000000e+00> : vector<32x192xf32>
    %10 = tpu.matmul %3, %9, %cst {dimension_numbers = #tpu.dot_dimension_numbers<[1], [0], [0], [1], [0, 0, 1, 1], [], []>} : vector<32x64xf32>, vector<64x192xf32>, vector<32x192xf32> -> vector<32x192xf32>
    %c0_11 = arith.constant 0 : index
    %c0_12 = arith.constant 0 : index
    %c0_13 = arith.constant 0 : index
    %11 = vector.load %arg5[%c0_11, %c0_12, %c0_13] : memref<1x1x192xf32, #tpu.memory_space<vmem>>, vector<1x1x192xf32>
    %12 = vector.shape_cast %11 : vector<1x1x192xf32> to vector<1x192xf32>
    %13 = vector.broadcast %12 : vector<1x192xf32> to vector<32x192xf32>
    %14 = arith.addf %10, %13 : vector<32x192xf32>
    %15 = vector.extract_strided_slice %14 {offsets = [0, 0], sizes = [32, 64], strides = [1, 1]} : vector<32x192xf32> to vector<32x64xf32>
    %16 = vector.shape_cast %15 : vector<32x64xf32> to vector<2x16x64xf32>
    %17 = vector.extract_strided_slice %14 {offsets = [0, 64], sizes = [32, 64], strides = [1, 1]} : vector<32x192xf32> to vector<32x64xf32>
    %18 = vector.shape_cast %17 : vector<32x64xf32> to vector<2x16x64xf32>
    %19 = vector.extract_strided_slice %14 {offsets = [0, 128], sizes = [32, 64], strides = [1, 1]} : vector<32x192xf32> to vector<32x64xf32>
    %20 = vector.shape_cast %19 : vector<32x64xf32> to vector<2x16x64xf32>
    %21 = tpu.iota {dimensions = array<i32: 2>} : vector<2x16x64xi32>
    %22 = vector.extract_strided_slice %16 {offsets = [0, 0, 0], sizes = [2, 16, 16], strides = [1, 1, 1]} : vector<2x16x64xf32> to vector<2x16x16xf32>
    %23 = vector.extract_strided_slice %18 {offsets = [0, 0, 0], sizes = [2, 16, 16], strides = [1, 1, 1]} : vector<2x16x64xf32> to vector<2x16x16xf32>
    "tpu.trace_start"() <{level = 10 : i32, message = "bqd,bkd->bqk"}> : () -> ()
    %cst_14 = arith.constant dense<0.000000e+00> : vector<2x16x16xf32>
    %24 = tpu.matmul %22, %23, %cst_14 {dimension_numbers = #tpu.dot_dimension_numbers<[2], [2], [1], [1], [0, 0, 0, 1, 1, 1], [0], [0]>} : vector<2x16x16xf32>, vector<2x16x16xf32>, vector<2x16x16xf32> -> vector<2x16x16xf32>
    "tpu.trace_stop"() : () -> ()
    %cst_15 = arith.constant dense<0xFF800000> : vector<2x16xf32>
    %25 = vector.multi_reduction <maximumf>, %24, %cst_15 [2] : vector<2x16x16xf32> to vector<2x16xf32>
    %26 = vector.shape_cast %25 : vector<2x16xf32> to vector<2x16x1xf32>
    %27 = vector.broadcast %26 : vector<2x16x1xf32> to vector<2x16x16xf32>
    %28 = arith.subf %24, %27 : vector<2x16x16xf32>
    %29 = math.exp %28 : vector<2x16x16xf32>
    %cst_16 = arith.constant dense<0.000000e+00> : vector<2x16xf32>
    %30 = vector.multi_reduction <add>, %29, %cst_16 [2] : vector<2x16x16xf32> to vector<2x16xf32>
    %31 = vector.shape_cast %30 : vector<2x16xf32> to vector<2x16x1xf32>
    %32 = tpu.reciprocal %31 {approx = true} : vector<2x16x1xf32> -> vector<2x16x1xf32>
    %33 = vector.broadcast %32 : vector<2x16x1xf32> to vector<2x16x16xf32>
    %34 = arith.mulf %29, %33 : vector<2x16x16xf32>
    %c0_i32_17 = arith.constant 0 : i32
    %35 = vector.broadcast %c0_i32_17 : i32 to vector<2x16x64xi32>
    %36 = arith.cmpi sge, %21, %35 : vector<2x16x64xi32>
    %c16_i32 = arith.constant 16 : i32
    %37 = vector.broadcast %c16_i32 : i32 to vector<2x16x64xi32>
    %38 = arith.cmpi slt, %21, %37 : vector<2x16x64xi32>
    %39 = arith.andi %36, %38 : vector<2x16x64xi1>
    %cst_18 = arith.constant 0.000000e+00 : f32
    %40 = vector.broadcast %cst_18 : f32 to vector<2x16x64xf32>
    %41 = arith.select %39, %20, %40 : vector<2x16x64xi1>, vector<2x16x64xf32>
    "tpu.trace_start"() <{level = 10 : i32, message = "bqk,bkd->bqd"}> : () -> ()
    %cst_19 = arith.constant dense<0.000000e+00> : vector<2x16x64xf32>
    %42 = tpu.matmul %34, %41, %cst_19 {dimension_numbers = #tpu.dot_dimension_numbers<[2], [1], [1], [2], [0, 0, 0, 1, 1, 2], [0], [0]>} : vector<2x16x16xf32>, vector<2x16x64xf32>, vector<2x16x64xf32> -> vector<2x16x64xf32>
    "tpu.trace_stop"() : () -> ()
    %43 = vector.extract_strided_slice %16 {offsets = [0, 0, 16], sizes = [2, 16, 16], strides = [1, 1, 1]} : vector<2x16x64xf32> to vector<2x16x16xf32>
    %44 = vector.extract_strided_slice %18 {offsets = [0, 0, 16], sizes = [2, 16, 16], strides = [1, 1, 1]} : vector<2x16x64xf32> to vector<2x16x16xf32>
    "tpu.trace_start"() <{level = 10 : i32, message = "bqd,bkd->bqk"}> : () -> ()
    %cst_20 = arith.constant dense<0.000000e+00> : vector<2x16x16xf32>
    %45 = tpu.matmul %43, %44, %cst_20 {dimension_numbers = #tpu.dot_dimension_numbers<[2], [2], [1], [1], [0, 0, 0, 1, 1, 1], [0], [0]>} : vector<2x16x16xf32>, vector<2x16x16xf32>, vector<2x16x16xf32> -> vector<2x16x16xf32>
    "tpu.trace_stop"() : () -> ()
    %cst_21 = arith.constant dense<0xFF800000> : vector<2x16xf32>
    %46 = vector.multi_reduction <maximumf>, %45, %cst_21 [2] : vector<2x16x16xf32> to vector<2x16xf32>
    %47 = vector.shape_cast %46 : vector<2x16xf32> to vector<2x16x1xf32>
    %48 = vector.broadcast %47 : vector<2x16x1xf32> to vector<2x16x16xf32>
    %49 = arith.subf %45, %48 : vector<2x16x16xf32>
    %50 = math.exp %49 : vector<2x16x16xf32>
    %cst_22 = arith.constant dense<0.000000e+00> : vector<2x16xf32>
    %51 = vector.multi_reduction <add>, %50, %cst_22 [2] : vector<2x16x16xf32> to vector<2x16xf32>
    %52 = vector.shape_cast %51 : vector<2x16xf32> to vector<2x16x1xf32>
    %53 = tpu.reciprocal %52 {approx = true} : vector<2x16x1xf32> -> vector<2x16x1xf32>
    %54 = vector.broadcast %53 : vector<2x16x1xf32> to vector<2x16x16xf32>
    %55 = arith.mulf %50, %54 : vector<2x16x16xf32>
    %c16_i32_23 = arith.constant 16 : i32
    %56 = vector.broadcast %c16_i32_23 : i32 to vector<2x16x64xi32>
    %57 = arith.cmpi sge, %21, %56 : vector<2x16x64xi32>
    %c32_i32 = arith.constant 32 : i32
    %58 = vector.broadcast %c32_i32 : i32 to vector<2x16x64xi32>
    %59 = arith.cmpi slt, %21, %58 : vector<2x16x64xi32>
    %60 = arith.andi %57, %59 : vector<2x16x64xi1>
    %cst_24 = arith.constant 0.000000e+00 : f32
    %61 = vector.broadcast %cst_24 : f32 to vector<2x16x64xf32>
    %62 = arith.select %60, %20, %61 : vector<2x16x64xi1>, vector<2x16x64xf32>
    "tpu.trace_start"() <{level = 10 : i32, message = "bqk,bkd->bqd"}> : () -> ()
    %cst_25 = arith.constant dense<0.000000e+00> : vector<2x16x64xf32>
    %63 = tpu.matmul %55, %62, %cst_25 {dimension_numbers = #tpu.dot_dimension_numbers<[2], [1], [1], [2], [0, 0, 0, 1, 1, 2], [0], [0]>} : vector<2x16x16xf32>, vector<2x16x64xf32>, vector<2x16x64xf32> -> vector<2x16x64xf32>
    "tpu.trace_stop"() : () -> ()
    %64 = arith.addf %42, %63 : vector<2x16x64xf32>
    %65 = vector.extract_strided_slice %16 {offsets = [0, 0, 32], sizes = [2, 16, 16], strides = [1, 1, 1]} : vector<2x16x64xf32> to vector<2x16x16xf32>
    %66 = vector.extract_strided_slice %18 {offsets = [0, 0, 32], sizes = [2, 16, 16], strides = [1, 1, 1]} : vector<2x16x64xf32> to vector<2x16x16xf32>
    "tpu.trace_start"() <{level = 10 : i32, message = "bqd,bkd->bqk"}> : () -> ()
    %cst_26 = arith.constant dense<0.000000e+00> : vector<2x16x16xf32>
    %67 = tpu.matmul %65, %66, %cst_26 {dimension_numbers = #tpu.dot_dimension_numbers<[2], [2], [1], [1], [0, 0, 0, 1, 1, 1], [0], [0]>} : vector<2x16x16xf32>, vector<2x16x16xf32>, vector<2x16x16xf32> -> vector<2x16x16xf32>
    "tpu.trace_stop"() : () -> ()
    %cst_27 = arith.constant dense<0xFF800000> : vector<2x16xf32>
    %68 = vector.multi_reduction <maximumf>, %67, %cst_27 [2] : vector<2x16x16xf32> to vector<2x16xf32>
    %69 = vector.shape_cast %68 : vector<2x16xf32> to vector<2x16x1xf32>
    %70 = vector.broadcast %69 : vector<2x16x1xf32> to vector<2x16x16xf32>
    %71 = arith.subf %67, %70 : vector<2x16x16xf32>
    %72 = math.exp %71 : vector<2x16x16xf32>
    %cst_28 = arith.constant dense<0.000000e+00> : vector<2x16xf32>
    %73 = vector.multi_reduction <add>, %72, %cst_28 [2] : vector<2x16x16xf32> to vector<2x16xf32>
    %74 = vector.shape_cast %73 : vector<2x16xf32> to vector<2x16x1xf32>
    %75 = tpu.reciprocal %74 {approx = true} : vector<2x16x1xf32> -> vector<2x16x1xf32>
    %76 = vector.broadcast %75 : vector<2x16x1xf32> to vector<2x16x16xf32>
    %77 = arith.mulf %72, %76 : vector<2x16x16xf32>
    %c32_i32_29 = arith.constant 32 : i32
    %78 = vector.broadcast %c32_i32_29 : i32 to vector<2x16x64xi32>
    %79 = arith.cmpi sge, %21, %78 : vector<2x16x64xi32>
    %c48_i32 = arith.constant 48 : i32
    %80 = vector.broadcast %c48_i32 : i32 to vector<2x16x64xi32>
    %81 = arith.cmpi slt, %21, %80 : vector<2x16x64xi32>
    %82 = arith.andi %79, %81 : vector<2x16x64xi1>
    %cst_30 = arith.constant 0.000000e+00 : f32
    %83 = vector.broadcast %cst_30 : f32 to vector<2x16x64xf32>
    %84 = arith.select %82, %20, %83 : vector<2x16x64xi1>, vector<2x16x64xf32>
    "tpu.trace_start"() <{level = 10 : i32, message = "bqk,bkd->bqd"}> : () -> ()
    %cst_31 = arith.constant dense<0.000000e+00> : vector<2x16x64xf32>
    %85 = tpu.matmul %77, %84, %cst_31 {dimension_numbers = #tpu.dot_dimension_numbers<[2], [1], [1], [2], [0, 0, 0, 1, 1, 2], [0], [0]>} : vector<2x16x16xf32>, vector<2x16x64xf32>, vector<2x16x64xf32> -> vector<2x16x64xf32>
    "tpu.trace_stop"() : () -> ()
    %86 = arith.addf %64, %85 : vector<2x16x64xf32>
    %87 = vector.extract_strided_slice %16 {offsets = [0, 0, 48], sizes = [2, 16, 16], strides = [1, 1, 1]} : vector<2x16x64xf32> to vector<2x16x16xf32>
    %88 = vector.extract_strided_slice %18 {offsets = [0, 0, 48], sizes = [2, 16, 16], strides = [1, 1, 1]} : vector<2x16x64xf32> to vector<2x16x16xf32>
    "tpu.trace_start"() <{level = 10 : i32, message = "bqd,bkd->bqk"}> : () -> ()
    %cst_32 = arith.constant dense<0.000000e+00> : vector<2x16x16xf32>
    %89 = tpu.matmul %87, %88, %cst_32 {dimension_numbers = #tpu.dot_dimension_numbers<[2], [2], [1], [1], [0, 0, 0, 1, 1, 1], [0], [0]>} : vector<2x16x16xf32>, vector<2x16x16xf32>, vector<2x16x16xf32> -> vector<2x16x16xf32>
    "tpu.trace_stop"() : () -> ()
    %cst_33 = arith.constant dense<0xFF800000> : vector<2x16xf32>
    %90 = vector.multi_reduction <maximumf>, %89, %cst_33 [2] : vector<2x16x16xf32> to vector<2x16xf32>
    %91 = vector.shape_cast %90 : vector<2x16xf32> to vector<2x16x1xf32>
    %92 = vector.broadcast %91 : vector<2x16x1xf32> to vector<2x16x16xf32>
    %93 = arith.subf %89, %92 : vector<2x16x16xf32>
    %94 = math.exp %93 : vector<2x16x16xf32>
    %cst_34 = arith.constant dense<0.000000e+00> : vector<2x16xf32>
    %95 = vector.multi_reduction <add>, %94, %cst_34 [2] : vector<2x16x16xf32> to vector<2x16xf32>
    %96 = vector.shape_cast %95 : vector<2x16xf32> to vector<2x16x1xf32>
    %97 = tpu.reciprocal %96 {approx = true} : vector<2x16x1xf32> -> vector<2x16x1xf32>
    %98 = vector.broadcast %97 : vector<2x16x1xf32> to vector<2x16x16xf32>
    %99 = arith.mulf %94, %98 : vector<2x16x16xf32>
    %c48_i32_35 = arith.constant 48 : i32
    %100 = vector.broadcast %c48_i32_35 : i32 to vector<2x16x64xi32>
    %101 = arith.cmpi sge, %21, %100 : vector<2x16x64xi32>
    %c64_i32 = arith.constant 64 : i32
    %102 = vector.broadcast %c64_i32 : i32 to vector<2x16x64xi32>
    %103 = arith.cmpi slt, %21, %102 : vector<2x16x64xi32>
    %104 = arith.andi %101, %103 : vector<2x16x64xi1>
    %cst_36 = arith.constant 0.000000e+00 : f32
    %105 = vector.broadcast %cst_36 : f32 to vector<2x16x64xf32>
    %106 = arith.select %104, %20, %105 : vector<2x16x64xi1>, vector<2x16x64xf32>
    "tpu.trace_start"() <{level = 10 : i32, message = "bqk,bkd->bqd"}> : () -> ()
    %cst_37 = arith.constant dense<0.000000e+00> : vector<2x16x64xf32>
    %107 = tpu.matmul %99, %106, %cst_37 {dimension_numbers = #tpu.dot_dimension_numbers<[2], [1], [1], [2], [0, 0, 0, 1, 1, 2], [0], [0]>} : vector<2x16x16xf32>, vector<2x16x64xf32>, vector<2x16x64xf32> -> vector<2x16x64xf32>
    "tpu.trace_stop"() : () -> ()
    %108 = arith.addf %86, %107 : vector<2x16x64xf32>
    %109 = vector.shape_cast %108 : vector<2x16x64xf32> to vector<32x64xf32>
    %c0_38 = arith.constant 0 : index
    %c0_39 = arith.constant 0 : index
    %c0_40 = arith.constant 0 : index
    %110 = vector.load %arg6[%c0_38, %c0_39, %c0_40] : memref<1x64x64xf32, #tpu.memory_space<vmem>>, vector<1x64x64xf32>
    %111 = vector.shape_cast %110 : vector<1x64x64xf32> to vector<64x64xf32>
    %cst_41 = arith.constant dense<0.000000e+00> : vector<32x64xf32>
    %112 = tpu.matmul %109, %111, %cst_41 {dimension_numbers = #tpu.dot_dimension_numbers<[1], [0], [0], [1], [0, 0, 1, 1], [], []>} : vector<32x64xf32>, vector<64x64xf32>, vector<32x64xf32> -> vector<32x64xf32>
    %c0_42 = arith.constant 0 : index
    %c0_43 = arith.constant 0 : index
    %c0_44 = arith.constant 0 : index
    %113 = vector.load %arg7[%c0_42, %c0_43, %c0_44] : memref<1x1x64xf32, #tpu.memory_space<vmem>>, vector<1x1x64xf32>
    %114 = vector.shape_cast %113 : vector<1x1x64xf32> to vector<1x64xf32>
    %115 = vector.broadcast %114 : vector<1x64xf32> to vector<32x64xf32>
    %116 = arith.addf %112, %115 : vector<32x64xf32>
    %117 = arith.addf %3, %116 : vector<32x64xf32>
    %118 = vector.extract_strided_slice %7 {offsets = [0, 0], sizes = [1, 64], strides = [1, 1]} : vector<6x64xf32> to vector<1x64xf32>
    %119 = vector.extract_strided_slice %7 {offsets = [1, 0], sizes = [1, 64], strides = [1, 1]} : vector<6x64xf32> to vector<1x64xf32>
    %cst_45 = arith.constant dense<0.000000e+00> : vector<32xf32>
    %120 = vector.multi_reduction <add>, %117, %cst_45 [1] : vector<32x64xf32> to vector<32xf32>
    %121 = vector.shape_cast %120 : vector<32xf32> to vector<32x1xf32>
    %cst_46 = arith.constant 6.400000e+01 : f32
    %122 = vector.broadcast %cst_46 : f32 to vector<32x1xf32>
    %123 = arith.divf %121, %122 : vector<32x1xf32>
    %124 = vector.broadcast %123 : vector<32x1xf32> to vector<32x64xf32>
    %125 = arith.subf %117, %124 : vector<32x64xf32>
    %126 = arith.mulf %125, %125 : vector<32x64xf32>
    %cst_47 = arith.constant dense<0.000000e+00> : vector<32xf32>
    %127 = vector.multi_reduction <add>, %126, %cst_47 [1] : vector<32x64xf32> to vector<32xf32>
    %128 = vector.shape_cast %127 : vector<32xf32> to vector<32x1xf32>
    %cst_48 = arith.constant 6.400000e+01 : f32
    %129 = vector.broadcast %cst_48 : f32 to vector<32x1xf32>
    %130 = arith.divf %128, %129 : vector<32x1xf32>
    %131 = vector.broadcast %123 : vector<32x1xf32> to vector<32x64xf32>
    %132 = arith.subf %117, %131 : vector<32x64xf32>
    %cst_49 = arith.constant 9.99999974E-6 : f32
    %133 = vector.broadcast %cst_49 : f32 to vector<32x1xf32>
    %134 = arith.addf %130, %133 : vector<32x1xf32>
    %135 = math.rsqrt %134 : vector<32x1xf32>
    %136 = vector.broadcast %135 : vector<32x1xf32> to vector<32x64xf32>
    %137 = arith.mulf %132, %136 : vector<32x64xf32>
    %138 = vector.broadcast %118 : vector<1x64xf32> to vector<32x64xf32>
    %139 = arith.mulf %137, %138 : vector<32x64xf32>
    %140 = vector.broadcast %119 : vector<1x64xf32> to vector<32x64xf32>
    %141 = arith.addf %139, %140 : vector<32x64xf32>
    %c0_50 = arith.constant 0 : index
    %c0_51 = arith.constant 0 : index
    %c0_52 = arith.constant 0 : index
    %142 = vector.load %arg8[%c0_50, %c0_51, %c0_52] : memref<1x64x64xf32, #tpu.memory_space<vmem>>, vector<1x64x64xf32>
    %143 = vector.shape_cast %142 : vector<1x64x64xf32> to vector<64x64xf32>
    %cst_53 = arith.constant dense<0.000000e+00> : vector<32x64xf32>
    %144 = tpu.matmul %141, %143, %cst_53 {dimension_numbers = #tpu.dot_dimension_numbers<[1], [0], [0], [1], [0, 0, 1, 1], [], []>} : vector<32x64xf32>, vector<64x64xf32>, vector<32x64xf32> -> vector<32x64xf32>
    %c0_54 = arith.constant 0 : index
    %c0_55 = arith.constant 0 : index
    %c0_56 = arith.constant 0 : index
    %145 = vector.load %arg9[%c0_54, %c0_55, %c0_56] : memref<1x1x64xf32, #tpu.memory_space<vmem>>, vector<1x1x64xf32>
    %146 = vector.shape_cast %145 : vector<1x1x64xf32> to vector<1x64xf32>
    %147 = vector.broadcast %146 : vector<1x64xf32> to vector<32x64xf32>
    %148 = arith.addf %144, %147 : vector<32x64xf32>
    %149 = vector.shape_cast %148 : vector<32x64xf32> to vector<2x16x64xf32>
    %c0_57 = arith.constant 0 : index
    %c0_58 = arith.constant 0 : index
    %c0_59 = arith.constant 0 : index
    %150 = vector.load %arg10[%c0_57, %c0_58, %c0_59] : memref<1x64x128xf32, #tpu.memory_space<vmem>>, vector<1x64x128xf32>
    %151 = vector.shape_cast %150 : vector<1x64x128xf32> to vector<64x128xf32>
    %cst_60 = arith.constant dense<0.000000e+00> : vector<64x128xf32>
    %152 = tpu.matmul %5, %151, %cst_60 {dimension_numbers = #tpu.dot_dimension_numbers<[1], [0], [0], [1], [0, 0, 1, 1], [], []>} : vector<64x64xf32>, vector<64x128xf32>, vector<64x128xf32> -> vector<64x128xf32>
    %c0_61 = arith.constant 0 : index
    %c0_62 = arith.constant 0 : index
    %c0_63 = arith.constant 0 : index
    %153 = vector.load %arg11[%c0_61, %c0_62, %c0_63] : memref<1x1x128xf32, #tpu.memory_space<vmem>>, vector<1x1x128xf32>
    %154 = vector.shape_cast %153 : vector<1x1x128xf32> to vector<1x128xf32>
    %155 = vector.broadcast %154 : vector<1x128xf32> to vector<64x128xf32>
    %156 = arith.addf %152, %155 : vector<64x128xf32>
    %157 = vector.shape_cast %156 : vector<64x128xf32> to vector<2x32x128xf32>
    %158 = vector.extract_strided_slice %157 {offsets = [0, 0, 0], sizes = [2, 32, 64], strides = [1, 1, 1]} : vector<2x32x128xf32> to vector<2x32x64xf32>
    %159 = vector.extract_strided_slice %157 {offsets = [0, 0, 64], sizes = [2, 32, 64], strides = [1, 1, 1]} : vector<2x32x128xf32> to vector<2x32x64xf32>
    %160 = tpu.iota {dimensions = array<i32: 2>} : vector<2x32x64xi32>
    %161 = vector.extract_strided_slice %149 {offsets = [0, 0, 0], sizes = [2, 16, 16], strides = [1, 1, 1]} : vector<2x16x64xf32> to vector<2x16x16xf32>
    %162 = vector.extract_strided_slice %158 {offsets = [0, 0, 0], sizes = [2, 32, 16], strides = [1, 1, 1]} : vector<2x32x64xf32> to vector<2x32x16xf32>
    "tpu.trace_start"() <{level = 10 : i32, message = "bqd,bkd->bqk"}> : () -> ()
    %cst_64 = arith.constant dense<0.000000e+00> : vector<2x16x32xf32>
    %163 = tpu.matmul %161, %162, %cst_64 {dimension_numbers = #tpu.dot_dimension_numbers<[2], [2], [1], [1], [0, 0, 0, 1, 1, 1], [0], [0]>} : vector<2x16x16xf32>, vector<2x32x16xf32>, vector<2x16x32xf32> -> vector<2x16x32xf32>
    "tpu.trace_stop"() : () -> ()
    %cst_65 = arith.constant dense<0xFF800000> : vector<2x16xf32>
    %164 = vector.multi_reduction <maximumf>, %163, %cst_65 [2] : vector<2x16x32xf32> to vector<2x16xf32>
    %165 = vector.shape_cast %164 : vector<2x16xf32> to vector<2x16x1xf32>
    %166 = vector.broadcast %165 : vector<2x16x1xf32> to vector<2x16x32xf32>
    %167 = arith.subf %163, %166 : vector<2x16x32xf32>
    %168 = math.exp %167 : vector<2x16x32xf32>
    %cst_66 = arith.constant dense<0.000000e+00> : vector<2x16xf32>
    %169 = vector.multi_reduction <add>, %168, %cst_66 [2] : vector<2x16x32xf32> to vector<2x16xf32>
    %170 = vector.shape_cast %169 : vector<2x16xf32> to vector<2x16x1xf32>
    %171 = tpu.reciprocal %170 {approx = true} : vector<2x16x1xf32> -> vector<2x16x1xf32>
    %172 = vector.broadcast %171 : vector<2x16x1xf32> to vector<2x16x32xf32>
    %173 = arith.mulf %168, %172 : vector<2x16x32xf32>
    %c0_i32_67 = arith.constant 0 : i32
    %174 = vector.broadcast %c0_i32_67 : i32 to vector<2x32x64xi32>
    %175 = arith.cmpi sge, %160, %174 : vector<2x32x64xi32>
    %c16_i32_68 = arith.constant 16 : i32
    %176 = vector.broadcast %c16_i32_68 : i32 to vector<2x32x64xi32>
    %177 = arith.cmpi slt, %160, %176 : vector<2x32x64xi32>
    %178 = arith.andi %175, %177 : vector<2x32x64xi1>
    %cst_69 = arith.constant 0.000000e+00 : f32
    %179 = vector.broadcast %cst_69 : f32 to vector<2x32x64xf32>
    %180 = arith.select %178, %159, %179 : vector<2x32x64xi1>, vector<2x32x64xf32>
    "tpu.trace_start"() <{level = 10 : i32, message = "bqk,bkd->bqd"}> : () -> ()
    %cst_70 = arith.constant dense<0.000000e+00> : vector<2x16x64xf32>
    %181 = tpu.matmul %173, %180, %cst_70 {dimension_numbers = #tpu.dot_dimension_numbers<[2], [1], [1], [2], [0, 0, 0, 1, 1, 2], [0], [0]>} : vector<2x16x32xf32>, vector<2x32x64xf32>, vector<2x16x64xf32> -> vector<2x16x64xf32>
    "tpu.trace_stop"() : () -> ()
    %182 = vector.extract_strided_slice %149 {offsets = [0, 0, 16], sizes = [2, 16, 16], strides = [1, 1, 1]} : vector<2x16x64xf32> to vector<2x16x16xf32>
    %183 = vector.extract_strided_slice %158 {offsets = [0, 0, 16], sizes = [2, 32, 16], strides = [1, 1, 1]} : vector<2x32x64xf32> to vector<2x32x16xf32>
    "tpu.trace_start"() <{level = 10 : i32, message = "bqd,bkd->bqk"}> : () -> ()
    %cst_71 = arith.constant dense<0.000000e+00> : vector<2x16x32xf32>
    %184 = tpu.matmul %182, %183, %cst_71 {dimension_numbers = #tpu.dot_dimension_numbers<[2], [2], [1], [1], [0, 0, 0, 1, 1, 1], [0], [0]>} : vector<2x16x16xf32>, vector<2x32x16xf32>, vector<2x16x32xf32> -> vector<2x16x32xf32>
    "tpu.trace_stop"() : () -> ()
    %cst_72 = arith.constant dense<0xFF800000> : vector<2x16xf32>
    %185 = vector.multi_reduction <maximumf>, %184, %cst_72 [2] : vector<2x16x32xf32> to vector<2x16xf32>
    %186 = vector.shape_cast %185 : vector<2x16xf32> to vector<2x16x1xf32>
    %187 = vector.broadcast %186 : vector<2x16x1xf32> to vector<2x16x32xf32>
    %188 = arith.subf %184, %187 : vector<2x16x32xf32>
    %189 = math.exp %188 : vector<2x16x32xf32>
    %cst_73 = arith.constant dense<0.000000e+00> : vector<2x16xf32>
    %190 = vector.multi_reduction <add>, %189, %cst_73 [2] : vector<2x16x32xf32> to vector<2x16xf32>
    %191 = vector.shape_cast %190 : vector<2x16xf32> to vector<2x16x1xf32>
    %192 = tpu.reciprocal %191 {approx = true} : vector<2x16x1xf32> -> vector<2x16x1xf32>
    %193 = vector.broadcast %192 : vector<2x16x1xf32> to vector<2x16x32xf32>
    %194 = arith.mulf %189, %193 : vector<2x16x32xf32>
    %c16_i32_74 = arith.constant 16 : i32
    %195 = vector.broadcast %c16_i32_74 : i32 to vector<2x32x64xi32>
    %196 = arith.cmpi sge, %160, %195 : vector<2x32x64xi32>
    %c32_i32_75 = arith.constant 32 : i32
    %197 = vector.broadcast %c32_i32_75 : i32 to vector<2x32x64xi32>
    %198 = arith.cmpi slt, %160, %197 : vector<2x32x64xi32>
    %199 = arith.andi %196, %198 : vector<2x32x64xi1>
    %cst_76 = arith.constant 0.000000e+00 : f32
    %200 = vector.broadcast %cst_76 : f32 to vector<2x32x64xf32>
    %201 = arith.select %199, %159, %200 : vector<2x32x64xi1>, vector<2x32x64xf32>
    "tpu.trace_start"() <{level = 10 : i32, message = "bqk,bkd->bqd"}> : () -> ()
    %cst_77 = arith.constant dense<0.000000e+00> : vector<2x16x64xf32>
    %202 = tpu.matmul %194, %201, %cst_77 {dimension_numbers = #tpu.dot_dimension_numbers<[2], [1], [1], [2], [0, 0, 0, 1, 1, 2], [0], [0]>} : vector<2x16x32xf32>, vector<2x32x64xf32>, vector<2x16x64xf32> -> vector<2x16x64xf32>
    "tpu.trace_stop"() : () -> ()
    %203 = arith.addf %181, %202 : vector<2x16x64xf32>
    %204 = vector.extract_strided_slice %149 {offsets = [0, 0, 32], sizes = [2, 16, 16], strides = [1, 1, 1]} : vector<2x16x64xf32> to vector<2x16x16xf32>
    %205 = vector.extract_strided_slice %158 {offsets = [0, 0, 32], sizes = [2, 32, 16], strides = [1, 1, 1]} : vector<2x32x64xf32> to vector<2x32x16xf32>
    "tpu.trace_start"() <{level = 10 : i32, message = "bqd,bkd->bqk"}> : () -> ()
    %cst_78 = arith.constant dense<0.000000e+00> : vector<2x16x32xf32>
    %206 = tpu.matmul %204, %205, %cst_78 {dimension_numbers = #tpu.dot_dimension_numbers<[2], [2], [1], [1], [0, 0, 0, 1, 1, 1], [0], [0]>} : vector<2x16x16xf32>, vector<2x32x16xf32>, vector<2x16x32xf32> -> vector<2x16x32xf32>
    "tpu.trace_stop"() : () -> ()
    %cst_79 = arith.constant dense<0xFF800000> : vector<2x16xf32>
    %207 = vector.multi_reduction <maximumf>, %206, %cst_79 [2] : vector<2x16x32xf32> to vector<2x16xf32>
    %208 = vector.shape_cast %207 : vector<2x16xf32> to vector<2x16x1xf32>
    %209 = vector.broadcast %208 : vector<2x16x1xf32> to vector<2x16x32xf32>
    %210 = arith.subf %206, %209 : vector<2x16x32xf32>
    %211 = math.exp %210 : vector<2x16x32xf32>
    %cst_80 = arith.constant dense<0.000000e+00> : vector<2x16xf32>
    %212 = vector.multi_reduction <add>, %211, %cst_80 [2] : vector<2x16x32xf32> to vector<2x16xf32>
    %213 = vector.shape_cast %212 : vector<2x16xf32> to vector<2x16x1xf32>
    %214 = tpu.reciprocal %213 {approx = true} : vector<2x16x1xf32> -> vector<2x16x1xf32>
    %215 = vector.broadcast %214 : vector<2x16x1xf32> to vector<2x16x32xf32>
    %216 = arith.mulf %211, %215 : vector<2x16x32xf32>
    %c32_i32_81 = arith.constant 32 : i32
    %217 = vector.broadcast %c32_i32_81 : i32 to vector<2x32x64xi32>
    %218 = arith.cmpi sge, %160, %217 : vector<2x32x64xi32>
    %c48_i32_82 = arith.constant 48 : i32
    %219 = vector.broadcast %c48_i32_82 : i32 to vector<2x32x64xi32>
    %220 = arith.cmpi slt, %160, %219 : vector<2x32x64xi32>
    %221 = arith.andi %218, %220 : vector<2x32x64xi1>
    %cst_83 = arith.constant 0.000000e+00 : f32
    %222 = vector.broadcast %cst_83 : f32 to vector<2x32x64xf32>
    %223 = arith.select %221, %159, %222 : vector<2x32x64xi1>, vector<2x32x64xf32>
    "tpu.trace_start"() <{level = 10 : i32, message = "bqk,bkd->bqd"}> : () -> ()
    %cst_84 = arith.constant dense<0.000000e+00> : vector<2x16x64xf32>
    %224 = tpu.matmul %216, %223, %cst_84 {dimension_numbers = #tpu.dot_dimension_numbers<[2], [1], [1], [2], [0, 0, 0, 1, 1, 2], [0], [0]>} : vector<2x16x32xf32>, vector<2x32x64xf32>, vector<2x16x64xf32> -> vector<2x16x64xf32>
    "tpu.trace_stop"() : () -> ()
    %225 = arith.addf %203, %224 : vector<2x16x64xf32>
    %226 = vector.extract_strided_slice %149 {offsets = [0, 0, 48], sizes = [2, 16, 16], strides = [1, 1, 1]} : vector<2x16x64xf32> to vector<2x16x16xf32>
    %227 = vector.extract_strided_slice %158 {offsets = [0, 0, 48], sizes = [2, 32, 16], strides = [1, 1, 1]} : vector<2x32x64xf32> to vector<2x32x16xf32>
    "tpu.trace_start"() <{level = 10 : i32, message = "bqd,bkd->bqk"}> : () -> ()
    %cst_85 = arith.constant dense<0.000000e+00> : vector<2x16x32xf32>
    %228 = tpu.matmul %226, %227, %cst_85 {dimension_numbers = #tpu.dot_dimension_numbers<[2], [2], [1], [1], [0, 0, 0, 1, 1, 1], [0], [0]>} : vector<2x16x16xf32>, vector<2x32x16xf32>, vector<2x16x32xf32> -> vector<2x16x32xf32>
    "tpu.trace_stop"() : () -> ()
    %cst_86 = arith.constant dense<0xFF800000> : vector<2x16xf32>
    %229 = vector.multi_reduction <maximumf>, %228, %cst_86 [2] : vector<2x16x32xf32> to vector<2x16xf32>
    %230 = vector.shape_cast %229 : vector<2x16xf32> to vector<2x16x1xf32>
    %231 = vector.broadcast %230 : vector<2x16x1xf32> to vector<2x16x32xf32>
    %232 = arith.subf %228, %231 : vector<2x16x32xf32>
    %233 = math.exp %232 : vector<2x16x32xf32>
    %cst_87 = arith.constant dense<0.000000e+00> : vector<2x16xf32>
    %234 = vector.multi_reduction <add>, %233, %cst_87 [2] : vector<2x16x32xf32> to vector<2x16xf32>
    %235 = vector.shape_cast %234 : vector<2x16xf32> to vector<2x16x1xf32>
    %236 = tpu.reciprocal %235 {approx = true} : vector<2x16x1xf32> -> vector<2x16x1xf32>
    %237 = vector.broadcast %236 : vector<2x16x1xf32> to vector<2x16x32xf32>
    %238 = arith.mulf %233, %237 : vector<2x16x32xf32>
    %c48_i32_88 = arith.constant 48 : i32
    %239 = vector.broadcast %c48_i32_88 : i32 to vector<2x32x64xi32>
    %240 = arith.cmpi sge, %160, %239 : vector<2x32x64xi32>
    %c64_i32_89 = arith.constant 64 : i32
    %241 = vector.broadcast %c64_i32_89 : i32 to vector<2x32x64xi32>
    %242 = arith.cmpi slt, %160, %241 : vector<2x32x64xi32>
    %243 = arith.andi %240, %242 : vector<2x32x64xi1>
    %cst_90 = arith.constant 0.000000e+00 : f32
    %244 = vector.broadcast %cst_90 : f32 to vector<2x32x64xf32>
    %245 = arith.select %243, %159, %244 : vector<2x32x64xi1>, vector<2x32x64xf32>
    "tpu.trace_start"() <{level = 10 : i32, message = "bqk,bkd->bqd"}> : () -> ()
    %cst_91 = arith.constant dense<0.000000e+00> : vector<2x16x64xf32>
    %246 = tpu.matmul %238, %245, %cst_91 {dimension_numbers = #tpu.dot_dimension_numbers<[2], [1], [1], [2], [0, 0, 0, 1, 1, 2], [0], [0]>} : vector<2x16x32xf32>, vector<2x32x64xf32>, vector<2x16x64xf32> -> vector<2x16x64xf32>
    "tpu.trace_stop"() : () -> ()
    %247 = arith.addf %225, %246 : vector<2x16x64xf32>
    %248 = vector.shape_cast %247 : vector<2x16x64xf32> to vector<32x64xf32>
    %c0_92 = arith.constant 0 : index
    %c0_93 = arith.constant 0 : index
    %c0_94 = arith.constant 0 : index
    %249 = vector.load %arg12[%c0_92, %c0_93, %c0_94] : memref<1x64x64xf32, #tpu.memory_space<vmem>>, vector<1x64x64xf32>
    %250 = vector.shape_cast %249 : vector<1x64x64xf32> to vector<64x64xf32>
    %cst_95 = arith.constant dense<0.000000e+00> : vector<32x64xf32>
    %251 = tpu.matmul %248, %250, %cst_95 {dimension_numbers = #tpu.dot_dimension_numbers<[1], [0], [0], [1], [0, 0, 1, 1], [], []>} : vector<32x64xf32>, vector<64x64xf32>, vector<32x64xf32> -> vector<32x64xf32>
    %c0_96 = arith.constant 0 : index
    %c0_97 = arith.constant 0 : index
    %c0_98 = arith.constant 0 : index
    %252 = vector.load %arg13[%c0_96, %c0_97, %c0_98] : memref<1x1x64xf32, #tpu.memory_space<vmem>>, vector<1x1x64xf32>
    %253 = vector.shape_cast %252 : vector<1x1x64xf32> to vector<1x64xf32>
    %254 = vector.broadcast %253 : vector<1x64xf32> to vector<32x64xf32>
    %255 = arith.addf %251, %254 : vector<32x64xf32>
    %256 = arith.addf %141, %255 : vector<32x64xf32>
    %257 = vector.extract_strided_slice %7 {offsets = [2, 0], sizes = [1, 64], strides = [1, 1]} : vector<6x64xf32> to vector<1x64xf32>
    %258 = vector.extract_strided_slice %7 {offsets = [3, 0], sizes = [1, 64], strides = [1, 1]} : vector<6x64xf32> to vector<1x64xf32>
    %cst_99 = arith.constant dense<0.000000e+00> : vector<32xf32>
    %259 = vector.multi_reduction <add>, %256, %cst_99 [1] : vector<32x64xf32> to vector<32xf32>
    %260 = vector.shape_cast %259 : vector<32xf32> to vector<32x1xf32>
    %cst_100 = arith.constant 6.400000e+01 : f32
    %261 = vector.broadcast %cst_100 : f32 to vector<32x1xf32>
    %262 = arith.divf %260, %261 : vector<32x1xf32>
    %263 = vector.broadcast %262 : vector<32x1xf32> to vector<32x64xf32>
    %264 = arith.subf %256, %263 : vector<32x64xf32>
    %265 = arith.mulf %264, %264 : vector<32x64xf32>
    %cst_101 = arith.constant dense<0.000000e+00> : vector<32xf32>
    %266 = vector.multi_reduction <add>, %265, %cst_101 [1] : vector<32x64xf32> to vector<32xf32>
    %267 = vector.shape_cast %266 : vector<32xf32> to vector<32x1xf32>
    %cst_102 = arith.constant 6.400000e+01 : f32
    %268 = vector.broadcast %cst_102 : f32 to vector<32x1xf32>
    %269 = arith.divf %267, %268 : vector<32x1xf32>
    %270 = vector.broadcast %262 : vector<32x1xf32> to vector<32x64xf32>
    %271 = arith.subf %256, %270 : vector<32x64xf32>
    %cst_103 = arith.constant 9.99999974E-6 : f32
    %272 = vector.broadcast %cst_103 : f32 to vector<32x1xf32>
    %273 = arith.addf %269, %272 : vector<32x1xf32>
    %274 = math.rsqrt %273 : vector<32x1xf32>
    %275 = vector.broadcast %274 : vector<32x1xf32> to vector<32x64xf32>
    %276 = arith.mulf %271, %275 : vector<32x64xf32>
    %277 = vector.broadcast %257 : vector<1x64xf32> to vector<32x64xf32>
    %278 = arith.mulf %276, %277 : vector<32x64xf32>
    %279 = vector.broadcast %258 : vector<1x64xf32> to vector<32x64xf32>
    %280 = arith.addf %278, %279 : vector<32x64xf32>
    %c0_104 = arith.constant 0 : index
    %c0_105 = arith.constant 0 : index
    %c0_106 = arith.constant 0 : index
    %281 = vector.load %arg15[%c0_104, %c0_105, %c0_106] : memref<1x64x256xf32, #tpu.memory_space<vmem>>, vector<1x64x256xf32>
    %282 = vector.shape_cast %281 : vector<1x64x256xf32> to vector<64x256xf32>
    %cst_107 = arith.constant dense<0.000000e+00> : vector<32x256xf32>
    %283 = tpu.matmul %280, %282, %cst_107 {dimension_numbers = #tpu.dot_dimension_numbers<[1], [0], [0], [1], [0, 0, 1, 1], [], []>} : vector<32x64xf32>, vector<64x256xf32>, vector<32x256xf32> -> vector<32x256xf32>
    %c0_108 = arith.constant 0 : index
    %c0_109 = arith.constant 0 : index
    %c0_110 = arith.constant 0 : index
    %284 = vector.load %arg16[%c0_108, %c0_109, %c0_110] : memref<1x1x256xf32, #tpu.memory_space<vmem>>, vector<1x1x256xf32>
    %285 = vector.shape_cast %284 : vector<1x1x256xf32> to vector<1x256xf32>
    %286 = vector.broadcast %285 : vector<1x256xf32> to vector<32x256xf32>
    %287 = arith.addf %283, %286 : vector<32x256xf32>
    %288 = arith.mulf %287, %287 : vector<32x256xf32>
    %289 = arith.mulf %287, %288 : vector<32x256xf32>
    %cst_111 = arith.constant 4.471500e-02 : f32
    %290 = vector.broadcast %cst_111 : f32 to vector<32x256xf32>
    %291 = arith.mulf %290, %289 : vector<32x256xf32>
    %292 = arith.addf %287, %291 : vector<32x256xf32>
    %cst_112 = arith.constant 0.797884583 : f32
    %293 = vector.broadcast %cst_112 : f32 to vector<32x256xf32>
    %294 = arith.mulf %293, %292 : vector<32x256xf32>
    %295 = math.tanh %294 : vector<32x256xf32>
    %cst_113 = arith.constant 1.000000e+00 : f32
    %296 = vector.broadcast %cst_113 : f32 to vector<32x256xf32>
    %297 = arith.addf %296, %295 : vector<32x256xf32>
    %cst_114 = arith.constant 5.000000e-01 : f32
    %298 = vector.broadcast %cst_114 : f32 to vector<32x256xf32>
    %299 = arith.mulf %298, %297 : vector<32x256xf32>
    %300 = arith.mulf %287, %299 : vector<32x256xf32>
    %c0_115 = arith.constant 0 : index
    %c0_116 = arith.constant 0 : index
    %c0_117 = arith.constant 0 : index
    %301 = vector.load %arg17[%c0_115, %c0_116, %c0_117] : memref<1x256x64xf32, #tpu.memory_space<vmem>>, vector<1x256x64xf32>
    %302 = vector.shape_cast %301 : vector<1x256x64xf32> to vector<256x64xf32>
    %cst_118 = arith.constant dense<0.000000e+00> : vector<32x64xf32>
    %303 = tpu.matmul %300, %302, %cst_118 {dimension_numbers = #tpu.dot_dimension_numbers<[1], [0], [0], [1], [0, 0, 1, 1], [], []>} : vector<32x256xf32>, vector<256x64xf32>, vector<32x64xf32> -> vector<32x64xf32>
    %c0_119 = arith.constant 0 : index
    %c0_120 = arith.constant 0 : index
    %c0_121 = arith.constant 0 : index
    %304 = vector.load %arg18[%c0_119, %c0_120, %c0_121] : memref<1x1x64xf32, #tpu.memory_space<vmem>>, vector<1x1x64xf32>
    %305 = vector.shape_cast %304 : vector<1x1x64xf32> to vector<1x64xf32>
    %306 = vector.broadcast %305 : vector<1x64xf32> to vector<32x64xf32>
    %307 = arith.addf %303, %306 : vector<32x64xf32>
    %308 = arith.addf %280, %307 : vector<32x64xf32>
    %309 = vector.extract_strided_slice %7 {offsets = [4, 0], sizes = [1, 64], strides = [1, 1]} : vector<6x64xf32> to vector<1x64xf32>
    %310 = vector.extract_strided_slice %7 {offsets = [5, 0], sizes = [1, 64], strides = [1, 1]} : vector<6x64xf32> to vector<1x64xf32>
    %cst_122 = arith.constant dense<0.000000e+00> : vector<32xf32>
    %311 = vector.multi_reduction <add>, %308, %cst_122 [1] : vector<32x64xf32> to vector<32xf32>
    %312 = vector.shape_cast %311 : vector<32xf32> to vector<32x1xf32>
    %cst_123 = arith.constant 6.400000e+01 : f32
    %313 = vector.broadcast %cst_123 : f32 to vector<32x1xf32>
    %314 = arith.divf %312, %313 : vector<32x1xf32>
    %315 = vector.broadcast %314 : vector<32x1xf32> to vector<32x64xf32>
    %316 = arith.subf %308, %315 : vector<32x64xf32>
    %317 = arith.mulf %316, %316 : vector<32x64xf32>
    %cst_124 = arith.constant dense<0.000000e+00> : vector<32xf32>
    %318 = vector.multi_reduction <add>, %317, %cst_124 [1] : vector<32x64xf32> to vector<32xf32>
    %319 = vector.shape_cast %318 : vector<32xf32> to vector<32x1xf32>
    %cst_125 = arith.constant 6.400000e+01 : f32
    %320 = vector.broadcast %cst_125 : f32 to vector<32x1xf32>
    %321 = arith.divf %319, %320 : vector<32x1xf32>
    %322 = vector.broadcast %314 : vector<32x1xf32> to vector<32x64xf32>
    %323 = arith.subf %308, %322 : vector<32x64xf32>
    %cst_126 = arith.constant 9.99999974E-6 : f32
    %324 = vector.broadcast %cst_126 : f32 to vector<32x1xf32>
    %325 = arith.addf %321, %324 : vector<32x1xf32>
    %326 = math.rsqrt %325 : vector<32x1xf32>
    %327 = vector.broadcast %326 : vector<32x1xf32> to vector<32x64xf32>
    %328 = arith.mulf %323, %327 : vector<32x64xf32>
    %329 = vector.broadcast %309 : vector<1x64xf32> to vector<32x64xf32>
    %330 = arith.mulf %328, %329 : vector<32x64xf32>
    %331 = vector.broadcast %310 : vector<1x64xf32> to vector<32x64xf32>
    %332 = arith.addf %330, %331 : vector<32x64xf32>
    %c0_127 = arith.constant 0 : index
    %c0_128 = arith.constant 0 : index
    %333 = vector.load %arg24[%c0_127, %c0_128] : memref<32x64xf32, #tpu.memory_space<vmem>>, vector<32x64xf32>
    tpu.vector_store %arg24[%c0_127, %c0_128], %332 {strides = array<i32>} : memref<32x64xf32, #tpu.memory_space<vmem>>, vector<32x64xf32>,
    %c1_i32 = arith.constant 1 : i32
    %334 = arith.cmpi eq, %arg1, %c1_i32 : i32
    %335 = arith.extui %334 : i1 to i32
    %c0_i32_129 = arith.constant 0 : i32
    %336 = arith.cmpi ne, %335, %c0_i32_129 : i32
    scf.if %336 {
      %337 = vector.shape_cast %332 : vector<32x64xf32> to vector<2x16x64xf32>
      %c0_130 = arith.constant 0 : index
      %c0_131 = arith.constant 0 : index
      %c0_132 = arith.constant 0 : index
      %338 = vector.load %arg22[%c0_130, %c0_131, %c0_132] : memref<2x16x128xf32, #tpu.memory_space<vmem>>, vector<2x16x64xf32>
      tpu.vector_store %arg22[%c0_130, %c0_131, %c0_132], %337 {strides = array<i32>} : memref<2x16x128xf32, #tpu.memory_space<vmem>>, vector<2x16x64xf32>,
      %c0_133 = arith.constant 0 : index
      %c0_134 = arith.constant 0 : index
      %339 = vector.load %arg19[%c0_133, %c0_134] : memref<2x64xf32, #tpu.memory_space<vmem>>, vector<2x64xf32>
      %340 = vector.extract_strided_slice %339 {offsets = [0, 0], sizes = [1, 64], strides = [1, 1]} : vector<2x64xf32> to vector<1x64xf32>
      %341 = vector.extract_strided_slice %339 {offsets = [1, 0], sizes = [1, 64], strides = [1, 1]} : vector<2x64xf32> to vector<1x64xf32>
      %cst_135 = arith.constant dense<0.000000e+00> : vector<32xf32>
      %342 = vector.multi_reduction <add>, %332, %cst_135 [1] : vector<32x64xf32> to vector<32xf32>
      %343 = vector.shape_cast %342 : vector<32xf32> to vector<32x1xf32>
      %cst_136 = arith.constant 6.400000e+01 : f32
      %344 = vector.broadcast %cst_136 : f32 to vector<32x1xf32>
      %345 = arith.divf %343, %344 : vector<32x1xf32>
      %346 = vector.broadcast %345 : vector<32x1xf32> to vector<32x64xf32>
      %347 = arith.subf %332, %346 : vector<32x64xf32>
      %348 = arith.mulf %347, %347 : vector<32x64xf32>
      %cst_137 = arith.constant dense<0.000000e+00> : vector<32xf32>
      %349 = vector.multi_reduction <add>, %348, %cst_137 [1] : vector<32x64xf32> to vector<32xf32>
      %350 = vector.shape_cast %349 : vector<32xf32> to vector<32x1xf32>
      %cst_138 = arith.constant 6.400000e+01 : f32
      %351 = vector.broadcast %cst_138 : f32 to vector<32x1xf32>
      %352 = arith.divf %350, %351 : vector<32x1xf32>
      %353 = vector.broadcast %345 : vector<32x1xf32> to vector<32x64xf32>
      %354 = arith.subf %332, %353 : vector<32x64xf32>
      %cst_139 = arith.constant 9.99999974E-6 : f32
      %355 = vector.broadcast %cst_139 : f32 to vector<32x1xf32>
      %356 = arith.addf %352, %355 : vector<32x1xf32>
      %357 = math.rsqrt %356 : vector<32x1xf32>
      %358 = vector.broadcast %357 : vector<32x1xf32> to vector<32x64xf32>
      %359 = arith.mulf %354, %358 : vector<32x64xf32>
      %360 = vector.broadcast %340 : vector<1x64xf32> to vector<32x64xf32>
      %361 = arith.mulf %359, %360 : vector<32x64xf32>
      %362 = vector.broadcast %341 : vector<1x64xf32> to vector<32x64xf32>
      %363 = arith.addf %361, %362 : vector<32x64xf32>
      %c0_140 = arith.constant 0 : index
      %c0_141 = arith.constant 0 : index
      %364 = vector.load %arg20[%c0_140, %c0_141] : memref<64x128xf32, #tpu.memory_space<vmem>>, vector<64x128xf32>
      %cst_142 = arith.constant dense<0.000000e+00> : vector<32x128xf32>
      %365 = tpu.matmul %363, %364, %cst_142 {dimension_numbers = #tpu.dot_dimension_numbers<[1], [0], [0], [1], [0, 0, 1, 1], [], []>} : vector<32x64xf32>, vector<64x128xf32>, vector<32x128xf32> -> vector<32x128xf32>
      %c0_143 = arith.constant 0 : index
      %c0_144 = arith.constant 0 : index
      %366 = vector.load %arg21[%c0_143, %c0_144] : memref<1x128xf32, #tpu.memory_space<vmem>>, vector<1x128xf32>
      %367 = vector.broadcast %366 : vector<1x128xf32> to vector<32x128xf32>
      %368 = arith.addf %365, %367 : vector<32x128xf32>
      %369 = tpu.iota {dimensions = array<i32: 1>} : vector<32x128xi32>
      %c4_i32 = arith.constant 4 : i32
      %370 = vector.broadcast %c4_i32 : i32 to vector<32x128xi32>
      %371 = arith.cmpi sge, %369, %370 : vector<32x128xi32>
      %c9_i32 = arith.constant 9 : i32
      %372 = vector.broadcast %c9_i32 : i32 to vector<32x128xi32>
      %373 = arith.cmpi slt, %369, %372 : vector<32x128xi32>
      %374 = arith.andi %371, %373 : vector<32x128xi1>
      %375 = arith.negf %368 : vector<32x128xf32>
      %376 = math.exp %375 : vector<32x128xf32>
      %cst_145 = arith.constant 1.000000e+00 : f32
      %377 = vector.broadcast %cst_145 : f32 to vector<32x128xf32>
      %378 = arith.addf %377, %376 : vector<32x128xf32>
      %379 = arith.divf %377, %378 : vector<32x128xf32>
      %380 = arith.select %374, %379, %368 : vector<32x128xi1>, vector<32x128xf32>
      %381 = vector.shape_cast %380 : vector<32x128xf32> to vector<2x16x128xf32>
      %c0_146 = arith.constant 0 : index
      %c0_147 = arith.constant 0 : index
      %c0_148 = arith.constant 0 : index
      %382 = vector.load %arg23[%c0_146, %c0_147, %c0_148] : memref<2x16x128xf32, #tpu.memory_space<vmem>>, vector<2x16x128xf32>
      tpu.vector_store %arg23[%c0_146, %c0_147, %c0_148], %381 {strides = array<i32>} : memref<2x16x128xf32, #tpu.memory_space<vmem>>, vector<2x16x128xf32>,
    } else {
    }
    return
  }
  func.func @transform_0(%arg0: i32, %arg1: i32) -> (i32, i32, i32) {
    %c0_i32 = arith.constant 0 : i32
    %c0_i32_0 = arith.constant 0 : i32
    %c0_i32_1 = arith.constant 0 : i32
    %c0_i32_2 = arith.constant 0 : i32
    return %c0_i32, %c0_i32_0, %c0_i32_1 : i32, i32, i32
  }
  func.func @transform_1(%arg0: i32, %arg1: i32) -> (i32, i32, i32) {
    %c0_i32 = arith.constant 0 : i32
    %c0_i32_0 = arith.constant 0 : i32
    %c0_i32_1 = arith.constant 0 : i32
    return %arg0, %c0_i32, %c0_i32_0 : i32, i32, i32
  }
  func.func @transform_2(%arg0: i32, %arg1: i32) -> (i32, i32, i32) {
    %c0_i32 = arith.constant 0 : i32
    %c0_i32_0 = arith.constant 0 : i32
    %c0_i32_1 = arith.constant 0 : i32
    return %arg1, %c0_i32, %c0_i32_0 : i32, i32, i32
  }
  func.func @transform_3(%arg0: i32, %arg1: i32) -> (i32, i32, i32) {
    %c0_i32 = arith.constant 0 : i32
    %c0_i32_0 = arith.constant 0 : i32
    %c0_i32_1 = arith.constant 0 : i32
    return %arg1, %c0_i32, %c0_i32_0 : i32, i32, i32
  }
  func.func @transform_4(%arg0: i32, %arg1: i32) -> (i32, i32, i32) {
    %c0_i32 = arith.constant 0 : i32
    %c0_i32_0 = arith.constant 0 : i32
    %c0_i32_1 = arith.constant 0 : i32
    return %arg1, %c0_i32, %c0_i32_0 : i32, i32, i32
  }
  func.func @transform_5(%arg0: i32, %arg1: i32) -> (i32, i32, i32) {
    %c0_i32 = arith.constant 0 : i32
    %c0_i32_0 = arith.constant 0 : i32
    %c0_i32_1 = arith.constant 0 : i32
    return %arg1, %c0_i32, %c0_i32_0 : i32, i32, i32
  }
  func.func @transform_6(%arg0: i32, %arg1: i32) -> (i32, i32, i32) {
    %c0_i32 = arith.constant 0 : i32
    %c0_i32_0 = arith.constant 0 : i32
    %c0_i32_1 = arith.constant 0 : i32
    return %arg1, %c0_i32, %c0_i32_0 : i32, i32, i32
  }
  func.func @transform_7(%arg0: i32, %arg1: i32) -> (i32, i32, i32) {
    %c0_i32 = arith.constant 0 : i32
    %c0_i32_0 = arith.constant 0 : i32
    %c0_i32_1 = arith.constant 0 : i32
    return %arg1, %c0_i32, %c0_i32_0 : i32, i32, i32
  }
  func.func @transform_8(%arg0: i32, %arg1: i32) -> (i32, i32, i32) {
    %c0_i32 = arith.constant 0 : i32
    %c0_i32_0 = arith.constant 0 : i32
    %c0_i32_1 = arith.constant 0 : i32
    return %arg1, %c0_i32, %c0_i32_0 : i32, i32, i32
  }
  func.func @transform_9(%arg0: i32, %arg1: i32) -> (i32, i32, i32) {
    %c0_i32 = arith.constant 0 : i32
    %c0_i32_0 = arith.constant 0 : i32
    %c0_i32_1 = arith.constant 0 : i32
    return %arg1, %c0_i32, %c0_i32_0 : i32, i32, i32
  }
  func.func @transform_10(%arg0: i32, %arg1: i32) -> (i32, i32, i32) {
    %c0_i32 = arith.constant 0 : i32
    %c0_i32_0 = arith.constant 0 : i32
    %c0_i32_1 = arith.constant 0 : i32
    return %arg1, %c0_i32, %c0_i32_0 : i32, i32, i32
  }
  func.func @transform_11(%arg0: i32, %arg1: i32) -> (i32, i32, i32) {
    %c0_i32 = arith.constant 0 : i32
    %c0_i32_0 = arith.constant 0 : i32
    %c0_i32_1 = arith.constant 0 : i32
    return %arg1, %c0_i32, %c0_i32_0 : i32, i32, i32
  }
  func.func @transform_12(%arg0: i32, %arg1: i32) -> (i32, i32, i32) {
    %c0_i32 = arith.constant 0 : i32
    %c0_i32_0 = arith.constant 0 : i32
    %c0_i32_1 = arith.constant 0 : i32
    return %arg1, %c0_i32, %c0_i32_0 : i32, i32, i32
  }
  func.func @transform_13(%arg0: i32, %arg1: i32) -> (i32, i32, i32) {
    %c0_i32 = arith.constant 0 : i32
    %c0_i32_0 = arith.constant 0 : i32
    %c0_i32_1 = arith.constant 0 : i32
    return %arg1, %c0_i32, %c0_i32_0 : i32, i32, i32
  }
  func.func @transform_14(%arg0: i32, %arg1: i32) -> (i32, i32, i32) {
    %c0_i32 = arith.constant 0 : i32
    %c0_i32_0 = arith.constant 0 : i32
    %c0_i32_1 = arith.constant 0 : i32
    return %arg1, %c0_i32, %c0_i32_0 : i32, i32, i32
  }
  func.func @transform_15(%arg0: i32, %arg1: i32) -> (i32, i32, i32) {
    %c0_i32 = arith.constant 0 : i32
    %c0_i32_0 = arith.constant 0 : i32
    %c0_i32_1 = arith.constant 0 : i32
    return %arg1, %c0_i32, %c0_i32_0 : i32, i32, i32
  }
  func.func @transform_16(%arg0: i32, %arg1: i32) -> (i32, i32, i32) {
    %c0_i32 = arith.constant 0 : i32
    %c0_i32_0 = arith.constant 0 : i32
    %c0_i32_1 = arith.constant 0 : i32
    return %arg1, %c0_i32, %c0_i32_0 : i32, i32, i32
  }
  func.func @transform_17(%arg0: i32, %arg1: i32) -> (i32, i32) {
    %c0_i32 = arith.constant 0 : i32
    %c0_i32_0 = arith.constant 0 : i32
    %c0_i32_1 = arith.constant 0 : i32
    return %c0_i32, %c0_i32_0 : i32, i32
  }
  func.func @transform_18(%arg0: i32, %arg1: i32) -> (i32, i32) {
    %c0_i32 = arith.constant 0 : i32
    %c0_i32_0 = arith.constant 0 : i32
    %c0_i32_1 = arith.constant 0 : i32
    return %c0_i32, %c0_i32_0 : i32, i32
  }
  func.func @transform_19(%arg0: i32, %arg1: i32) -> (i32, i32) {
    %c0_i32 = arith.constant 0 : i32
    %c0_i32_0 = arith.constant 0 : i32
    %c0_i32_1 = arith.constant 0 : i32
    return %c0_i32, %c0_i32_0 : i32, i32
  }
  func.func @transform_20(%arg0: i32, %arg1: i32) -> (i32, i32, i32) {
    %c0_i32 = arith.constant 0 : i32
    %c0_i32_0 = arith.constant 0 : i32
    %c0_i32_1 = arith.constant 0 : i32
    return %arg0, %c0_i32, %c0_i32_0 : i32, i32, i32
  }
  func.func @transform_21(%arg0: i32, %arg1: i32) -> (i32, i32, i32) {
    %c0_i32 = arith.constant 0 : i32
    %c0_i32_0 = arith.constant 0 : i32
    %c0_i32_1 = arith.constant 0 : i32
    return %arg0, %c0_i32, %c0_i32_0 : i32, i32, i32
  }
}

</mosaic_0001>

<llo_original>
// kernel: tpu_custom_call.1
$region0: #{tpu_custom_call.1}
  #allocation0 [shape = 'u32[]', space=smem, size = 0x4, offset = 0x4, fixed_abs, tag = 'smem constant byte address 0x4 - core index']
  #allocation1 [shape = 'u32[144,128]{1,0:T(1,128)}', space=vmem, size = 0x12000, scoped, tag = 'internal scratch']
  #allocation2 [shape = 'f32[32,64]{1,0:T(8,128)}', space=vmem, size = 0x4000, scoped, tag = 'scratch operand']
  %s0 = inlined_call_operand.vmem [shape: f32[1,16,64], index: 0, kind: input, shape index: {}]
  %s1 = inlined_call_operand.vmem [shape: f32[4,32,64], index: 1, kind: input, shape index: {}]
  %s2 = inlined_call_operand.vmem [shape: f32[2,64,192], index: 2, kind: input, shape index: {}]
  %s3 = inlined_call_operand.vmem [shape: f32[2,1,192], index: 3, kind: input, shape index: {}]
  %s4 = inlined_call_operand.vmem [shape: f32[2,64,64], index: 4, kind: input, shape index: {}]
  %s5 = inlined_call_operand.vmem [shape: f32[2,1,64], index: 5, kind: input, shape index: {}]
  %s6 = inlined_call_operand.hbm [shape: f32[2,64,64], index: 6, kind: input, shape index: {}]
  %s7 = inlined_call_operand.vmem [shape: f32[2,1,64], index: 7, kind: input, shape index: {}]
  %s8 = inlined_call_operand.hbm [shape: f32[2,64,128], index: 8, kind: input, shape index: {}]
  %s9 = inlined_call_operand.vmem [shape: f32[2,1,128], index: 9, kind: input, shape index: {}]
  %s10 = inlined_call_operand.hbm [shape: f32[2,64,64], index: 10, kind: input, shape index: {}]
  %s11 = inlined_call_operand.vmem [shape: f32[2,1,64], index: 11, kind: input, shape index: {}]
  %s12 = inlined_call_operand.vmem [shape: f32[2,6,64], index: 12, kind: input, shape index: {}]
  %s13 = inlined_call_operand.vmem [shape: f32[2,64,256], index: 13, kind: input, shape index: {}]
  %s14 = inlined_call_operand.vmem [shape: f32[2,1,256], index: 14, kind: input, shape index: {}]
  %s15 = inlined_call_operand.vmem [shape: f32[2,256,64], index: 15, kind: input, shape index: {}]
  %s16 = inlined_call_operand.vmem [shape: f32[2,1,64], index: 16, kind: input, shape index: {}]
  %s17 = inlined_call_operand.vmem [shape: f32[2,64], index: 17, kind: input, shape index: {}]
  %s18 = inlined_call_operand.hbm [shape: f32[64,128], index: 18, kind: input, shape index: {}]
  %s19 = inlined_call_operand.vmem [shape: f32[1,128], index: 19, kind: input, shape index: {}]
  %s20 = inlined_call_operand.hbm [shape: f32[4,16,128], index: 20, kind: output, shape index: {0}]
  %s21 = inlined_call_operand.hbm [shape: f32[4,16,128], index: 21, kind: output, shape index: {1}]
  %22 = xla_tuple %s20, %s21
  %s23 = sld [smem:[#allocation0]]
  $region145: #{tpu_custom_call.1} parent=0
    _
  %s25 = ssub.s32 1, %s23
  %s26 = scalar_select 0, %s25, %s23
  $region1: #{tpu_custom_call.1} parent=0
    #allocation3 [shape = 'u8[65536]{0}', space=vmem, size = 0x10000, scoped, tag = 'input window, operand 6']
    #allocation4 [shape = 's32[2]{0}', space=sflag, size = 0x8, scoped, tag = 'scoped memory for tpu_custom_call.1']
    #allocation5 [shape = 's32[2]{0}', space=sflag, size = 0x8, scoped, tag = 'scoped memory for tpu_custom_call.1']
    #allocation6 [shape = 'u8[65536]{0}', space=vmem, size = 0x10000, scoped, tag = 'input window, operand 8']
    #allocation7 [shape = 's32[2]{0}', space=sflag, size = 0x8, scoped, tag = 'scoped memory for tpu_custom_call.1']
    #allocation8 [shape = 'u8[65536]{0}', space=vmem, size = 0x10000, scoped, tag = 'input window, operand 10']
    #allocation9 [shape = 'u8[32768]{0}', space=vmem, size = 0x8000, scoped, tag = 'input window, operand 18, single buffered']
    #allocation10 [shape = 's32[1]{0}', space=sflag, size = 0x4, scoped, tag = 'scoped memory for tpu_custom_call.1']
    #allocation11 [shape = 'u8[32768]{0}', space=vmem, size = 0x8000, scoped, tag = 'output window, operand 0']
    #allocation12 [shape = 'u8[32768]{0}', space=vmem, size = 0x8000, scoped, tag = 'output window, operand 1']
    #allocation13 [shape = 's32[2]{0}', space=sflag, size = 0x8, scoped, tag = 'scoped memory for tpu_custom_call.1']
    %27 = vsyncpa [#allocation4], 0
    %s28 = scalar_lea.sflag [#allocation4], 1
    %29 = vsyncpa %s28, 0
    %30 = vsyncpa [#allocation7], 0
    %s31 = scalar_lea.sflag [#allocation7], 1
    %32 = vsyncpa %s31, 0
    %33 = vsyncpa [#allocation10], 0
    %34 = vsyncpa [#allocation5], 0
    %s35 = scalar_lea.sflag [#allocation5], 1
    %36 = vsyncpa %s35, 0
    %37 = vsyncpa [#allocation13], 0
    %s38 = scalar_lea.sflag [#allocation13], 1
    %39 = vsyncpa %s38, 0
    loop: start=0, step=1, limit=6
    $region2: #{tpu_custom_call.1} parent=1 // loop_pre_header
      _
    $region3: #{tpu_custom_call.1} parent=1 // loop_header
      %s41 = sphi 0, %s45
      %p42 = scmp.ge.s32.totalorder %s41, 6
      %s48 = sphi 0, %s60
      %s49 = sphi 0, %s56
      %s50 = sphi 0, %s48
      %s51 = sphi 0, %s49
      %s52 = sphi 0, %s50
      %s53 = sphi 0, %s51
      %s61 = sphi 0, %s61
      %s63 = sphi 0, %s61
      %s64 = sphi 0, %s63
      %s78 = sphi 0, %s64
      %s84 = sphi 0, %s86
      %s87 = sphi 0, %s84
      %s88 = sphi 0, %s87
      %s104 = sphi 0, %s88
      %s110 = sphi 0, %s112
      %s113 = sphi 0, %s110
      %s114 = sphi 0, %s113
      %s130 = sphi 0, %s114
      %s136 = sphi 0, %s138
      %s139 = sphi 0, %s136
      %s140 = sphi 0, %s139
      %s156 = sphi 0, %s140
      %s162 = sphi 0, %s164
      %s165 = sphi 0, %s162
      %s166 = sphi 0, %s165
      %s182 = sphi 0, %s166
      %s188 = sphi 0, %s190
      %s191 = sphi 0, %s188
      %s192 = sphi 0, %s191
      %s208 = sphi 0, %s192
      %s214 = sphi 0, %s216
      %s217 = sphi 0, %s214
      %s218 = sphi 0, %s217
      %s234 = sphi 0, %s218
      %s240 = sphi 0, %s242
      %s243 = sphi 0, %s240
      %s244 = sphi 0, %s243
      %s260 = sphi 0, %s244
      %s266 = sphi 0, %s268
      %s269 = sphi 0, %s266
      %s270 = sphi 0, %s269
      %s286 = sphi 0, %s270
      %s292 = sphi 0, %s294
      %s295 = sphi 0, %s292
      %s296 = sphi 0, %s295
      %s312 = sphi 0, %s296
      %s318 = sphi 0, %s320
      %s321 = sphi 0, %s318
      %s322 = sphi 0, %s321
      %s338 = sphi 0, %s322
      %s344 = sphi 0, %s346
      %s347 = sphi 0, %s344
      %s348 = sphi 0, %s347
      %s364 = sphi 0, %s348
      %s370 = sphi 0, %s372
      %s373 = sphi 0, %s370
      %s374 = sphi 0, %s373
      %s390 = sphi 0, %s374
      %s396 = sphi 0, %s398
      %s399 = sphi 0, %s396
      %s400 = sphi 0, %s399
      %s416 = sphi 0, %s400
      %s422 = sphi 0, %s424
      %s425 = sphi 0, %s422
      %s426 = sphi 0, %s425
      %s442 = sphi 0, %s426
      %s448 = sphi 0, %s450
      %s451 = sphi 0, %s448
      %s452 = sphi 0, %s451
      %s468 = sphi 0, %s452
      %s474 = sphi 0, %s476
      %s477 = sphi 0, %s474
      %s478 = sphi 0, %s477
      %s494 = sphi 0, %s478
      %s498 = sphi 0, %s498
      %s500 = sphi 0, %s498
      %s501 = sphi 0, %s500
      %s515 = sphi 0, %s501
      %s519 = sphi 0, %s519
      %s521 = sphi 0, %s519
      %s522 = sphi 0, %s521
      %s536 = sphi 0, %s522
      %s540 = sphi 0, %s540
      %s542 = sphi 0, %s540
      %s543 = sphi 0, %s542
      %s557 = sphi 0, %s543
      %s563 = sphi 0, %s565
      %s566 = sphi 0, %s563
      %s567 = sphi 0, %s566
      %s583 = sphi 0, %s567
      %s589 = sphi 0, %s591
      %s592 = sphi 0, %s589
      %s593 = sphi 0, %s592
      %s609 = sphi 0, %s593
    $region4: #{tpu_custom_call.1} parent=1 // loop_header_branch
      %44 = sbr.rel (%p42) target = $region8
    $region5: #{tpu_custom_call.1} parent=1 // loop_body
      %s46 = ssub.s32 %s41, 1
      %s47 = ssub.s32 %s41, 2
      %s54 = sadd.s32 1, %s49
      %p55 = scmp.ge.s32.totalorder %s54, 2
      %s56 = scalar_select %p55, 0, %s54
      %s57 = sadd.s32 1, %s48
      %s58 = scalar_select %p55, %s57, %s48
      %p59 = scmp.ge.s32.totalorder %s58, 2
      %s60 = scalar_select %p59, 0, %s58
      %s62 = sadd.s32 %s61, 1
      %p65 = scmp.eq.s32.totalorder %s41, 3
      %p66 = scmp.ne.s32.totalorder %s61, %s63
      %p67 = scmp.eq.s32.totalorder %s41, 0
      %p68 = por %p66, %p67
      %p69 = scmp.ne.s32.totalorder %s61, %s63
      %p70 = scmp.eq.s32.totalorder %s46, 3
      %p71 = por %p69, %p70
      %p72 = scmp.ne.s32.totalorder %s63, %s64
      %p73 = scmp.eq.s32.totalorder %s46, 0
      %p74 = por %p72, %p73
      %p75 = scmp.ne.s32.totalorder %s63, %s64
      %p76 = scmp.eq.s32.totalorder %s47, 3
      %p77 = por %p75, %p76
      %p79 = scmp.ne.s32.totalorder %s64, %s78
      %p80 = scmp.eq.s32.totalorder %s47, 0
      %p81 = por %p79, %p80
      %s82 = ssub.s32 %s48, %s60
      %p83 = scmp.eq.s32.totalorder %s82, 0
      %s85 = sadd.s32 %s84, 1
      %s86 = scalar_select %p83, %s84, %s85
      %p89 = pneg %p83
      %p90 = scmp.eq.s32.totalorder %s41, 3
      %p91 = por %p89, %p90
      %p92 = scmp.ne.s32.totalorder %s84, %s87
      %p93 = scmp.eq.s32.totalorder %s41, 0
      %p94 = por %p92, %p93
      %p95 = scmp.ne.s32.totalorder %s84, %s87
      %p96 = scmp.eq.s32.totalorder %s46, 3
      %p97 = por %p95, %p96
      %p98 = scmp.ne.s32.totalorder %s87, %s88
      %p99 = scmp.eq.s32.totalorder %s46, 0
      %p100 = por %p98, %p99
      %p101 = scmp.ne.s32.totalorder %s87, %s88
      %p102 = scmp.eq.s32.totalorder %s47, 3
      %p103 = por %p101, %p102
      %p105 = scmp.ne.s32.totalorder %s88, %s104
      %p106 = scmp.eq.s32.totalorder %s47, 0
      %p107 = por %p105, %p106
      %s108 = ssub.s32 %s49, %s56
      %p109 = scmp.eq.s32.totalorder %s108, 0
      %s111 = sadd.s32 %s110, 1
      %s112 = scalar_select %p109, %s110, %s111
      %p115 = pneg %p109
      %p116 = scmp.eq.s32.totalorder %s41, 3
      %p117 = por %p115, %p116
      %p118 = scmp.ne.s32.totalorder %s110, %s113
      %p119 = scmp.eq.s32.totalorder %s41, 0
      %p120 = por %p118, %p119
      %p121 = scmp.ne.s32.totalorder %s110, %s113
      %p122 = scmp.eq.s32.totalorder %s46, 3
      %p123 = por %p121, %p122
      %p124 = scmp.ne.s32.totalorder %s113, %s114
      %p125 = scmp.eq.s32.totalorder %s46, 0
      %p126 = por %p124, %p125
      %p127 = scmp.ne.s32.totalorder %s113, %s114
      %p128 = scmp.eq.s32.totalorder %s47, 3
      %p129 = por %p127, %p128
      %p131 = scmp.ne.s32.totalorder %s114, %s130
      %p132 = scmp.eq.s32.totalorder %s47, 0
      %p133 = por %p131, %p132
      %s134 = ssub.s32 %s49, %s56
      %p135 = scmp.eq.s32.totalorder %s134, 0
      %s137 = sadd.s32 %s136, 1
      %s138 = scalar_select %p135, %s136, %s137
      %p141 = pneg %p135
      %p142 = scmp.eq.s32.totalorder %s41, 3
      %p143 = por %p141, %p142
      %p144 = scmp.ne.s32.totalorder %s136, %s139
      %p145 = scmp.eq.s32.totalorder %s41, 0
      %p146 = por %p144, %p145
      %p147 = scmp.ne.s32.totalorder %s136, %s139
      %p148 = scmp.eq.s32.totalorder %s46, 3
      %p149 = por %p147, %p148
      %p150 = scmp.ne.s32.totalorder %s139, %s140
      %p151 = scmp.eq.s32.totalorder %s46, 0
      %p152 = por %p150, %p151
      %p153 = scmp.ne.s32.totalorder %s139, %s140
      %p154 = scmp.eq.s32.totalorder %s47, 3
      %p155 = por %p153, %p154
      %p157 = scmp.ne.s32.totalorder %s140, %s156
      %p158 = scmp.eq.s32.totalorder %s47, 0
      %p159 = por %p157, %p158
      %s160 = ssub.s32 %s49, %s56
      %p161 = scmp.eq.s32.totalorder %s160, 0
      %s163 = sadd.s32 %s162, 1
      %s164 = scalar_select %p161, %s162, %s163
      %p167 = pneg %p161
      %p168 = scmp.eq.s32.totalorder %s41, 3
      %p169 = por %p167, %p168
      %p170 = scmp.ne.s32.totalorder %s162, %s165
      %p171 = scmp.eq.s32.totalorder %s41, 0
      %p172 = por %p170, %p171
      %p173 = scmp.ne.s32.totalorder %s162, %s165
      %p174 = scmp.eq.s32.totalorder %s46, 3
      %p175 = por %p173, %p174
      %p176 = scmp.ne.s32.totalorder %s165, %s166
      %p177 = scmp.eq.s32.totalorder %s46, 0
      %p178 = por %p176, %p177
      %p179 = scmp.ne.s32.totalorder %s165, %s166
      %p180 = scmp.eq.s32.totalorder %s47, 3
      %p181 = por %p179, %p180
      %p183 = scmp.ne.s32.totalorder %s166, %s182
      %p184 = scmp.eq.s32.totalorder %s47, 0
      %p185 = por %p183, %p184
      %s186 = ssub.s32 %s49, %s56
      %p187 = scmp.eq.s32.totalorder %s186, 0
      %s189 = sadd.s32 %s188, 1
      %s190 = scalar_select %p187, %s188, %s189
      %p193 = pneg %p187
      %p194 = scmp.eq.s32.totalorder %s41, 3
      %p195 = por %p193, %p194
      %p196 = scmp.ne.s32.totalorder %s188, %s191
      %p197 = scmp.eq.s32.totalorder %s41, 0
      %p198 = por %p196, %p197
      %p199 = scmp.ne.s32.totalorder %s188, %s191
      %p200 = scmp.eq.s32.totalorder %s46, 3
      %p201 = por %p199, %p200
      %p202 = scmp.ne.s32.totalorder %s191, %s192
      %p203 = scmp.eq.s32.totalorder %s46, 0
      %p204 = por %p202, %p203
      %p205 = scmp.ne.s32.totalorder %s191, %s192
      %p206 = scmp.eq.s32.totalorder %s47, 3
      %p207 = por %p205, %p206
      %p209 = scmp.ne.s32.totalorder %s192, %s208
      %p210 = scmp.eq.s32.totalorder %s47, 0
      %p211 = por %p209, %p210
      %s212 = ssub.s32 %s49, %s56
      %p213 = scmp.eq.s32.totalorder %s212, 0
      %s215 = sadd.s32 %s214, 1
      %s216 = scalar_select %p213, %s214, %s215
      %p219 = pneg %p213
      %p220 = scmp.eq.s32.totalorder %s41, 3
      %p221 = por %p219, %p220
      %p222 = scmp.ne.s32.totalorder %s214, %s217
      %p223 = scmp.eq.s32.totalorder %s41, 0
      %p224 = por %p222, %p223
      %p225 = scmp.ne.s32.totalorder %s214, %s217
      %p226 = scmp.eq.s32.totalorder %s46, 3
      %p227 = por %p225, %p226
      %p228 = scmp.ne.s32.totalorder %s217, %s218
      %p229 = scmp.eq.s32.totalorder %s46, 0
      %p230 = por %p228, %p229
      %p231 = scmp.ne.s32.totalorder %s217, %s218
      %p232 = scmp.eq.s32.totalorder %s47, 3
      %p233 = por %p231, %p232
      %p235 = scmp.ne.s32.totalorder %s218, %s234
      %p236 = scmp.eq.s32.totalorder %s47, 0
      %p237 = por %p235, %p236
      %s238 = ssub.s32 %s49, %s56
      %p239 = scmp.eq.s32.totalorder %s238, 0
      %s241 = sadd.s32 %s240, 1
      %s242 = scalar_select %p239, %s240, %s241
      %p245 = pneg %p239
      %p246 = scmp.eq.s32.totalorder %s41, 3
      %p247 = por %p245, %p246
      %p248 = scmp.ne.s32.totalorder %s240, %s243
      %p249 = scmp.eq.s32.totalorder %s41, 0
      %p250 = por %p248, %p249
      %p251 = scmp.ne.s32.totalorder %s240, %s243
      %p252 = scmp.eq.s32.totalorder %s46, 3
      %p253 = por %p251, %p252
      %p254 = scmp.ne.s32.totalorder %s243, %s244
      %p255 = scmp.eq.s32.totalorder %s46, 0
      %p256 = por %p254, %p255
      %p257 = scmp.ne.s32.totalorder %s243, %s244
      %p258 = scmp.eq.s32.totalorder %s47, 3
      %p259 = por %p257, %p258
      %p261 = scmp.ne.s32.totalorder %s244, %s260
      %p262 = scmp.eq.s32.totalorder %s47, 0
      %p263 = por %p261, %p262
      %s264 = ssub.s32 %s49, %s56
      %p265 = scmp.eq.s32.totalorder %s264, 0
      %s267 = sadd.s32 %s266, 1
      %s268 = scalar_select %p265, %s266, %s267
      %p271 = pneg %p265
      %p272 = scmp.eq.s32.totalorder %s41, 3
      %p273 = por %p271, %p272
      %p274 = scmp.ne.s32.totalorder %s266, %s269
      %p275 = scmp.eq.s32.totalorder %s41, 0
      %p276 = por %p274, %p275
      %p277 = scmp.ne.s32.totalorder %s266, %s269
      %p278 = scmp.eq.s32.totalorder %s46, 3
      %p279 = por %p277, %p278
      %p280 = scmp.ne.s32.totalorder %s269, %s270
      %p281 = scmp.eq.s32.totalorder %s46, 0
      %p282 = por %p280, %p281
      %p283 = scmp.ne.s32.totalorder %s269, %s270
      %p284 = scmp.eq.s32.totalorder %s47, 3
      %p285 = por %p283, %p284
      %p287 = scmp.ne.s32.totalorder %s270, %s286
      %p288 = scmp.eq.s32.totalorder %s47, 0
      %p289 = por %p287, %p288
      %s290 = ssub.s32 %s49, %s56
      %p291 = scmp.eq.s32.totalorder %s290, 0
      %s293 = sadd.s32 %s292, 1
      %s294 = scalar_select %p291, %s292, %s293
      %p297 = pneg %p291
      %p298 = scmp.eq.s32.totalorder %s41, 3
      %p299 = por %p297, %p298
      %p300 = scmp.ne.s32.totalorder %s292, %s295
      %p301 = scmp.eq.s32.totalorder %s41, 0
      %p302 = por %p300, %p301
      %p303 = scmp.ne.s32.totalorder %s292, %s295
      %p304 = scmp.eq.s32.totalorder %s46, 3
      %p305 = por %p303, %p304
      %p306 = scmp.ne.s32.totalorder %s295, %s296
      %p307 = scmp.eq.s32.totalorder %s46, 0
      %p308 = por %p306, %p307
      %p309 = scmp.ne.s32.totalorder %s295, %s296
      %p310 = scmp.eq.s32.totalorder %s47, 3
      %p311 = por %p309, %p310
      %p313 = scmp.ne.s32.totalorder %s296, %s312
      %p314 = scmp.eq.s32.totalorder %s47, 0
      %p315 = por %p313, %p314
      %s316 = ssub.s32 %s49, %s56
      %p317 = scmp.eq.s32.totalorder %s316, 0
      %s319 = sadd.s32 %s318, 1
      %s320 = scalar_select %p317, %s318, %s319
      %p323 = pneg %p317
      %p324 = scmp.eq.s32.totalorder %s41, 3
      %p325 = por %p323, %p324
      %p326 = scmp.ne.s32.totalorder %s318, %s321
      %p327 = scmp.eq.s32.totalorder %s41, 0
      %p328 = por %p326, %p327
      %p329 = scmp.ne.s32.totalorder %s318, %s321
      %p330 = scmp.eq.s32.totalorder %s46, 3
      %p331 = por %p329, %p330
      %p332 = scmp.ne.s32.totalorder %s321, %s322
      %p333 = scmp.eq.s32.totalorder %s46, 0
      %p334 = por %p332, %p333
      %p335 = scmp.ne.s32.totalorder %s321, %s322
      %p336 = scmp.eq.s32.totalorder %s47, 3
      %p337 = por %p335, %p336
      %p339 = scmp.ne.s32.totalorder %s322, %s338
      %p340 = scmp.eq.s32.totalorder %s47, 0
      %p341 = por %p339, %p340
      %s342 = ssub.s32 %s49, %s56
      %p343 = scmp.eq.s32.totalorder %s342, 0
      %s345 = sadd.s32 %s344, 1
      %s346 = scalar_select %p343, %s344, %s345
      %p349 = pneg %p343
      %p350 = scmp.eq.s32.totalorder %s41, 3
      %p351 = por %p349, %p350
      %p352 = scmp.ne.s32.totalorder %s344, %s347
      %p353 = scmp.eq.s32.totalorder %s41, 0
      %p354 = por %p352, %p353
      %p355 = scmp.ne.s32.totalorder %s344, %s347
      %p356 = scmp.eq.s32.totalorder %s46, 3
      %p357 = por %p355, %p356
      %p358 = scmp.ne.s32.totalorder %s347, %s348
      %p359 = scmp.eq.s32.totalorder %s46, 0
      %p360 = por %p358, %p359
      %p361 = scmp.ne.s32.totalorder %s347, %s348
      %p362 = scmp.eq.s32.totalorder %s47, 3
      %p363 = por %p361, %p362
      %p365 = scmp.ne.s32.totalorder %s348, %s364
      %p366 = scmp.eq.s32.totalorder %s47, 0
      %p367 = por %p365, %p366
      %s368 = ssub.s32 %s49, %s56
      %p369 = scmp.eq.s32.totalorder %s368, 0
      %s371 = sadd.s32 %s370, 1
      %s372 = scalar_select %p369, %s370, %s371
      %p375 = pneg %p369
      %p376 = scmp.eq.s32.totalorder %s41, 3
      %p377 = por %p375, %p376
      %p378 = scmp.ne.s32.totalorder %s370, %s373
      %p379 = scmp.eq.s32.totalorder %s41, 0
      %p380 = por %p378, %p379
      %p381 = scmp.ne.s32.totalorder %s370, %s373
      %p382 = scmp.eq.s32.totalorder %s46, 3
      %p383 = por %p381, %p382
      %p384 = scmp.ne.s32.totalorder %s373, %s374
      %p385 = scmp.eq.s32.totalorder %s46, 0
      %p386 = por %p384, %p385
      %p387 = scmp.ne.s32.totalorder %s373, %s374
      %p388 = scmp.eq.s32.totalorder %s47, 3
      %p389 = por %p387, %p388
      %p391 = scmp.ne.s32.totalorder %s374, %s390
      %p392 = scmp.eq.s32.totalorder %s47, 0
      %p393 = por %p391, %p392
      %s394 = ssub.s32 %s49, %s56
      %p395 = scmp.eq.s32.totalorder %s394, 0
      %s397 = sadd.s32 %s396, 1
      %s398 = scalar_select %p395, %s396, %s397
      %p401 = pneg %p395
      %p402 = scmp.eq.s32.totalorder %s41, 3
      %p403 = por %p401, %p402
      %p404 = scmp.ne.s32.totalorder %s396, %s399
      %p405 = scmp.eq.s32.totalorder %s41, 0
      %p406 = por %p404, %p405
      %p407 = scmp.ne.s32.totalorder %s396, %s399
      %p408 = scmp.eq.s32.totalorder %s46, 3
      %p409 = por %p407, %p408
      %p410 = scmp.ne.s32.totalorder %s399, %s400
      %p411 = scmp.eq.s32.totalorder %s46, 0
      %p412 = por %p410, %p411
      %p413 = scmp.ne.s32.totalorder %s399, %s400
      %p414 = scmp.eq.s32.totalorder %s47, 3
      %p415 = por %p413, %p414
      %p417 = scmp.ne.s32.totalorder %s400, %s416
      %p418 = scmp.eq.s32.totalorder %s47, 0
      %p419 = por %p417, %p418
      %s420 = ssub.s32 %s49, %s56
      %p421 = scmp.eq.s32.totalorder %s420, 0
      %s423 = sadd.s32 %s422, 1
      %s424 = scalar_select %p421, %s422, %s423
      %p427 = pneg %p421
      %p428 = scmp.eq.s32.totalorder %s41, 3
      %p429 = por %p427, %p428
      %p430 = scmp.ne.s32.totalorder %s422, %s425
      %p431 = scmp.eq.s32.totalorder %s41, 0
      %p432 = por %p430, %p431
      %p433 = scmp.ne.s32.totalorder %s422, %s425
      %p434 = scmp.eq.s32.totalorder %s46, 3
      %p435 = por %p433, %p434
      %p436 = scmp.ne.s32.totalorder %s425, %s426
      %p437 = scmp.eq.s32.totalorder %s46, 0
      %p438 = por %p436, %p437
      %p439 = scmp.ne.s32.totalorder %s425, %s426
      %p440 = scmp.eq.s32.totalorder %s47, 3
      %p441 = por %p439, %p440
      %p443 = scmp.ne.s32.totalorder %s426, %s442
      %p444 = scmp.eq.s32.totalorder %s47, 0
      %p445 = por %p443, %p444
      %s446 = ssub.s32 %s49, %s56
      %p447 = scmp.eq.s32.totalorder %s446, 0
      %s449 = sadd.s32 %s448, 1
      %s450 = scalar_select %p447, %s448, %s449
      %p453 = pneg %p447
      %p454 = scmp.eq.s32.totalorder %s41, 3
      %p455 = por %p453, %p454
      %p456 = scmp.ne.s32.totalorder %s448, %s451
      %p457 = scmp.eq.s32.totalorder %s41, 0
      %p458 = por %p456, %p457
      %p459 = scmp.ne.s32.totalorder %s448, %s451
      %p460 = scmp.eq.s32.totalorder %s46, 3
      %p461 = por %p459, %p460
      %p462 = scmp.ne.s32.totalorder %s451, %s452
      %p463 = scmp.eq.s32.totalorder %s46, 0
      %p464 = por %p462, %p463
      %p465 = scmp.ne.s32.totalorder %s451, %s452
      %p466 = scmp.eq.s32.totalorder %s47, 3
      %p467 = por %p465, %p466
      %p469 = scmp.ne.s32.totalorder %s452, %s468
      %p470 = scmp.eq.s32.totalorder %s47, 0
      %p471 = por %p469, %p470
      %s472 = ssub.s32 %s49, %s56
      %p473 = scmp.eq.s32.totalorder %s472, 0
      %s475 = sadd.s32 %s474, 1
      %s476 = scalar_select %p473, %s474, %s475
      %p479 = pneg %p473
      %p480 = scmp.eq.s32.totalorder %s41, 3
      %p481 = por %p479, %p480
      %p482 = scmp.ne.s32.totalorder %s474, %s477
      %p483 = scmp.eq.s32.totalorder %s41, 0
      %p484 = por %p482, %p483
      %p485 = scmp.ne.s32.totalorder %s474, %s477
      %p486 = scmp.eq.s32.totalorder %s46, 3
      %p487 = por %p485, %p486
      %p488 = scmp.ne.s32.totalorder %s477, %s478
      %p489 = scmp.eq.s32.totalorder %s46, 0
      %p490 = por %p488, %p489
      %p491 = scmp.ne.s32.totalorder %s477, %s478
      %p492 = scmp.eq.s32.totalorder %s47, 3
      %p493 = por %p491, %p492
      %p495 = scmp.ne.s32.totalorder %s478, %s494
      %p496 = scmp.eq.s32.totalorder %s47, 0
      %p497 = por %p495, %p496
      %s499 = sadd.s32 %s498, 1
      %p502 = scmp.eq.s32.totalorder %s41, 3
      %p503 = scmp.ne.s32.totalorder %s498, %s500
      %p504 = scmp.eq.s32.totalorder %s41, 0
      %p505 = por %p503, %p504
      %p506 = scmp.ne.s32.totalorder %s498, %s500
      %p507 = scmp.eq.s32.totalorder %s46, 3
      %p508 = por %p506, %p507
      %p509 = scmp.ne.s32.totalorder %s500, %s501
      %p510 = scmp.eq.s32.totalorder %s46, 0
      %p511 = por %p509, %p510
      %p512 = scmp.ne.s32.totalorder %s500, %s501
      %p513 = scmp.eq.s32.totalorder %s47, 3
      %p514 = por %p512, %p513
      %p516 = scmp.ne.s32.totalorder %s501, %s515
      %p517 = scmp.eq.s32.totalorder %s47, 0
      %p518 = por %p516, %p517
      %s520 = sadd.s32 %s519, 1
      %p523 = scmp.eq.s32.totalorder %s41, 3
      %p524 = scmp.ne.s32.totalorder %s519, %s521
      %p525 = scmp.eq.s32.totalorder %s41, 0
      %p526 = por %p524, %p525
      %p527 = scmp.ne.s32.totalorder %s519, %s521
      %p528 = scmp.eq.s32.totalorder %s46, 3
      %p529 = por %p527, %p528
      %p530 = scmp.ne.s32.totalorder %s521, %s522
      %p531 = scmp.eq.s32.totalorder %s46, 0
      %p532 = por %p530, %p531
      %p533 = scmp.ne.s32.totalorder %s521, %s522
      %p534 = scmp.eq.s32.totalorder %s47, 3
      %p535 = por %p533, %p534
      %p537 = scmp.ne.s32.totalorder %s522, %s536
      %p538 = scmp.eq.s32.totalorder %s47, 0
      %p539 = por %p537, %p538
      %s541 = sadd.s32 %s540, 1
      %p544 = scmp.eq.s32.totalorder %s41, 3
      %p545 = scmp.ne.s32.totalorder %s540, %s542
      %p546 = scmp.eq.s32.totalorder %s41, 0
      %p547 = por %p545, %p546
      %p548 = scmp.ne.s32.totalorder %s540, %s542
      %p549 = scmp.eq.s32.totalorder %s46, 3
      %p550 = por %p548, %p549
      %p551 = scmp.ne.s32.totalorder %s542, %s543
      %p552 = scmp.eq.s32.totalorder %s46, 0
      %p553 = por %p551, %p552
      %p554 = scmp.ne.s32.totalorder %s542, %s543
      %p555 = scmp.eq.s32.totalorder %s47, 3
      %p556 = por %p554, %p555
      %p558 = scmp.ne.s32.totalorder %s543, %s557
      %p559 = scmp.eq.s32.totalorder %s47, 0
      %p560 = por %p558, %p559
      %s561 = ssub.s32 %s48, %s60
      %p562 = scmp.eq.s32.totalorder %s561, 0
      %s564 = sadd.s32 %s563, 1
      %s565 = scalar_select %p562, %s563, %s564
      %p568 = pneg %p562
      %p569 = scmp.eq.s32.totalorder %s41, 3
      %p570 = por %p568, %p569
      %p571 = scmp.ne.s32.totalorder %s563, %s566
      %p572 = scmp.eq.s32.totalorder %s41, 0
      %p573 = por %p571, %p572
      %p574 = scmp.ne.s32.totalorder %s563, %s566
      %p575 = scmp.eq.s32.totalorder %s46, 3
      %p576 = por %p574, %p575
      %p577 = scmp.ne.s32.totalorder %s566, %s567
      %p578 = scmp.eq.s32.totalorder %s46, 0
      %p579 = por %p577, %p578
      %p580 = scmp.ne.s32.totalorder %s566, %s567
      %p581 = scmp.eq.s32.totalorder %s47, 3
      %p582 = por %p580, %p581
      %p584 = scmp.ne.s32.totalorder %s567, %s583
      %p585 = scmp.eq.s32.totalorder %s47, 0
      %p586 = por %p584, %p585
      %s587 = ssub.s32 %s48, %s60
      %p588 = scmp.eq.s32.totalorder %s587, 0
      %s590 = sadd.s32 %s589, 1
      %s591 = scalar_select %p588, %s589, %s590
      %p594 = pneg %p588
      %p595 = scmp.eq.s32.totalorder %s41, 3
      %p596 = por %p594, %p595
      %p597 = scmp.ne.s32.totalorder %s589, %s592
      %p598 = scmp.eq.s32.totalorder %s41, 0
      %p599 = por %p597, %p598
      %p600 = scmp.ne.s32.totalorder %s589, %s592
      %p601 = scmp.eq.s32.totalorder %s46, 3
      %p602 = por %p600, %p601
      %p603 = scmp.ne.s32.totalorder %s592, %s593
      %p604 = scmp.eq.s32.totalorder %s46, 0
      %p605 = por %p603, %p604
      %p606 = scmp.ne.s32.totalorder %s592, %s593
      %p607 = scmp.eq.s32.totalorder %s47, 3
      %p608 = por %p606, %p607
      %p610 = scmp.ne.s32.totalorder %s593, %s609
      %p611 = scmp.eq.s32.totalorder %s47, 0
      %p612 = por %p610, %p611
      %p613 = scmp.le.s32.totalorder 1, %s41
      %p614 = scmp.lt.s32.totalorder %s41, 5
      %p615 = pnand %p613, %p614
      %p616 = pneg %p615
      // Predicated region
      $region9: #{tpu_custom_call.1} parent=5 // pred_check
        _
      $region10: #{tpu_custom_call.1} parent=5 // pred_check_branch
        %618 = sbr.rel (%p615) target = $region12
      $region11: #{tpu_custom_call.1} parent=5 // pred_region
        %s619 = ssub.s32 %s41, 1
        // Predicated region
        $region13: #{tpu_custom_call.1} parent=11 // pred_check
          %p620 = pneg %p74
        $region14: #{tpu_custom_call.1} parent=11 // pred_check_branch
          %622 = sbr.rel (%p620) target = $region16
        $region15: #{tpu_custom_call.1} parent=11 // pred_region
          _
        $region16: #{tpu_custom_call.1} parent=11 // pred_fallthru
          _
        // Predicated region
        $region17: #{tpu_custom_call.1} parent=11 // pred_check
          %p623 = pneg %p511
        $region18: #{tpu_custom_call.1} parent=11 // pred_check_branch
          %625 = sbr.rel (%p623) target = $region20
        $region19: #{tpu_custom_call.1} parent=11 // pred_region
          _
        $region20: #{tpu_custom_call.1} parent=11 // pred_fallthru
          _
        // Predicated region
        $region21: #{tpu_custom_call.1} parent=11 // pred_check
          %p626 = pneg %p532
        $region22: #{tpu_custom_call.1} parent=11 // pred_check_branch
          %628 = sbr.rel (%p626) target = $region24
        $region23: #{tpu_custom_call.1} parent=11 // pred_region
          %s630 = ssub.s32 1024, 1024
          %631 = vsyncadd [#allocation10], %s630
          %s632 = sshll.u32 [#allocation9], 4
          %s633 = int_to_ptr.vmem [resolvable:$true] %s632
          %638 = dma.hbm_to_vmem [thread:$0]  %s18, 1024, %s633, [#allocation10], 128, 128, 8
        $region24: #{tpu_custom_call.1} parent=11 // pred_fallthru
          _
        // Predicated region
        $region25: #{tpu_custom_call.1} parent=11 // pred_check
          %p639 = pneg %p553
        $region26: #{tpu_custom_call.1} parent=11 // pred_check_branch
          %641 = sbr.rel (%p639) target = $region28
        $region27: #{tpu_custom_call.1} parent=11 // pred_region
          _
        $region28: #{tpu_custom_call.1} parent=11 // pred_fallthru
          _
      $region12: #{tpu_custom_call.1} parent=5 // pred_fallthru
        _
      %p642 = scmp.lt.s32.totalorder %s41, 4
      // Predicated region
      $region29: #{tpu_custom_call.1} parent=5 // pred_check
        %p643 = pneg %p642
      $region30: #{tpu_custom_call.1} parent=5 // pred_check_branch
        %645 = sbr.rel (%p643) target = $region32
      $region31: #{tpu_custom_call.1} parent=5 // pred_region
        // Predicated region
        $region33: #{tpu_custom_call.1} parent=31 // pred_check
          %p646 = pneg %p94
        $region34: #{tpu_custom_call.1} parent=31 // pred_check_branch
          %648 = sbr.rel (%p646) target = $region36
        $region35: #{tpu_custom_call.1} parent=31 // pred_region
          %s649 = smul.u32 2, %s48
          %p650 = scmp.lt.s32.totalorder %s649, 3
          %s651 = scalar_select %p650, %s649, 3
          %s652 = smul.addr %s651, 4
          %s653 = smul.addr %s652, 8
          %s654 = scalar_lea.vmem %s1, %s653
          %s655 = smul.u32 2, %s48
        $region36: #{tpu_custom_call.1} parent=31 // pred_fallthru
          _
        // Predicated region
        $region37: #{tpu_custom_call.1} parent=31 // pred_check
          %p656 = pneg %p120
        $region38: #{tpu_custom_call.1} parent=31 // pred_check_branch
          %658 = sbr.rel (%p656) target = $region40
        $region39: #{tpu_custom_call.1} parent=31 // pred_region
          %p659 = scmp.lt.s32.totalorder %s49, 1
          %s660 = scalar_select %p659, %s49, 1
          %s661 = smul.addr %s660, 16
          %s662 = smul.addr %s661, 8
          %s663 = scalar_lea.vmem %s2, %s662
        $region40: #{tpu_custom_call.1} parent=31 // pred_fallthru
          _
        // Predicated region
        $region41: #{tpu_custom_call.1} parent=31 // pred_check
          %p664 = pneg %p146
        $region42: #{tpu_custom_call.1} parent=31 // pred_check_branch
          %666 = sbr.rel (%p664) target = $region44
        $region43: #{tpu_custom_call.1} parent=31 // pred_region
          %p667 = scmp.lt.s32.totalorder %s49, 1
          %s668 = scalar_select %p667, %s49, 1
          %s669 = smul.addr %s668, 2
          %s670 = scalar_lea.vmem %s3, %s669
        $region44: #{tpu_custom_call.1} parent=31 // pred_fallthru
          _
        // Predicated region
        $region45: #{tpu_custom_call.1} parent=31 // pred_check
          %p671 = pneg %p172
        $region46: #{tpu_custom_call.1} parent=31 // pred_check_branch
          %673 = sbr.rel (%p671) target = $region48
        $region47: #{tpu_custom_call.1} parent=31 // pred_region
          %p674 = scmp.lt.s32.totalorder %s49, 1
          %s675 = scalar_select %p674, %s49, 1
          %s676 = smul.addr %s675, 8
          %s677 = smul.addr %s676, 8
          %s678 = scalar_lea.vmem %s4, %s677
        $region48: #{tpu_custom_call.1} parent=31 // pred_fallthru
          _
        // Predicated region
        $region49: #{tpu_custom_call.1} parent=31 // pred_check
          %p679 = pneg %p198
        $region50: #{tpu_custom_call.1} parent=31 // pred_check_branch
          %681 = sbr.rel (%p679) target = $region52
        $region51: #{tpu_custom_call.1} parent=31 // pred_region
          %p682 = scmp.lt.s32.totalorder %s49, 1
          %s683 = scalar_select %p682, %s49, 1
          %s684 = scalar_lea.vmem %s5, %s683
        $region52: #{tpu_custom_call.1} parent=31 // pred_fallthru
          _
        // Predicated region
        $region53: #{tpu_custom_call.1} parent=31 // pred_check
          %p685 = pneg %p224
        $region54: #{tpu_custom_call.1} parent=31 // pred_check_branch
          %687 = sbr.rel (%p685) target = $region56
        $region55: #{tpu_custom_call.1} parent=31 // pred_region
          %s688 = sand.u32 %s214, 1
          %s689 = scalar_lea.sflag [#allocation4], %s688
          %s690 = sand.u32 %s214, 1
          %s691 = smul.addr %s690, 64
          %s692 = scalar_lea.vmem [#allocation3], %s691
          %s694 = ssub.s32 1024, 1024
          %695 = vsyncadd %s689, %s694
          %s696 = smul.addr %s49, 8
          %s697 = smul.addr %s696, 128
          %s698 = scalar_lea.hbm %s6, %s697
          %s699 = sshll.u32 %s692, 4
          %s700 = int_to_ptr.vmem [resolvable:$true] %s699
          %705 = dma.hbm_to_vmem [thread:$0]  %s698, 1024, %s700, %s689, 128, 128, 8
        $region56: #{tpu_custom_call.1} parent=31 // pred_fallthru
          _
        // Predicated region
        $region57: #{tpu_custom_call.1} parent=31 // pred_check
          %p706 = pneg %p250
        $region58: #{tpu_custom_call.1} parent=31 // pred_check_branch
          %708 = sbr.rel (%p706) target = $region60
        $region59: #{tpu_custom_call.1} parent=31 // pred_region
          %p709 = scmp.lt.s32.totalorder %s49, 1
          %s710 = scalar_select %p709, %s49, 1
          %s711 = scalar_lea.vmem %s7, %s710
        $region60: #{tpu_custom_call.1} parent=31 // pred_fallthru
          _
        // Predicated region
        $region61: #{tpu_custom_call.1} parent=31 // pred_check
          %p712 = pneg %p276
        $region62: #{tpu_custom_call.1} parent=31 // pred_check_branch
          %714 = sbr.rel (%p712) target = $region64
        $region63: #{tpu_custom_call.1} parent=31 // pred_region
          %s715 = sand.u32 %s41, 1
          %s716 = scalar_lea.sflag [#allocation7], %s715
          %s717 = sand.u32 %s266, 1
          %s718 = smul.addr %s717, 64
          %s719 = scalar_lea.vmem [#allocation6], %s718
          %s721 = ssub.s32 1024, 1024
          %722 = vsyncadd %s716, %s721
          %s723 = smul.addr %s49, 8
          %s724 = smul.addr %s723, 128
          %s725 = scalar_lea.hbm %s8, %s724
          %s726 = sshll.u32 %s719, 4
          %s727 = int_to_ptr.vmem [resolvable:$true] %s726
          %732 = dma.hbm_to_vmem [thread:$0]  %s725, 1024, %s727, %s716, 128, 128, 8
        $region64: #{tpu_custom_call.1} parent=31 // pred_fallthru
          _
        // Predicated region
        $region65: #{tpu_custom_call.1} parent=31 // pred_check
          %p733 = pneg %p302
        $region66: #{tpu_custom_call.1} parent=31 // pred_check_branch
          %735 = sbr.rel (%p733) target = $region68
        $region67: #{tpu_custom_call.1} parent=31 // pred_region
          %p736 = scmp.lt.s32.totalorder %s49, 1
          %s737 = scalar_select %p736, %s49, 1
          %s738 = scalar_lea.vmem %s9, %s737
        $region68: #{tpu_custom_call.1} parent=31 // pred_fallthru
          _
        // Predicated region
        $region69: #{tpu_custom_call.1} parent=31 // pred_check
          %p739 = pneg %p328
        $region70: #{tpu_custom_call.1} parent=31 // pred_check_branch
          %741 = sbr.rel (%p739) target = $region72
        $region71: #{tpu_custom_call.1} parent=31 // pred_region
          %s742 = sand.u32 %s41, 1
          %s743 = scalar_lea.sflag [#allocation7], %s742
          %s744 = sand.u32 %s318, 1
          %s745 = smul.addr %s744, 64
          %s746 = scalar_lea.vmem [#allocation8], %s745
          %s748 = ssub.s32 1024, 1024
          %749 = vsyncadd %s743, %s748
          %s750 = smul.addr %s49, 8
          %s751 = smul.addr %s750, 128
          %s752 = scalar_lea.hbm %s10, %s751
          %s753 = sshll.u32 %s746, 4
          %s754 = int_to_ptr.vmem [resolvable:$true] %s753
          %759 = dma.hbm_to_vmem [thread:$0]  %s752, 1024, %s754, %s743, 128, 128, 8
        $region72: #{tpu_custom_call.1} parent=31 // pred_fallthru
          _
        // Predicated region
        $region73: #{tpu_custom_call.1} parent=31 // pred_check
          %p760 = pneg %p354
        $region74: #{tpu_custom_call.1} parent=31 // pred_check_branch
          %762 = sbr.rel (%p760) target = $region76
        $region75: #{tpu_custom_call.1} parent=31 // pred_region
          %p763 = scmp.lt.s32.totalorder %s49, 1
          %s764 = scalar_select %p763, %s49, 1
          %s765 = scalar_lea.vmem %s11, %s764
        $region76: #{tpu_custom_call.1} parent=31 // pred_fallthru
          _
        // Predicated region
        $region77: #{tpu_custom_call.1} parent=31 // pred_check
          %p766 = pneg %p380
        $region78: #{tpu_custom_call.1} parent=31 // pred_check_branch
          %768 = sbr.rel (%p766) target = $region80
        $region79: #{tpu_custom_call.1} parent=31 // pred_region
          %p769 = scmp.lt.s32.totalorder %s49, 1
          %s770 = scalar_select %p769, %s49, 1
          %s771 = smul.addr %s770, 8
          %s772 = scalar_lea.vmem %s12, %s771
        $region80: #{tpu_custom_call.1} parent=31 // pred_fallthru
          _
        // Predicated region
        $region81: #{tpu_custom_call.1} parent=31 // pred_check
          %p773 = pneg %p406
        $region82: #{tpu_custom_call.1} parent=31 // pred_check_branch
          %775 = sbr.rel (%p773) target = $region84
        $region83: #{tpu_custom_call.1} parent=31 // pred_region
          %p776 = scmp.lt.s32.totalorder %s49, 1
          %s777 = scalar_select %p776, %s49, 1
          %s778 = smul.addr %s777, 16
          %s779 = smul.addr %s778, 8
          %s780 = scalar_lea.vmem %s13, %s779
        $region84: #{tpu_custom_call.1} parent=31 // pred_fallthru
          _
        // Predicated region
        $region85: #{tpu_custom_call.1} parent=31 // pred_check
          %p781 = pneg %p432
        $region86: #{tpu_custom_call.1} parent=31 // pred_check_branch
          %783 = sbr.rel (%p781) target = $region88
        $region87: #{tpu_custom_call.1} parent=31 // pred_region
          %p784 = scmp.lt.s32.totalorder %s49, 1
          %s785 = scalar_select %p784, %s49, 1
          %s786 = smul.addr %s785, 2
          %s787 = scalar_lea.vmem %s14, %s786
        $region88: #{tpu_custom_call.1} parent=31 // pred_fallthru
          _
        // Predicated region
        $region89: #{tpu_custom_call.1} parent=31 // pred_check
          %p788 = pneg %p458
        $region90: #{tpu_custom_call.1} parent=31 // pred_check_branch
          %790 = sbr.rel (%p788) target = $region92
        $region91: #{tpu_custom_call.1} parent=31 // pred_region
          %p791 = scmp.lt.s32.totalorder %s49, 1
          %s792 = scalar_select %p791, %s49, 1
          %s793 = smul.addr %s792, 32
          %s794 = smul.addr %s793, 8
          %s795 = scalar_lea.vmem %s15, %s794
        $region92: #{tpu_custom_call.1} parent=31 // pred_fallthru
          _
        // Predicated region
        $region93: #{tpu_custom_call.1} parent=31 // pred_check
          %p796 = pneg %p484
        $region94: #{tpu_custom_call.1} parent=31 // pred_check_branch
          %798 = sbr.rel (%p796) target = $region96
        $region95: #{tpu_custom_call.1} parent=31 // pred_region
          %p799 = scmp.lt.s32.totalorder %s49, 1
          %s800 = scalar_select %p799, %s49, 1
          %s801 = scalar_lea.vmem %s16, %s800
        $region96: #{tpu_custom_call.1} parent=31 // pred_fallthru
          _
      $region32: #{tpu_custom_call.1} parent=5 // pred_fallthru
        _
      %p802 = scmp.le.s32.totalorder 1, %s41
      %p803 = scmp.lt.s32.totalorder %s41, 5
      %p804 = pnand %p802, %p803
      %p805 = pneg %p804
      // Predicated region
      $region97: #{tpu_custom_call.1} parent=5 // pred_check
        _
      $region98: #{tpu_custom_call.1} parent=5 // pred_check_branch
        %807 = sbr.rel (%p804) target = $region100
      $region99: #{tpu_custom_call.1} parent=5 // pred_region
        %s808 = ssub.s32 %s41, 1
        %s809 = sand.u32 %s217, 1
        %s810 = scalar_lea.sflag [#allocation4], %s809
        %s811 = sand.u32 %s217, 1
        %s812 = smul.addr %s811, 64
        %s813 = scalar_lea.vmem [#allocation3], %s812
        // Predicated region
        $region101: #{tpu_custom_call.1} parent=99 // pred_check
          %p814 = pneg %p230
        $region102: #{tpu_custom_call.1} parent=99 // pred_check_branch
          %816 = sbr.rel (%p814) target = $region104
        $region103: #{tpu_custom_call.1} parent=99 // pred_region
          %817 = dma.done %s810, 1024
        $region104: #{tpu_custom_call.1} parent=99 // pred_fallthru
          _
        %s818 = sand.u32 %s46, 1
        %s819 = scalar_lea.sflag [#allocation7], %s818
        %s820 = sand.u32 %s269, 1
        %s821 = smul.addr %s820, 64
        %s822 = scalar_lea.vmem [#allocation6], %s821
        // Predicated region
        $region105: #{tpu_custom_call.1} parent=99 // pred_check
          %p823 = pneg %p282
        $region106: #{tpu_custom_call.1} parent=99 // pred_check_branch
          %825 = sbr.rel (%p823) target = $region108
        $region107: #{tpu_custom_call.1} parent=99 // pred_region
          %826 = dma.done %s819, 1024
        $region108: #{tpu_custom_call.1} parent=99 // pred_fallthru
          _
        %s827 = sand.u32 %s46, 1
        %s828 = scalar_lea.sflag [#allocation7], %s827
        %s829 = sand.u32 %s321, 1
        %s830 = smul.addr %s829, 64
        %s831 = scalar_lea.vmem [#allocation8], %s830
        // Predicated region
        $region109: #{tpu_custom_call.1} parent=99 // pred_check
          %p832 = pneg %p334
        $region110: #{tpu_custom_call.1} parent=99 // pred_check_branch
          %834 = sbr.rel (%p832) target = $region112
        $region111: #{tpu_custom_call.1} parent=99 // pred_region
          %835 = dma.done %s828, 1024
        $region112: #{tpu_custom_call.1} parent=99 // pred_fallthru
          _
        // Predicated region
        $region113: #{tpu_custom_call.1} parent=99 // pred_check
          %p836 = pneg %p532
        $region114: #{tpu_custom_call.1} parent=99 // pred_check_branch
          %838 = sbr.rel (%p836) target = $region116
        $region115: #{tpu_custom_call.1} parent=99 // pred_region
          %839 = dma.done [#allocation10], 1024
        $region116: #{tpu_custom_call.1} parent=99 // pred_fallthru
          _
        %p840 = pneg %p74
        %p841 = pneg %p71
        %s842 = smul.u32 2, %s50
        %p843 = scmp.lt.s32.totalorder %s842, 3
        %s844 = scalar_select %p843, %s842, 3
        %s845 = smul.addr %s844, 4
        %s846 = smul.addr %s845, 8
        %s847 = scalar_lea.vmem %s1, %s846
        %p848 = pneg %p100
        %p849 = pneg %p97
        %p850 = scmp.lt.s32.totalorder %s51, 1
        %s851 = scalar_select %p850, %s51, 1
        %s852 = smul.addr %s851, 16
        %s853 = smul.addr %s852, 8
        %s854 = scalar_lea.vmem %s2, %s853
        %p855 = pneg %p126
        %p856 = pneg %p123
        %p857 = scmp.lt.s32.totalorder %s51, 1
        %s858 = scalar_select %p857, %s51, 1
        %s859 = smul.addr %s858, 2
        %s860 = scalar_lea.vmem %s3, %s859
        %p861 = pneg %p152
        %p862 = pneg %p149
        %p863 = scmp.lt.s32.totalorder %s51, 1
        %s864 = scalar_select %p863, %s51, 1
        %s865 = smul.addr %s864, 8
        %s866 = smul.addr %s865, 8
        %s867 = scalar_lea.vmem %s4, %s866
        %p868 = pneg %p178
        %p869 = pneg %p175
        %p870 = scmp.lt.s32.totalorder %s51, 1
        %s871 = scalar_select %p870, %s51, 1
        %s872 = scalar_lea.vmem %s5, %s871
        %p873 = pneg %p204
        %p874 = pneg %p201
        %s875 = sand.u32 %s217, 1
        %s876 = scalar_lea.sflag [#allocation4], %s875
        %s877 = sand.u32 %s217, 1
        %s878 = smul.addr %s877, 64
        %s879 = scalar_lea.vmem [#allocation3], %s878
        %p880 = pneg %p230
        %p881 = pneg %p227
        %p882 = scmp.lt.s32.totalorder %s51, 1
        %s883 = scalar_select %p882, %s51, 1
        %s884 = scalar_lea.vmem %s7, %s883
        %p885 = pneg %p256
        %p886 = pneg %p253
        %s887 = sand.u32 %s46, 1
        %s888 = scalar_lea.sflag [#allocation7], %s887
        %s889 = sand.u32 %s269, 1
        %s890 = smul.addr %s889, 64
        %s891 = scalar_lea.vmem [#allocation6], %s890
        %p892 = pneg %p282
        %p893 = pneg %p279
        %p894 = scmp.lt.s32.totalorder %s51, 1
        %s895 = scalar_select %p894, %s51, 1
        %s896 = scalar_lea.vmem %s9, %s895
        %p897 = pneg %p308
        %p898 = pneg %p305
        %s899 = sand.u32 %s46, 1
        %s900 = scalar_lea.sflag [#allocation7], %s899
        %s901 = sand.u32 %s321, 1
        %s902 = smul.addr %s901, 64
        %s903 = scalar_lea.vmem [#allocation8], %s902
        %p904 = pneg %p334
        %p905 = pneg %p331
        %p906 = scmp.lt.s32.totalorder %s51, 1
        %s907 = scalar_select %p906, %s51, 1
        %s908 = scalar_lea.vmem %s11, %s907
        %p909 = pneg %p360
        %p910 = pneg %p357
        %p911 = scmp.lt.s32.totalorder %s51, 1
        %s912 = scalar_select %p911, %s51, 1
        %s913 = smul.addr %s912, 8
        %s914 = scalar_lea.vmem %s12, %s913
        %p915 = pneg %p386
        %p916 = pneg %p383
        %p917 = scmp.lt.s32.totalorder %s51, 1
        %s918 = scalar_select %p917, %s51, 1
        %s919 = smul.addr %s918, 16
        %s920 = smul.addr %s919, 8
        %s921 = scalar_lea.vmem %s13, %s920
        %p922 = pneg %p412
        %p923 = pneg %p409
        %p924 = scmp.lt.s32.totalorder %s51, 1
        %s925 = scalar_select %p924, %s51, 1
        %s926 = smul.addr %s925, 2
        %s927 = scalar_lea.vmem %s14, %s926
        %p928 = pneg %p438
        %p929 = pneg %p435
        %p930 = scmp.lt.s32.totalorder %s51, 1
        %s931 = scalar_select %p930, %s51, 1
        %s932 = smul.addr %s931, 32
        %s933 = smul.addr %s932, 8
        %s934 = scalar_lea.vmem %s15, %s933
        %p935 = pneg %p464
        %p936 = pneg %p461
        %p937 = scmp.lt.s32.totalorder %s51, 1
        %s938 = scalar_select %p937, %s51, 1
        %s939 = scalar_lea.vmem %s16, %s938
        %p940 = pneg %p490
        %p941 = pneg %p487
        %p942 = pneg %p511
        %p943 = pneg %p508
        %p944 = pneg %p532
        %p945 = pneg %p529
        %p946 = pneg %p553
        %p947 = pneg %p550
        %p948 = pneg %p579
        %p949 = pneg %p576
        %s950 = sand.u32 %s566, 1
        %s951 = scalar_lea.sflag [#allocation5], %s950
        %s952 = sand.u32 %s566, 1
        %s953 = smul.addr %s952, 32
        %s954 = scalar_lea.vmem [#allocation11], %s953
        %p955 = pneg %p605
        %p956 = pneg %p602
        %s957 = sand.u32 %s592, 1
        %s958 = scalar_lea.sflag [#allocation13], %s957
        %s959 = sand.u32 %s592, 1
        %s960 = smul.addr %s959, 32
        %s961 = scalar_lea.vmem [#allocation12], %s960
        %s962 = smul.u32 2, %s50
        %p963 = scmp.lt.s32.totalorder %s962, 3
        %s964 = scalar_select %p963, %s962, 3
        %s965 = smul.addr %s964, 4
        %s966 = smul.addr %s965, 8
        %s967 = scalar_lea.vmem %s1, %s966
        %s968 = smul.u32 2, %s50
        %p969 = scmp.lt.s32.totalorder %s51, 1
        %s970 = scalar_select %p969, %s51, 1
        %s971 = smul.addr %s970, 16
        %s972 = smul.addr %s971, 8
        %s973 = scalar_lea.vmem %s2, %s972
        %p974 = scmp.lt.s32.totalorder %s51, 1
        %s975 = scalar_select %p974, %s51, 1
        %s976 = smul.addr %s975, 2
        %s977 = scalar_lea.vmem %s3, %s976
        %p978 = scmp.lt.s32.totalorder %s51, 1
        %s979 = scalar_select %p978, %s51, 1
        %s980 = smul.addr %s979, 8
        %s981 = smul.addr %s980, 8
        %s982 = scalar_lea.vmem %s4, %s981
        %p983 = scmp.lt.s32.totalorder %s51, 1
        %s984 = scalar_select %p983, %s51, 1
        %s985 = scalar_lea.vmem %s5, %s984
        %p986 = scmp.lt.s32.totalorder %s51, 1
        %s987 = scalar_select %p986, %s51, 1
        %s988 = scalar_lea.vmem %s7, %s987
        %p989 = scmp.lt.s32.totalorder %s51, 1
        %s990 = scalar_select %p989, %s51, 1
        %s991 = scalar_lea.vmem %s9, %s990
        %p992 = scmp.lt.s32.totalorder %s51, 1
        %s993 = scalar_select %p992, %s51, 1
        %s994 = scalar_lea.vmem %s11, %s993
        %p995 = scmp.lt.s32.totalorder %s51, 1
        %s996 = scalar_select %p995, %s51, 1
        %s997 = smul.addr %s996, 8
        %s998 = scalar_lea.vmem %s12, %s997
        %p999 = scmp.lt.s32.totalorder %s51, 1
        %s1000 = scalar_select %p999, %s51, 1
        %s1001 = smul.addr %s1000, 16
        %s1002 = smul.addr %s1001, 8
        %s1003 = scalar_lea.vmem %s13, %s1002
        %p1004 = scmp.lt.s32.totalorder %s51, 1
        %s1005 = scalar_select %p1004, %s51, 1
        %s1006 = smul.addr %s1005, 2
        %s1007 = scalar_lea.vmem %s14, %s1006
        %p1008 = scmp.lt.s32.totalorder %s51, 1
        %s1009 = scalar_select %p1008, %s51, 1
        %s1010 = smul.addr %s1009, 32
        %s1011 = smul.addr %s1010, 8
        %s1012 = scalar_lea.vmem %s15, %s1011
        %p1013 = scmp.lt.s32.totalorder %s51, 1
        %s1014 = scalar_select %p1013, %s51, 1
        %s1015 = scalar_lea.vmem %s16, %s1014
        %s1016 = smul.u32 2, %s50
        %s1017 = smul.u32 2, %s50
        %p1018 = scmp.eq.s32.totalorder %s51, 0
        // Predicated region
        $region117: #{tpu_custom_call.1} parent=99 // pred_check
          %p1019 = pneg %p1018
        $region118: #{tpu_custom_call.1} parent=99 // pred_check_branch
          %1021 = sbr.rel (%p1019) target = $region120
        $region119: #{tpu_custom_call.1} parent=99 // pred_region
          %v1022 = vld [vmem:[%s0] sm:$0xff]
          %v1023 = vld [vmem:[%s0 + $0x8] sm:$0xff]
          %vm1024 = vcmask 523264
          %1025 = vst.msk [vmem:[#allocation2] sm:$0xff] %vm1024, %v1022
          %1026 = vst.msk [vmem:[#allocation2 + $0x8] sm:$0xff] %vm1024, %v1023
          %1027 = vst.msk [vmem:[#allocation2 + $0x10] sm:$0xff] %vm1024, %v1022
          %1028 = vst.msk [vmem:[#allocation2 + $0x18] sm:$0xff] %vm1024, %v1023
        $region120: #{tpu_custom_call.1} parent=99 // pred_fallthru
          _
        %v1029 = vld [vmem:[#allocation2] sm:$0xff]
        %v1030 = vld [vmem:[#allocation2 + $0x8] sm:$0xff]
        %v1031 = vld [vmem:[#allocation2 + $0x10] sm:$0xff]
        %v1032 = vld [vmem:[#allocation2 + $0x18] sm:$0xff]
        %v1033 = vld [vmem:[%s967] sm:$0xff]
        %v1034 = vld [vmem:[%s967 + $0x8] sm:$0xff]
        %v1035 = vld [vmem:[%s967 + $0x10] sm:$0xff]
        %v1036 = vld [vmem:[%s967 + $0x18] sm:$0xff]
        %v1037 = vld [vmem:[%s967 + $0x20] sm:$0xff]
        %v1038 = vld [vmem:[%s967 + $0x28] sm:$0xff]
        %v1039 = vld [vmem:[%s967 + $0x30] sm:$0xff]
        %v1040 = vld [vmem:[%s967 + $0x38] sm:$0xff]
        %v1041 = vld [vmem:[%s998] sm:$0x3f]
        %v1042 = vld [vmem:[%s973] sm:$0xff]
        %v1043 = vld [vmem:[%s973 + $0x8] sm:$0xff]
        %v1044 = vld [vmem:[%s973 + $0x10] sm:$0xff]
        %v1045 = vld [vmem:[%s973 + $0x18] sm:$0xff]
        %v1046 = vld [vmem:[%s973 + $0x20] sm:$0xff]
        %v1047 = vld [vmem:[%s973 + $0x28] sm:$0xff]
        %v1048 = vld [vmem:[%s973 + $0x30] sm:$0xff]
        %v1049 = vld [vmem:[%s973 + $0x38] sm:$0xff]
        %v1050 = vld [vmem:[%s973 + $0x40] sm:$0xff]
        %v1051 = vld [vmem:[%s973 + $0x48] sm:$0xff]
        %v1052 = vld [vmem:[%s973 + $0x50] sm:$0xff]
        %v1053 = vld [vmem:[%s973 + $0x58] sm:$0xff]
        %v1054 = vld [vmem:[%s973 + $0x60] sm:$0xff]
        %v1055 = vld [vmem:[%s973 + $0x68] sm:$0xff]
        %v1056 = vld [vmem:[%s973 + $0x70] sm:$0xff]
        %v1057 = vld [vmem:[%s973 + $0x78] sm:$0xff]
        %v1058 = vld [vmem:[%s977] sm:$0x3]
        %v1060 = vlaneseq
        %v1061 = vshrl.u32 %v1060, 7
        %v1062 = vsub.s32 0, %v1061
        %v1063 = vrot.slane %v1058, %v1062
        %v1064 = vlaneseq
        %v1065 = vshrl.u32 %v1064, 7
        %v1066 = vsub.s32 1, %v1065
        %v1067 = vrot.slane %v1058, %v1066
        %vm1070 = vcmask 523264
        %v1072 = vsel %vm1070, %v1029, 0
        %v1075 = vsel %vm1070, %v1030, 0
        %v1078 = vsel %vm1070, %v1031, 0
        %v1081 = vsel %vm1070, %v1032, 0
        %1083 = vmatprep.subr.mxu0 0.0
        %1084 = vmatpush1.msra.mxu0 0.0
        %1085 = vmatprep.subr.mxu0 0.0
        %1086 = vmatpush1.msra.mxu0 0.0
        %1087 = vmatprep.subr.mxu0 0.0
        %1088 = vmatpush1.msra.mxu0 0.0
        %1089 = vmatprep.subr.mxu0 0.0
        %1090 = vmatpush1.msra.mxu0 0.0
        %1091 = vmatprep.subr.mxu0 0.0
        %1092 = vmatpush1.msra.mxu0 0.0
        %1093 = vmatprep.subr.mxu0 0.0
        %1094 = vmatpush1.msra.mxu0 0.0
        %1095 = vmatprep.subr.mxu0 0.0
        %1096 = vmatpush1.msra.mxu0 0.0
        %1097 = vmatprep.subr.mxu0 0.0
        %1098 = vmatpush1.msra.mxu0 0.0
        %1099 = vmatprep.subr.mxu0 %v1057
        %1100 = vmatpush1.msra.mxu0 %v1056
        %1101 = vmatprep.subr.mxu0 %v1055
        %1102 = vmatpush1.msra.mxu0 %v1054
        %1103 = vmatprep.subr.mxu0 %v1053
        %1104 = vmatpush1.msra.mxu0 %v1052
        %1105 = vmatprep.subr.mxu0 %v1051
        %1106 = vmatpush1.msra.mxu0 %v1050
        %1107 = vmatprep.subr.mxu0 %v1049
        %1108 = vmatpush1.msra.mxu0 %v1048
        %1109 = vmatprep.subr.mxu0 %v1047
        %1110 = vmatpush1.msra.mxu0 %v1046
        %1111 = vmatprep.subr.mxu0 %v1045
        %1112 = vmatpush1.msra.mxu0 %v1044
        %1113 = vmatprep.subr.mxu0 %v1043
        %1114 = vmatpush1.msra.mxu0 %v1042
        %1115 = vmatprep.subr.mxu0 0.0
        %1116 = vmatpush2.msra.mxu0 0.0
        %1117 = vmatprep.subr.mxu0 0.0
        %1118 = vmatpush2.msra.mxu0 0.0
        %1119 = vmatprep.subr.mxu0 0.0
        %1120 = vmatpush2.msra.mxu0 0.0
        %1121 = vmatprep.subr.mxu0 0.0
        %1122 = vmatpush2.msra.mxu0 0.0
        %1123 = vmatprep.subr.mxu0 0.0
        %1124 = vmatpush2.msra.mxu0 0.0
        %1125 = vmatprep.subr.mxu0 0.0
        %1126 = vmatpush2.msra.mxu0 0.0
        %1127 = vmatprep.subr.mxu0 0.0
        %1128 = vmatpush2.msra.mxu0 0.0
        %1129 = vmatprep.subr.mxu0 0.0
        %1130 = vmatpush2.msra.mxu0 0.0
        %1131 = vmatprep.subr.mxu0 0.0
        %1132 = vmatpush2.msra.mxu0 0.0
        %1133 = vmatprep.subr.mxu0 0.0
        %1134 = vmatpush2.msra.mxu0 0.0
        %1135 = vmatprep.subr.mxu0 0.0
        %1136 = vmatpush2.msra.mxu0 0.0
        %1137 = vmatprep.subr.mxu0 0.0
        %1138 = vmatpush2.msra.mxu0 0.0
        %1139 = vmatprep.subr.mxu0 0.0
        %1140 = vmatpush2.msra.mxu0 0.0
        %1141 = vmatprep.subr.mxu0 0.0
        %1142 = vmatpush2.msra.mxu0 0.0
        %1143 = vmatprep.subr.mxu0 0.0
        %1144 = vmatpush2.msra.mxu0 0.0
        %1145 = vmatprep.subr.mxu0 0.0
        %1146 = vmatpush2.msra.mxu0 0.0
        %1147 = vmatprep.mubr.f32.mxu0 0.0
        %1148 = vmatmul.mubr.f32.gmra.mxu0 %v1072
        %v1149 = vpop.f32.mrf.mxu0
        %v1150 = vadd.f32 %v1063, %v1149
        %v1151 = vpop.f32.mrf.mxu0
        %v1152 = vadd.f32 %v1067, %v1151
        %1153 = vmatprep.mubr.f32.mxu0 0.0
        %1154 = vmatmul.mubr.f32.gmra.mxu0 %v1075
        %v1155 = vpop.f32.mrf.mxu0
        %v1156 = vadd.f32 %v1063, %v1155
        %v1157 = vpop.f32.mrf.mxu0
        %v1158 = vadd.f32 %v1067, %v1157
        %1159 = vmatprep.mubr.f32.mxu0 0.0
        %1160 = vmatmul.mubr.f32.gmra.mxu0 %v1078
        %v1161 = vpop.f32.mrf.mxu0
        %v1162 = vadd.f32 %v1063, %v1161
        %v1163 = vpop.f32.mrf.mxu0
        %v1164 = vadd.f32 %v1067, %v1163
        %1165 = vmatprep.mubr.f32.mxu0 0.0
        %1166 = vmatmul.mubr.f32.gmra.mxu0 %v1081
        %v1167 = vpop.f32.mrf.mxu0
        %v1168 = vadd.f32 %v1063, %v1167
        %v1169 = vpop.f32.mrf.mxu0
        %v1170 = vadd.f32 %v1067, %v1169
        %1171 = vdwg.mxu0
        %v1172 = vlaneseq
        %v1173 = vand.u32 %v1172, 127
        %1176 = vrot.lane.b32.xlu0 %v1150, 64
        %v1177 = vpop.permute.xlu0 %1176
        %1178 = vrot.lane.b32.xlu0 %v1156, 64
        %v1179 = vpop.permute.xlu0 %1178
        %vm1180 = vcmask 130048
        %v1181 = vsel %vm1180, %v1150, 0
        %v1183 = vsel %vm1180, %v1156, 0
        %v1185 = vsel %vm1180, %v1177, 0
        %v1187 = vsel %vm1180, %v1179, 0
        %1189 = vmatprep.subr.mxu0 0.0
        %1190 = vmatpush1.xpose.msra.mxu0 0.0
        %1191 = vmatprep.subr.mxu0 0.0
        %1192 = vmatpush1.xpose.msra.mxu0 0.0
        %1193 = vmatprep.subr.mxu0 0.0
        %1194 = vmatpush1.xpose.msra.mxu0 0.0
        %1195 = vmatprep.subr.mxu0 0.0
        %1196 = vmatpush1.xpose.msra.mxu0 0.0
        %1197 = vmatprep.subr.mxu0 0.0
        %1198 = vmatpush1.xpose.msra.mxu0 0.0
        %1199 = vmatprep.subr.mxu0 0.0
        %1200 = vmatpush1.xpose.msra.mxu0 0.0
        %1201 = vmatprep.subr.mxu0 0.0
        %1202 = vmatpush1.xpose.msra.mxu0 0.0
        %1203 = vmatprep.subr.mxu0 0.0
        %1204 = vmatpush1.xpose.msra.mxu0 0.0
        %1205 = vmatprep.subr.mxu0 0.0
        %1206 = vmatpush1.xpose.msra.mxu0 0.0
        %1207 = vmatprep.subr.mxu0 0.0
        %1208 = vmatpush1.xpose.msra.mxu0 0.0
        %1209 = vmatprep.subr.mxu0 0.0
        %1210 = vmatpush1.xpose.msra.mxu0 0.0
        %1211 = vmatprep.subr.mxu0 0.0
        %1212 = vmatpush1.xpose.msra.mxu0 0.0
        %1213 = vmatprep.subr.mxu0 0.0
        %1214 = vmatpush1.xpose.msra.mxu0 0.0
        %1215 = vmatprep.subr.mxu0 0.0
        %1216 = vmatpush1.xpose.msra.mxu0 0.0
        %1217 = vmatprep.subr.mxu0 0.0
        %1218 = vmatpush1.xpose.msra.mxu0 %v1187
        %1219 = vmatprep.subr.mxu0 0.0
        %1220 = vmatpush1.xpose.msra.mxu0 %v1185
        %1221 = vmatprep.subr.mxu0 0.0
        %1222 = vmatpush2.xpose.msra.mxu0 0.0
        %1223 = vmatprep.subr.mxu0 0.0
        %1224 = vmatpush2.xpose.msra.mxu0 0.0
        %1225 = vmatprep.subr.mxu0 0.0
        %1226 = vmatpush2.xpose.msra.mxu0 0.0
        %1227 = vmatprep.subr.mxu0 0.0
        %1228 = vmatpush2.xpose.msra.mxu0 0.0
        %1229 = vmatprep.subr.mxu0 0.0
        %1230 = vmatpush2.xpose.msra.mxu0 0.0
        %1231 = vmatprep.subr.mxu0 0.0
        %1232 = vmatpush2.xpose.msra.mxu0 0.0
        %1233 = vmatprep.subr.mxu0 0.0
        %1234 = vmatpush2.xpose.msra.mxu0 0.0
        %1235 = vmatprep.subr.mxu0 0.0
        %1236 = vmatpush2.xpose.msra.mxu0 0.0
        %1237 = vmatprep.subr.mxu0 0.0
        %1238 = vmatpush2.xpose.msra.mxu0 0.0
        %1239 = vmatprep.subr.mxu0 0.0
        %1240 = vmatpush2.xpose.msra.mxu0 0.0
        %1241 = vmatprep.subr.mxu0 0.0
        %1242 = vmatpush2.xpose.msra.mxu0 0.0
        %1243 = vmatprep.subr.mxu0 0.0
        %1244 = vmatpush2.xpose.msra.mxu0 0.0
        %1245 = vmatprep.subr.mxu0 0.0
        %1246 = vmatpush2.xpose.msra.mxu0 0.0
        %1247 = vmatprep.subr.mxu0 0.0
        %1248 = vmatpush2.xpose.msra.mxu0 0.0
        %1249 = vmatprep.subr.mxu0 0.0
        %1250 = vmatpush2.xpose.msra.mxu0 0.0
        %1251 = vmatprep.subr.mxu0 0.0
        %1252 = vmatpush2.xpose.msra.mxu0 0.0
        %1253 = vmatprep.mubr.f32.mxu0 0.0
        %1254 = vmatmul.mubr.f32.gmra.mxu0 %v1181
        %v1255 = vpop.f32.mrf.mxu0
        %v1256 = vadd.f32 0.0, %v1255
        %v1257 = vpop.f32.mrf.mxu0
        %1258 = vmatprep.mubr.f32.mxu0 0.0
        %1259 = vmatmul.mubr.f32.gmra.mxu0 %v1183
        %v1260 = vpop.f32.mrf.mxu0
        %v1261 = vadd.f32 0.0, %v1260
        %v1262 = vpop.f32.mrf.mxu0
        %1263 = vdwg.mxu0
        %1266 = vrot.lane.b32.xlu0 %v1162, 64
        %v1267 = vpop.permute.xlu0 %1266
        %1268 = vrot.lane.b32.xlu0 %v1168, 64
        %v1269 = vpop.permute.xlu0 %1268
        %v1270 = vsel %vm1180, %v1162, 0
        %v1272 = vsel %vm1180, %v1168, 0
        %v1274 = vsel %vm1180, %v1267, 0
        %v1276 = vsel %vm1180, %v1269, 0
        %1278 = vmatprep.subr.mxu0 0.0
        %1279 = vmatpush1.xpose.msra.mxu0 0.0
        %1280 = vmatprep.subr.mxu0 0.0
        %1281 = vmatpush1.xpose.msra.mxu0 0.0
        %1282 = vmatprep.subr.mxu0 0.0
        %1283 = vmatpush1.xpose.msra.mxu0 0.0
        %1284 = vmatprep.subr.mxu0 0.0
        %1285 = vmatpush1.xpose.msra.mxu0 0.0
        %1286 = vmatprep.subr.mxu0 0.0
        %1287 = vmatpush1.xpose.msra.mxu0 0.0
        %1288 = vmatprep.subr.mxu0 0.0
        %1289 = vmatpush1.xpose.msra.mxu0 0.0
        %1290 = vmatprep.subr.mxu0 0.0
        %1291 = vmatpush1.xpose.msra.mxu0 0.0
        %1292 = vmatprep.subr.mxu0 0.0
        %1293 = vmatpush1.xpose.msra.mxu0 0.0
        %1294 = vmatprep.subr.mxu0 0.0
        %1295 = vmatpush1.xpose.msra.mxu0 0.0
        %1296 = vmatprep.subr.mxu0 0.0
        %1297 = vmatpush1.xpose.msra.mxu0 0.0
        %1298 = vmatprep.subr.mxu0 0.0
        %1299 = vmatpush1.xpose.msra.mxu0 0.0
        %1300 = vmatprep.subr.mxu0 0.0
        %1301 = vmatpush1.xpose.msra.mxu0 0.0
        %1302 = vmatprep.subr.mxu0 0.0
        %1303 = vmatpush1.xpose.msra.mxu0 0.0
        %1304 = vmatprep.subr.mxu0 0.0
        %1305 = vmatpush1.xpose.msra.mxu0 0.0
        %1306 = vmatprep.subr.mxu0 0.0
        %1307 = vmatpush1.xpose.msra.mxu0 %v1276
        %1308 = vmatprep.subr.mxu0 0.0
        %1309 = vmatpush1.xpose.msra.mxu0 %v1274
        %1310 = vmatprep.subr.mxu0 0.0
        %1311 = vmatpush2.xpose.msra.mxu0 0.0
        %1312 = vmatprep.subr.mxu0 0.0
        %1313 = vmatpush2.xpose.msra.mxu0 0.0
        %1314 = vmatprep.subr.mxu0 0.0
        %1315 = vmatpush2.xpose.msra.mxu0 0.0
        %1316 = vmatprep.subr.mxu0 0.0
        %1317 = vmatpush2.xpose.msra.mxu0 0.0
        %1318 = vmatprep.subr.mxu0 0.0
        %1319 = vmatpush2.xpose.msra.mxu0 0.0
        %1320 = vmatprep.subr.mxu0 0.0
        %1321 = vmatpush2.xpose.msra.mxu0 0.0
        %1322 = vmatprep.subr.mxu0 0.0
        %1323 = vmatpush2.xpose.msra.mxu0 0.0
        %1324 = vmatprep.subr.mxu0 0.0
        %1325 = vmatpush2.xpose.msra.mxu0 0.0
        %1326 = vmatprep.subr.mxu0 0.0
        %1327 = vmatpush2.xpose.msra.mxu0 0.0
        %1328 = vmatprep.subr.mxu0 0.0
        %1329 = vmatpush2.xpose.msra.mxu0 0.0
        %1330 = vmatprep.subr.mxu0 0.0
        %1331 = vmatpush2.xpose.msra.mxu0 0.0
        %1332 = vmatprep.subr.mxu0 0.0
        %1333 = vmatpush2.xpose.msra.mxu0 0.0
        %1334 = vmatprep.subr.mxu0 0.0
        %1335 = vmatpush2.xpose.msra.mxu0 0.0
        %1336 = vmatprep.subr.mxu0 0.0
        %1337 = vmatpush2.xpose.msra.mxu0 0.0
        %1338 = vmatprep.subr.mxu0 0.0
        %1339 = vmatpush2.xpose.msra.mxu0 0.0
        %1340 = vmatprep.subr.mxu0 0.0
        %1341 = vmatpush2.xpose.msra.mxu0 0.0
        %1342 = vmatprep.mubr.f32.mxu0 0.0
        %1343 = vmatmul.mubr.f32.gmra.mxu0 %v1270
        %v1344 = vpop.f32.mrf.mxu0
        %v1345 = vadd.f32 0.0, %v1344
        %v1346 = vpop.f32.mrf.mxu0
        %1347 = vmatprep.mubr.f32.mxu0 0.0
        %1348 = vmatmul.mubr.f32.gmra.mxu0 %v1272
        %v1349 = vpop.f32.mrf.mxu0
        %v1350 = vadd.f32 0.0, %v1349
        %v1351 = vpop.f32.mrf.mxu0
        %1352 = vdwg.mxu0
        %v1353 = vsel %vm1180, %v1256, -inf
        %1354 = vmax.xlane.f32.xlu0 %v1353
        %v1355 = vpop.xlane.xlu0 %1354
        %v1356 = vsel %vm1180, %v1261, -inf
        %1357 = vmax.xlane.f32.xlu0 %v1356
        %v1358 = vpop.xlane.xlu0 %1357
        %v1359 = vsel %vm1180, %v1345, -inf
        %1360 = vmax.xlane.f32.xlu0 %v1359
        %v1361 = vpop.xlane.xlu0 %1360
        %v1362 = vsel %vm1180, %v1350, -inf
        %1363 = vmax.xlane.f32.xlu0 %v1362
        %v1364 = vpop.xlane.xlu0 %1363
        %v1365 = vsub.f32 %v1256, %v1355
        %v1366 = vsub.f32 %v1261, %v1358
        %v1367 = vsub.f32 %v1345, %v1361
        %v1368 = vsub.f32 %v1350, %v1364
        %v1369 = vmul.f32 %v1365, 1.442695
        %v1370 = vpow.pop %v1369
        %v1371 = vmul.f32 %v1366, 1.442695
        %v1372 = vpow.pop %v1371
        %v1373 = vmul.f32 %v1367, 1.442695
        %v1374 = vpow.pop %v1373
        %v1375 = vmul.f32 %v1368, 1.442695
        %v1376 = vpow.pop %v1375
        %v1377 = vsel %vm1180, %v1370, 0.0
        %1378 = vadd.xlane.f32.xlu0 %v1377
        %v1379 = vpop.xlane.xlu0 %1378
        %v1380 = vsel %vm1180, %v1372, 0.0
        %1381 = vadd.xlane.f32.xlu0 %v1380
        %v1382 = vpop.xlane.xlu0 %1381
        %v1383 = vsel %vm1180, %v1374, 0.0
        %1384 = vadd.xlane.f32.xlu0 %v1383
        %v1385 = vpop.xlane.xlu0 %1384
        %v1386 = vsel %vm1180, %v1376, 0.0
        %1387 = vadd.xlane.f32.xlu0 %v1386
        %v1388 = vpop.xlane.xlu0 %1387
        %v1389 = vrcp.pop %v1379
        %v1390 = vrcp.pop %v1382
        %v1391 = vrcp.pop %v1385
        %v1392 = vrcp.pop %v1388
        %v1393 = vmul.f32 %v1370, %v1389
        %v1394 = vmul.f32 %v1372, %v1390
        %v1395 = vmul.f32 %v1374, %v1391
        %v1396 = vmul.f32 %v1376, %v1392
        %vm1397 = vcmp.ge.s32.totalorder %v1173, 0
        %vm1398 = vcmp.lt.s32.totalorder %v1173, 16
        %vm1399 = vmand %vm1397, %vm1398
        %v1400 = vsel %vm1399, %v1152, 0.0
        %v1401 = vsel %vm1399, %v1158, 0.0
        %v1402 = vsel %vm1399, %v1164, 0.0
        %v1403 = vsel %vm1399, %v1170, 0.0
        %1404 = vrot.lane.b32.xlu0 %v1150, 112
        %v1405 = vpop.permute.xlu0 %1404
        %1406 = vrot.lane.b32.xlu0 %v1156, 112
        %v1407 = vpop.permute.xlu0 %1406
        %1408 = vrot.lane.b32.xlu0 %v1150, 48
        %v1409 = vpop.permute.xlu0 %1408
        %1410 = vrot.lane.b32.xlu0 %v1156, 48
        %v1411 = vpop.permute.xlu0 %1410
        %v1412 = vsel %vm1180, %v1405, 0
        %v1414 = vsel %vm1180, %v1407, 0
        %v1416 = vsel %vm1180, %v1409, 0
        %v1418 = vsel %vm1180, %v1411, 0
        %1420 = vmatprep.subr.mxu0 0.0
        %1421 = vmatpush1.xpose.msra.mxu0 0.0
        %1422 = vmatprep.subr.mxu0 0.0
        %1423 = vmatpush1.xpose.msra.mxu0 0.0
        %1424 = vmatprep.subr.mxu0 0.0
        %1425 = vmatpush1.xpose.msra.mxu0 0.0
        %1426 = vmatprep.subr.mxu0 0.0
        %1427 = vmatpush1.xpose.msra.mxu0 0.0
        %1428 = vmatprep.subr.mxu0 0.0
        %1429 = vmatpush1.xpose.msra.mxu0 0.0
        %1430 = vmatprep.subr.mxu0 0.0
        %1431 = vmatpush1.xpose.msra.mxu0 0.0
        %1432 = vmatprep.subr.mxu0 0.0
        %1433 = vmatpush1.xpose.msra.mxu0 0.0
        %1434 = vmatprep.subr.mxu0 0.0
        %1435 = vmatpush1.xpose.msra.mxu0 0.0
        %1436 = vmatprep.subr.mxu0 0.0
        %1437 = vmatpush1.xpose.msra.mxu0 0.0
        %1438 = vmatprep.subr.mxu0 0.0
        %1439 = vmatpush1.xpose.msra.mxu0 0.0
        %1440 = vmatprep.subr.mxu0 0.0
        %1441 = vmatpush1.xpose.msra.mxu0 0.0
        %1442 = vmatprep.subr.mxu0 0.0
        %1443 = vmatpush1.xpose.msra.mxu0 0.0
        %1444 = vmatprep.subr.mxu0 0.0
        %1445 = vmatpush1.xpose.msra.mxu0 0.0
        %1446 = vmatprep.subr.mxu0 0.0
        %1447 = vmatpush1.xpose.msra.mxu0 0.0
        %1448 = vmatprep.subr.mxu0 0.0
        %1449 = vmatpush1.xpose.msra.mxu0 %v1418
        %1450 = vmatprep.subr.mxu0 0.0
        %1451 = vmatpush1.xpose.msra.mxu0 %v1416
        %1452 = vmatprep.subr.mxu0 0.0
        %1453 = vmatpush2.xpose.msra.mxu0 0.0
        %1454 = vmatprep.subr.mxu0 0.0
        %1455 = vmatpush2.xpose.msra.mxu0 0.0
        %1456 = vmatprep.subr.mxu0 0.0
        %1457 = vmatpush2.xpose.msra.mxu0 0.0
        %1458 = vmatprep.subr.mxu0 0.0
        %1459 = vmatpush2.xpose.msra.mxu0 0.0
        %1460 = vmatprep.subr.mxu0 0.0
        %1461 = vmatpush2.xpose.msra.mxu0 0.0
        %1462 = vmatprep.subr.mxu0 0.0
        %1463 = vmatpush2.xpose.msra.mxu0 0.0
        %1464 = vmatprep.subr.mxu0 0.0
        %1465 = vmatpush2.xpose.msra.mxu0 0.0
        %1466 = vmatprep.subr.mxu0 0.0
        %1467 = vmatpush2.xpose.msra.mxu0 0.0
        %1468 = vmatprep.subr.mxu0 0.0
        %1469 = vmatpush2.xpose.msra.mxu0 0.0
        %1470 = vmatprep.subr.mxu0 0.0
        %1471 = vmatpush2.xpose.msra.mxu0 0.0
        %1472 = vmatprep.subr.mxu0 0.0
        %1473 = vmatpush2.xpose.msra.mxu0 0.0
        %1474 = vmatprep.subr.mxu0 0.0
        %1475 = vmatpush2.xpose.msra.mxu0 0.0
        %1476 = vmatprep.subr.mxu0 0.0
        %1477 = vmatpush2.xpose.msra.mxu0 0.0
        %1478 = vmatprep.subr.mxu0 0.0
        %1479 = vmatpush2.xpose.msra.mxu0 0.0
        %1480 = vmatprep.subr.mxu0 0.0
        %1481 = vmatpush2.xpose.msra.mxu0 0.0
        %1482 = vmatprep.subr.mxu0 0.0
        %1483 = vmatpush2.xpose.msra.mxu0 0.0
        %1484 = vmatprep.mubr.f32.mxu0 0.0
        %1485 = vmatmul.mubr.f32.gmra.mxu0 %v1412
        %v1486 = vpop.f32.mrf.mxu0
        %v1487 = vadd.f32 0.0, %v1486
        %v1488 = vpop.f32.mrf.mxu0
        %1489 = vmatprep.mubr.f32.mxu0 0.0
        %1490 = vmatmul.mubr.f32.gmra.mxu0 %v1414
        %v1491 = vpop.f32.mrf.mxu0
        %v1492 = vadd.f32 0.0, %v1491
        %v1493 = vpop.f32.mrf.mxu0
        %1494 = vdwg.mxu0
        %1495 = vrot.lane.b32.xlu0 %v1162, 112
        %v1496 = vpop.permute.xlu0 %1495
        %1497 = vrot.lane.b32.xlu0 %v1168, 112
        %v1498 = vpop.permute.xlu0 %1497
        %1499 = vrot.lane.b32.xlu0 %v1162, 48
        %v1500 = vpop.permute.xlu0 %1499
        %1501 = vrot.lane.b32.xlu0 %v1168, 48
        %v1502 = vpop.permute.xlu0 %1501
        %v1503 = vsel %vm1180, %v1496, 0
        %v1505 = vsel %vm1180, %v1498, 0
        %v1507 = vsel %vm1180, %v1500, 0
        %v1509 = vsel %vm1180, %v1502, 0
        %1511 = vmatprep.subr.mxu0 0.0
        %1512 = vmatpush1.xpose.msra.mxu0 0.0
        %1513 = vmatprep.subr.mxu0 0.0
        %1514 = vmatpush1.xpose.msra.mxu0 0.0
        %1515 = vmatprep.subr.mxu0 0.0
        %1516 = vmatpush1.xpose.msra.mxu0 0.0
        %1517 = vmatprep.subr.mxu0 0.0
        %1518 = vmatpush1.xpose.msra.mxu0 0.0
        %1519 = vmatprep.subr.mxu0 0.0
        %1520 = vmatpush1.xpose.msra.mxu0 0.0
        %1521 = vmatprep.subr.mxu0 0.0
        %1522 = vmatpush1.xpose.msra.mxu0 0.0
        %1523 = vmatprep.subr.mxu0 0.0
        %1524 = vmatpush1.xpose.msra.mxu0 0.0
        %1525 = vmatprep.subr.mxu0 0.0
        %1526 = vmatpush1.xpose.msra.mxu0 0.0
        %1527 = vmatprep.subr.mxu0 0.0
        %1528 = vmatpush1.xpose.msra.mxu0 0.0
        %1529 = vmatprep.subr.mxu0 0.0
        %1530 = vmatpush1.xpose.msra.mxu0 0.0
        %1531 = vmatprep.subr.mxu0 0.0
        %1532 = vmatpush1.xpose.msra.mxu0 0.0
        %1533 = vmatprep.subr.mxu0 0.0
        %1534 = vmatpush1.xpose.msra.mxu0 0.0
        %1535 = vmatprep.subr.mxu0 0.0
        %1536 = vmatpush1.xpose.msra.mxu0 0.0
        %1537 = vmatprep.subr.mxu0 0.0
        %1538 = vmatpush1.xpose.msra.mxu0 0.0
        %1539 = vmatprep.subr.mxu0 0.0
        %1540 = vmatpush1.xpose.msra.mxu0 %v1509
        %1541 = vmatprep.subr.mxu0 0.0
        %1542 = vmatpush1.xpose.msra.mxu0 %v1507
        %1543 = vmatprep.subr.mxu0 0.0
        %1544 = vmatpush2.xpose.msra.mxu0 0.0
        %1545 = vmatprep.subr.mxu0 0.0
        %1546 = vmatpush2.xpose.msra.mxu0 0.0
        %1547 = vmatprep.subr.mxu0 0.0
        %1548 = vmatpush2.xpose.msra.mxu0 0.0
        %1549 = vmatprep.subr.mxu0 0.0
        %1550 = vmatpush2.xpose.msra.mxu0 0.0
        %1551 = vmatprep.subr.mxu0 0.0
        %1552 = vmatpush2.xpose.msra.mxu0 0.0
        %1553 = vmatprep.subr.mxu0 0.0
        %1554 = vmatpush2.xpose.msra.mxu0 0.0
        %1555 = vmatprep.subr.mxu0 0.0
        %1556 = vmatpush2.xpose.msra.mxu0 0.0
        %1557 = vmatprep.subr.mxu0 0.0
        %1558 = vmatpush2.xpose.msra.mxu0 0.0
        %1559 = vmatprep.subr.mxu0 0.0
        %1560 = vmatpush2.xpose.msra.mxu0 0.0
        %1561 = vmatprep.subr.mxu0 0.0
        %1562 = vmatpush2.xpose.msra.mxu0 0.0
        %1563 = vmatprep.subr.mxu0 0.0
        %1564 = vmatpush2.xpose.msra.mxu0 0.0
        %1565 = vmatprep.subr.mxu0 0.0
        %1566 = vmatpush2.xpose.msra.mxu0 0.0
        %1567 = vmatprep.subr.mxu0 0.0
        %1568 = vmatpush2.xpose.msra.mxu0 0.0
        %1569 = vmatprep.subr.mxu0 0.0
        %1570 = vmatpush2.xpose.msra.mxu0 0.0
        %1571 = vmatprep.subr.mxu0 0.0
        %1572 = vmatpush2.xpose.msra.mxu0 0.0
        %1573 = vmatprep.subr.mxu0 0.0
        %1574 = vmatpush2.xpose.msra.mxu0 0.0
        %1575 = vmatprep.mubr.f32.mxu0 0.0
        %1576 = vmatmul.mubr.f32.gmra.mxu0 %v1503
        %v1577 = vpop.f32.mrf.mxu0
        %v1578 = vadd.f32 0.0, %v1577
        %v1579 = vpop.f32.mrf.mxu0
        %1580 = vmatprep.mubr.f32.mxu0 0.0
        %1581 = vmatmul.mubr.f32.gmra.mxu0 %v1505
        %v1582 = vpop.f32.mrf.mxu0
        %v1583 = vadd.f32 0.0, %v1582
        %v1584 = vpop.f32.mrf.mxu0
        %1585 = vdwg.mxu0
        %v1586 = vsel %vm1180, %v1487, -inf
        %1587 = vmax.xlane.f32.xlu0 %v1586
        %v1588 = vpop.xlane.xlu0 %1587
        %v1589 = vsel %vm1180, %v1492, -inf
        %1590 = vmax.xlane.f32.xlu0 %v1589
        %v1591 = vpop.xlane.xlu0 %1590
        %v1592 = vsel %vm1180, %v1578, -inf
        %1593 = vmax.xlane.f32.xlu0 %v1592
        %v1594 = vpop.xlane.xlu0 %1593
        %v1595 = vsel %vm1180, %v1583, -inf
        %1596 = vmax.xlane.f32.xlu0 %v1595
        %v1597 = vpop.xlane.xlu0 %1596
        %v1598 = vsub.f32 %v1487, %v1588
        %v1599 = vsub.f32 %v1492, %v1591
        %v1600 = vsub.f32 %v1578, %v1594
        %v1601 = vsub.f32 %v1583, %v1597
        %v1602 = vmul.f32 %v1598, 1.442695
        %v1603 = vpow.pop %v1602
        %v1604 = vmul.f32 %v1599, 1.442695
        %v1605 = vpow.pop %v1604
        %v1606 = vmul.f32 %v1600, 1.442695
        %v1607 = vpow.pop %v1606
        %v1608 = vmul.f32 %v1601, 1.442695
        %v1609 = vpow.pop %v1608
        %v1610 = vsel %vm1180, %v1603, 0.0
        %1611 = vadd.xlane.f32.xlu0 %v1610
        %v1612 = vpop.xlane.xlu0 %1611
        %v1613 = vsel %vm1180, %v1605, 0.0
        %1614 = vadd.xlane.f32.xlu0 %v1613
        %v1615 = vpop.xlane.xlu0 %1614
        %v1616 = vsel %vm1180, %v1607, 0.0
        %1617 = vadd.xlane.f32.xlu0 %v1616
        %v1618 = vpop.xlane.xlu0 %1617
        %v1619 = vsel %vm1180, %v1609, 0.0
        %1620 = vadd.xlane.f32.xlu0 %v1619
        %v1621 = vpop.xlane.xlu0 %1620
        %v1622 = vrcp.pop %v1612
        %v1623 = vrcp.pop %v1615
        %v1624 = vrcp.pop %v1618
        %v1625 = vrcp.pop %v1621
        %v1626 = vmul.f32 %v1603, %v1622
        %v1627 = vmul.f32 %v1605, %v1623
        %v1628 = vmul.f32 %v1607, %v1624
        %v1629 = vmul.f32 %v1609, %v1625
        %vm1630 = vcmp.ge.s32.totalorder %v1173, 16
        %vm1631 = vcmp.lt.s32.totalorder %v1173, 32
        %vm1632 = vmand %vm1630, %vm1631
        %v1633 = vsel %vm1632, %v1152, 0.0
        %v1634 = vsel %vm1632, %v1158, 0.0
        %v1635 = vsel %vm1632, %v1164, 0.0
        %v1636 = vsel %vm1632, %v1170, 0.0
        %v1638 = vsel %vm1180, %v1626, 0
        %v1641 = vsel %vm1180, %v1627, 0
        %1643 = vmatprep.subr.mxu0 0.0
        %1644 = vmatpush1.msra.mxu0 0.0
        %1645 = vmatprep.subr.mxu0 0.0
        %1646 = vmatpush1.msra.mxu0 0.0
        %1647 = vmatprep.subr.mxu0 0.0
        %1648 = vmatpush1.msra.mxu0 0.0
        %1649 = vmatprep.subr.mxu0 0.0
        %1650 = vmatpush1.msra.mxu0 0.0
        %1651 = vmatprep.subr.mxu0 0.0
        %1652 = vmatpush1.msra.mxu0 0.0
        %1653 = vmatprep.subr.mxu0 0.0
        %1654 = vmatpush1.msra.mxu0 0.0
        %1655 = vmatprep.subr.mxu0 0.0
        %1656 = vmatpush1.msra.mxu0 0.0
        %1657 = vmatprep.subr.mxu0 0.0
        %1658 = vmatpush1.msra.mxu0 0.0
        %1659 = vmatprep.subr.mxu0 0.0
        %1660 = vmatpush1.msra.mxu0 0.0
        %1661 = vmatprep.subr.mxu0 0.0
        %1662 = vmatpush1.msra.mxu0 0.0
        %1663 = vmatprep.subr.mxu0 0.0
        %1664 = vmatpush1.msra.mxu0 0.0
        %1665 = vmatprep.subr.mxu0 0.0
        %1666 = vmatpush1.msra.mxu0 0.0
        %1667 = vmatprep.subr.mxu0 0.0
        %1668 = vmatpush1.msra.mxu0 0.0
        %1669 = vmatprep.subr.mxu0 0.0
        %1670 = vmatpush1.msra.mxu0 0.0
        %1671 = vmatprep.subr.mxu0 0.0
        %1672 = vmatpush1.msra.mxu0 %v1634
        %1673 = vmatprep.subr.mxu0 0.0
        %1674 = vmatpush1.msra.mxu0 %v1633
        %1675 = vmatprep.subr.mxu0 0.0
        %1676 = vmatpush2.msra.mxu0 0.0
        %1677 = vmatprep.subr.mxu0 0.0
        %1678 = vmatpush2.msra.mxu0 0.0
        %1679 = vmatprep.subr.mxu0 0.0
        %1680 = vmatpush2.msra.mxu0 0.0
        %1681 = vmatprep.subr.mxu0 0.0
        %1682 = vmatpush2.msra.mxu0 0.0
        %1683 = vmatprep.subr.mxu0 0.0
        %1684 = vmatpush2.msra.mxu0 0.0
        %1685 = vmatprep.subr.mxu0 0.0
        %1686 = vmatpush2.msra.mxu0 0.0
        %1687 = vmatprep.subr.mxu0 0.0
        %1688 = vmatpush2.msra.mxu0 0.0
        %1689 = vmatprep.subr.mxu0 0.0
        %1690 = vmatpush2.msra.mxu0 0.0
        %1691 = vmatprep.subr.mxu0 0.0
        %1692 = vmatpush2.msra.mxu0 0.0
        %1693 = vmatprep.subr.mxu0 0.0
        %1694 = vmatpush2.msra.mxu0 0.0
        %1695 = vmatprep.subr.mxu0 0.0
        %1696 = vmatpush2.msra.mxu0 0.0
        %1697 = vmatprep.subr.mxu0 0.0
        %1698 = vmatpush2.msra.mxu0 0.0
        %1699 = vmatprep.subr.mxu0 0.0
        %1700 = vmatpush2.msra.mxu0 0.0
        %1701 = vmatprep.subr.mxu0 0.0
        %1702 = vmatpush2.msra.mxu0 0.0
        %1703 = vmatprep.subr.mxu0 0.0
        %1704 = vmatpush2.msra.mxu0 0.0
        %1705 = vmatprep.subr.mxu0 0.0
        %1706 = vmatpush2.msra.mxu0 0.0
        %1707 = vmatprep.mubr.f32.mxu0 0.0
        %1708 = vmatmul.mubr.f32.gmra.mxu0 %v1638
        %v1709 = vpop.f32.mrf.mxu0
        %v1710 = vadd.f32 0.0, %v1709
        %v1711 = vpop.f32.mrf.mxu0
        %1712 = vmatprep.mubr.f32.mxu0 0.0
        %1713 = vmatmul.mubr.f32.gmra.mxu0 %v1641
        %v1714 = vpop.f32.mrf.mxu0
        %v1715 = vadd.f32 0.0, %v1714
        %v1716 = vpop.f32.mrf.mxu0
        %1717 = vdwg.mxu0
        %v1719 = vsel %vm1180, %v1628, 0
        %v1722 = vsel %vm1180, %v1629, 0
        %1724 = vmatprep.subr.mxu0 0.0
        %1725 = vmatpush1.msra.mxu0 0.0
        %1726 = vmatprep.subr.mxu0 0.0
        %1727 = vmatpush1.msra.mxu0 0.0
        %1728 = vmatprep.subr.mxu0 0.0
        %1729 = vmatpush1.msra.mxu0 0.0
        %1730 = vmatprep.subr.mxu0 0.0
        %1731 = vmatpush1.msra.mxu0 0.0
        %1732 = vmatprep.subr.mxu0 0.0
        %1733 = vmatpush1.msra.mxu0 0.0
        %1734 = vmatprep.subr.mxu0 0.0
        %1735 = vmatpush1.msra.mxu0 0.0
        %1736 = vmatprep.subr.mxu0 0.0
        %1737 = vmatpush1.msra.mxu0 0.0
        %1738 = vmatprep.subr.mxu0 0.0
        %1739 = vmatpush1.msra.mxu0 0.0
        %1740 = vmatprep.subr.mxu0 0.0
        %1741 = vmatpush1.msra.mxu0 0.0
        %1742 = vmatprep.subr.mxu0 0.0
        %1743 = vmatpush1.msra.mxu0 0.0
        %1744 = vmatprep.subr.mxu0 0.0
        %1745 = vmatpush1.msra.mxu0 0.0
        %1746 = vmatprep.subr.mxu0 0.0
        %1747 = vmatpush1.msra.mxu0 0.0
        %1748 = vmatprep.subr.mxu0 0.0
        %1749 = vmatpush1.msra.mxu0 0.0
        %1750 = vmatprep.subr.mxu0 0.0
        %1751 = vmatpush1.msra.mxu0 0.0
        %1752 = vmatprep.subr.mxu0 0.0
        %1753 = vmatpush1.msra.mxu0 %v1636
        %1754 = vmatprep.subr.mxu0 0.0
        %1755 = vmatpush1.msra.mxu0 %v1635
        %1756 = vmatprep.subr.mxu0 0.0
        %1757 = vmatpush2.msra.mxu0 0.0
        %1758 = vmatprep.subr.mxu0 0.0
        %1759 = vmatpush2.msra.mxu0 0.0
        %1760 = vmatprep.subr.mxu0 0.0
        %1761 = vmatpush2.msra.mxu0 0.0
        %1762 = vmatprep.subr.mxu0 0.0
        %1763 = vmatpush2.msra.mxu0 0.0
        %1764 = vmatprep.subr.mxu0 0.0
        %1765 = vmatpush2.msra.mxu0 0.0
        %1766 = vmatprep.subr.mxu0 0.0
        %1767 = vmatpush2.msra.mxu0 0.0
        %1768 = vmatprep.subr.mxu0 0.0
        %1769 = vmatpush2.msra.mxu0 0.0
        %1770 = vmatprep.subr.mxu0 0.0
        %1771 = vmatpush2.msra.mxu0 0.0
        %1772 = vmatprep.subr.mxu0 0.0
        %1773 = vmatpush2.msra.mxu0 0.0
        %1774 = vmatprep.subr.mxu0 0.0
        %1775 = vmatpush2.msra.mxu0 0.0
        %1776 = vmatprep.subr.mxu0 0.0
        %1777 = vmatpush2.msra.mxu0 0.0
        %1778 = vmatprep.subr.mxu0 0.0
        %1779 = vmatpush2.msra.mxu0 0.0
        %1780 = vmatprep.subr.mxu0 0.0
        %1781 = vmatpush2.msra.mxu0 0.0
        %1782 = vmatprep.subr.mxu0 0.0
        %1783 = vmatpush2.msra.mxu0 0.0
        %1784 = vmatprep.subr.mxu0 0.0
        %1785 = vmatpush2.msra.mxu0 0.0
        %1786 = vmatprep.subr.mxu0 0.0
        %1787 = vmatpush2.msra.mxu0 0.0
        %1788 = vmatprep.mubr.f32.mxu0 0.0
        %1789 = vmatmul.mubr.f32.gmra.mxu0 %v1719
        %v1790 = vpop.f32.mrf.mxu0
        %v1791 = vadd.f32 0.0, %v1790
        %v1792 = vpop.f32.mrf.mxu0
        %1793 = vmatprep.mubr.f32.mxu0 0.0
        %1794 = vmatmul.mubr.f32.gmra.mxu0 %v1722
        %v1795 = vpop.f32.mrf.mxu0
        %v1796 = vadd.f32 0.0, %v1795
        %v1797 = vpop.f32.mrf.mxu0
        %1798 = vdwg.mxu0
        %v1800 = vsel %vm1180, %v1393, 0
        %v1803 = vsel %vm1180, %v1394, 0
        %1805 = vmatprep.subr.mxu0 0.0
        %1806 = vmatpush1.msra.mxu0 0.0
        %1807 = vmatprep.subr.mxu0 0.0
        %1808 = vmatpush1.msra.mxu0 0.0
        %1809 = vmatprep.subr.mxu0 0.0
        %1810 = vmatpush1.msra.mxu0 0.0
        %1811 = vmatprep.subr.mxu0 0.0
        %1812 = vmatpush1.msra.mxu0 0.0
        %1813 = vmatprep.subr.mxu0 0.0
        %1814 = vmatpush1.msra.mxu0 0.0
        %1815 = vmatprep.subr.mxu0 0.0
        %1816 = vmatpush1.msra.mxu0 0.0
        %1817 = vmatprep.subr.mxu0 0.0
        %1818 = vmatpush1.msra.mxu0 0.0
        %1819 = vmatprep.subr.mxu0 0.0
        %1820 = vmatpush1.msra.mxu0 0.0
        %1821 = vmatprep.subr.mxu0 0.0
        %1822 = vmatpush1.msra.mxu0 0.0
        %1823 = vmatprep.subr.mxu0 0.0
        %1824 = vmatpush1.msra.mxu0 0.0
        %1825 = vmatprep.subr.mxu0 0.0
        %1826 = vmatpush1.msra.mxu0 0.0
        %1827 = vmatprep.subr.mxu0 0.0
        %1828 = vmatpush1.msra.mxu0 0.0
        %1829 = vmatprep.subr.mxu0 0.0
        %1830 = vmatpush1.msra.mxu0 0.0
        %1831 = vmatprep.subr.mxu0 0.0
        %1832 = vmatpush1.msra.mxu0 0.0
        %1833 = vmatprep.subr.mxu0 0.0
        %1834 = vmatpush1.msra.mxu0 %v1401
        %1835 = vmatprep.subr.mxu0 0.0
        %1836 = vmatpush1.msra.mxu0 %v1400
        %1837 = vmatprep.subr.mxu0 0.0
        %1838 = vmatpush2.msra.mxu0 0.0
        %1839 = vmatprep.subr.mxu0 0.0
        %1840 = vmatpush2.msra.mxu0 0.0
        %1841 = vmatprep.subr.mxu0 0.0
        %1842 = vmatpush2.msra.mxu0 0.0
        %1843 = vmatprep.subr.mxu0 0.0
        %1844 = vmatpush2.msra.mxu0 0.0
        %1845 = vmatprep.subr.mxu0 0.0
        %1846 = vmatpush2.msra.mxu0 0.0
        %1847 = vmatprep.subr.mxu0 0.0
        %1848 = vmatpush2.msra.mxu0 0.0
        %1849 = vmatprep.subr.mxu0 0.0
        %1850 = vmatpush2.msra.mxu0 0.0
        %1851 = vmatprep.subr.mxu0 0.0
        %1852 = vmatpush2.msra.mxu0 0.0
        %1853 = vmatprep.subr.mxu0 0.0
        %1854 = vmatpush2.msra.mxu0 0.0
        %1855 = vmatprep.subr.mxu0 0.0
        %1856 = vmatpush2.msra.mxu0 0.0
        %1857 = vmatprep.subr.mxu0 0.0
        %1858 = vmatpush2.msra.mxu0 0.0
        %1859 = vmatprep.subr.mxu0 0.0
        %1860 = vmatpush2.msra.mxu0 0.0
        %1861 = vmatprep.subr.mxu0 0.0
        %1862 = vmatpush2.msra.mxu0 0.0
        %1863 = vmatprep.subr.mxu0 0.0
        %1864 = vmatpush2.msra.mxu0 0.0
        %1865 = vmatprep.subr.mxu0 0.0
        %1866 = vmatpush2.msra.mxu0 0.0
        %1867 = vmatprep.subr.mxu0 0.0
        %1868 = vmatpush2.msra.mxu0 0.0
        %1869 = vmatprep.mubr.f32.mxu0 0.0
        %1870 = vmatmul.mubr.f32.gmra.mxu0 %v1800
        %v1871 = vpop.f32.mrf.mxu0
        %v1872 = vadd.f32 %v1710, %v1871
        %v1873 = vpop.f32.mrf.mxu0
        %1874 = vmatprep.mubr.f32.mxu0 0.0
        %1875 = vmatmul.mubr.f32.gmra.mxu0 %v1803
        %v1876 = vpop.f32.mrf.mxu0
        %v1877 = vadd.f32 %v1715, %v1876
        %v1878 = vpop.f32.mrf.mxu0
        %1879 = vdwg.mxu0
        %v1881 = vsel %vm1180, %v1395, 0
        %v1884 = vsel %vm1180, %v1396, 0
        %1886 = vmatprep.subr.mxu0 0.0
        %1887 = vmatpush1.msra.mxu0 0.0
        %1888 = vmatprep.subr.mxu0 0.0
        %1889 = vmatpush1.msra.mxu0 0.0
        %1890 = vmatprep.subr.mxu0 0.0
        %1891 = vmatpush1.msra.mxu0 0.0
        %1892 = vmatprep.subr.mxu0 0.0
        %1893 = vmatpush1.msra.mxu0 0.0
        %1894 = vmatprep.subr.mxu0 0.0
        %1895 = vmatpush1.msra.mxu0 0.0
        %1896 = vmatprep.subr.mxu0 0.0
        %1897 = vmatpush1.msra.mxu0 0.0
        %1898 = vmatprep.subr.mxu0 0.0
        %1899 = vmatpush1.msra.mxu0 0.0
        %1900 = vmatprep.subr.mxu0 0.0
        %1901 = vmatpush1.msra.mxu0 0.0
        %1902 = vmatprep.subr.mxu0 0.0
        %1903 = vmatpush1.msra.mxu0 0.0
        %1904 = vmatprep.subr.mxu0 0.0
        %1905 = vmatpush1.msra.mxu0 0.0
        %1906 = vmatprep.subr.mxu0 0.0
        %1907 = vmatpush1.msra.mxu0 0.0
        %1908 = vmatprep.subr.mxu0 0.0
        %1909 = vmatpush1.msra.mxu0 0.0
        %1910 = vmatprep.subr.mxu0 0.0
        %1911 = vmatpush1.msra.mxu0 0.0
        %1912 = vmatprep.subr.mxu0 0.0
        %1913 = vmatpush1.msra.mxu0 0.0
        %1914 = vmatprep.subr.mxu0 0.0
        %1915 = vmatpush1.msra.mxu0 %v1403
        %1916 = vmatprep.subr.mxu0 0.0
        %1917 = vmatpush1.msra.mxu0 %v1402
        %1918 = vmatprep.subr.mxu0 0.0
        %1919 = vmatpush2.msra.mxu0 0.0
        %1920 = vmatprep.subr.mxu0 0.0
        %1921 = vmatpush2.msra.mxu0 0.0
        %1922 = vmatprep.subr.mxu0 0.0
        %1923 = vmatpush2.msra.mxu0 0.0
        %1924 = vmatprep.subr.mxu0 0.0
        %1925 = vmatpush2.msra.mxu0 0.0
        %1926 = vmatprep.subr.mxu0 0.0
        %1927 = vmatpush2.msra.mxu0 0.0
        %1928 = vmatprep.subr.mxu0 0.0
        %1929 = vmatpush2.msra.mxu0 0.0
        %1930 = vmatprep.subr.mxu0 0.0
        %1931 = vmatpush2.msra.mxu0 0.0
        %1932 = vmatprep.subr.mxu0 0.0
        %1933 = vmatpush2.msra.mxu0 0.0
        %1934 = vmatprep.subr.mxu0 0.0
        %1935 = vmatpush2.msra.mxu0 0.0
        %1936 = vmatprep.subr.mxu0 0.0
        %1937 = vmatpush2.msra.mxu0 0.0
        %1938 = vmatprep.subr.mxu0 0.0
        %1939 = vmatpush2.msra.mxu0 0.0
        %1940 = vmatprep.subr.mxu0 0.0
        %1941 = vmatpush2.msra.mxu0 0.0
        %1942 = vmatprep.subr.mxu0 0.0
        %1943 = vmatpush2.msra.mxu0 0.0
        %1944 = vmatprep.subr.mxu0 0.0
        %1945 = vmatpush2.msra.mxu0 0.0
        %1946 = vmatprep.subr.mxu0 0.0
        %1947 = vmatpush2.msra.mxu0 0.0
        %1948 = vmatprep.subr.mxu0 0.0
        %1949 = vmatpush2.msra.mxu0 0.0
        %1950 = vmatprep.mubr.f32.mxu0 0.0
        %1951 = vmatmul.mubr.f32.gmra.mxu0 %v1881
        %v1952 = vpop.f32.mrf.mxu0
        %v1953 = vadd.f32 %v1791, %v1952
        %v1954 = vpop.f32.mrf.mxu0
        %1955 = vmatprep.mubr.f32.mxu0 0.0
        %1956 = vmatmul.mubr.f32.gmra.mxu0 %v1884
        %v1957 = vpop.f32.mrf.mxu0
        %v1958 = vadd.f32 %v1796, %v1957
        %v1959 = vpop.f32.mrf.mxu0
        %1960 = vdwg.mxu0
        %1961 = vrot.lane.b32.xlu0 %v1150, 96
        %v1962 = vpop.permute.xlu0 %1961
        %1963 = vrot.lane.b32.xlu0 %v1156, 96
        %v1964 = vpop.permute.xlu0 %1963
        %1965 = vrot.lane.b32.xlu0 %v1150, 32
        %v1966 = vpop.permute.xlu0 %1965
        %1967 = vrot.lane.b32.xlu0 %v1156, 32
        %v1968 = vpop.permute.xlu0 %1967
        %v1969 = vsel %vm1180, %v1962, 0
        %v1971 = vsel %vm1180, %v1964, 0
        %v1973 = vsel %vm1180, %v1966, 0
        %v1975 = vsel %vm1180, %v1968, 0
        %1977 = vmatprep.subr.mxu0 0.0
        %1978 = vmatpush1.xpose.msra.mxu0 0.0
        %1979 = vmatprep.subr.mxu0 0.0
        %1980 = vmatpush1.xpose.msra.mxu0 0.0
        %1981 = vmatprep.subr.mxu0 0.0
        %1982 = vmatpush1.xpose.msra.mxu0 0.0
        %1983 = vmatprep.subr.mxu0 0.0
        %1984 = vmatpush1.xpose.msra.mxu0 0.0
        %1985 = vmatprep.subr.mxu0 0.0
        %1986 = vmatpush1.xpose.msra.mxu0 0.0
        %1987 = vmatprep.subr.mxu0 0.0
        %1988 = vmatpush1.xpose.msra.mxu0 0.0
        %1989 = vmatprep.subr.mxu0 0.0
        %1990 = vmatpush1.xpose.msra.mxu0 0.0
        %1991 = vmatprep.subr.mxu0 0.0
        %1992 = vmatpush1.xpose.msra.mxu0 0.0
        %1993 = vmatprep.subr.mxu0 0.0
        %1994 = vmatpush1.xpose.msra.mxu0 0.0
        %1995 = vmatprep.subr.mxu0 0.0
        %1996 = vmatpush1.xpose.msra.mxu0 0.0
        %1997 = vmatprep.subr.mxu0 0.0
        %1998 = vmatpush1.xpose.msra.mxu0 0.0
        %1999 = vmatprep.subr.mxu0 0.0
        %2000 = vmatpush1.xpose.msra.mxu0 0.0
        %2001 = vmatprep.subr.mxu0 0.0
        %2002 = vmatpush1.xpose.msra.mxu0 0.0
        %2003 = vmatprep.subr.mxu0 0.0
        %2004 = vmatpush1.xpose.msra.mxu0 0.0
        %2005 = vmatprep.subr.mxu0 0.0
        %2006 = vmatpush1.xpose.msra.mxu0 %v1975
        %2007 = vmatprep.subr.mxu0 0.0
        %2008 = vmatpush1.xpose.msra.mxu0 %v1973
        %2009 = vmatprep.subr.mxu0 0.0
        %2010 = vmatpush2.xpose.msra.mxu0 0.0
        %2011 = vmatprep.subr.mxu0 0.0
        %2012 = vmatpush2.xpose.msra.mxu0 0.0
        %2013 = vmatprep.subr.mxu0 0.0
        %2014 = vmatpush2.xpose.msra.mxu0 0.0
        %2015 = vmatprep.subr.mxu0 0.0
        %2016 = vmatpush2.xpose.msra.mxu0 0.0
        %2017 = vmatprep.subr.mxu0 0.0
        %2018 = vmatpush2.xpose.msra.mxu0 0.0
        %2019 = vmatprep.subr.mxu0 0.0
        %2020 = vmatpush2.xpose.msra.mxu0 0.0
        %2021 = vmatprep.subr.mxu0 0.0
        %2022 = vmatpush2.xpose.msra.mxu0 0.0
        %2023 = vmatprep.subr.mxu0 0.0
        %2024 = vmatpush2.xpose.msra.mxu0 0.0
        %2025 = vmatprep.subr.mxu0 0.0
        %2026 = vmatpush2.xpose.msra.mxu0 0.0
        %2027 = vmatprep.subr.mxu0 0.0
        %2028 = vmatpush2.xpose.msra.mxu0 0.0
        %2029 = vmatprep.subr.mxu0 0.0
        %2030 = vmatpush2.xpose.msra.mxu0 0.0
        %2031 = vmatprep.subr.mxu0 0.0
        %2032 = vmatpush2.xpose.msra.mxu0 0.0
        %2033 = vmatprep.subr.mxu0 0.0
        %2034 = vmatpush2.xpose.msra.mxu0 0.0
        %2035 = vmatprep.subr.mxu0 0.0
        %2036 = vmatpush2.xpose.msra.mxu0 0.0
        %2037 = vmatprep.subr.mxu0 0.0
        %2038 = vmatpush2.xpose.msra.mxu0 0.0
        %2039 = vmatprep.subr.mxu0 0.0
        %2040 = vmatpush2.xpose.msra.mxu0 0.0
        %2041 = vmatprep.mubr.f32.mxu0 0.0
        %2042 = vmatmul.mubr.f32.gmra.mxu0 %v1969
        %v2043 = vpop.f32.mrf.mxu0
        %v2044 = vadd.f32 0.0, %v2043
        %v2045 = vpop.f32.mrf.mxu0
        %2046 = vmatprep.mubr.f32.mxu0 0.0
        %2047 = vmatmul.mubr.f32.gmra.mxu0 %v1971
        %v2048 = vpop.f32.mrf.mxu0
        %v2049 = vadd.f32 0.0, %v2048
        %v2050 = vpop.f32.mrf.mxu0
        %2051 = vdwg.mxu0
        %2052 = vrot.lane.b32.xlu0 %v1162, 96
        %v2053 = vpop.permute.xlu0 %2052
        %2054 = vrot.lane.b32.xlu0 %v1168, 96
        %v2055 = vpop.permute.xlu0 %2054
        %2056 = vrot.lane.b32.xlu0 %v1162, 32
        %v2057 = vpop.permute.xlu0 %2056
        %2058 = vrot.lane.b32.xlu0 %v1168, 32
        %v2059 = vpop.permute.xlu0 %2058
        %v2060 = vsel %vm1180, %v2053, 0
        %v2062 = vsel %vm1180, %v2055, 0
        %v2064 = vsel %vm1180, %v2057, 0
        %v2066 = vsel %vm1180, %v2059, 0
        %2068 = vmatprep.subr.mxu0 0.0
        %2069 = vmatpush1.xpose.msra.mxu0 0.0
        %2070 = vmatprep.subr.mxu0 0.0
        %2071 = vmatpush1.xpose.msra.mxu0 0.0
        %2072 = vmatprep.subr.mxu0 0.0
        %2073 = vmatpush1.xpose.msra.mxu0 0.0
        %2074 = vmatprep.subr.mxu0 0.0
        %2075 = vmatpush1.xpose.msra.mxu0 0.0
        %2076 = vmatprep.subr.mxu0 0.0
        %2077 = vmatpush1.xpose.msra.mxu0 0.0
        %2078 = vmatprep.subr.mxu0 0.0
        %2079 = vmatpush1.xpose.msra.mxu0 0.0
        %2080 = vmatprep.subr.mxu0 0.0
        %2081 = vmatpush1.xpose.msra.mxu0 0.0
        %2082 = vmatprep.subr.mxu0 0.0
        %2083 = vmatpush1.xpose.msra.mxu0 0.0
        %2084 = vmatprep.subr.mxu0 0.0
        %2085 = vmatpush1.xpose.msra.mxu0 0.0
        %2086 = vmatprep.subr.mxu0 0.0
        %2087 = vmatpush1.xpose.msra.mxu0 0.0
        %2088 = vmatprep.subr.mxu0 0.0
        %2089 = vmatpush1.xpose.msra.mxu0 0.0
        %2090 = vmatprep.subr.mxu0 0.0
        %2091 = vmatpush1.xpose.msra.mxu0 0.0
        %2092 = vmatprep.subr.mxu0 0.0
        %2093 = vmatpush1.xpose.msra.mxu0 0.0
        %2094 = vmatprep.subr.mxu0 0.0
        %2095 = vmatpush1.xpose.msra.mxu0 0.0
        %2096 = vmatprep.subr.mxu0 0.0
        %2097 = vmatpush1.xpose.msra.mxu0 %v2066
        %2098 = vmatprep.subr.mxu0 0.0
        %2099 = vmatpush1.xpose.msra.mxu0 %v2064
        %2100 = vmatprep.subr.mxu0 0.0
        %2101 = vmatpush2.xpose.msra.mxu0 0.0
        %2102 = vmatprep.subr.mxu0 0.0
        %2103 = vmatpush2.xpose.msra.mxu0 0.0
        %2104 = vmatprep.subr.mxu0 0.0
        %2105 = vmatpush2.xpose.msra.mxu0 0.0
        %2106 = vmatprep.subr.mxu0 0.0
        %2107 = vmatpush2.xpose.msra.mxu0 0.0
        %2108 = vmatprep.subr.mxu0 0.0
        %2109 = vmatpush2.xpose.msra.mxu0 0.0
        %2110 = vmatprep.subr.mxu0 0.0
        %2111 = vmatpush2.xpose.msra.mxu0 0.0
        %2112 = vmatprep.subr.mxu0 0.0
        %2113 = vmatpush2.xpose.msra.mxu0 0.0
        %2114 = vmatprep.subr.mxu0 0.0
        %2115 = vmatpush2.xpose.msra.mxu0 0.0
        %2116 = vmatprep.subr.mxu0 0.0
        %2117 = vmatpush2.xpose.msra.mxu0 0.0
        %2118 = vmatprep.subr.mxu0 0.0
        %2119 = vmatpush2.xpose.msra.mxu0 0.0
        %2120 = vmatprep.subr.mxu0 0.0
        %2121 = vmatpush2.xpose.msra.mxu0 0.0
        %2122 = vmatprep.subr.mxu0 0.0
        %2123 = vmatpush2.xpose.msra.mxu0 0.0
        %2124 = vmatprep.subr.mxu0 0.0
        %2125 = vmatpush2.xpose.msra.mxu0 0.0
        %2126 = vmatprep.subr.mxu0 0.0
        %2127 = vmatpush2.xpose.msra.mxu0 0.0
        %2128 = vmatprep.subr.mxu0 0.0
        %2129 = vmatpush2.xpose.msra.mxu0 0.0
        %2130 = vmatprep.subr.mxu0 0.0
        %2131 = vmatpush2.xpose.msra.mxu0 0.0
        %2132 = vmatprep.mubr.f32.mxu0 0.0
        %2133 = vmatmul.mubr.f32.gmra.mxu0 %v2060
        %v2134 = vpop.f32.mrf.mxu0
        %v2135 = vadd.f32 0.0, %v2134
        %v2136 = vpop.f32.mrf.mxu0
        %2137 = vmatprep.mubr.f32.mxu0 0.0
        %2138 = vmatmul.mubr.f32.gmra.mxu0 %v2062
        %v2139 = vpop.f32.mrf.mxu0
        %v2140 = vadd.f32 0.0, %v2139
        %v2141 = vpop.f32.mrf.mxu0
        %2142 = vdwg.mxu0
        %v2143 = vsel %vm1180, %v2044, -inf
        %2144 = vmax.xlane.f32.xlu0 %v2143
        %v2145 = vpop.xlane.xlu0 %2144
        %v2146 = vsel %vm1180, %v2049, -inf
        %2147 = vmax.xlane.f32.xlu0 %v2146
        %v2148 = vpop.xlane.xlu0 %2147
        %v2149 = vsel %vm1180, %v2135, -inf
        %2150 = vmax.xlane.f32.xlu0 %v2149
        %v2151 = vpop.xlane.xlu0 %2150
        %v2152 = vsel %vm1180, %v2140, -inf
        %2153 = vmax.xlane.f32.xlu0 %v2152
        %v2154 = vpop.xlane.xlu0 %2153
        %v2155 = vsub.f32 %v2044, %v2145
        %v2156 = vsub.f32 %v2049, %v2148
        %v2157 = vsub.f32 %v2135, %v2151
        %v2158 = vsub.f32 %v2140, %v2154
        %v2159 = vmul.f32 %v2155, 1.442695
        %v2160 = vpow.pop %v2159
        %v2161 = vmul.f32 %v2156, 1.442695
        %v2162 = vpow.pop %v2161
        %v2163 = vmul.f32 %v2157, 1.442695
        %v2164 = vpow.pop %v2163
        %v2165 = vmul.f32 %v2158, 1.442695
        %v2166 = vpow.pop %v2165
        %v2167 = vsel %vm1180, %v2160, 0.0
        %2168 = vadd.xlane.f32.xlu0 %v2167
        %v2169 = vpop.xlane.xlu0 %2168
        %v2170 = vsel %vm1180, %v2162, 0.0
        %2171 = vadd.xlane.f32.xlu0 %v2170
        %v2172 = vpop.xlane.xlu0 %2171
        %v2173 = vsel %vm1180, %v2164, 0.0
        %2174 = vadd.xlane.f32.xlu0 %v2173
        %v2175 = vpop.xlane.xlu0 %2174
        %v2176 = vsel %vm1180, %v2166, 0.0
        %2177 = vadd.xlane.f32.xlu0 %v2176
        %v2178 = vpop.xlane.xlu0 %2177
        %v2179 = vrcp.pop %v2169
        %v2180 = vrcp.pop %v2172
        %v2181 = vrcp.pop %v2175
        %v2182 = vrcp.pop %v2178
        %v2183 = vmul.f32 %v2160, %v2179
        %v2184 = vmul.f32 %v2162, %v2180
        %v2185 = vmul.f32 %v2164, %v2181
        %v2186 = vmul.f32 %v2166, %v2182
        %vm2187 = vcmp.ge.s32.totalorder %v1173, 32
        %vm2188 = vcmp.lt.s32.totalorder %v1173, 48
        %vm2189 = vmand %vm2187, %vm2188
        %v2190 = vsel %vm2189, %v1152, 0.0
        %v2191 = vsel %vm2189, %v1158, 0.0
        %v2192 = vsel %vm2189, %v1164, 0.0
        %v2193 = vsel %vm2189, %v1170, 0.0
        %v2195 = vsel %vm1180, %v2183, 0
        %v2198 = vsel %vm1180, %v2184, 0
        %2200 = vmatprep.subr.mxu0 0.0
        %2201 = vmatpush1.msra.mxu0 0.0
        %2202 = vmatprep.subr.mxu0 0.0
        %2203 = vmatpush1.msra.mxu0 0.0
        %2204 = vmatprep.subr.mxu0 0.0
        %2205 = vmatpush1.msra.mxu0 0.0
        %2206 = vmatprep.subr.mxu0 0.0
        %2207 = vmatpush1.msra.mxu0 0.0
        %2208 = vmatprep.subr.mxu0 0.0
        %2209 = vmatpush1.msra.mxu0 0.0
        %2210 = vmatprep.subr.mxu0 0.0
        %2211 = vmatpush1.msra.mxu0 0.0
        %2212 = vmatprep.subr.mxu0 0.0
        %2213 = vmatpush1.msra.mxu0 0.0
        %2214 = vmatprep.subr.mxu0 0.0
        %2215 = vmatpush1.msra.mxu0 0.0
        %2216 = vmatprep.subr.mxu0 0.0
        %2217 = vmatpush1.msra.mxu0 0.0
        %2218 = vmatprep.subr.mxu0 0.0
        %2219 = vmatpush1.msra.mxu0 0.0
        %2220 = vmatprep.subr.mxu0 0.0
        %2221 = vmatpush1.msra.mxu0 0.0
        %2222 = vmatprep.subr.mxu0 0.0
        %2223 = vmatpush1.msra.mxu0 0.0
        %2224 = vmatprep.subr.mxu0 0.0
        %2225 = vmatpush1.msra.mxu0 0.0
        %2226 = vmatprep.subr.mxu0 0.0
        %2227 = vmatpush1.msra.mxu0 0.0
        %2228 = vmatprep.subr.mxu0 0.0
        %2229 = vmatpush1.msra.mxu0 %v2191
        %2230 = vmatprep.subr.mxu0 0.0
        %2231 = vmatpush1.msra.mxu0 %v2190
        %2232 = vmatprep.subr.mxu0 0.0
        %2233 = vmatpush2.msra.mxu0 0.0
        %2234 = vmatprep.subr.mxu0 0.0
        %2235 = vmatpush2.msra.mxu0 0.0
        %2236 = vmatprep.subr.mxu0 0.0
        %2237 = vmatpush2.msra.mxu0 0.0
        %2238 = vmatprep.subr.mxu0 0.0
        %2239 = vmatpush2.msra.mxu0 0.0
        %2240 = vmatprep.subr.mxu0 0.0
        %2241 = vmatpush2.msra.mxu0 0.0
        %2242 = vmatprep.subr.mxu0 0.0
        %2243 = vmatpush2.msra.mxu0 0.0
        %2244 = vmatprep.subr.mxu0 0.0
        %2245 = vmatpush2.msra.mxu0 0.0
        %2246 = vmatprep.subr.mxu0 0.0
        %2247 = vmatpush2.msra.mxu0 0.0
        %2248 = vmatprep.subr.mxu0 0.0
        %2249 = vmatpush2.msra.mxu0 0.0
        %2250 = vmatprep.subr.mxu0 0.0
        %2251 = vmatpush2.msra.mxu0 0.0
        %2252 = vmatprep.subr.mxu0 0.0
        %2253 = vmatpush2.msra.mxu0 0.0
        %2254 = vmatprep.subr.mxu0 0.0
        %2255 = vmatpush2.msra.mxu0 0.0
        %2256 = vmatprep.subr.mxu0 0.0
        %2257 = vmatpush2.msra.mxu0 0.0
        %2258 = vmatprep.subr.mxu0 0.0
        %2259 = vmatpush2.msra.mxu0 0.0
        %2260 = vmatprep.subr.mxu0 0.0
        %2261 = vmatpush2.msra.mxu0 0.0
        %2262 = vmatprep.subr.mxu0 0.0
        %2263 = vmatpush2.msra.mxu0 0.0
        %2264 = vmatprep.mubr.f32.mxu0 0.0
        %2265 = vmatmul.mubr.f32.gmra.mxu0 %v2195
        %v2266 = vpop.f32.mrf.mxu0
        %v2267 = vadd.f32 0.0, %v2266
        %v2268 = vpop.f32.mrf.mxu0
        %2269 = vmatprep.mubr.f32.mxu0 0.0
        %2270 = vmatmul.mubr.f32.gmra.mxu0 %v2198
        %v2271 = vpop.f32.mrf.mxu0
        %v2272 = vadd.f32 0.0, %v2271
        %v2273 = vpop.f32.mrf.mxu0
        %2274 = vdwg.mxu0
        %v2276 = vsel %vm1180, %v2185, 0
        %v2279 = vsel %vm1180, %v2186, 0
        %2281 = vmatprep.subr.mxu0 0.0
        %2282 = vmatpush1.msra.mxu0 0.0
        %2283 = vmatprep.subr.mxu0 0.0
        %2284 = vmatpush1.msra.mxu0 0.0
        %2285 = vmatprep.subr.mxu0 0.0
        %2286 = vmatpush1.msra.mxu0 0.0
        %2287 = vmatprep.subr.mxu0 0.0
        %2288 = vmatpush1.msra.mxu0 0.0
        %2289 = vmatprep.subr.mxu0 0.0
        %2290 = vmatpush1.msra.mxu0 0.0
        %2291 = vmatprep.subr.mxu0 0.0
        %2292 = vmatpush1.msra.mxu0 0.0
        %2293 = vmatprep.subr.mxu0 0.0
        %2294 = vmatpush1.msra.mxu0 0.0
        %2295 = vmatprep.subr.mxu0 0.0
        %2296 = vmatpush1.msra.mxu0 0.0
        %2297 = vmatprep.subr.mxu0 0.0
        %2298 = vmatpush1.msra.mxu0 0.0
        %2299 = vmatprep.subr.mxu0 0.0
        %2300 = vmatpush1.msra.mxu0 0.0
        %2301 = vmatprep.subr.mxu0 0.0
        %2302 = vmatpush1.msra.mxu0 0.0
        %2303 = vmatprep.subr.mxu0 0.0
        %2304 = vmatpush1.msra.mxu0 0.0
        %2305 = vmatprep.subr.mxu0 0.0
        %2306 = vmatpush1.msra.mxu0 0.0
        %2307 = vmatprep.subr.mxu0 0.0
        %2308 = vmatpush1.msra.mxu0 0.0
        %2309 = vmatprep.subr.mxu0 0.0
        %2310 = vmatpush1.msra.mxu0 %v2193
        %2311 = vmatprep.subr.mxu0 0.0
        %2312 = vmatpush1.msra.mxu0 %v2192
        %2313 = vmatprep.subr.mxu0 0.0
        %2314 = vmatpush2.msra.mxu0 0.0
        %2315 = vmatprep.subr.mxu0 0.0
        %2316 = vmatpush2.msra.mxu0 0.0
        %2317 = vmatprep.subr.mxu0 0.0
        %2318 = vmatpush2.msra.mxu0 0.0
        %2319 = vmatprep.subr.mxu0 0.0
        %2320 = vmatpush2.msra.mxu0 0.0
        %2321 = vmatprep.subr.mxu0 0.0
        %2322 = vmatpush2.msra.mxu0 0.0
        %2323 = vmatprep.subr.mxu0 0.0
        %2324 = vmatpush2.msra.mxu0 0.0
        %2325 = vmatprep.subr.mxu0 0.0
        %2326 = vmatpush2.msra.mxu0 0.0
        %2327 = vmatprep.subr.mxu0 0.0
        %2328 = vmatpush2.msra.mxu0 0.0
        %2329 = vmatprep.subr.mxu0 0.0
        %2330 = vmatpush2.msra.mxu0 0.0
        %2331 = vmatprep.subr.mxu0 0.0
        %2332 = vmatpush2.msra.mxu0 0.0
        %2333 = vmatprep.subr.mxu0 0.0
        %2334 = vmatpush2.msra.mxu0 0.0
        %2335 = vmatprep.subr.mxu0 0.0
        %2336 = vmatpush2.msra.mxu0 0.0
        %2337 = vmatprep.subr.mxu0 0.0
        %2338 = vmatpush2.msra.mxu0 0.0
        %2339 = vmatprep.subr.mxu0 0.0
        %2340 = vmatpush2.msra.mxu0 0.0
        %2341 = vmatprep.subr.mxu0 0.0
        %2342 = vmatpush2.msra.mxu0 0.0
        %2343 = vmatprep.subr.mxu0 0.0
        %2344 = vmatpush2.msra.mxu0 0.0
        %2345 = vmatprep.mubr.f32.mxu0 0.0
        %2346 = vmatmul.mubr.f32.gmra.mxu0 %v2276
        %v2347 = vpop.f32.mrf.mxu0
        %v2348 = vadd.f32 0.0, %v2347
        %v2349 = vpop.f32.mrf.mxu0
        %2350 = vmatprep.mubr.f32.mxu0 0.0
        %2351 = vmatmul.mubr.f32.gmra.mxu0 %v2279
        %v2352 = vpop.f32.mrf.mxu0
        %v2353 = vadd.f32 0.0, %v2352
        %v2354 = vpop.f32.mrf.mxu0
        %2355 = vdwg.mxu0
        %v2356 = vadd.f32 %v1872, %v2267
        %v2357 = vadd.f32 %v1877, %v2272
        %v2358 = vadd.f32 %v1953, %v2348
        %v2359 = vadd.f32 %v1958, %v2353
        %2360 = vrot.lane.b32.xlu0 %v1150, 80
        %v2361 = vpop.permute.xlu0 %2360
        %2362 = vrot.lane.b32.xlu0 %v1156, 80
        %v2363 = vpop.permute.xlu0 %2362
        %2364 = vrot.lane.b32.xlu0 %v1150, 16
        %v2365 = vpop.permute.xlu0 %2364
        %2366 = vrot.lane.b32.xlu0 %v1156, 16
        %v2367 = vpop.permute.xlu0 %2366
        %v2368 = vsel %vm1180, %v2361, 0
        %v2370 = vsel %vm1180, %v2363, 0
        %v2372 = vsel %vm1180, %v2365, 0
        %v2374 = vsel %vm1180, %v2367, 0
        %2376 = vmatprep.subr.mxu0 0.0
        %2377 = vmatpush1.xpose.msra.mxu0 0.0
        %2378 = vmatprep.subr.mxu0 0.0
        %2379 = vmatpush1.xpose.msra.mxu0 0.0
        %2380 = vmatprep.subr.mxu0 0.0
        %2381 = vmatpush1.xpose.msra.mxu0 0.0
        %2382 = vmatprep.subr.mxu0 0.0
        %2383 = vmatpush1.xpose.msra.mxu0 0.0
        %2384 = vmatprep.subr.mxu0 0.0
        %2385 = vmatpush1.xpose.msra.mxu0 0.0
        %2386 = vmatprep.subr.mxu0 0.0
        %2387 = vmatpush1.xpose.msra.mxu0 0.0
        %2388 = vmatprep.subr.mxu0 0.0
        %2389 = vmatpush1.xpose.msra.mxu0 0.0
        %2390 = vmatprep.subr.mxu0 0.0
        %2391 = vmatpush1.xpose.msra.mxu0 0.0
        %2392 = vmatprep.subr.mxu0 0.0
        %2393 = vmatpush1.xpose.msra.mxu0 0.0
        %2394 = vmatprep.subr.mxu0 0.0
        %2395 = vmatpush1.xpose.msra.mxu0 0.0
        %2396 = vmatprep.subr.mxu0 0.0
        %2397 = vmatpush1.xpose.msra.mxu0 0.0
        %2398 = vmatprep.subr.mxu0 0.0
        %2399 = vmatpush1.xpose.msra.mxu0 0.0
        %2400 = vmatprep.subr.mxu0 0.0
        %2401 = vmatpush1.xpose.msra.mxu0 0.0
        %2402 = vmatprep.subr.mxu0 0.0
        %2403 = vmatpush1.xpose.msra.mxu0 0.0
        %2404 = vmatprep.subr.mxu0 0.0
        %2405 = vmatpush1.xpose.msra.mxu0 %v2374
        %2406 = vmatprep.subr.mxu0 0.0
        %2407 = vmatpush1.xpose.msra.mxu0 %v2372
        %2408 = vmatprep.subr.mxu0 0.0
        %2409 = vmatpush2.xpose.msra.mxu0 0.0
        %2410 = vmatprep.subr.mxu0 0.0
        %2411 = vmatpush2.xpose.msra.mxu0 0.0
        %2412 = vmatprep.subr.mxu0 0.0
        %2413 = vmatpush2.xpose.msra.mxu0 0.0
        %2414 = vmatprep.subr.mxu0 0.0
        %2415 = vmatpush2.xpose.msra.mxu0 0.0
        %2416 = vmatprep.subr.mxu0 0.0
        %2417 = vmatpush2.xpose.msra.mxu0 0.0
        %2418 = vmatprep.subr.mxu0 0.0
        %2419 = vmatpush2.xpose.msra.mxu0 0.0
        %2420 = vmatprep.subr.mxu0 0.0
        %2421 = vmatpush2.xpose.msra.mxu0 0.0
        %2422 = vmatprep.subr.mxu0 0.0
        %2423 = vmatpush2.xpose.msra.mxu0 0.0
        %2424 = vmatprep.subr.mxu0 0.0
        %2425 = vmatpush2.xpose.msra.mxu0 0.0
        %2426 = vmatprep.subr.mxu0 0.0
        %2427 = vmatpush2.xpose.msra.mxu0 0.0
        %2428 = vmatprep.subr.mxu0 0.0
        %2429 = vmatpush2.xpose.msra.mxu0 0.0
        %2430 = vmatprep.subr.mxu0 0.0
        %2431 = vmatpush2.xpose.msra.mxu0 0.0
        %2432 = vmatprep.subr.mxu0 0.0
        %2433 = vmatpush2.xpose.msra.mxu0 0.0
        %2434 = vmatprep.subr.mxu0 0.0
        %2435 = vmatpush2.xpose.msra.mxu0 0.0
        %2436 = vmatprep.subr.mxu0 0.0
        %2437 = vmatpush2.xpose.msra.mxu0 0.0
        %2438 = vmatprep.subr.mxu0 0.0
        %2439 = vmatpush2.xpose.msra.mxu0 0.0
        %2440 = vmatprep.mubr.f32.mxu0 0.0
        %2441 = vmatmul.mubr.f32.gmra.mxu0 %v2368
        %v2442 = vpop.f32.mrf.mxu0
        %v2443 = vadd.f32 0.0, %v2442
        %v2444 = vpop.f32.mrf.mxu0
        %2445 = vmatprep.mubr.f32.mxu0 0.0
        %2446 = vmatmul.mubr.f32.gmra.mxu0 %v2370
        %v2447 = vpop.f32.mrf.mxu0
        %v2448 = vadd.f32 0.0, %v2447
        %v2449 = vpop.f32.mrf.mxu0
        %2450 = vdwg.mxu0
        %2451 = vrot.lane.b32.xlu0 %v1162, 80
        %v2452 = vpop.permute.xlu0 %2451
        %2453 = vrot.lane.b32.xlu0 %v1168, 80
        %v2454 = vpop.permute.xlu0 %2453
        %2455 = vrot.lane.b32.xlu0 %v1162, 16
        %v2456 = vpop.permute.xlu0 %2455
        %2457 = vrot.lane.b32.xlu0 %v1168, 16
        %v2458 = vpop.permute.xlu0 %2457
        %v2459 = vsel %vm1180, %v2452, 0
        %v2461 = vsel %vm1180, %v2454, 0
        %v2463 = vsel %vm1180, %v2456, 0
        %v2465 = vsel %vm1180, %v2458, 0
        %2467 = vmatprep.subr.mxu0 0.0
        %2468 = vmatpush1.xpose.msra.mxu0 0.0
        %2469 = vmatprep.subr.mxu0 0.0
        %2470 = vmatpush1.xpose.msra.mxu0 0.0
        %2471 = vmatprep.subr.mxu0 0.0
        %2472 = vmatpush1.xpose.msra.mxu0 0.0
        %2473 = vmatprep.subr.mxu0 0.0
        %2474 = vmatpush1.xpose.msra.mxu0 0.0
        %2475 = vmatprep.subr.mxu0 0.0
        %2476 = vmatpush1.xpose.msra.mxu0 0.0
        %2477 = vmatprep.subr.mxu0 0.0
        %2478 = vmatpush1.xpose.msra.mxu0 0.0
        %2479 = vmatprep.subr.mxu0 0.0
        %2480 = vmatpush1.xpose.msra.mxu0 0.0
        %2481 = vmatprep.subr.mxu0 0.0
        %2482 = vmatpush1.xpose.msra.mxu0 0.0
        %2483 = vmatprep.subr.mxu0 0.0
        %2484 = vmatpush1.xpose.msra.mxu0 0.0
        %2485 = vmatprep.subr.mxu0 0.0
        %2486 = vmatpush1.xpose.msra.mxu0 0.0
        %2487 = vmatprep.subr.mxu0 0.0
        %2488 = vmatpush1.xpose.msra.mxu0 0.0
        %2489 = vmatprep.subr.mxu0 0.0
        %2490 = vmatpush1.xpose.msra.mxu0 0.0
        %2491 = vmatprep.subr.mxu0 0.0
        %2492 = vmatpush1.xpose.msra.mxu0 0.0
        %2493 = vmatprep.subr.mxu0 0.0
        %2494 = vmatpush1.xpose.msra.mxu0 0.0
        %2495 = vmatprep.subr.mxu0 0.0
        %2496 = vmatpush1.xpose.msra.mxu0 %v2465
        %2497 = vmatprep.subr.mxu0 0.0
        %2498 = vmatpush1.xpose.msra.mxu0 %v2463
        %2499 = vmatprep.subr.mxu0 0.0
        %2500 = vmatpush2.xpose.msra.mxu0 0.0
        %2501 = vmatprep.subr.mxu0 0.0
        %2502 = vmatpush2.xpose.msra.mxu0 0.0
        %2503 = vmatprep.subr.mxu0 0.0
        %2504 = vmatpush2.xpose.msra.mxu0 0.0
        %2505 = vmatprep.subr.mxu0 0.0
        %2506 = vmatpush2.xpose.msra.mxu0 0.0
        %2507 = vmatprep.subr.mxu0 0.0
        %2508 = vmatpush2.xpose.msra.mxu0 0.0
        %2509 = vmatprep.subr.mxu0 0.0
        %2510 = vmatpush2.xpose.msra.mxu0 0.0
        %2511 = vmatprep.subr.mxu0 0.0
        %2512 = vmatpush2.xpose.msra.mxu0 0.0
        %2513 = vmatprep.subr.mxu0 0.0
        %2514 = vmatpush2.xpose.msra.mxu0 0.0
        %2515 = vmatprep.subr.mxu0 0.0
        %2516 = vmatpush2.xpose.msra.mxu0 0.0
        %2517 = vmatprep.subr.mxu0 0.0
        %2518 = vmatpush2.xpose.msra.mxu0 0.0
        %2519 = vmatprep.subr.mxu0 0.0
        %2520 = vmatpush2.xpose.msra.mxu0 0.0
        %2521 = vmatprep.subr.mxu0 0.0
        %2522 = vmatpush2.xpose.msra.mxu0 0.0
        %2523 = vmatprep.subr.mxu0 0.0
        %2524 = vmatpush2.xpose.msra.mxu0 0.0
        %2525 = vmatprep.subr.mxu0 0.0
        %2526 = vmatpush2.xpose.msra.mxu0 0.0
        %2527 = vmatprep.subr.mxu0 0.0
        %2528 = vmatpush2.xpose.msra.mxu0 0.0
        %2529 = vmatprep.subr.mxu0 0.0
        %2530 = vmatpush2.xpose.msra.mxu0 0.0
        %2531 = vmatprep.mubr.f32.mxu0 0.0
        %2532 = vmatmul.mubr.f32.gmra.mxu0 %v2459
        %v2533 = vpop.f32.mrf.mxu0
        %v2534 = vadd.f32 0.0, %v2533
        %v2535 = vpop.f32.mrf.mxu0
        %2536 = vmatprep.mubr.f32.mxu0 0.0
        %2537 = vmatmul.mubr.f32.gmra.mxu0 %v2461
        %v2538 = vpop.f32.mrf.mxu0
        %v2539 = vadd.f32 0.0, %v2538
        %v2540 = vpop.f32.mrf.mxu0
        %2541 = vdwg.mxu0
        %v2542 = vsel %vm1180, %v2443, -inf
        %2543 = vmax.xlane.f32.xlu0 %v2542
        %v2544 = vpop.xlane.xlu0 %2543
        %v2545 = vsel %vm1180, %v2448, -inf
        %2546 = vmax.xlane.f32.xlu0 %v2545
        %v2547 = vpop.xlane.xlu0 %2546
        %v2548 = vsel %vm1180, %v2534, -inf
        %2549 = vmax.xlane.f32.xlu0 %v2548
        %v2550 = vpop.xlane.xlu0 %2549
        %v2551 = vsel %vm1180, %v2539, -inf
        %2552 = vmax.xlane.f32.xlu0 %v2551
        %v2553 = vpop.xlane.xlu0 %2552
        %v2554 = vsub.f32 %v2443, %v2544
        %v2555 = vsub.f32 %v2448, %v2547
        %v2556 = vsub.f32 %v2534, %v2550
        %v2557 = vsub.f32 %v2539, %v2553
        %v2558 = vmul.f32 %v2554, 1.442695
        %v2559 = vpow.pop %v2558
        %v2560 = vmul.f32 %v2555, 1.442695
        %v2561 = vpow.pop %v2560
        %v2562 = vmul.f32 %v2556, 1.442695
        %v2563 = vpow.pop %v2562
        %v2564 = vmul.f32 %v2557, 1.442695
        %v2565 = vpow.pop %v2564
        %v2566 = vsel %vm1180, %v2559, 0.0
        %2567 = vadd.xlane.f32.xlu0 %v2566
        %v2568 = vpop.xlane.xlu0 %2567
        %v2569 = vsel %vm1180, %v2561, 0.0
        %2570 = vadd.xlane.f32.xlu0 %v2569
        %v2571 = vpop.xlane.xlu0 %2570
        %v2572 = vsel %vm1180, %v2563, 0.0
        %2573 = vadd.xlane.f32.xlu0 %v2572
        %v2574 = vpop.xlane.xlu0 %2573
        %v2575 = vsel %vm1180, %v2565, 0.0
        %2576 = vadd.xlane.f32.xlu0 %v2575
        %v2577 = vpop.xlane.xlu0 %2576
        %v2578 = vrcp.pop %v2568
        %v2579 = vrcp.pop %v2571
        %v2580 = vrcp.pop %v2574
        %v2581 = vrcp.pop %v2577
        %v2582 = vmul.f32 %v2559, %v2578
        %v2583 = vmul.f32 %v2561, %v2579
        %v2584 = vmul.f32 %v2563, %v2580
        %v2585 = vmul.f32 %v2565, %v2581
        %vm2586 = vcmp.ge.s32.totalorder %v1173, 48
        %vm2587 = vcmp.lt.s32.totalorder %v1173, 64
        %vm2588 = vmand %vm2586, %vm2587
        %v2589 = vsel %vm2588, %v1152, 0.0
        %v2590 = vsel %vm2588, %v1158, 0.0
        %v2591 = vsel %vm2588, %v1164, 0.0
        %v2592 = vsel %vm2588, %v1170, 0.0
        %v2594 = vsel %vm1180, %v2582, 0
        %v2597 = vsel %vm1180, %v2583, 0
        %2599 = vmatprep.subr.mxu0 0.0
        %2600 = vmatpush1.msra.mxu0 0.0
        %2601 = vmatprep.subr.mxu0 0.0
        %2602 = vmatpush1.msra.mxu0 0.0
        %2603 = vmatprep.subr.mxu0 0.0
        %2604 = vmatpush1.msra.mxu0 0.0
        %2605 = vmatprep.subr.mxu0 0.0
        %2606 = vmatpush1.msra.mxu0 0.0
        %2607 = vmatprep.subr.mxu0 0.0
        %2608 = vmatpush1.msra.mxu0 0.0
        %2609 = vmatprep.subr.mxu0 0.0
        %2610 = vmatpush1.msra.mxu0 0.0
        %2611 = vmatprep.subr.mxu0 0.0
        %2612 = vmatpush1.msra.mxu0 0.0
        %2613 = vmatprep.subr.mxu0 0.0
        %2614 = vmatpush1.msra.mxu0 0.0
        %2615 = vmatprep.subr.mxu0 0.0
        %2616 = vmatpush1.msra.mxu0 0.0
        %2617 = vmatprep.subr.mxu0 0.0
        %2618 = vmatpush1.msra.mxu0 0.0
        %2619 = vmatprep.subr.mxu0 0.0
        %2620 = vmatpush1.msra.mxu0 0.0
        %2621 = vmatprep.subr.mxu0 0.0
        %2622 = vmatpush1.msra.mxu0 0.0
        %2623 = vmatprep.subr.mxu0 0.0
        %2624 = vmatpush1.msra.mxu0 0.0
        %2625 = vmatprep.subr.mxu0 0.0
        %2626 = vmatpush1.msra.mxu0 0.0
        %2627 = vmatprep.subr.mxu0 0.0
        %2628 = vmatpush1.msra.mxu0 %v2590
        %2629 = vmatprep.subr.mxu0 0.0
        %2630 = vmatpush1.msra.mxu0 %v2589
        %2631 = vmatprep.subr.mxu0 0.0
        %2632 = vmatpush2.msra.mxu0 0.0
        %2633 = vmatprep.subr.mxu0 0.0
        %2634 = vmatpush2.msra.mxu0 0.0
        %2635 = vmatprep.subr.mxu0 0.0
        %2636 = vmatpush2.msra.mxu0 0.0
        %2637 = vmatprep.subr.mxu0 0.0
        %2638 = vmatpush2.msra.mxu0 0.0
        %2639 = vmatprep.subr.mxu0 0.0
        %2640 = vmatpush2.msra.mxu0 0.0
        %2641 = vmatprep.subr.mxu0 0.0
        %2642 = vmatpush2.msra.mxu0 0.0
        %2643 = vmatprep.subr.mxu0 0.0
        %2644 = vmatpush2.msra.mxu0 0.0
        %2645 = vmatprep.subr.mxu0 0.0
        %2646 = vmatpush2.msra.mxu0 0.0
        %2647 = vmatprep.subr.mxu0 0.0
        %2648 = vmatpush2.msra.mxu0 0.0
        %2649 = vmatprep.subr.mxu0 0.0
        %2650 = vmatpush2.msra.mxu0 0.0
        %2651 = vmatprep.subr.mxu0 0.0
        %2652 = vmatpush2.msra.mxu0 0.0
        %2653 = vmatprep.subr.mxu0 0.0
        %2654 = vmatpush2.msra.mxu0 0.0
        %2655 = vmatprep.subr.mxu0 0.0
        %2656 = vmatpush2.msra.mxu0 0.0
        %2657 = vmatprep.subr.mxu0 0.0
        %2658 = vmatpush2.msra.mxu0 0.0
        %2659 = vmatprep.subr.mxu0 0.0
        %2660 = vmatpush2.msra.mxu0 0.0
        %2661 = vmatprep.subr.mxu0 0.0
        %2662 = vmatpush2.msra.mxu0 0.0
        %2663 = vmatprep.mubr.f32.mxu0 0.0
        %2664 = vmatmul.mubr.f32.gmra.mxu0 %v2594
        %v2665 = vpop.f32.mrf.mxu0
        %v2666 = vadd.f32 0.0, %v2665
        %v2667 = vpop.f32.mrf.mxu0
        %2668 = vmatprep.mubr.f32.mxu0 0.0
        %2669 = vmatmul.mubr.f32.gmra.mxu0 %v2597
        %v2670 = vpop.f32.mrf.mxu0
        %v2671 = vadd.f32 0.0, %v2670
        %v2672 = vpop.f32.mrf.mxu0
        %2673 = vdwg.mxu0
        %v2675 = vsel %vm1180, %v2584, 0
        %v2678 = vsel %vm1180, %v2585, 0
        %2680 = vmatprep.subr.mxu0 0.0
        %2681 = vmatpush1.msra.mxu0 0.0
        %2682 = vmatprep.subr.mxu0 0.0
        %2683 = vmatpush1.msra.mxu0 0.0
        %2684 = vmatprep.subr.mxu0 0.0
        %2685 = vmatpush1.msra.mxu0 0.0
        %2686 = vmatprep.subr.mxu0 0.0
        %2687 = vmatpush1.msra.mxu0 0.0
        %2688 = vmatprep.subr.mxu0 0.0
        %2689 = vmatpush1.msra.mxu0 0.0
        %2690 = vmatprep.subr.mxu0 0.0
        %2691 = vmatpush1.msra.mxu0 0.0
        %2692 = vmatprep.subr.mxu0 0.0
        %2693 = vmatpush1.msra.mxu0 0.0
        %2694 = vmatprep.subr.mxu0 0.0
        %2695 = vmatpush1.msra.mxu0 0.0
        %2696 = vmatprep.subr.mxu0 0.0
        %2697 = vmatpush1.msra.mxu0 0.0
        %2698 = vmatprep.subr.mxu0 0.0
        %2699 = vmatpush1.msra.mxu0 0.0
        %2700 = vmatprep.subr.mxu0 0.0
        %2701 = vmatpush1.msra.mxu0 0.0
        %2702 = vmatprep.subr.mxu0 0.0
        %2703 = vmatpush1.msra.mxu0 0.0
        %2704 = vmatprep.subr.mxu0 0.0
        %2705 = vmatpush1.msra.mxu0 0.0
        %2706 = vmatprep.subr.mxu0 0.0
        %2707 = vmatpush1.msra.mxu0 0.0
        %2708 = vmatprep.subr.mxu0 0.0
        %2709 = vmatpush1.msra.mxu0 %v2592
        %2710 = vmatprep.subr.mxu0 0.0
        %2711 = vmatpush1.msra.mxu0 %v2591
        %2712 = vmatprep.subr.mxu0 0.0
        %2713 = vmatpush2.msra.mxu0 0.0
        %2714 = vmatprep.subr.mxu0 0.0
        %2715 = vmatpush2.msra.mxu0 0.0
        %2716 = vmatprep.subr.mxu0 0.0
        %2717 = vmatpush2.msra.mxu0 0.0
        %2718 = vmatprep.subr.mxu0 0.0
        %2719 = vmatpush2.msra.mxu0 0.0
        %2720 = vmatprep.subr.mxu0 0.0
        %2721 = vmatpush2.msra.mxu0 0.0
        %2722 = vmatprep.subr.mxu0 0.0
        %2723 = vmatpush2.msra.mxu0 0.0
        %2724 = vmatprep.subr.mxu0 0.0
        %2725 = vmatpush2.msra.mxu0 0.0
        %2726 = vmatprep.subr.mxu0 0.0
        %2727 = vmatpush2.msra.mxu0 0.0
        %2728 = vmatprep.subr.mxu0 0.0
        %2729 = vmatpush2.msra.mxu0 0.0
        %2730 = vmatprep.subr.mxu0 0.0
        %2731 = vmatpush2.msra.mxu0 0.0
        %2732 = vmatprep.subr.mxu0 0.0
        %2733 = vmatpush2.msra.mxu0 0.0
        %2734 = vmatprep.subr.mxu0 0.0
        %2735 = vmatpush2.msra.mxu0 0.0
        %2736 = vmatprep.subr.mxu0 0.0
        %2737 = vmatpush2.msra.mxu0 0.0
        %2738 = vmatprep.subr.mxu0 0.0
        %2739 = vmatpush2.msra.mxu0 0.0
        %2740 = vmatprep.subr.mxu0 0.0
        %2741 = vmatpush2.msra.mxu0 0.0
        %2742 = vmatprep.subr.mxu0 0.0
        %2743 = vmatpush2.msra.mxu0 0.0
        %2744 = vmatprep.mubr.f32.mxu0 0.0
        %2745 = vmatmul.mubr.f32.gmra.mxu0 %v2675
        %v2746 = vpop.f32.mrf.mxu0
        %v2747 = vadd.f32 0.0, %v2746
        %v2748 = vpop.f32.mrf.mxu0
        %2749 = vmatprep.mubr.f32.mxu0 0.0
        %2750 = vmatmul.mubr.f32.gmra.mxu0 %v2678
        %v2751 = vpop.f32.mrf.mxu0
        %v2752 = vadd.f32 0.0, %v2751
        %v2753 = vpop.f32.mrf.mxu0
        %2754 = vdwg.mxu0
        %v2755 = vadd.f32 %v2356, %v2666
        %v2756 = vadd.f32 %v2357, %v2671
        %v2757 = vadd.f32 %v2358, %v2747
        %v2758 = vadd.f32 %v2359, %v2752
        %v2759 = vld [vmem:[%s982] sm:$0xff]
        %v2760 = vld [vmem:[%s982 + $0x8] sm:$0xff]
        %v2761 = vld [vmem:[%s982 + $0x10] sm:$0xff]
        %v2762 = vld [vmem:[%s982 + $0x18] sm:$0xff]
        %v2763 = vld [vmem:[%s982 + $0x20] sm:$0xff]
        %v2764 = vld [vmem:[%s982 + $0x28] sm:$0xff]
        %v2765 = vld [vmem:[%s982 + $0x30] sm:$0xff]
        %v2766 = vld [vmem:[%s982 + $0x38] sm:$0xff]
        %v2767 = vld [vmem:[%s985] sm:$0x1]
        %v2769 = vlaneseq
        %v2770 = vshrl.u32 %v2769, 7
        %v2771 = vsub.s32 0, %v2770
        %v2772 = vrot.slane %v2767, %v2771
        %v2775 = vsel %vm1070, %v2755, 0
        %v2778 = vsel %vm1070, %v2756, 0
        %v2781 = vsel %vm1070, %v2757, 0
        %v2784 = vsel %vm1070, %v2758, 0
        %2786 = vmatprep.subr.mxu0 0.0
        %2787 = vmatpush1.msra.mxu0 0.0
        %2788 = vmatprep.subr.mxu0 0.0
        %2789 = vmatpush1.msra.mxu0 0.0
        %2790 = vmatprep.subr.mxu0 0.0
        %2791 = vmatpush1.msra.mxu0 0.0
        %2792 = vmatprep.subr.mxu0 0.0
        %2793 = vmatpush1.msra.mxu0 0.0
        %2794 = vmatprep.subr.mxu0 0.0
        %2795 = vmatpush1.msra.mxu0 0.0
        %2796 = vmatprep.subr.mxu0 0.0
        %2797 = vmatpush1.msra.mxu0 0.0
        %2798 = vmatprep.subr.mxu0 0.0
        %2799 = vmatpush1.msra.mxu0 0.0
        %2800 = vmatprep.subr.mxu0 0.0
        %2801 = vmatpush1.msra.mxu0 0.0
        %2802 = vmatprep.subr.mxu0 0.0
        %2803 = vmatpush1.msra.mxu0 %v2766
        %2804 = vmatprep.subr.mxu0 0.0
        %2805 = vmatpush1.msra.mxu0 %v2765
        %2806 = vmatprep.subr.mxu0 0.0
        %2807 = vmatpush1.msra.mxu0 %v2764
        %2808 = vmatprep.subr.mxu0 0.0
        %2809 = vmatpush1.msra.mxu0 %v2763
        %2810 = vmatprep.subr.mxu0 0.0
        %2811 = vmatpush1.msra.mxu0 %v2762
        %2812 = vmatprep.subr.mxu0 0.0
        %2813 = vmatpush1.msra.mxu0 %v2761
        %2814 = vmatprep.subr.mxu0 0.0
        %2815 = vmatpush1.msra.mxu0 %v2760
        %2816 = vmatprep.subr.mxu0 0.0
        %2817 = vmatpush1.msra.mxu0 %v2759
        %2818 = vmatprep.subr.mxu0 0.0
        %2819 = vmatpush2.msra.mxu0 0.0
        %2820 = vmatprep.subr.mxu0 0.0
        %2821 = vmatpush2.msra.mxu0 0.0
        %2822 = vmatprep.subr.mxu0 0.0
        %2823 = vmatpush2.msra.mxu0 0.0
        %2824 = vmatprep.subr.mxu0 0.0
        %2825 = vmatpush2.msra.mxu0 0.0
        %2826 = vmatprep.subr.mxu0 0.0
        %2827 = vmatpush2.msra.mxu0 0.0
        %2828 = vmatprep.subr.mxu0 0.0
        %2829 = vmatpush2.msra.mxu0 0.0
        %2830 = vmatprep.subr.mxu0 0.0
        %2831 = vmatpush2.msra.mxu0 0.0
        %2832 = vmatprep.subr.mxu0 0.0
        %2833 = vmatpush2.msra.mxu0 0.0
        %2834 = vmatprep.subr.mxu0 0.0
        %2835 = vmatpush2.msra.mxu0 0.0
        %2836 = vmatprep.subr.mxu0 0.0
        %2837 = vmatpush2.msra.mxu0 0.0
        %2838 = vmatprep.subr.mxu0 0.0
        %2839 = vmatpush2.msra.mxu0 0.0
        %2840 = vmatprep.subr.mxu0 0.0
        %2841 = vmatpush2.msra.mxu0 0.0
        %2842 = vmatprep.subr.mxu0 0.0
        %2843 = vmatpush2.msra.mxu0 0.0
        %2844 = vmatprep.subr.mxu0 0.0
        %2845 = vmatpush2.msra.mxu0 0.0
        %2846 = vmatprep.subr.mxu0 0.0
        %2847 = vmatpush2.msra.mxu0 0.0
        %2848 = vmatprep.subr.mxu0 0.0
        %2849 = vmatpush2.msra.mxu0 0.0
        %2850 = vmatprep.mubr.f32.mxu0 0.0
        %2851 = vmatmul.mubr.f32.gmra.mxu0 %v2775
        %v2852 = vpop.f32.mrf.mxu0
        %v2853 = vadd.f32 %v2772, %v2852
        %v2854 = vpop.f32.mrf.mxu0
        %2855 = vmatprep.mubr.f32.mxu0 0.0
        %2856 = vmatmul.mubr.f32.gmra.mxu0 %v2778
        %v2857 = vpop.f32.mrf.mxu0
        %v2858 = vadd.f32 %v2772, %v2857
        %v2859 = vpop.f32.mrf.mxu0
        %2860 = vmatprep.mubr.f32.mxu0 0.0
        %2861 = vmatmul.mubr.f32.gmra.mxu0 %v2781
        %v2862 = vpop.f32.mrf.mxu0
        %v2863 = vadd.f32 %v2772, %v2862
        %v2864 = vpop.f32.mrf.mxu0
        %2865 = vmatprep.mubr.f32.mxu0 0.0
        %2866 = vmatmul.mubr.f32.gmra.mxu0 %v2784
        %v2867 = vpop.f32.mrf.mxu0
        %v2868 = vadd.f32 %v2772, %v2867
        %v2869 = vpop.f32.mrf.mxu0
        %2870 = vdwg.mxu0
        %v2871 = vadd.f32 %v1029, %v2853
        %v2872 = vadd.f32 %v1030, %v2858
        %v2873 = vadd.f32 %v1031, %v2863
        %v2874 = vadd.f32 %v1032, %v2868
        %v2875 = vsel %vm1070, %v2871, 0.0
        %2876 = vadd.xlane.f32.xlu0 %v2875
        %v2877 = vpop.xlane.xlu0 %2876
        %v2878 = vsel %vm1070, %v2872, 0.0
        %2879 = vadd.xlane.f32.xlu0 %v2878
        %v2880 = vpop.xlane.xlu0 %2879
        %v2881 = vsel %vm1070, %v2873, 0.0
        %2882 = vadd.xlane.f32.xlu0 %v2881
        %v2883 = vpop.xlane.xlu0 %2882
        %v2884 = vsel %vm1070, %v2874, 0.0
        %2885 = vadd.xlane.f32.xlu0 %v2884
        %v2886 = vpop.xlane.xlu0 %2885
        %v2887 = vrcp.pop 64.0
        %v2888 = vmul.f32 %v2877, %v2887
        %v2889 = vmul.f32 %v2880, %v2887
        %v2890 = vmul.f32 %v2883, %v2887
        %v2891 = vmul.f32 %v2886, %v2887
        %v2892 = vsub.f32 %v2871, %v2888
        %v2893 = vsub.f32 %v2872, %v2889
        %v2894 = vsub.f32 %v2873, %v2890
        %v2895 = vsub.f32 %v2874, %v2891
        %v2896 = vmul.f32 %v2892, %v2892
        %v2897 = vmul.f32 %v2893, %v2893
        %v2898 = vmul.f32 %v2894, %v2894
        %v2899 = vmul.f32 %v2895, %v2895
        %v2900 = vsel %vm1070, %v2896, 0.0
        %2901 = vadd.xlane.f32.xlu0 %v2900
        %v2902 = vpop.xlane.xlu0 %2901
        %v2903 = vsel %vm1070, %v2897, 0.0
        %2904 = vadd.xlane.f32.xlu0 %v2903
        %v2905 = vpop.xlane.xlu0 %2904
        %v2906 = vsel %vm1070, %v2898, 0.0
        %2907 = vadd.xlane.f32.xlu0 %v2906
        %v2908 = vpop.xlane.xlu0 %2907
        %v2909 = vsel %vm1070, %v2899, 0.0
        %2910 = vadd.xlane.f32.xlu0 %v2909
        %v2911 = vpop.xlane.xlu0 %2910
        %v2912 = vmul.f32 %v2902, %v2887
        %v2913 = vmul.f32 %v2905, %v2887
        %v2914 = vmul.f32 %v2908, %v2887
        %v2915 = vmul.f32 %v2911, %v2887
        %v2916 = vadd.f32 %v2912, 1e-05
        %v2917 = vadd.f32 %v2913, 1e-05
        %v2918 = vadd.f32 %v2914, 1e-05
        %v2919 = vadd.f32 %v2915, 1e-05
        %v2920 = vrsqrt.pop %v2916
        %v2921 = vrsqrt.pop %v2917
        %v2922 = vrsqrt.pop %v2918
        %v2923 = vrsqrt.pop %v2919
        %v2924 = vmul.f32 %v2892, %v2920
        %v2925 = vmul.f32 %v2893, %v2921
        %v2926 = vmul.f32 %v2894, %v2922
        %v2927 = vmul.f32 %v2895, %v2923
        %v2928 = vlaneseq
        %v2929 = vshrl.u32 %v2928, 7
        %v2930 = vsub.s32 0, %v2929
        %v2931 = vrot.slane %v1041, %v2930
        %v2932 = vmul.f32 %v2924, %v2931
        %v2933 = vmul.f32 %v2925, %v2931
        %v2934 = vmul.f32 %v2926, %v2931
        %v2935 = vmul.f32 %v2927, %v2931
        %v2936 = vlaneseq
        %v2937 = vshrl.u32 %v2936, 7
        %v2938 = vsub.s32 1, %v2937
        %v2939 = vrot.slane %v1041, %v2938
        %v2940 = vadd.f32 %v2932, %v2939
        %v2941 = vadd.f32 %v2933, %v2939
        %v2942 = vadd.f32 %v2934, %v2939
        %v2943 = vadd.f32 %v2935, %v2939
        %v2944 = vld [vmem:[%s813] sm:$0xff]
        %v2945 = vld [vmem:[%s813 + $0x8] sm:$0xff]
        %v2946 = vld [vmem:[%s813 + $0x10] sm:$0xff]
        %v2947 = vld [vmem:[%s813 + $0x18] sm:$0xff]
        %v2948 = vld [vmem:[%s813 + $0x20] sm:$0xff]
        %v2949 = vld [vmem:[%s813 + $0x28] sm:$0xff]
        %v2950 = vld [vmem:[%s813 + $0x30] sm:$0xff]
        %v2951 = vld [vmem:[%s813 + $0x38] sm:$0xff]
        %v2952 = vld [vmem:[%s988] sm:$0x1]
        %v2954 = vlaneseq
        %v2955 = vshrl.u32 %v2954, 7
        %v2956 = vsub.s32 0, %v2955
        %v2957 = vrot.slane %v2952, %v2956
        %v2960 = vsel %vm1070, %v2940, 0
        %v2963 = vsel %vm1070, %v2941, 0
        %v2966 = vsel %vm1070, %v2942, 0
        %v2969 = vsel %vm1070, %v2943, 0
        %2971 = vmatprep.subr.mxu0 0.0
        %2972 = vmatpush1.msra.mxu0 0.0
        %2973 = vmatprep.subr.mxu0 0.0
        %2974 = vmatpush1.msra.mxu0 0.0
        %2975 = vmatprep.subr.mxu0 0.0
        %2976 = vmatpush1.msra.mxu0 0.0
        %2977 = vmatprep.subr.mxu0 0.0
        %2978 = vmatpush1.msra.mxu0 0.0
        %2979 = vmatprep.subr.mxu0 0.0
        %2980 = vmatpush1.msra.mxu0 0.0
        %2981 = vmatprep.subr.mxu0 0.0
        %2982 = vmatpush1.msra.mxu0 0.0
        %2983 = vmatprep.subr.mxu0 0.0
        %2984 = vmatpush1.msra.mxu0 0.0
        %2985 = vmatprep.subr.mxu0 0.0
        %2986 = vmatpush1.msra.mxu0 0.0
        %2987 = vmatprep.subr.mxu0 0.0
        %2988 = vmatpush1.msra.mxu0 %v2951
        %2989 = vmatprep.subr.mxu0 0.0
        %2990 = vmatpush1.msra.mxu0 %v2950
        %2991 = vmatprep.subr.mxu0 0.0
        %2992 = vmatpush1.msra.mxu0 %v2949
        %2993 = vmatprep.subr.mxu0 0.0
        %2994 = vmatpush1.msra.mxu0 %v2948
        %2995 = vmatprep.subr.mxu0 0.0
        %2996 = vmatpush1.msra.mxu0 %v2947
        %2997 = vmatprep.subr.mxu0 0.0
        %2998 = vmatpush1.msra.mxu0 %v2946
        %2999 = vmatprep.subr.mxu0 0.0
        %3000 = vmatpush1.msra.mxu0 %v2945
        %3001 = vmatprep.subr.mxu0 0.0
        %3002 = vmatpush1.msra.mxu0 %v2944
        %3003 = vmatprep.subr.mxu0 0.0
        %3004 = vmatpush2.msra.mxu0 0.0
        %3005 = vmatprep.subr.mxu0 0.0
        %3006 = vmatpush2.msra.mxu0 0.0
        %3007 = vmatprep.subr.mxu0 0.0
        %3008 = vmatpush2.msra.mxu0 0.0
        %3009 = vmatprep.subr.mxu0 0.0
        %3010 = vmatpush2.msra.mxu0 0.0
        %3011 = vmatprep.subr.mxu0 0.0
        %3012 = vmatpush2.msra.mxu0 0.0
        %3013 = vmatprep.subr.mxu0 0.0
        %3014 = vmatpush2.msra.mxu0 0.0
        %3015 = vmatprep.subr.mxu0 0.0
        %3016 = vmatpush2.msra.mxu0 0.0
        %3017 = vmatprep.subr.mxu0 0.0
        %3018 = vmatpush2.msra.mxu0 0.0
        %3019 = vmatprep.subr.mxu0 0.0
        %3020 = vmatpush2.msra.mxu0 0.0
        %3021 = vmatprep.subr.mxu0 0.0
        %3022 = vmatpush2.msra.mxu0 0.0
        %3023 = vmatprep.subr.mxu0 0.0
        %3024 = vmatpush2.msra.mxu0 0.0
        %3025 = vmatprep.subr.mxu0 0.0
        %3026 = vmatpush2.msra.mxu0 0.0
        %3027 = vmatprep.subr.mxu0 0.0
        %3028 = vmatpush2.msra.mxu0 0.0
        %3029 = vmatprep.subr.mxu0 0.0
        %3030 = vmatpush2.msra.mxu0 0.0
        %3031 = vmatprep.subr.mxu0 0.0
        %3032 = vmatpush2.msra.mxu0 0.0
        %3033 = vmatprep.subr.mxu0 0.0
        %3034 = vmatpush2.msra.mxu0 0.0
        %3035 = vmatprep.mubr.f32.mxu0 0.0
        %3036 = vmatmul.mubr.f32.gmra.mxu0 %v2960
        %v3037 = vpop.f32.mrf.mxu0
        %v3038 = vadd.f32 %v2957, %v3037
        %v3039 = vpop.f32.mrf.mxu0
        %3040 = vmatprep.mubr.f32.mxu0 0.0
        %3041 = vmatmul.mubr.f32.gmra.mxu0 %v2963
        %v3042 = vpop.f32.mrf.mxu0
        %v3043 = vadd.f32 %v2957, %v3042
        %v3044 = vpop.f32.mrf.mxu0
        %3045 = vmatprep.mubr.f32.mxu0 0.0
        %3046 = vmatmul.mubr.f32.gmra.mxu0 %v2966
        %v3047 = vpop.f32.mrf.mxu0
        %v3048 = vadd.f32 %v2957, %v3047
        %v3049 = vpop.f32.mrf.mxu0
        %3050 = vmatprep.mubr.f32.mxu0 0.0
        %3051 = vmatmul.mubr.f32.gmra.mxu0 %v2969
        %v3052 = vpop.f32.mrf.mxu0
        %v3053 = vadd.f32 %v2957, %v3052
        %v3054 = vpop.f32.mrf.mxu0
        %3055 = vdwg.mxu0
        %v3056 = vld [vmem:[%s822] sm:$0xff]
        %v3057 = vld [vmem:[%s822 + $0x8] sm:$0xff]
        %v3058 = vld [vmem:[%s822 + $0x10] sm:$0xff]
        %v3059 = vld [vmem:[%s822 + $0x18] sm:$0xff]
        %v3060 = vld [vmem:[%s822 + $0x20] sm:$0xff]
        %v3061 = vld [vmem:[%s822 + $0x28] sm:$0xff]
        %v3062 = vld [vmem:[%s822 + $0x30] sm:$0xff]
        %v3063 = vld [vmem:[%s822 + $0x38] sm:$0xff]
        %v3064 = vld [vmem:[%s991] sm:$0x1]
        %v3066 = vlaneseq
        %v3067 = vshrl.u32 %v3066, 7
        %v3068 = vsub.s32 0, %v3067
        %v3069 = vrot.slane %v3064, %v3068
        %v3072 = vsel %vm1070, %v1033, 0
        %v3075 = vsel %vm1070, %v1034, 0
        %v3078 = vsel %vm1070, %v1035, 0
        %v3081 = vsel %vm1070, %v1036, 0
        %v3084 = vsel %vm1070, %v1037, 0
        %v3087 = vsel %vm1070, %v1038, 0
        %v3090 = vsel %vm1070, %v1039, 0
        %v3093 = vsel %vm1070, %v1040, 0
        %3095 = vmatprep.subr.mxu0 0.0
        %3096 = vmatpush1.msra.mxu0 0.0
        %3097 = vmatprep.subr.mxu0 0.0
        %3098 = vmatpush1.msra.mxu0 0.0
        %3099 = vmatprep.subr.mxu0 0.0
        %3100 = vmatpush1.msra.mxu0 0.0
        %3101 = vmatprep.subr.mxu0 0.0
        %3102 = vmatpush1.msra.mxu0 0.0
        %3103 = vmatprep.subr.mxu0 0.0
        %3104 = vmatpush1.msra.mxu0 0.0
        %3105 = vmatprep.subr.mxu0 0.0
        %3106 = vmatpush1.msra.mxu0 0.0
        %3107 = vmatprep.subr.mxu0 0.0
        %3108 = vmatpush1.msra.mxu0 0.0
        %3109 = vmatprep.subr.mxu0 0.0
        %3110 = vmatpush1.msra.mxu0 0.0
        %3111 = vmatprep.subr.mxu0 0.0
        %3112 = vmatpush1.msra.mxu0 %v3063
        %3113 = vmatprep.subr.mxu0 0.0
        %3114 = vmatpush1.msra.mxu0 %v3062
        %3115 = vmatprep.subr.mxu0 0.0
        %3116 = vmatpush1.msra.mxu0 %v3061
        %3117 = vmatprep.subr.mxu0 0.0
        %3118 = vmatpush1.msra.mxu0 %v3060
        %3119 = vmatprep.subr.mxu0 0.0
        %3120 = vmatpush1.msra.mxu0 %v3059
        %3121 = vmatprep.subr.mxu0 0.0
        %3122 = vmatpush1.msra.mxu0 %v3058
        %3123 = vmatprep.subr.mxu0 0.0
        %3124 = vmatpush1.msra.mxu0 %v3057
        %3125 = vmatprep.subr.mxu0 0.0
        %3126 = vmatpush1.msra.mxu0 %v3056
        %3127 = vmatprep.subr.mxu0 0.0
        %3128 = vmatpush2.msra.mxu0 0.0
        %3129 = vmatprep.subr.mxu0 0.0
        %3130 = vmatpush2.msra.mxu0 0.0
        %3131 = vmatprep.subr.mxu0 0.0
        %3132 = vmatpush2.msra.mxu0 0.0
        %3133 = vmatprep.subr.mxu0 0.0
        %3134 = vmatpush2.msra.mxu0 0.0
        %3135 = vmatprep.subr.mxu0 0.0
        %3136 = vmatpush2.msra.mxu0 0.0
        %3137 = vmatprep.subr.mxu0 0.0
        %3138 = vmatpush2.msra.mxu0 0.0
        %3139 = vmatprep.subr.mxu0 0.0
        %3140 = vmatpush2.msra.mxu0 0.0
        %3141 = vmatprep.subr.mxu0 0.0
        %3142 = vmatpush2.msra.mxu0 0.0
        %3143 = vmatprep.subr.mxu0 0.0
        %3144 = vmatpush2.msra.mxu0 0.0
        %3145 = vmatprep.subr.mxu0 0.0
        %3146 = vmatpush2.msra.mxu0 0.0
        %3147 = vmatprep.subr.mxu0 0.0
        %3148 = vmatpush2.msra.mxu0 0.0
        %3149 = vmatprep.subr.mxu0 0.0
        %3150 = vmatpush2.msra.mxu0 0.0
        %3151 = vmatprep.subr.mxu0 0.0
        %3152 = vmatpush2.msra.mxu0 0.0
        %3153 = vmatprep.subr.mxu0 0.0
        %3154 = vmatpush2.msra.mxu0 0.0
        %3155 = vmatprep.subr.mxu0 0.0
        %3156 = vmatpush2.msra.mxu0 0.0
        %3157 = vmatprep.subr.mxu0 0.0
        %3158 = vmatpush2.msra.mxu0 0.0
        %3159 = vmatprep.mubr.f32.mxu0 0.0
        %3160 = vmatmul.mubr.f32.gmra.mxu0 %v3072
        %v3161 = vpop.f32.mrf.mxu0
        %v3162 = vadd.f32 %v3069, %v3161
        %v3163 = vpop.f32.mrf.mxu0
        %3164 = vmatprep.mubr.f32.mxu0 0.0
        %3165 = vmatmul.mubr.f32.gmra.mxu0 %v3075
        %v3166 = vpop.f32.mrf.mxu0
        %v3167 = vadd.f32 %v3069, %v3166
        %v3168 = vpop.f32.mrf.mxu0
        %3169 = vmatprep.mubr.f32.mxu0 0.0
        %3170 = vmatmul.mubr.f32.gmra.mxu0 %v3078
        %v3171 = vpop.f32.mrf.mxu0
        %v3172 = vadd.f32 %v3069, %v3171
        %v3173 = vpop.f32.mrf.mxu0
        %3174 = vmatprep.mubr.f32.mxu0 0.0
        %3175 = vmatmul.mubr.f32.gmra.mxu0 %v3081
        %v3176 = vpop.f32.mrf.mxu0
        %v3177 = vadd.f32 %v3069, %v3176
        %v3178 = vpop.f32.mrf.mxu0
        %3179 = vmatprep.mubr.f32.mxu0 0.0
        %3180 = vmatmul.mubr.f32.gmra.mxu0 %v3084
        %v3181 = vpop.f32.mrf.mxu0
        %v3182 = vadd.f32 %v3069, %v3181
        %v3183 = vpop.f32.mrf.mxu0
        %3184 = vmatprep.mubr.f32.mxu0 0.0
        %3185 = vmatmul.mubr.f32.gmra.mxu0 %v3087
        %v3186 = vpop.f32.mrf.mxu0
        %v3187 = vadd.f32 %v3069, %v3186
        %v3188 = vpop.f32.mrf.mxu0
        %3189 = vmatprep.mubr.f32.mxu0 0.0
        %3190 = vmatmul.mubr.f32.gmra.mxu0 %v3090
        %v3191 = vpop.f32.mrf.mxu0
        %v3192 = vadd.f32 %v3069, %v3191
        %v3193 = vpop.f32.mrf.mxu0
        %3194 = vmatprep.mubr.f32.mxu0 0.0
        %3195 = vmatmul.mubr.f32.gmra.mxu0 %v3093
        %v3196 = vpop.f32.mrf.mxu0
        %v3197 = vadd.f32 %v3069, %v3196
        %v3198 = vpop.f32.mrf.mxu0
        %3199 = vdwg.mxu0
        %v3201 = vsel %vm1180, %v3038, 0
        %v3204 = vsel %vm1180, %v3043, 0
        %v3207 = vsel %vm1180, %v3162, 0
        %v3210 = vsel %vm1180, %v3167, 0
        %v3213 = vsel %vm1180, %v3172, 0
        %v3216 = vsel %vm1180, %v3177, 0
        %3218 = vmatprep.subr.mxu0 0.0
        %3219 = vmatpush1.xpose.msra.mxu0 0.0
        %3220 = vmatprep.subr.mxu0 0.0
        %3221 = vmatpush1.xpose.msra.mxu0 0.0
        %3222 = vmatprep.subr.mxu0 0.0
        %3223 = vmatpush1.xpose.msra.mxu0 0.0
        %3224 = vmatprep.subr.mxu0 0.0
        %3225 = vmatpush1.xpose.msra.mxu0 0.0
        %3226 = vmatprep.subr.mxu0 0.0
        %3227 = vmatpush1.xpose.msra.mxu0 0.0
        %3228 = vmatprep.subr.mxu0 0.0
        %3229 = vmatpush1.xpose.msra.mxu0 0.0
        %3230 = vmatprep.subr.mxu0 0.0
        %3231 = vmatpush1.xpose.msra.mxu0 0.0
        %3232 = vmatprep.subr.mxu0 0.0
        %3233 = vmatpush1.xpose.msra.mxu0 0.0
        %3234 = vmatprep.subr.mxu0 0.0
        %3235 = vmatpush1.xpose.msra.mxu0 0.0
        %3236 = vmatprep.subr.mxu0 0.0
        %3237 = vmatpush1.xpose.msra.mxu0 0.0
        %3238 = vmatprep.subr.mxu0 0.0
        %3239 = vmatpush1.xpose.msra.mxu0 0.0
        %3240 = vmatprep.subr.mxu0 0.0
        %3241 = vmatpush1.xpose.msra.mxu0 0.0
        %3242 = vmatprep.subr.mxu0 0.0
        %3243 = vmatpush1.xpose.msra.mxu0 %v3216
        %3244 = vmatprep.subr.mxu0 0.0
        %3245 = vmatpush1.xpose.msra.mxu0 %v3213
        %3246 = vmatprep.subr.mxu0 0.0
        %3247 = vmatpush1.xpose.msra.mxu0 %v3210
        %3248 = vmatprep.subr.mxu0 0.0
        %3249 = vmatpush1.xpose.msra.mxu0 %v3207
        %3250 = vmatprep.subr.mxu0 0.0
        %3251 = vmatpush2.xpose.msra.mxu0 0.0
        %3252 = vmatprep.subr.mxu0 0.0
        %3253 = vmatpush2.xpose.msra.mxu0 0.0
        %3254 = vmatprep.subr.mxu0 0.0
        %3255 = vmatpush2.xpose.msra.mxu0 0.0
        %3256 = vmatprep.subr.mxu0 0.0
        %3257 = vmatpush2.xpose.msra.mxu0 0.0
        %3258 = vmatprep.subr.mxu0 0.0
        %3259 = vmatpush2.xpose.msra.mxu0 0.0
        %3260 = vmatprep.subr.mxu0 0.0
        %3261 = vmatpush2.xpose.msra.mxu0 0.0
        %3262 = vmatprep.subr.mxu0 0.0
        %3263 = vmatpush2.xpose.msra.mxu0 0.0
        %3264 = vmatprep.subr.mxu0 0.0
        %3265 = vmatpush2.xpose.msra.mxu0 0.0
        %3266 = vmatprep.subr.mxu0 0.0
        %3267 = vmatpush2.xpose.msra.mxu0 0.0
        %3268 = vmatprep.subr.mxu0 0.0
        %3269 = vmatpush2.xpose.msra.mxu0 0.0
        %3270 = vmatprep.subr.mxu0 0.0
        %3271 = vmatpush2.xpose.msra.mxu0 0.0
        %3272 = vmatprep.subr.mxu0 0.0
        %3273 = vmatpush2.xpose.msra.mxu0 0.0
        %3274 = vmatprep.subr.mxu0 0.0
        %3275 = vmatpush2.xpose.msra.mxu0 0.0
        %3276 = vmatprep.subr.mxu0 0.0
        %3277 = vmatpush2.xpose.msra.mxu0 0.0
        %3278 = vmatprep.subr.mxu0 0.0
        %3279 = vmatpush2.xpose.msra.mxu0 0.0
        %3280 = vmatprep.subr.mxu0 0.0
        %3281 = vmatpush2.xpose.msra.mxu0 0.0
        %3282 = vmatprep.mubr.f32.mxu0 0.0
        %3283 = vmatmul.mubr.f32.gmra.mxu0 %v3201
        %v3284 = vpop.f32.mrf.mxu0
        %v3285 = vadd.f32 0.0, %v3284
        %v3286 = vpop.f32.mrf.mxu0
        %3287 = vmatprep.mubr.f32.mxu0 0.0
        %3288 = vmatmul.mubr.f32.gmra.mxu0 %v3204
        %v3289 = vpop.f32.mrf.mxu0
        %v3290 = vadd.f32 0.0, %v3289
        %v3291 = vpop.f32.mrf.mxu0
        %3292 = vdwg.mxu0
        %v3294 = vsel %vm1180, %v3048, 0
        %v3297 = vsel %vm1180, %v3053, 0
        %v3300 = vsel %vm1180, %v3182, 0
        %v3303 = vsel %vm1180, %v3187, 0
        %v3306 = vsel %vm1180, %v3192, 0
        %v3309 = vsel %vm1180, %v3197, 0
        %3311 = vmatprep.subr.mxu0 0.0
        %3312 = vmatpush1.xpose.msra.mxu0 0.0
        %3313 = vmatprep.subr.mxu0 0.0
        %3314 = vmatpush1.xpose.msra.mxu0 0.0
        %3315 = vmatprep.subr.mxu0 0.0
        %3316 = vmatpush1.xpose.msra.mxu0 0.0
        %3317 = vmatprep.subr.mxu0 0.0
        %3318 = vmatpush1.xpose.msra.mxu0 0.0
        %3319 = vmatprep.subr.mxu0 0.0
        %3320 = vmatpush1.xpose.msra.mxu0 0.0
        %3321 = vmatprep.subr.mxu0 0.0
        %3322 = vmatpush1.xpose.msra.mxu0 0.0
        %3323 = vmatprep.subr.mxu0 0.0
        %3324 = vmatpush1.xpose.msra.mxu0 0.0
        %3325 = vmatprep.subr.mxu0 0.0
        %3326 = vmatpush1.xpose.msra.mxu0 0.0
        %3327 = vmatprep.subr.mxu0 0.0
        %3328 = vmatpush1.xpose.msra.mxu0 0.0
        %3329 = vmatprep.subr.mxu0 0.0
        %3330 = vmatpush1.xpose.msra.mxu0 0.0
        %3331 = vmatprep.subr.mxu0 0.0
        %3332 = vmatpush1.xpose.msra.mxu0 0.0
        %3333 = vmatprep.subr.mxu0 0.0
        %3334 = vmatpush1.xpose.msra.mxu0 0.0
        %3335 = vmatprep.subr.mxu0 0.0
        %3336 = vmatpush1.xpose.msra.mxu0 %v3309
        %3337 = vmatprep.subr.mxu0 0.0
        %3338 = vmatpush1.xpose.msra.mxu0 %v3306
        %3339 = vmatprep.subr.mxu0 0.0
        %3340 = vmatpush1.xpose.msra.mxu0 %v3303
        %3341 = vmatprep.subr.mxu0 0.0
        %3342 = vmatpush1.xpose.msra.mxu0 %v3300
        %3343 = vmatprep.subr.mxu0 0.0
        %3344 = vmatpush2.xpose.msra.mxu0 0.0
        %3345 = vmatprep.subr.mxu0 0.0
        %3346 = vmatpush2.xpose.msra.mxu0 0.0
        %3347 = vmatprep.subr.mxu0 0.0
        %3348 = vmatpush2.xpose.msra.mxu0 0.0
        %3349 = vmatprep.subr.mxu0 0.0
        %3350 = vmatpush2.xpose.msra.mxu0 0.0
        %3351 = vmatprep.subr.mxu0 0.0
        %3352 = vmatpush2.xpose.msra.mxu0 0.0
        %3353 = vmatprep.subr.mxu0 0.0
        %3354 = vmatpush2.xpose.msra.mxu0 0.0
        %3355 = vmatprep.subr.mxu0 0.0
        %3356 = vmatpush2.xpose.msra.mxu0 0.0
        %3357 = vmatprep.subr.mxu0 0.0
        %3358 = vmatpush2.xpose.msra.mxu0 0.0
        %3359 = vmatprep.subr.mxu0 0.0
        %3360 = vmatpush2.xpose.msra.mxu0 0.0
        %3361 = vmatprep.subr.mxu0 0.0
        %3362 = vmatpush2.xpose.msra.mxu0 0.0
        %3363 = vmatprep.subr.mxu0 0.0
        %3364 = vmatpush2.xpose.msra.mxu0 0.0
        %3365 = vmatprep.subr.mxu0 0.0
        %3366 = vmatpush2.xpose.msra.mxu0 0.0
        %3367 = vmatprep.subr.mxu0 0.0
        %3368 = vmatpush2.xpose.msra.mxu0 0.0
        %3369 = vmatprep.subr.mxu0 0.0
        %3370 = vmatpush2.xpose.msra.mxu0 0.0
        %3371 = vmatprep.subr.mxu0 0.0
        %3372 = vmatpush2.xpose.msra.mxu0 0.0
        %3373 = vmatprep.subr.mxu0 0.0
        %3374 = vmatpush2.xpose.msra.mxu0 0.0
        %3375 = vmatprep.mubr.f32.mxu0 0.0
        %3376 = vmatmul.mubr.f32.gmra.mxu0 %v3294
        %v3377 = vpop.f32.mrf.mxu0
        %v3378 = vadd.f32 0.0, %v3377
        %v3379 = vpop.f32.mrf.mxu0
        %3380 = vmatprep.mubr.f32.mxu0 0.0
        %3381 = vmatmul.mubr.f32.gmra.mxu0 %v3297
        %v3382 = vpop.f32.mrf.mxu0
        %v3383 = vadd.f32 0.0, %v3382
        %v3384 = vpop.f32.mrf.mxu0
        %3385 = vdwg.mxu0
        %vm3386 = vcmask 261120
        %v3387 = vsel %vm3386, %v3285, -inf
        %3388 = vmax.xlane.f32.xlu0 %v3387
        %v3389 = vpop.xlane.xlu0 %3388
        %v3390 = vsel %vm3386, %v3290, -inf
        %3391 = vmax.xlane.f32.xlu0 %v3390
        %v3392 = vpop.xlane.xlu0 %3391
        %v3393 = vsel %vm3386, %v3378, -inf
        %3394 = vmax.xlane.f32.xlu0 %v3393
        %v3395 = vpop.xlane.xlu0 %3394
        %v3396 = vsel %vm3386, %v3383, -inf
        %3397 = vmax.xlane.f32.xlu0 %v3396
        %v3398 = vpop.xlane.xlu0 %3397
        %v3399 = vsub.f32 %v3285, %v3389
        %v3400 = vsub.f32 %v3290, %v3392
        %v3401 = vsub.f32 %v3378, %v3395
        %v3402 = vsub.f32 %v3383, %v3398
        %v3403 = vmul.f32 %v3399, 1.442695
        %v3404 = vpow.pop %v3403
        %v3405 = vmul.f32 %v3400, 1.442695
        %v3406 = vpow.pop %v3405
        %v3407 = vmul.f32 %v3401, 1.442695
        %v3408 = vpow.pop %v3407
        %v3409 = vmul.f32 %v3402, 1.442695
        %v3410 = vpow.pop %v3409
        %v3411 = vsel %vm3386, %v3404, 0.0
        %3412 = vadd.xlane.f32.xlu0 %v3411
        %v3413 = vpop.xlane.xlu0 %3412
        %v3414 = vsel %vm3386, %v3406, 0.0
        %3415 = vadd.xlane.f32.xlu0 %v3414
        %v3416 = vpop.xlane.xlu0 %3415
        %v3417 = vsel %vm3386, %v3408, 0.0
        %3418 = vadd.xlane.f32.xlu0 %v3417
        %v3419 = vpop.xlane.xlu0 %3418
        %v3420 = vsel %vm3386, %v3410, 0.0
        %3421 = vadd.xlane.f32.xlu0 %v3420
        %v3422 = vpop.xlane.xlu0 %3421
        %v3423 = vrcp.pop %v3413
        %v3424 = vrcp.pop %v3416
        %v3425 = vrcp.pop %v3419
        %v3426 = vrcp.pop %v3422
        %v3427 = vmul.f32 %v3404, %v3423
        %v3428 = vmul.f32 %v3406, %v3424
        %v3429 = vmul.f32 %v3408, %v3425
        %v3430 = vmul.f32 %v3410, %v3426
        %3431 = vrot.lane.b32.xlu0 %v3162, 64
        %v3432 = vpop.permute.xlu0 %3431
        %3433 = vrot.lane.b32.xlu0 %v3167, 64
        %v3434 = vpop.permute.xlu0 %3433
        %3435 = vrot.lane.b32.xlu0 %v3172, 64
        %v3436 = vpop.permute.xlu0 %3435
        %3437 = vrot.lane.b32.xlu0 %v3177, 64
        %v3438 = vpop.permute.xlu0 %3437
        %3439 = vrot.lane.b32.xlu0 %v3182, 64
        %v3440 = vpop.permute.xlu0 %3439
        %3441 = vrot.lane.b32.xlu0 %v3187, 64
        %v3442 = vpop.permute.xlu0 %3441
        %3443 = vrot.lane.b32.xlu0 %v3192, 64
        %v3444 = vpop.permute.xlu0 %3443
        %3445 = vrot.lane.b32.xlu0 %v3197, 64
        %v3446 = vpop.permute.xlu0 %3445
        %v3455 = vsel %vm1399, %v3432, 0.0
        %v3456 = vsel %vm1399, %v3434, 0.0
        %v3457 = vsel %vm1399, %v3436, 0.0
        %v3458 = vsel %vm1399, %v3438, 0.0
        %v3459 = vsel %vm1399, %v3440, 0.0
        %v3460 = vsel %vm1399, %v3442, 0.0
        %v3461 = vsel %vm1399, %v3444, 0.0
        %v3462 = vsel %vm1399, %v3446, 0.0
        %3463 = vrot.lane.b32.xlu0 %v3038, 112
        %v3464 = vpop.permute.xlu0 %3463
        %3465 = vrot.lane.b32.xlu0 %v3043, 112
        %v3466 = vpop.permute.xlu0 %3465
        %3467 = vrot.lane.b32.xlu0 %v3162, 112
        %v3468 = vpop.permute.xlu0 %3467
        %3469 = vrot.lane.b32.xlu0 %v3167, 112
        %v3470 = vpop.permute.xlu0 %3469
        %3471 = vrot.lane.b32.xlu0 %v3172, 112
        %v3472 = vpop.permute.xlu0 %3471
        %3473 = vrot.lane.b32.xlu0 %v3177, 112
        %v3474 = vpop.permute.xlu0 %3473
        %v3475 = vsel %vm1180, %v3464, 0
        %v3477 = vsel %vm1180, %v3466, 0
        %v3479 = vsel %vm1180, %v3468, 0
        %v3481 = vsel %vm1180, %v3470, 0
        %v3483 = vsel %vm1180, %v3472, 0
        %v3485 = vsel %vm1180, %v3474, 0
        %3487 = vmatprep.subr.mxu0 0.0
        %3488 = vmatpush1.xpose.msra.mxu0 0.0
        %3489 = vmatprep.subr.mxu0 0.0
        %3490 = vmatpush1.xpose.msra.mxu0 0.0
        %3491 = vmatprep.subr.mxu0 0.0
        %3492 = vmatpush1.xpose.msra.mxu0 0.0
        %3493 = vmatprep.subr.mxu0 0.0
        %3494 = vmatpush1.xpose.msra.mxu0 0.0
        %3495 = vmatprep.subr.mxu0 0.0
        %3496 = vmatpush1.xpose.msra.mxu0 0.0
        %3497 = vmatprep.subr.mxu0 0.0
        %3498 = vmatpush1.xpose.msra.mxu0 0.0
        %3499 = vmatprep.subr.mxu0 0.0
        %3500 = vmatpush1.xpose.msra.mxu0 0.0
        %3501 = vmatprep.subr.mxu0 0.0
        %3502 = vmatpush1.xpose.msra.mxu0 0.0
        %3503 = vmatprep.subr.mxu0 0.0
        %3504 = vmatpush1.xpose.msra.mxu0 0.0
        %3505 = vmatprep.subr.mxu0 0.0
        %3506 = vmatpush1.xpose.msra.mxu0 0.0
        %3507 = vmatprep.subr.mxu0 0.0
        %3508 = vmatpush1.xpose.msra.mxu0 0.0
        %3509 = vmatprep.subr.mxu0 0.0
        %3510 = vmatpush1.xpose.msra.mxu0 0.0
        %3511 = vmatprep.subr.mxu0 0.0
        %3512 = vmatpush1.xpose.msra.mxu0 %v3485
        %3513 = vmatprep.subr.mxu0 0.0
        %3514 = vmatpush1.xpose.msra.mxu0 %v3483
        %3515 = vmatprep.subr.mxu0 0.0
        %3516 = vmatpush1.xpose.msra.mxu0 %v3481
        %3517 = vmatprep.subr.mxu0 0.0
        %3518 = vmatpush1.xpose.msra.mxu0 %v3479
        %3519 = vmatprep.subr.mxu0 0.0
        %3520 = vmatpush2.xpose.msra.mxu0 0.0
        %3521 = vmatprep.subr.mxu0 0.0
        %3522 = vmatpush2.xpose.msra.mxu0 0.0
        %3523 = vmatprep.subr.mxu0 0.0
        %3524 = vmatpush2.xpose.msra.mxu0 0.0
        %3525 = vmatprep.subr.mxu0 0.0
        %3526 = vmatpush2.xpose.msra.mxu0 0.0
        %3527 = vmatprep.subr.mxu0 0.0
        %3528 = vmatpush2.xpose.msra.mxu0 0.0
        %3529 = vmatprep.subr.mxu0 0.0
        %3530 = vmatpush2.xpose.msra.mxu0 0.0
        %3531 = vmatprep.subr.mxu0 0.0
        %3532 = vmatpush2.xpose.msra.mxu0 0.0
        %3533 = vmatprep.subr.mxu0 0.0
        %3534 = vmatpush2.xpose.msra.mxu0 0.0
        %3535 = vmatprep.subr.mxu0 0.0
        %3536 = vmatpush2.xpose.msra.mxu0 0.0
        %3537 = vmatprep.subr.mxu0 0.0
        %3538 = vmatpush2.xpose.msra.mxu0 0.0
        %3539 = vmatprep.subr.mxu0 0.0
        %3540 = vmatpush2.xpose.msra.mxu0 0.0
        %3541 = vmatprep.subr.mxu0 0.0
        %3542 = vmatpush2.xpose.msra.mxu0 0.0
        %3543 = vmatprep.subr.mxu0 0.0
        %3544 = vmatpush2.xpose.msra.mxu0 0.0
        %3545 = vmatprep.subr.mxu0 0.0
        %3546 = vmatpush2.xpose.msra.mxu0 0.0
        %3547 = vmatprep.subr.mxu0 0.0
        %3548 = vmatpush2.xpose.msra.mxu0 0.0
        %3549 = vmatprep.subr.mxu0 0.0
        %3550 = vmatpush2.xpose.msra.mxu0 0.0
        %3551 = vmatprep.mubr.f32.mxu0 0.0
        %3552 = vmatmul.mubr.f32.gmra.mxu0 %v3475
        %v3553 = vpop.f32.mrf.mxu0
        %v3554 = vadd.f32 0.0, %v3553
        %v3555 = vpop.f32.mrf.mxu0
        %3556 = vmatprep.mubr.f32.mxu0 0.0
        %3557 = vmatmul.mubr.f32.gmra.mxu0 %v3477
        %v3558 = vpop.f32.mrf.mxu0
        %v3559 = vadd.f32 0.0, %v3558
        %v3560 = vpop.f32.mrf.mxu0
        %3561 = vdwg.mxu0
        %3562 = vrot.lane.b32.xlu0 %v3048, 112
        %v3563 = vpop.permute.xlu0 %3562
        %3564 = vrot.lane.b32.xlu0 %v3053, 112
        %v3565 = vpop.permute.xlu0 %3564
        %3566 = vrot.lane.b32.xlu0 %v3182, 112
        %v3567 = vpop.permute.xlu0 %3566
        %3568 = vrot.lane.b32.xlu0 %v3187, 112
        %v3569 = vpop.permute.xlu0 %3568
        %3570 = vrot.lane.b32.xlu0 %v3192, 112
        %v3571 = vpop.permute.xlu0 %3570
        %3572 = vrot.lane.b32.xlu0 %v3197, 112
        %v3573 = vpop.permute.xlu0 %3572
        %v3574 = vsel %vm1180, %v3563, 0
        %v3576 = vsel %vm1180, %v3565, 0
        %v3578 = vsel %vm1180, %v3567, 0
        %v3580 = vsel %vm1180, %v3569, 0
        %v3582 = vsel %vm1180, %v3571, 0
        %v3584 = vsel %vm1180, %v3573, 0
        %3586 = vmatprep.subr.mxu0 0.0
        %3587 = vmatpush1.xpose.msra.mxu0 0.0
        %3588 = vmatprep.subr.mxu0 0.0
        %3589 = vmatpush1.xpose.msra.mxu0 0.0
        %3590 = vmatprep.subr.mxu0 0.0
        %3591 = vmatpush1.xpose.msra.mxu0 0.0
        %3592 = vmatprep.subr.mxu0 0.0
        %3593 = vmatpush1.xpose.msra.mxu0 0.0
        %3594 = vmatprep.subr.mxu0 0.0
        %3595 = vmatpush1.xpose.msra.mxu0 0.0
        %3596 = vmatprep.subr.mxu0 0.0
        %3597 = vmatpush1.xpose.msra.mxu0 0.0
        %3598 = vmatprep.subr.mxu0 0.0
        %3599 = vmatpush1.xpose.msra.mxu0 0.0
        %3600 = vmatprep.subr.mxu0 0.0
        %3601 = vmatpush1.xpose.msra.mxu0 0.0
        %3602 = vmatprep.subr.mxu0 0.0
        %3603 = vmatpush1.xpose.msra.mxu0 0.0
        %3604 = vmatprep.subr.mxu0 0.0
        %3605 = vmatpush1.xpose.msra.mxu0 0.0
        %3606 = vmatprep.subr.mxu0 0.0
        %3607 = vmatpush1.xpose.msra.mxu0 0.0
        %3608 = vmatprep.subr.mxu0 0.0
        %3609 = vmatpush1.xpose.msra.mxu0 0.0
        %3610 = vmatprep.subr.mxu0 0.0
        %3611 = vmatpush1.xpose.msra.mxu0 %v3584
        %3612 = vmatprep.subr.mxu0 0.0
        %3613 = vmatpush1.xpose.msra.mxu0 %v3582
        %3614 = vmatprep.subr.mxu0 0.0
        %3615 = vmatpush1.xpose.msra.mxu0 %v3580
        %3616 = vmatprep.subr.mxu0 0.0
        %3617 = vmatpush1.xpose.msra.mxu0 %v3578
        %3618 = vmatprep.subr.mxu0 0.0
        %3619 = vmatpush2.xpose.msra.mxu0 0.0
        %3620 = vmatprep.subr.mxu0 0.0
        %3621 = vmatpush2.xpose.msra.mxu0 0.0
        %3622 = vmatprep.subr.mxu0 0.0
        %3623 = vmatpush2.xpose.msra.mxu0 0.0
        %3624 = vmatprep.subr.mxu0 0.0
        %3625 = vmatpush2.xpose.msra.mxu0 0.0
        %3626 = vmatprep.subr.mxu0 0.0
        %3627 = vmatpush2.xpose.msra.mxu0 0.0
        %3628 = vmatprep.subr.mxu0 0.0
        %3629 = vmatpush2.xpose.msra.mxu0 0.0
        %3630 = vmatprep.subr.mxu0 0.0
        %3631 = vmatpush2.xpose.msra.mxu0 0.0
        %3632 = vmatprep.subr.mxu0 0.0
        %3633 = vmatpush2.xpose.msra.mxu0 0.0
        %3634 = vmatprep.subr.mxu0 0.0
        %3635 = vmatpush2.xpose.msra.mxu0 0.0
        %3636 = vmatprep.subr.mxu0 0.0
        %3637 = vmatpush2.xpose.msra.mxu0 0.0
        %3638 = vmatprep.subr.mxu0 0.0
        %3639 = vmatpush2.xpose.msra.mxu0 0.0
        %3640 = vmatprep.subr.mxu0 0.0
        %3641 = vmatpush2.xpose.msra.mxu0 0.0
        %3642 = vmatprep.subr.mxu0 0.0
        %3643 = vmatpush2.xpose.msra.mxu0 0.0
        %3644 = vmatprep.subr.mxu0 0.0
        %3645 = vmatpush2.xpose.msra.mxu0 0.0
        %3646 = vmatprep.subr.mxu0 0.0
        %3647 = vmatpush2.xpose.msra.mxu0 0.0
        %3648 = vmatprep.subr.mxu0 0.0
        %3649 = vmatpush2.xpose.msra.mxu0 0.0
        %3650 = vmatprep.mubr.f32.mxu0 0.0
        %3651 = vmatmul.mubr.f32.gmra.mxu0 %v3574
        %v3652 = vpop.f32.mrf.mxu0
        %v3653 = vadd.f32 0.0, %v3652
        %v3654 = vpop.f32.mrf.mxu0
        %3655 = vmatprep.mubr.f32.mxu0 0.0
        %3656 = vmatmul.mubr.f32.gmra.mxu0 %v3576
        %v3657 = vpop.f32.mrf.mxu0
        %v3658 = vadd.f32 0.0, %v3657
        %v3659 = vpop.f32.mrf.mxu0
        %3660 = vdwg.mxu0
        %v3661 = vsel %vm3386, %v3554, -inf
        %3662 = vmax.xlane.f32.xlu0 %v3661
        %v3663 = vpop.xlane.xlu0 %3662
        %v3664 = vsel %vm3386, %v3559, -inf
        %3665 = vmax.xlane.f32.xlu0 %v3664
        %v3666 = vpop.xlane.xlu0 %3665
        %v3667 = vsel %vm3386, %v3653, -inf
        %3668 = vmax.xlane.f32.xlu0 %v3667
        %v3669 = vpop.xlane.xlu0 %3668
        %v3670 = vsel %vm3386, %v3658, -inf
        %3671 = vmax.xlane.f32.xlu0 %v3670
        %v3672 = vpop.xlane.xlu0 %3671
        %v3673 = vsub.f32 %v3554, %v3663
        %v3674 = vsub.f32 %v3559, %v3666
        %v3675 = vsub.f32 %v3653, %v3669
        %v3676 = vsub.f32 %v3658, %v3672
        %v3677 = vmul.f32 %v3673, 1.442695
        %v3678 = vpow.pop %v3677
        %v3679 = vmul.f32 %v3674, 1.442695
        %v3680 = vpow.pop %v3679
        %v3681 = vmul.f32 %v3675, 1.442695
        %v3682 = vpow.pop %v3681
        %v3683 = vmul.f32 %v3676, 1.442695
        %v3684 = vpow.pop %v3683
        %v3685 = vsel %vm3386, %v3678, 0.0
        %3686 = vadd.xlane.f32.xlu0 %v3685
        %v3687 = vpop.xlane.xlu0 %3686
        %v3688 = vsel %vm3386, %v3680, 0.0
        %3689 = vadd.xlane.f32.xlu0 %v3688
        %v3690 = vpop.xlane.xlu0 %3689
        %v3691 = vsel %vm3386, %v3682, 0.0
        %3692 = vadd.xlane.f32.xlu0 %v3691
        %v3693 = vpop.xlane.xlu0 %3692
        %v3694 = vsel %vm3386, %v3684, 0.0
        %3695 = vadd.xlane.f32.xlu0 %v3694
        %v3696 = vpop.xlane.xlu0 %3695
        %v3697 = vrcp.pop %v3687
        %v3698 = vrcp.pop %v3690
        %v3699 = vrcp.pop %v3693
        %v3700 = vrcp.pop %v3696
        %v3701 = vmul.f32 %v3678, %v3697
        %v3702 = vmul.f32 %v3680, %v3698
        %v3703 = vmul.f32 %v3682, %v3699
        %v3704 = vmul.f32 %v3684, %v3700
        %v3705 = vsel %vm1632, %v3432, 0.0
        %v3706 = vsel %vm1632, %v3434, 0.0
        %v3707 = vsel %vm1632, %v3436, 0.0
        %v3708 = vsel %vm1632, %v3438, 0.0
        %v3709 = vsel %vm1632, %v3440, 0.0
        %v3710 = vsel %vm1632, %v3442, 0.0
        %v3711 = vsel %vm1632, %v3444, 0.0
        %v3712 = vsel %vm1632, %v3446, 0.0
        %v3714 = vsel %vm3386, %v3701, 0
        %v3717 = vsel %vm3386, %v3702, 0
        %3719 = vmatprep.subr.mxu0 0.0
        %3720 = vmatpush1.msra.mxu0 0.0
        %3721 = vmatprep.subr.mxu0 0.0
        %3722 = vmatpush1.msra.mxu0 0.0
        %3723 = vmatprep.subr.mxu0 0.0
        %3724 = vmatpush1.msra.mxu0 0.0
        %3725 = vmatprep.subr.mxu0 0.0
        %3726 = vmatpush1.msra.mxu0 0.0
        %3727 = vmatprep.subr.mxu0 0.0
        %3728 = vmatpush1.msra.mxu0 0.0
        %3729 = vmatprep.subr.mxu0 0.0
        %3730 = vmatpush1.msra.mxu0 0.0
        %3731 = vmatprep.subr.mxu0 0.0
        %3732 = vmatpush1.msra.mxu0 0.0
        %3733 = vmatprep.subr.mxu0 0.0
        %3734 = vmatpush1.msra.mxu0 0.0
        %3735 = vmatprep.subr.mxu0 0.0
        %3736 = vmatpush1.msra.mxu0 0.0
        %3737 = vmatprep.subr.mxu0 0.0
        %3738 = vmatpush1.msra.mxu0 0.0
        %3739 = vmatprep.subr.mxu0 0.0
        %3740 = vmatpush1.msra.mxu0 0.0
        %3741 = vmatprep.subr.mxu0 0.0
        %3742 = vmatpush1.msra.mxu0 0.0
        %3743 = vmatprep.subr.mxu0 0.0
        %3744 = vmatpush1.msra.mxu0 %v3708
        %3745 = vmatprep.subr.mxu0 0.0
        %3746 = vmatpush1.msra.mxu0 %v3707
        %3747 = vmatprep.subr.mxu0 0.0
        %3748 = vmatpush1.msra.mxu0 %v3706
        %3749 = vmatprep.subr.mxu0 0.0
        %3750 = vmatpush1.msra.mxu0 %v3705
        %3751 = vmatprep.subr.mxu0 0.0
        %3752 = vmatpush2.msra.mxu0 0.0
        %3753 = vmatprep.subr.mxu0 0.0
        %3754 = vmatpush2.msra.mxu0 0.0
        %3755 = vmatprep.subr.mxu0 0.0
        %3756 = vmatpush2.msra.mxu0 0.0
        %3757 = vmatprep.subr.mxu0 0.0
        %3758 = vmatpush2.msra.mxu0 0.0
        %3759 = vmatprep.subr.mxu0 0.0
        %3760 = vmatpush2.msra.mxu0 0.0
        %3761 = vmatprep.subr.mxu0 0.0
        %3762 = vmatpush2.msra.mxu0 0.0
        %3763 = vmatprep.subr.mxu0 0.0
        %3764 = vmatpush2.msra.mxu0 0.0
        %3765 = vmatprep.subr.mxu0 0.0
        %3766 = vmatpush2.msra.mxu0 0.0
        %3767 = vmatprep.subr.mxu0 0.0
        %3768 = vmatpush2.msra.mxu0 0.0
        %3769 = vmatprep.subr.mxu0 0.0
        %3770 = vmatpush2.msra.mxu0 0.0
        %3771 = vmatprep.subr.mxu0 0.0
        %3772 = vmatpush2.msra.mxu0 0.0
        %3773 = vmatprep.subr.mxu0 0.0
        %3774 = vmatpush2.msra.mxu0 0.0
        %3775 = vmatprep.subr.mxu0 0.0
        %3776 = vmatpush2.msra.mxu0 0.0
        %3777 = vmatprep.subr.mxu0 0.0
        %3778 = vmatpush2.msra.mxu0 0.0
        %3779 = vmatprep.subr.mxu0 0.0
        %3780 = vmatpush2.msra.mxu0 0.0
        %3781 = vmatprep.subr.mxu0 0.0
        %3782 = vmatpush2.msra.mxu0 0.0
        %3783 = vmatprep.mubr.f32.mxu0 0.0
        %3784 = vmatmul.mubr.f32.gmra.mxu0 %v3714
        %v3785 = vpop.f32.mrf.mxu0
        %v3786 = vadd.f32 0.0, %v3785
        %v3787 = vpop.f32.mrf.mxu0
        %3788 = vmatprep.mubr.f32.mxu0 0.0
        %3789 = vmatmul.mubr.f32.gmra.mxu0 %v3717
        %v3790 = vpop.f32.mrf.mxu0
        %v3791 = vadd.f32 0.0, %v3790
        %v3792 = vpop.f32.mrf.mxu0
        %3793 = vdwg.mxu0
        %v3795 = vsel %vm3386, %v3703, 0
        %v3798 = vsel %vm3386, %v3704, 0
        %3800 = vmatprep.subr.mxu0 0.0
        %3801 = vmatpush1.msra.mxu0 0.0
        %3802 = vmatprep.subr.mxu0 0.0
        %3803 = vmatpush1.msra.mxu0 0.0
        %3804 = vmatprep.subr.mxu0 0.0
        %3805 = vmatpush1.msra.mxu0 0.0
        %3806 = vmatprep.subr.mxu0 0.0
        %3807 = vmatpush1.msra.mxu0 0.0
        %3808 = vmatprep.subr.mxu0 0.0
        %3809 = vmatpush1.msra.mxu0 0.0
        %3810 = vmatprep.subr.mxu0 0.0
        %3811 = vmatpush1.msra.mxu0 0.0
        %3812 = vmatprep.subr.mxu0 0.0
        %3813 = vmatpush1.msra.mxu0 0.0
        %3814 = vmatprep.subr.mxu0 0.0
        %3815 = vmatpush1.msra.mxu0 0.0
        %3816 = vmatprep.subr.mxu0 0.0
        %3817 = vmatpush1.msra.mxu0 0.0
        %3818 = vmatprep.subr.mxu0 0.0
        %3819 = vmatpush1.msra.mxu0 0.0
        %3820 = vmatprep.subr.mxu0 0.0
        %3821 = vmatpush1.msra.mxu0 0.0
        %3822 = vmatprep.subr.mxu0 0.0
        %3823 = vmatpush1.msra.mxu0 0.0
        %3824 = vmatprep.subr.mxu0 0.0
        %3825 = vmatpush1.msra.mxu0 %v3712
        %3826 = vmatprep.subr.mxu0 0.0
        %3827 = vmatpush1.msra.mxu0 %v3711
        %3828 = vmatprep.subr.mxu0 0.0
        %3829 = vmatpush1.msra.mxu0 %v3710
        %3830 = vmatprep.subr.mxu0 0.0
        %3831 = vmatpush1.msra.mxu0 %v3709
        %3832 = vmatprep.subr.mxu0 0.0
        %3833 = vmatpush2.msra.mxu0 0.0
        %3834 = vmatprep.subr.mxu0 0.0
        %3835 = vmatpush2.msra.mxu0 0.0
        %3836 = vmatprep.subr.mxu0 0.0
        %3837 = vmatpush2.msra.mxu0 0.0
        %3838 = vmatprep.subr.mxu0 0.0
        %3839 = vmatpush2.msra.mxu0 0.0
        %3840 = vmatprep.subr.mxu0 0.0
        %3841 = vmatpush2.msra.mxu0 0.0
        %3842 = vmatprep.subr.mxu0 0.0
        %3843 = vmatpush2.msra.mxu0 0.0
        %3844 = vmatprep.subr.mxu0 0.0
        %3845 = vmatpush2.msra.mxu0 0.0
        %3846 = vmatprep.subr.mxu0 0.0
        %3847 = vmatpush2.msra.mxu0 0.0
        %3848 = vmatprep.subr.mxu0 0.0
        %3849 = vmatpush2.msra.mxu0 0.0
        %3850 = vmatprep.subr.mxu0 0.0
        %3851 = vmatpush2.msra.mxu0 0.0
        %3852 = vmatprep.subr.mxu0 0.0
        %3853 = vmatpush2.msra.mxu0 0.0
        %3854 = vmatprep.subr.mxu0 0.0
        %3855 = vmatpush2.msra.mxu0 0.0
        %3856 = vmatprep.subr.mxu0 0.0
        %3857 = vmatpush2.msra.mxu0 0.0
        %3858 = vmatprep.subr.mxu0 0.0
        %3859 = vmatpush2.msra.mxu0 0.0
        %3860 = vmatprep.subr.mxu0 0.0
        %3861 = vmatpush2.msra.mxu0 0.0
        %3862 = vmatprep.subr.mxu0 0.0
        %3863 = vmatpush2.msra.mxu0 0.0
        %3864 = vmatprep.mubr.f32.mxu0 0.0
        %3865 = vmatmul.mubr.f32.gmra.mxu0 %v3795
        %v3866 = vpop.f32.mrf.mxu0
        %v3867 = vadd.f32 0.0, %v3866
        %v3868 = vpop.f32.mrf.mxu0
        %3869 = vmatprep.mubr.f32.mxu0 0.0
        %3870 = vmatmul.mubr.f32.gmra.mxu0 %v3798
        %v3871 = vpop.f32.mrf.mxu0
        %v3872 = vadd.f32 0.0, %v3871
        %v3873 = vpop.f32.mrf.mxu0
        %3874 = vdwg.mxu0
        %v3876 = vsel %vm3386, %v3427, 0
        %v3879 = vsel %vm3386, %v3428, 0
        %3881 = vmatprep.subr.mxu0 0.0
        %3882 = vmatpush1.msra.mxu0 0.0
        %3883 = vmatprep.subr.mxu0 0.0
        %3884 = vmatpush1.msra.mxu0 0.0
        %3885 = vmatprep.subr.mxu0 0.0
        %3886 = vmatpush1.msra.mxu0 0.0
        %3887 = vmatprep.subr.mxu0 0.0
        %3888 = vmatpush1.msra.mxu0 0.0
        %3889 = vmatprep.subr.mxu0 0.0
        %3890 = vmatpush1.msra.mxu0 0.0
        %3891 = vmatprep.subr.mxu0 0.0
        %3892 = vmatpush1.msra.mxu0 0.0
        %3893 = vmatprep.subr.mxu0 0.0
        %3894 = vmatpush1.msra.mxu0 0.0
        %3895 = vmatprep.subr.mxu0 0.0
        %3896 = vmatpush1.msra.mxu0 0.0
        %3897 = vmatprep.subr.mxu0 0.0
        %3898 = vmatpush1.msra.mxu0 0.0
        %3899 = vmatprep.subr.mxu0 0.0
        %3900 = vmatpush1.msra.mxu0 0.0
        %3901 = vmatprep.subr.mxu0 0.0
        %3902 = vmatpush1.msra.mxu0 0.0
        %3903 = vmatprep.subr.mxu0 0.0
        %3904 = vmatpush1.msra.mxu0 0.0
        %3905 = vmatprep.subr.mxu0 0.0
        %3906 = vmatpush1.msra.mxu0 %v3458
        %3907 = vmatprep.subr.mxu0 0.0
        %3908 = vmatpush1.msra.mxu0 %v3457
        %3909 = vmatprep.subr.mxu0 0.0
        %3910 = vmatpush1.msra.mxu0 %v3456
        %3911 = vmatprep.subr.mxu0 0.0
        %3912 = vmatpush1.msra.mxu0 %v3455
        %3913 = vmatprep.subr.mxu0 0.0
        %3914 = vmatpush2.msra.mxu0 0.0
        %3915 = vmatprep.subr.mxu0 0.0
        %3916 = vmatpush2.msra.mxu0 0.0
        %3917 = vmatprep.subr.mxu0 0.0
        %3918 = vmatpush2.msra.mxu0 0.0
        %3919 = vmatprep.subr.mxu0 0.0
        %3920 = vmatpush2.msra.mxu0 0.0
        %3921 = vmatprep.subr.mxu0 0.0
        %3922 = vmatpush2.msra.mxu0 0.0
        %3923 = vmatprep.subr.mxu0 0.0
        %3924 = vmatpush2.msra.mxu0 0.0
        %3925 = vmatprep.subr.mxu0 0.0
        %3926 = vmatpush2.msra.mxu0 0.0
        %3927 = vmatprep.subr.mxu0 0.0
        %3928 = vmatpush2.msra.mxu0 0.0
        %3929 = vmatprep.subr.mxu0 0.0
        %3930 = vmatpush2.msra.mxu0 0.0
        %3931 = vmatprep.subr.mxu0 0.0
        %3932 = vmatpush2.msra.mxu0 0.0
        %3933 = vmatprep.subr.mxu0 0.0
        %3934 = vmatpush2.msra.mxu0 0.0
        %3935 = vmatprep.subr.mxu0 0.0
        %3936 = vmatpush2.msra.mxu0 0.0
        %3937 = vmatprep.subr.mxu0 0.0
        %3938 = vmatpush2.msra.mxu0 0.0
        %3939 = vmatprep.subr.mxu0 0.0
        %3940 = vmatpush2.msra.mxu0 0.0
        %3941 = vmatprep.subr.mxu0 0.0
        %3942 = vmatpush2.msra.mxu0 0.0
        %3943 = vmatprep.subr.mxu0 0.0
        %3944 = vmatpush2.msra.mxu0 0.0
        %3945 = vmatprep.mubr.f32.mxu0 0.0
        %3946 = vmatmul.mubr.f32.gmra.mxu0 %v3876
        %v3947 = vpop.f32.mrf.mxu0
        %v3948 = vadd.f32 %v3786, %v3947
        %v3949 = vpop.f32.mrf.mxu0
        %3950 = vmatprep.mubr.f32.mxu0 0.0
        %3951 = vmatmul.mubr.f32.gmra.mxu0 %v3879
        %v3952 = vpop.f32.mrf.mxu0
        %v3953 = vadd.f32 %v3791, %v3952
        %v3954 = vpop.f32.mrf.mxu0
        %3955 = vdwg.mxu0
        %v3957 = vsel %vm3386, %v3429, 0
        %v3960 = vsel %vm3386, %v3430, 0
        %3962 = vmatprep.subr.mxu0 0.0
        %3963 = vmatpush1.msra.mxu0 0.0
        %3964 = vmatprep.subr.mxu0 0.0
        %3965 = vmatpush1.msra.mxu0 0.0
        %3966 = vmatprep.subr.mxu0 0.0
        %3967 = vmatpush1.msra.mxu0 0.0
        %3968 = vmatprep.subr.mxu0 0.0
        %3969 = vmatpush1.msra.mxu0 0.0
        %3970 = vmatprep.subr.mxu0 0.0
        %3971 = vmatpush1.msra.mxu0 0.0
        %3972 = vmatprep.subr.mxu0 0.0
        %3973 = vmatpush1.msra.mxu0 0.0
        %3974 = vmatprep.subr.mxu0 0.0
        %3975 = vmatpush1.msra.mxu0 0.0
        %3976 = vmatprep.subr.mxu0 0.0
        %3977 = vmatpush1.msra.mxu0 0.0
        %3978 = vmatprep.subr.mxu0 0.0
        %3979 = vmatpush1.msra.mxu0 0.0
        %3980 = vmatprep.subr.mxu0 0.0
        %3981 = vmatpush1.msra.mxu0 0.0
        %3982 = vmatprep.subr.mxu0 0.0
        %3983 = vmatpush1.msra.mxu0 0.0
        %3984 = vmatprep.subr.mxu0 0.0
        %3985 = vmatpush1.msra.mxu0 0.0
        %3986 = vmatprep.subr.mxu0 0.0
        %3987 = vmatpush1.msra.mxu0 %v3462
        %3988 = vmatprep.subr.mxu0 0.0
        %3989 = vmatpush1.msra.mxu0 %v3461
        %3990 = vmatprep.subr.mxu0 0.0
        %3991 = vmatpush1.msra.mxu0 %v3460
        %3992 = vmatprep.subr.mxu0 0.0
        %3993 = vmatpush1.msra.mxu0 %v3459
        %3994 = vmatprep.subr.mxu0 0.0
        %3995 = vmatpush2.msra.mxu0 0.0
        %3996 = vmatprep.subr.mxu0 0.0
        %3997 = vmatpush2.msra.mxu0 0.0
        %3998 = vmatprep.subr.mxu0 0.0
        %3999 = vmatpush2.msra.mxu0 0.0
        %4000 = vmatprep.subr.mxu0 0.0
        %4001 = vmatpush2.msra.mxu0 0.0
        %4002 = vmatprep.subr.mxu0 0.0
        %4003 = vmatpush2.msra.mxu0 0.0
        %4004 = vmatprep.subr.mxu0 0.0
        %4005 = vmatpush2.msra.mxu0 0.0
        %4006 = vmatprep.subr.mxu0 0.0
        %4007 = vmatpush2.msra.mxu0 0.0
        %4008 = vmatprep.subr.mxu0 0.0
        %4009 = vmatpush2.msra.mxu0 0.0
        %4010 = vmatprep.subr.mxu0 0.0
        %4011 = vmatpush2.msra.mxu0 0.0
        %4012 = vmatprep.subr.mxu0 0.0
        %4013 = vmatpush2.msra.mxu0 0.0
        %4014 = vmatprep.subr.mxu0 0.0
        %4015 = vmatpush2.msra.mxu0 0.0
        %4016 = vmatprep.subr.mxu0 0.0
        %4017 = vmatpush2.msra.mxu0 0.0
        %4018 = vmatprep.subr.mxu0 0.0
        %4019 = vmatpush2.msra.mxu0 0.0
        %4020 = vmatprep.subr.mxu0 0.0
        %4021 = vmatpush2.msra.mxu0 0.0
        %4022 = vmatprep.subr.mxu0 0.0
        %4023 = vmatpush2.msra.mxu0 0.0
        %4024 = vmatprep.subr.mxu0 0.0
        %4025 = vmatpush2.msra.mxu0 0.0
        %4026 = vmatprep.mubr.f32.mxu0 0.0
        %4027 = vmatmul.mubr.f32.gmra.mxu0 %v3957
        %v4028 = vpop.f32.mrf.mxu0
        %v4029 = vadd.f32 %v3867, %v4028
        %v4030 = vpop.f32.mrf.mxu0
        %4031 = vmatprep.mubr.f32.mxu0 0.0
        %4032 = vmatmul.mubr.f32.gmra.mxu0 %v3960
        %v4033 = vpop.f32.mrf.mxu0
        %v4034 = vadd.f32 %v3872, %v4033
        %v4035 = vpop.f32.mrf.mxu0
        %4036 = vdwg.mxu0
        %4037 = vrot.lane.b32.xlu0 %v3038, 96
        %v4038 = vpop.permute.xlu0 %4037
        %4039 = vrot.lane.b32.xlu0 %v3043, 96
        %v4040 = vpop.permute.xlu0 %4039
        %4041 = vrot.lane.b32.xlu0 %v3162, 96
        %v4042 = vpop.permute.xlu0 %4041
        %4043 = vrot.lane.b32.xlu0 %v3167, 96
        %v4044 = vpop.permute.xlu0 %4043
        %4045 = vrot.lane.b32.xlu0 %v3172, 96
        %v4046 = vpop.permute.xlu0 %4045
        %4047 = vrot.lane.b32.xlu0 %v3177, 96
        %v4048 = vpop.permute.xlu0 %4047
        %v4049 = vsel %vm1180, %v4038, 0
        %v4051 = vsel %vm1180, %v4040, 0
        %v4053 = vsel %vm1180, %v4042, 0
        %v4055 = vsel %vm1180, %v4044, 0
        %v4057 = vsel %vm1180, %v4046, 0
        %v4059 = vsel %vm1180, %v4048, 0
        %4061 = vmatprep.subr.mxu0 0.0
        %4062 = vmatpush1.xpose.msra.mxu0 0.0
        %4063 = vmatprep.subr.mxu0 0.0
        %4064 = vmatpush1.xpose.msra.mxu0 0.0
        %4065 = vmatprep.subr.mxu0 0.0
        %4066 = vmatpush1.xpose.msra.mxu0 0.0
        %4067 = vmatprep.subr.mxu0 0.0
        %4068 = vmatpush1.xpose.msra.mxu0 0.0
        %4069 = vmatprep.subr.mxu0 0.0
        %4070 = vmatpush1.xpose.msra.mxu0 0.0
        %4071 = vmatprep.subr.mxu0 0.0
        %4072 = vmatpush1.xpose.msra.mxu0 0.0
        %4073 = vmatprep.subr.mxu0 0.0
        %4074 = vmatpush1.xpose.msra.mxu0 0.0
        %4075 = vmatprep.subr.mxu0 0.0
        %4076 = vmatpush1.xpose.msra.mxu0 0.0
        %4077 = vmatprep.subr.mxu0 0.0
        %4078 = vmatpush1.xpose.msra.mxu0 0.0
        %4079 = vmatprep.subr.mxu0 0.0
        %4080 = vmatpush1.xpose.msra.mxu0 0.0
        %4081 = vmatprep.subr.mxu0 0.0
        %4082 = vmatpush1.xpose.msra.mxu0 0.0
        %4083 = vmatprep.subr.mxu0 0.0
        %4084 = vmatpush1.xpose.msra.mxu0 0.0
        %4085 = vmatprep.subr.mxu0 0.0
        %4086 = vmatpush1.xpose.msra.mxu0 %v4059
        %4087 = vmatprep.subr.mxu0 0.0
        %4088 = vmatpush1.xpose.msra.mxu0 %v4057
        %4089 = vmatprep.subr.mxu0 0.0
        %4090 = vmatpush1.xpose.msra.mxu0 %v4055
        %4091 = vmatprep.subr.mxu0 0.0
        %4092 = vmatpush1.xpose.msra.mxu0 %v4053
        %4093 = vmatprep.subr.mxu0 0.0
        %4094 = vmatpush2.xpose.msra.mxu0 0.0
        %4095 = vmatprep.subr.mxu0 0.0
        %4096 = vmatpush2.xpose.msra.mxu0 0.0
        %4097 = vmatprep.subr.mxu0 0.0
        %4098 = vmatpush2.xpose.msra.mxu0 0.0
        %4099 = vmatprep.subr.mxu0 0.0
        %4100 = vmatpush2.xpose.msra.mxu0 0.0
        %4101 = vmatprep.subr.mxu0 0.0
        %4102 = vmatpush2.xpose.msra.mxu0 0.0
        %4103 = vmatprep.subr.mxu0 0.0
        %4104 = vmatpush2.xpose.msra.mxu0 0.0
        %4105 = vmatprep.subr.mxu0 0.0
        %4106 = vmatpush2.xpose.msra.mxu0 0.0
        %4107 = vmatprep.subr.mxu0 0.0
        %4108 = vmatpush2.xpose.msra.mxu0 0.0
        %4109 = vmatprep.subr.mxu0 0.0
        %4110 = vmatpush2.xpose.msra.mxu0 0.0
        %4111 = vmatprep.subr.mxu0 0.0
        %4112 = vmatpush2.xpose.msra.mxu0 0.0
        %4113 = vmatprep.subr.mxu0 0.0
        %4114 = vmatpush2.xpose.msra.mxu0 0.0
        %4115 = vmatprep.subr.mxu0 0.0
        %4116 = vmatpush2.xpose.msra.mxu0 0.0
        %4117 = vmatprep.subr.mxu0 0.0
        %4118 = vmatpush2.xpose.msra.mxu0 0.0
        %4119 = vmatprep.subr.mxu0 0.0
        %4120 = vmatpush2.xpose.msra.mxu0 0.0
        %4121 = vmatprep.subr.mxu0 0.0
        %4122 = vmatpush2.xpose.msra.mxu0 0.0
        %4123 = vmatprep.subr.mxu0 0.0
        %4124 = vmatpush2.xpose.msra.mxu0 0.0
        %4125 = vmatprep.mubr.f32.mxu0 0.0
        %4126 = vmatmul.mubr.f32.gmra.mxu0 %v4049
        %v4127 = vpop.f32.mrf.mxu0
        %v4128 = vadd.f32 0.0, %v4127
        %v4129 = vpop.f32.mrf.mxu0
        %4130 = vmatprep.mubr.f32.mxu0 0.0
        %4131 = vmatmul.mubr.f32.gmra.mxu0 %v4051
        %v4132 = vpop.f32.mrf.mxu0
        %v4133 = vadd.f32 0.0, %v4132
        %v4134 = vpop.f32.mrf.mxu0
        %4135 = vdwg.mxu0
        %4136 = vrot.lane.b32.xlu0 %v3048, 96
        %v4137 = vpop.permute.xlu0 %4136
        %4138 = vrot.lane.b32.xlu0 %v3053, 96
        %v4139 = vpop.permute.xlu0 %4138
        %4140 = vrot.lane.b32.xlu0 %v3182, 96
        %v4141 = vpop.permute.xlu0 %4140
        %4142 = vrot.lane.b32.xlu0 %v3187, 96
        %v4143 = vpop.permute.xlu0 %4142
        %4144 = vrot.lane.b32.xlu0 %v3192, 96
        %v4145 = vpop.permute.xlu0 %4144
        %4146 = vrot.lane.b32.xlu0 %v3197, 96
        %v4147 = vpop.permute.xlu0 %4146
        %v4148 = vsel %vm1180, %v4137, 0
        %v4150 = vsel %vm1180, %v4139, 0
        %v4152 = vsel %vm1180, %v4141, 0
        %v4154 = vsel %vm1180, %v4143, 0
        %v4156 = vsel %vm1180, %v4145, 0
        %v4158 = vsel %vm1180, %v4147, 0
        %4160 = vmatprep.subr.mxu0 0.0
        %4161 = vmatpush1.xpose.msra.mxu0 0.0
        %4162 = vmatprep.subr.mxu0 0.0
        %4163 = vmatpush1.xpose.msra.mxu0 0.0
        %4164 = vmatprep.subr.mxu0 0.0
        %4165 = vmatpush1.xpose.msra.mxu0 0.0
        %4166 = vmatprep.subr.mxu0 0.0
        %4167 = vmatpush1.xpose.msra.mxu0 0.0
        %4168 = vmatprep.subr.mxu0 0.0
        %4169 = vmatpush1.xpose.msra.mxu0 0.0
        %4170 = vmatprep.subr.mxu0 0.0
        %4171 = vmatpush1.xpose.msra.mxu0 0.0
        %4172 = vmatprep.subr.mxu0 0.0
        %4173 = vmatpush1.xpose.msra.mxu0 0.0
        %4174 = vmatprep.subr.mxu0 0.0
        %4175 = vmatpush1.xpose.msra.mxu0 0.0
        %4176 = vmatprep.subr.mxu0 0.0
        %4177 = vmatpush1.xpose.msra.mxu0 0.0
        %4178 = vmatprep.subr.mxu0 0.0
        %4179 = vmatpush1.xpose.msra.mxu0 0.0
        %4180 = vmatprep.subr.mxu0 0.0
        %4181 = vmatpush1.xpose.msra.mxu0 0.0
        %4182 = vmatprep.subr.mxu0 0.0
        %4183 = vmatpush1.xpose.msra.mxu0 0.0
        %4184 = vmatprep.subr.mxu0 0.0
        %4185 = vmatpush1.xpose.msra.mxu0 %v4158
        %4186 = vmatprep.subr.mxu0 0.0
        %4187 = vmatpush1.xpose.msra.mxu0 %v4156
        %4188 = vmatprep.subr.mxu0 0.0
        %4189 = vmatpush1.xpose.msra.mxu0 %v4154
        %4190 = vmatprep.subr.mxu0 0.0
        %4191 = vmatpush1.xpose.msra.mxu0 %v4152
        %4192 = vmatprep.subr.mxu0 0.0
        %4193 = vmatpush2.xpose.msra.mxu0 0.0
        %4194 = vmatprep.subr.mxu0 0.0
        %4195 = vmatpush2.xpose.msra.mxu0 0.0
        %4196 = vmatprep.subr.mxu0 0.0
        %4197 = vmatpush2.xpose.msra.mxu0 0.0
        %4198 = vmatprep.subr.mxu0 0.0
        %4199 = vmatpush2.xpose.msra.mxu0 0.0
        %4200 = vmatprep.subr.mxu0 0.0
        %4201 = vmatpush2.xpose.msra.mxu0 0.0
        %4202 = vmatprep.subr.mxu0 0.0
        %4203 = vmatpush2.xpose.msra.mxu0 0.0
        %4204 = vmatprep.subr.mxu0 0.0
        %4205 = vmatpush2.xpose.msra.mxu0 0.0
        %4206 = vmatprep.subr.mxu0 0.0
        %4207 = vmatpush2.xpose.msra.mxu0 0.0
        %4208 = vmatprep.subr.mxu0 0.0
        %4209 = vmatpush2.xpose.msra.mxu0 0.0
        %4210 = vmatprep.subr.mxu0 0.0
        %4211 = vmatpush2.xpose.msra.mxu0 0.0
        %4212 = vmatprep.subr.mxu0 0.0
        %4213 = vmatpush2.xpose.msra.mxu0 0.0
        %4214 = vmatprep.subr.mxu0 0.0
        %4215 = vmatpush2.xpose.msra.mxu0 0.0
        %4216 = vmatprep.subr.mxu0 0.0
        %4217 = vmatpush2.xpose.msra.mxu0 0.0
        %4218 = vmatprep.subr.mxu0 0.0
        %4219 = vmatpush2.xpose.msra.mxu0 0.0
        %4220 = vmatprep.subr.mxu0 0.0
        %4221 = vmatpush2.xpose.msra.mxu0 0.0
        %4222 = vmatprep.subr.mxu0 0.0
        %4223 = vmatpush2.xpose.msra.mxu0 0.0
        %4224 = vmatprep.mubr.f32.mxu0 0.0
        %4225 = vmatmul.mubr.f32.gmra.mxu0 %v4148
        %v4226 = vpop.f32.mrf.mxu0
        %v4227 = vadd.f32 0.0, %v4226
        %v4228 = vpop.f32.mrf.mxu0
        %4229 = vmatprep.mubr.f32.mxu0 0.0
        %4230 = vmatmul.mubr.f32.gmra.mxu0 %v4150
        %v4231 = vpop.f32.mrf.mxu0
        %v4232 = vadd.f32 0.0, %v4231
        %v4233 = vpop.f32.mrf.mxu0
        %4234 = vdwg.mxu0
        %v4235 = vsel %vm3386, %v4128, -inf
        %4236 = vmax.xlane.f32.xlu0 %v4235
        %v4237 = vpop.xlane.xlu0 %4236
        %v4238 = vsel %vm3386, %v4133, -inf
        %4239 = vmax.xlane.f32.xlu0 %v4238
        %v4240 = vpop.xlane.xlu0 %4239
        %v4241 = vsel %vm3386, %v4227, -inf
        %4242 = vmax.xlane.f32.xlu0 %v4241
        %v4243 = vpop.xlane.xlu0 %4242
        %v4244 = vsel %vm3386, %v4232, -inf
        %4245 = vmax.xlane.f32.xlu0 %v4244
        %v4246 = vpop.xlane.xlu0 %4245
        %v4247 = vsub.f32 %v4128, %v4237
        %v4248 = vsub.f32 %v4133, %v4240
        %v4249 = vsub.f32 %v4227, %v4243
        %v4250 = vsub.f32 %v4232, %v4246
        %v4251 = vmul.f32 %v4247, 1.442695
        %v4252 = vpow.pop %v4251
        %v4253 = vmul.f32 %v4248, 1.442695
        %v4254 = vpow.pop %v4253
        %v4255 = vmul.f32 %v4249, 1.442695
        %v4256 = vpow.pop %v4255
        %v4257 = vmul.f32 %v4250, 1.442695
        %v4258 = vpow.pop %v4257
        %v4259 = vsel %vm3386, %v4252, 0.0
        %4260 = vadd.xlane.f32.xlu0 %v4259
        %v4261 = vpop.xlane.xlu0 %4260
        %v4262 = vsel %vm3386, %v4254, 0.0
        %4263 = vadd.xlane.f32.xlu0 %v4262
        %v4264 = vpop.xlane.xlu0 %4263
        %v4265 = vsel %vm3386, %v4256, 0.0
        %4266 = vadd.xlane.f32.xlu0 %v4265
        %v4267 = vpop.xlane.xlu0 %4266
        %v4268 = vsel %vm3386, %v4258, 0.0
        %4269 = vadd.xlane.f32.xlu0 %v4268
        %v4270 = vpop.xlane.xlu0 %4269
        %v4271 = vrcp.pop %v4261
        %v4272 = vrcp.pop %v4264
        %v4273 = vrcp.pop %v4267
        %v4274 = vrcp.pop %v4270
        %v4275 = vmul.f32 %v4252, %v4271
        %v4276 = vmul.f32 %v4254, %v4272
        %v4277 = vmul.f32 %v4256, %v4273
        %v4278 = vmul.f32 %v4258, %v4274
        %v4279 = vsel %vm2189, %v3432, 0.0
        %v4280 = vsel %vm2189, %v3434, 0.0
        %v4281 = vsel %vm2189, %v3436, 0.0
        %v4282 = vsel %vm2189, %v3438, 0.0
        %v4283 = vsel %vm2189, %v3440, 0.0
        %v4284 = vsel %vm2189, %v3442, 0.0
        %v4285 = vsel %vm2189, %v3444, 0.0
        %v4286 = vsel %vm2189, %v3446, 0.0
        %v4288 = vsel %vm3386, %v4275, 0
        %v4291 = vsel %vm3386, %v4276, 0
        %4293 = vmatprep.subr.mxu0 0.0
        %4294 = vmatpush1.msra.mxu0 0.0
        %4295 = vmatprep.subr.mxu0 0.0
        %4296 = vmatpush1.msra.mxu0 0.0
        %4297 = vmatprep.subr.mxu0 0.0
        %4298 = vmatpush1.msra.mxu0 0.0
        %4299 = vmatprep.subr.mxu0 0.0
        %4300 = vmatpush1.msra.mxu0 0.0
        %4301 = vmatprep.subr.mxu0 0.0
        %4302 = vmatpush1.msra.mxu0 0.0
        %4303 = vmatprep.subr.mxu0 0.0
        %4304 = vmatpush1.msra.mxu0 0.0
        %4305 = vmatprep.subr.mxu0 0.0
        %4306 = vmatpush1.msra.mxu0 0.0
        %4307 = vmatprep.subr.mxu0 0.0
        %4308 = vmatpush1.msra.mxu0 0.0
        %4309 = vmatprep.subr.mxu0 0.0
        %4310 = vmatpush1.msra.mxu0 0.0
        %4311 = vmatprep.subr.mxu0 0.0
        %4312 = vmatpush1.msra.mxu0 0.0
        %4313 = vmatprep.subr.mxu0 0.0
        %4314 = vmatpush1.msra.mxu0 0.0
        %4315 = vmatprep.subr.mxu0 0.0
        %4316 = vmatpush1.msra.mxu0 0.0
        %4317 = vmatprep.subr.mxu0 0.0
        %4318 = vmatpush1.msra.mxu0 %v4282
        %4319 = vmatprep.subr.mxu0 0.0
        %4320 = vmatpush1.msra.mxu0 %v4281
        %4321 = vmatprep.subr.mxu0 0.0
        %4322 = vmatpush1.msra.mxu0 %v4280
        %4323 = vmatprep.subr.mxu0 0.0
        %4324 = vmatpush1.msra.mxu0 %v4279
        %4325 = vmatprep.subr.mxu0 0.0
        %4326 = vmatpush2.msra.mxu0 0.0
        %4327 = vmatprep.subr.mxu0 0.0
        %4328 = vmatpush2.msra.mxu0 0.0
        %4329 = vmatprep.subr.mxu0 0.0
        %4330 = vmatpush2.msra.mxu0 0.0
        %4331 = vmatprep.subr.mxu0 0.0
        %4332 = vmatpush2.msra.mxu0 0.0
        %4333 = vmatprep.subr.mxu0 0.0
        %4334 = vmatpush2.msra.mxu0 0.0
        %4335 = vmatprep.subr.mxu0 0.0
        %4336 = vmatpush2.msra.mxu0 0.0
        %4337 = vmatprep.subr.mxu0 0.0
        %4338 = vmatpush2.msra.mxu0 0.0
        %4339 = vmatprep.subr.mxu0 0.0
        %4340 = vmatpush2.msra.mxu0 0.0
        %4341 = vmatprep.subr.mxu0 0.0
        %4342 = vmatpush2.msra.mxu0 0.0
        %4343 = vmatprep.subr.mxu0 0.0
        %4344 = vmatpush2.msra.mxu0 0.0
        %4345 = vmatprep.subr.mxu0 0.0
        %4346 = vmatpush2.msra.mxu0 0.0
        %4347 = vmatprep.subr.mxu0 0.0
        %4348 = vmatpush2.msra.mxu0 0.0
        %4349 = vmatprep.subr.mxu0 0.0
        %4350 = vmatpush2.msra.mxu0 0.0
        %4351 = vmatprep.subr.mxu0 0.0
        %4352 = vmatpush2.msra.mxu0 0.0
        %4353 = vmatprep.subr.mxu0 0.0
        %4354 = vmatpush2.msra.mxu0 0.0
        %4355 = vmatprep.subr.mxu0 0.0
        %4356 = vmatpush2.msra.mxu0 0.0
        %4357 = vmatprep.mubr.f32.mxu0 0.0
        %4358 = vmatmul.mubr.f32.gmra.mxu0 %v4288
        %v4359 = vpop.f32.mrf.mxu0
        %v4360 = vadd.f32 0.0, %v4359
        %v4361 = vpop.f32.mrf.mxu0
        %4362 = vmatprep.mubr.f32.mxu0 0.0
        %4363 = vmatmul.mubr.f32.gmra.mxu0 %v4291
        %v4364 = vpop.f32.mrf.mxu0
        %v4365 = vadd.f32 0.0, %v4364
        %v4366 = vpop.f32.mrf.mxu0
        %4367 = vdwg.mxu0
        %v4369 = vsel %vm3386, %v4277, 0
        %v4372 = vsel %vm3386, %v4278, 0
        %4374 = vmatprep.subr.mxu0 0.0
        %4375 = vmatpush1.msra.mxu0 0.0
        %4376 = vmatprep.subr.mxu0 0.0
        %4377 = vmatpush1.msra.mxu0 0.0
        %4378 = vmatprep.subr.mxu0 0.0
        %4379 = vmatpush1.msra.mxu0 0.0
        %4380 = vmatprep.subr.mxu0 0.0
        %4381 = vmatpush1.msra.mxu0 0.0
        %4382 = vmatprep.subr.mxu0 0.0
        %4383 = vmatpush1.msra.mxu0 0.0
        %4384 = vmatprep.subr.mxu0 0.0
        %4385 = vmatpush1.msra.mxu0 0.0
        %4386 = vmatprep.subr.mxu0 0.0
        %4387 = vmatpush1.msra.mxu0 0.0
        %4388 = vmatprep.subr.mxu0 0.0
        %4389 = vmatpush1.msra.mxu0 0.0
        %4390 = vmatprep.subr.mxu0 0.0
        %4391 = vmatpush1.msra.mxu0 0.0
        %4392 = vmatprep.subr.mxu0 0.0
        %4393 = vmatpush1.msra.mxu0 0.0
        %4394 = vmatprep.subr.mxu0 0.0
        %4395 = vmatpush1.msra.mxu0 0.0
        %4396 = vmatprep.subr.mxu0 0.0
        %4397 = vmatpush1.msra.mxu0 0.0
        %4398 = vmatprep.subr.mxu0 0.0
        %4399 = vmatpush1.msra.mxu0 %v4286
        %4400 = vmatprep.subr.mxu0 0.0
        %4401 = vmatpush1.msra.mxu0 %v4285
        %4402 = vmatprep.subr.mxu0 0.0
        %4403 = vmatpush1.msra.mxu0 %v4284
        %4404 = vmatprep.subr.mxu0 0.0
        %4405 = vmatpush1.msra.mxu0 %v4283
        %4406 = vmatprep.subr.mxu0 0.0
        %4407 = vmatpush2.msra.mxu0 0.0
        %4408 = vmatprep.subr.mxu0 0.0
        %4409 = vmatpush2.msra.mxu0 0.0
        %4410 = vmatprep.subr.mxu0 0.0
        %4411 = vmatpush2.msra.mxu0 0.0
        %4412 = vmatprep.subr.mxu0 0.0
        %4413 = vmatpush2.msra.mxu0 0.0
        %4414 = vmatprep.subr.mxu0 0.0
        %4415 = vmatpush2.msra.mxu0 0.0
        %4416 = vmatprep.subr.mxu0 0.0
        %4417 = vmatpush2.msra.mxu0 0.0
        %4418 = vmatprep.subr.mxu0 0.0
        %4419 = vmatpush2.msra.mxu0 0.0
        %4420 = vmatprep.subr.mxu0 0.0
        %4421 = vmatpush2.msra.mxu0 0.0
        %4422 = vmatprep.subr.mxu0 0.0
        %4423 = vmatpush2.msra.mxu0 0.0
        %4424 = vmatprep.subr.mxu0 0.0
        %4425 = vmatpush2.msra.mxu0 0.0
        %4426 = vmatprep.subr.mxu0 0.0
        %4427 = vmatpush2.msra.mxu0 0.0
        %4428 = vmatprep.subr.mxu0 0.0
        %4429 = vmatpush2.msra.mxu0 0.0
        %4430 = vmatprep.subr.mxu0 0.0
        %4431 = vmatpush2.msra.mxu0 0.0
        %4432 = vmatprep.subr.mxu0 0.0
        %4433 = vmatpush2.msra.mxu0 0.0
        %4434 = vmatprep.subr.mxu0 0.0
        %4435 = vmatpush2.msra.mxu0 0.0
        %4436 = vmatprep.subr.mxu0 0.0
        %4437 = vmatpush2.msra.mxu0 0.0
        %4438 = vmatprep.mubr.f32.mxu0 0.0
        %4439 = vmatmul.mubr.f32.gmra.mxu0 %v4369
        %v4440 = vpop.f32.mrf.mxu0
        %v4441 = vadd.f32 0.0, %v4440
        %v4442 = vpop.f32.mrf.mxu0
        %4443 = vmatprep.mubr.f32.mxu0 0.0
        %4444 = vmatmul.mubr.f32.gmra.mxu0 %v4372
        %v4445 = vpop.f32.mrf.mxu0
        %v4446 = vadd.f32 0.0, %v4445
        %v4447 = vpop.f32.mrf.mxu0
        %4448 = vdwg.mxu0
        %v4449 = vadd.f32 %v3948, %v4360
        %v4450 = vadd.f32 %v3953, %v4365
        %v4451 = vadd.f32 %v4029, %v4441
        %v4452 = vadd.f32 %v4034, %v4446
        %4453 = vrot.lane.b32.xlu0 %v3038, 80
        %v4454 = vpop.permute.xlu0 %4453
        %4455 = vrot.lane.b32.xlu0 %v3043, 80
        %v4456 = vpop.permute.xlu0 %4455
        %4457 = vrot.lane.b32.xlu0 %v3162, 80
        %v4458 = vpop.permute.xlu0 %4457
        %4459 = vrot.lane.b32.xlu0 %v3167, 80
        %v4460 = vpop.permute.xlu0 %4459
        %4461 = vrot.lane.b32.xlu0 %v3172, 80
        %v4462 = vpop.permute.xlu0 %4461
        %4463 = vrot.lane.b32.xlu0 %v3177, 80
        %v4464 = vpop.permute.xlu0 %4463
        %v4465 = vsel %vm1180, %v4454, 0
        %v4467 = vsel %vm1180, %v4456, 0
        %v4469 = vsel %vm1180, %v4458, 0
        %v4471 = vsel %vm1180, %v4460, 0
        %v4473 = vsel %vm1180, %v4462, 0
        %v4475 = vsel %vm1180, %v4464, 0
        %4477 = vmatprep.subr.mxu0 0.0
        %4478 = vmatpush1.xpose.msra.mxu0 0.0
        %4479 = vmatprep.subr.mxu0 0.0
        %4480 = vmatpush1.xpose.msra.mxu0 0.0
        %4481 = vmatprep.subr.mxu0 0.0
        %4482 = vmatpush1.xpose.msra.mxu0 0.0
        %4483 = vmatprep.subr.mxu0 0.0
        %4484 = vmatpush1.xpose.msra.mxu0 0.0
        %4485 = vmatprep.subr.mxu0 0.0
        %4486 = vmatpush1.xpose.msra.mxu0 0.0
        %4487 = vmatprep.subr.mxu0 0.0
        %4488 = vmatpush1.xpose.msra.mxu0 0.0
        %4489 = vmatprep.subr.mxu0 0.0
        %4490 = vmatpush1.xpose.msra.mxu0 0.0
        %4491 = vmatprep.subr.mxu0 0.0
        %4492 = vmatpush1.xpose.msra.mxu0 0.0
        %4493 = vmatprep.subr.mxu0 0.0
        %4494 = vmatpush1.xpose.msra.mxu0 0.0
        %4495 = vmatprep.subr.mxu0 0.0
        %4496 = vmatpush1.xpose.msra.mxu0 0.0
        %4497 = vmatprep.subr.mxu0 0.0
        %4498 = vmatpush1.xpose.msra.mxu0 0.0
        %4499 = vmatprep.subr.mxu0 0.0
        %4500 = vmatpush1.xpose.msra.mxu0 0.0
        %4501 = vmatprep.subr.mxu0 0.0
        %4502 = vmatpush1.xpose.msra.mxu0 %v4475
        %4503 = vmatprep.subr.mxu0 0.0
        %4504 = vmatpush1.xpose.msra.mxu0 %v4473
        %4505 = vmatprep.subr.mxu0 0.0
        %4506 = vmatpush1.xpose.msra.mxu0 %v4471
        %4507 = vmatprep.subr.mxu0 0.0
        %4508 = vmatpush1.xpose.msra.mxu0 %v4469
        %4509 = vmatprep.subr.mxu0 0.0
        %4510 = vmatpush2.xpose.msra.mxu0 0.0
        %4511 = vmatprep.subr.mxu0 0.0
        %4512 = vmatpush2.xpose.msra.mxu0 0.0
        %4513 = vmatprep.subr.mxu0 0.0
        %4514 = vmatpush2.xpose.msra.mxu0 0.0
        %4515 = vmatprep.subr.mxu0 0.0
        %4516 = vmatpush2.xpose.msra.mxu0 0.0
        %4517 = vmatprep.subr.mxu0 0.0
        %4518 = vmatpush2.xpose.msra.mxu0 0.0
        %4519 = vmatprep.subr.mxu0 0.0
        %4520 = vmatpush2.xpose.msra.mxu0 0.0
        %4521 = vmatprep.subr.mxu0 0.0
        %4522 = vmatpush2.xpose.msra.mxu0 0.0
        %4523 = vmatprep.subr.mxu0 0.0
        %4524 = vmatpush2.xpose.msra.mxu0 0.0
        %4525 = vmatprep.subr.mxu0 0.0
        %4526 = vmatpush2.xpose.msra.mxu0 0.0
        %4527 = vmatprep.subr.mxu0 0.0
        %4528 = vmatpush2.xpose.msra.mxu0 0.0
        %4529 = vmatprep.subr.mxu0 0.0
        %4530 = vmatpush2.xpose.msra.mxu0 0.0
        %4531 = vmatprep.subr.mxu0 0.0
        %4532 = vmatpush2.xpose.msra.mxu0 0.0
        %4533 = vmatprep.subr.mxu0 0.0
        %4534 = vmatpush2.xpose.msra.mxu0 0.0
        %4535 = vmatprep.subr.mxu0 0.0
        %4536 = vmatpush2.xpose.msra.mxu0 0.0
        %4537 = vmatprep.subr.mxu0 0.0
        %4538 = vmatpush2.xpose.msra.mxu0 0.0
        %4539 = vmatprep.subr.mxu0 0.0
        %4540 = vmatpush2.xpose.msra.mxu0 0.0
        %4541 = vmatprep.mubr.f32.mxu0 0.0
        %4542 = vmatmul.mubr.f32.gmra.mxu0 %v4465
        %v4543 = vpop.f32.mrf.mxu0
        %v4544 = vadd.f32 0.0, %v4543
        %v4545 = vpop.f32.mrf.mxu0
        %4546 = vmatprep.mubr.f32.mxu0 0.0
        %4547 = vmatmul.mubr.f32.gmra.mxu0 %v4467
        %v4548 = vpop.f32.mrf.mxu0
        %v4549 = vadd.f32 0.0, %v4548
        %v4550 = vpop.f32.mrf.mxu0
        %4551 = vdwg.mxu0
        %4552 = vrot.lane.b32.xlu0 %v3048, 80
        %v4553 = vpop.permute.xlu0 %4552
        %4554 = vrot.lane.b32.xlu0 %v3053, 80
        %v4555 = vpop.permute.xlu0 %4554
        %4556 = vrot.lane.b32.xlu0 %v3182, 80
        %v4557 = vpop.permute.xlu0 %4556
        %4558 = vrot.lane.b32.xlu0 %v3187, 80
        %v4559 = vpop.permute.xlu0 %4558
        %4560 = vrot.lane.b32.xlu0 %v3192, 80
        %v4561 = vpop.permute.xlu0 %4560
        %4562 = vrot.lane.b32.xlu0 %v3197, 80
        %v4563 = vpop.permute.xlu0 %4562
        %v4564 = vsel %vm1180, %v4553, 0
        %v4566 = vsel %vm1180, %v4555, 0
        %v4568 = vsel %vm1180, %v4557, 0
        %v4570 = vsel %vm1180, %v4559, 0
        %v4572 = vsel %vm1180, %v4561, 0
        %v4574 = vsel %vm1180, %v4563, 0
        %4576 = vmatprep.subr.mxu0 0.0
        %4577 = vmatpush1.xpose.msra.mxu0 0.0
        %4578 = vmatprep.subr.mxu0 0.0
        %4579 = vmatpush1.xpose.msra.mxu0 0.0
        %4580 = vmatprep.subr.mxu0 0.0
        %4581 = vmatpush1.xpose.msra.mxu0 0.0
        %4582 = vmatprep.subr.mxu0 0.0
        %4583 = vmatpush1.xpose.msra.mxu0 0.0
        %4584 = vmatprep.subr.mxu0 0.0
        %4585 = vmatpush1.xpose.msra.mxu0 0.0
        %4586 = vmatprep.subr.mxu0 0.0
        %4587 = vmatpush1.xpose.msra.mxu0 0.0
        %4588 = vmatprep.subr.mxu0 0.0
        %4589 = vmatpush1.xpose.msra.mxu0 0.0
        %4590 = vmatprep.subr.mxu0 0.0
        %4591 = vmatpush1.xpose.msra.mxu0 0.0
        %4592 = vmatprep.subr.mxu0 0.0
        %4593 = vmatpush1.xpose.msra.mxu0 0.0
        %4594 = vmatprep.subr.mxu0 0.0
        %4595 = vmatpush1.xpose.msra.mxu0 0.0
        %4596 = vmatprep.subr.mxu0 0.0
        %4597 = vmatpush1.xpose.msra.mxu0 0.0
        %4598 = vmatprep.subr.mxu0 0.0
        %4599 = vmatpush1.xpose.msra.mxu0 0.0
        %4600 = vmatprep.subr.mxu0 0.0
        %4601 = vmatpush1.xpose.msra.mxu0 %v4574
        %4602 = vmatprep.subr.mxu0 0.0
        %4603 = vmatpush1.xpose.msra.mxu0 %v4572
        %4604 = vmatprep.subr.mxu0 0.0
        %4605 = vmatpush1.xpose.msra.mxu0 %v4570
        %4606 = vmatprep.subr.mxu0 0.0
        %4607 = vmatpush1.xpose.msra.mxu0 %v4568
        %4608 = vmatprep.subr.mxu0 0.0
        %4609 = vmatpush2.xpose.msra.mxu0 0.0
        %4610 = vmatprep.subr.mxu0 0.0
        %4611 = vmatpush2.xpose.msra.mxu0 0.0
        %4612 = vmatprep.subr.mxu0 0.0
        %4613 = vmatpush2.xpose.msra.mxu0 0.0
        %4614 = vmatprep.subr.mxu0 0.0
        %4615 = vmatpush2.xpose.msra.mxu0 0.0
        %4616 = vmatprep.subr.mxu0 0.0
        %4617 = vmatpush2.xpose.msra.mxu0 0.0
        %4618 = vmatprep.subr.mxu0 0.0
        %4619 = vmatpush2.xpose.msra.mxu0 0.0
        %4620 = vmatprep.subr.mxu0 0.0
        %4621 = vmatpush2.xpose.msra.mxu0 0.0
        %4622 = vmatprep.subr.mxu0 0.0
        %4623 = vmatpush2.xpose.msra.mxu0 0.0
        %4624 = vmatprep.subr.mxu0 0.0
        %4625 = vmatpush2.xpose.msra.mxu0 0.0
        %4626 = vmatprep.subr.mxu0 0.0
        %4627 = vmatpush2.xpose.msra.mxu0 0.0
        %4628 = vmatprep.subr.mxu0 0.0
        %4629 = vmatpush2.xpose.msra.mxu0 0.0
        %4630 = vmatprep.subr.mxu0 0.0
        %4631 = vmatpush2.xpose.msra.mxu0 0.0
        %4632 = vmatprep.subr.mxu0 0.0
        %4633 = vmatpush2.xpose.msra.mxu0 0.0
        %4634 = vmatprep.subr.mxu0 0.0
        %4635 = vmatpush2.xpose.msra.mxu0 0.0
        %4636 = vmatprep.subr.mxu0 0.0
        %4637 = vmatpush2.xpose.msra.mxu0 0.0
        %4638 = vmatprep.subr.mxu0 0.0
        %4639 = vmatpush2.xpose.msra.mxu0 0.0
        %4640 = vmatprep.mubr.f32.mxu0 0.0
        %4641 = vmatmul.mubr.f32.gmra.mxu0 %v4564
        %v4642 = vpop.f32.mrf.mxu0
        %v4643 = vadd.f32 0.0, %v4642
        %v4644 = vpop.f32.mrf.mxu0
        %4645 = vmatprep.mubr.f32.mxu0 0.0
        %4646 = vmatmul.mubr.f32.gmra.mxu0 %v4566
        %v4647 = vpop.f32.mrf.mxu0
        %v4648 = vadd.f32 0.0, %v4647
        %v4649 = vpop.f32.mrf.mxu0
        %4650 = vdwg.mxu0
        %v4651 = vsel %vm3386, %v4544, -inf
        %4652 = vmax.xlane.f32.xlu0 %v4651
        %v4653 = vpop.xlane.xlu0 %4652
        %v4654 = vsel %vm3386, %v4549, -inf
        %4655 = vmax.xlane.f32.xlu0 %v4654
        %v4656 = vpop.xlane.xlu0 %4655
        %v4657 = vsel %vm3386, %v4643, -inf
        %4658 = vmax.xlane.f32.xlu0 %v4657
        %v4659 = vpop.xlane.xlu0 %4658
        %v4660 = vsel %vm3386, %v4648, -inf
        %4661 = vmax.xlane.f32.xlu0 %v4660
        %v4662 = vpop.xlane.xlu0 %4661
        %v4663 = vsub.f32 %v4544, %v4653
        %v4664 = vsub.f32 %v4549, %v4656
        %v4665 = vsub.f32 %v4643, %v4659
        %v4666 = vsub.f32 %v4648, %v4662
        %v4667 = vmul.f32 %v4663, 1.442695
        %v4668 = vpow.pop %v4667
        %v4669 = vmul.f32 %v4664, 1.442695
        %v4670 = vpow.pop %v4669
        %v4671 = vmul.f32 %v4665, 1.442695
        %v4672 = vpow.pop %v4671
        %v4673 = vmul.f32 %v4666, 1.442695
        %v4674 = vpow.pop %v4673
        %v4675 = vsel %vm3386, %v4668, 0.0
        %4676 = vadd.xlane.f32.xlu0 %v4675
        %v4677 = vpop.xlane.xlu0 %4676
        %v4678 = vsel %vm3386, %v4670, 0.0
        %4679 = vadd.xlane.f32.xlu0 %v4678
        %v4680 = vpop.xlane.xlu0 %4679
        %v4681 = vsel %vm3386, %v4672, 0.0
        %4682 = vadd.xlane.f32.xlu0 %v4681
        %v4683 = vpop.xlane.xlu0 %4682
        %v4684 = vsel %vm3386, %v4674, 0.0
        %4685 = vadd.xlane.f32.xlu0 %v4684
        %v4686 = vpop.xlane.xlu0 %4685
        %v4687 = vrcp.pop %v4677
        %v4688 = vrcp.pop %v4680
        %v4689 = vrcp.pop %v4683
        %v4690 = vrcp.pop %v4686
        %v4691 = vmul.f32 %v4668, %v4687
        %v4692 = vmul.f32 %v4670, %v4688
        %v4693 = vmul.f32 %v4672, %v4689
        %v4694 = vmul.f32 %v4674, %v4690
        %v4695 = vsel %vm2588, %v3432, 0.0
        %v4696 = vsel %vm2588, %v3434, 0.0
        %v4697 = vsel %vm2588, %v3436, 0.0
        %v4698 = vsel %vm2588, %v3438, 0.0
        %v4699 = vsel %vm2588, %v3440, 0.0
        %v4700 = vsel %vm2588, %v3442, 0.0
        %v4701 = vsel %vm2588, %v3444, 0.0
        %v4702 = vsel %vm2588, %v3446, 0.0
        %v4704 = vsel %vm3386, %v4691, 0
        %v4707 = vsel %vm3386, %v4692, 0
        %4709 = vmatprep.subr.mxu0 0.0
        %4710 = vmatpush1.msra.mxu0 0.0
        %4711 = vmatprep.subr.mxu0 0.0
        %4712 = vmatpush1.msra.mxu0 0.0
        %4713 = vmatprep.subr.mxu0 0.0
        %4714 = vmatpush1.msra.mxu0 0.0
        %4715 = vmatprep.subr.mxu0 0.0
        %4716 = vmatpush1.msra.mxu0 0.0
        %4717 = vmatprep.subr.mxu0 0.0
        %4718 = vmatpush1.msra.mxu0 0.0
        %4719 = vmatprep.subr.mxu0 0.0
        %4720 = vmatpush1.msra.mxu0 0.0
        %4721 = vmatprep.subr.mxu0 0.0
        %4722 = vmatpush1.msra.mxu0 0.0
        %4723 = vmatprep.subr.mxu0 0.0
        %4724 = vmatpush1.msra.mxu0 0.0
        %4725 = vmatprep.subr.mxu0 0.0
        %4726 = vmatpush1.msra.mxu0 0.0
        %4727 = vmatprep.subr.mxu0 0.0
        %4728 = vmatpush1.msra.mxu0 0.0
        %4729 = vmatprep.subr.mxu0 0.0
        %4730 = vmatpush1.msra.mxu0 0.0
        %4731 = vmatprep.subr.mxu0 0.0
        %4732 = vmatpush1.msra.mxu0 0.0
        %4733 = vmatprep.subr.mxu0 0.0
        %4734 = vmatpush1.msra.mxu0 %v4698
        %4735 = vmatprep.subr.mxu0 0.0
        %4736 = vmatpush1.msra.mxu0 %v4697
        %4737 = vmatprep.subr.mxu0 0.0
        %4738 = vmatpush1.msra.mxu0 %v4696
        %4739 = vmatprep.subr.mxu0 0.0
        %4740 = vmatpush1.msra.mxu0 %v4695
        %4741 = vmatprep.subr.mxu0 0.0
        %4742 = vmatpush2.msra.mxu0 0.0
        %4743 = vmatprep.subr.mxu0 0.0
        %4744 = vmatpush2.msra.mxu0 0.0
        %4745 = vmatprep.subr.mxu0 0.0
        %4746 = vmatpush2.msra.mxu0 0.0
        %4747 = vmatprep.subr.mxu0 0.0
        %4748 = vmatpush2.msra.mxu0 0.0
        %4749 = vmatprep.subr.mxu0 0.0
        %4750 = vmatpush2.msra.mxu0 0.0
        %4751 = vmatprep.subr.mxu0 0.0
        %4752 = vmatpush2.msra.mxu0 0.0
        %4753 = vmatprep.subr.mxu0 0.0
        %4754 = vmatpush2.msra.mxu0 0.0
        %4755 = vmatprep.subr.mxu0 0.0
        %4756 = vmatpush2.msra.mxu0 0.0
        %4757 = vmatprep.subr.mxu0 0.0
        %4758 = vmatpush2.msra.mxu0 0.0
        %4759 = vmatprep.subr.mxu0 0.0
        %4760 = vmatpush2.msra.mxu0 0.0
        %4761 = vmatprep.subr.mxu0 0.0
        %4762 = vmatpush2.msra.mxu0 0.0
        %4763 = vmatprep.subr.mxu0 0.0
        %4764 = vmatpush2.msra.mxu0 0.0
        %4765 = vmatprep.subr.mxu0 0.0
        %4766 = vmatpush2.msra.mxu0 0.0
        %4767 = vmatprep.subr.mxu0 0.0
        %4768 = vmatpush2.msra.mxu0 0.0
        %4769 = vmatprep.subr.mxu0 0.0
        %4770 = vmatpush2.msra.mxu0 0.0
        %4771 = vmatprep.subr.mxu0 0.0
        %4772 = vmatpush2.msra.mxu0 0.0
        %4773 = vmatprep.mubr.f32.mxu0 0.0
        %4774 = vmatmul.mubr.f32.gmra.mxu0 %v4704
        %v4775 = vpop.f32.mrf.mxu0
        %v4776 = vadd.f32 0.0, %v4775
        %v4777 = vpop.f32.mrf.mxu0
        %4778 = vmatprep.mubr.f32.mxu0 0.0
        %4779 = vmatmul.mubr.f32.gmra.mxu0 %v4707
        %v4780 = vpop.f32.mrf.mxu0
        %v4781 = vadd.f32 0.0, %v4780
        %v4782 = vpop.f32.mrf.mxu0
        %4783 = vdwg.mxu0
        %v4785 = vsel %vm3386, %v4693, 0
        %v4788 = vsel %vm3386, %v4694, 0
        %4790 = vmatprep.subr.mxu0 0.0
        %4791 = vmatpush1.msra.mxu0 0.0
        %4792 = vmatprep.subr.mxu0 0.0
        %4793 = vmatpush1.msra.mxu0 0.0
        %4794 = vmatprep.subr.mxu0 0.0
        %4795 = vmatpush1.msra.mxu0 0.0
        %4796 = vmatprep.subr.mxu0 0.0
        %4797 = vmatpush1.msra.mxu0 0.0
        %4798 = vmatprep.subr.mxu0 0.0
        %4799 = vmatpush1.msra.mxu0 0.0
        %4800 = vmatprep.subr.mxu0 0.0
        %4801 = vmatpush1.msra.mxu0 0.0
        %4802 = vmatprep.subr.mxu0 0.0
        %4803 = vmatpush1.msra.mxu0 0.0
        %4804 = vmatprep.subr.mxu0 0.0
        %4805 = vmatpush1.msra.mxu0 0.0
        %4806 = vmatprep.subr.mxu0 0.0
        %4807 = vmatpush1.msra.mxu0 0.0
        %4808 = vmatprep.subr.mxu0 0.0
        %4809 = vmatpush1.msra.mxu0 0.0
        %4810 = vmatprep.subr.mxu0 0.0
        %4811 = vmatpush1.msra.mxu0 0.0
        %4812 = vmatprep.subr.mxu0 0.0
        %4813 = vmatpush1.msra.mxu0 0.0
        %4814 = vmatprep.subr.mxu0 0.0
        %4815 = vmatpush1.msra.mxu0 %v4702
        %4816 = vmatprep.subr.mxu0 0.0
        %4817 = vmatpush1.msra.mxu0 %v4701
        %4818 = vmatprep.subr.mxu0 0.0
        %4819 = vmatpush1.msra.mxu0 %v4700
        %4820 = vmatprep.subr.mxu0 0.0
        %4821 = vmatpush1.msra.mxu0 %v4699
        %4822 = vmatprep.subr.mxu0 0.0
        %4823 = vmatpush2.msra.mxu0 0.0
        %4824 = vmatprep.subr.mxu0 0.0
        %4825 = vmatpush2.msra.mxu0 0.0
        %4826 = vmatprep.subr.mxu0 0.0
        %4827 = vmatpush2.msra.mxu0 0.0
        %4828 = vmatprep.subr.mxu0 0.0
        %4829 = vmatpush2.msra.mxu0 0.0
        %4830 = vmatprep.subr.mxu0 0.0
        %4831 = vmatpush2.msra.mxu0 0.0
        %4832 = vmatprep.subr.mxu0 0.0
        %4833 = vmatpush2.msra.mxu0 0.0
        %4834 = vmatprep.subr.mxu0 0.0
        %4835 = vmatpush2.msra.mxu0 0.0
        %4836 = vmatprep.subr.mxu0 0.0
        %4837 = vmatpush2.msra.mxu0 0.0
        %4838 = vmatprep.subr.mxu0 0.0
        %4839 = vmatpush2.msra.mxu0 0.0
        %4840 = vmatprep.subr.mxu0 0.0
        %4841 = vmatpush2.msra.mxu0 0.0
        %4842 = vmatprep.subr.mxu0 0.0
        %4843 = vmatpush2.msra.mxu0 0.0
        %4844 = vmatprep.subr.mxu0 0.0
        %4845 = vmatpush2.msra.mxu0 0.0
        %4846 = vmatprep.subr.mxu0 0.0
        %4847 = vmatpush2.msra.mxu0 0.0
        %4848 = vmatprep.subr.mxu0 0.0
        %4849 = vmatpush2.msra.mxu0 0.0
        %4850 = vmatprep.subr.mxu0 0.0
        %4851 = vmatpush2.msra.mxu0 0.0
        %4852 = vmatprep.subr.mxu0 0.0
        %4853 = vmatpush2.msra.mxu0 0.0
        %4854 = vmatprep.mubr.f32.mxu0 0.0
        %4855 = vmatmul.mubr.f32.gmra.mxu0 %v4785
        %v4856 = vpop.f32.mrf.mxu0
        %v4857 = vadd.f32 0.0, %v4856
        %v4858 = vpop.f32.mrf.mxu0
        %4859 = vmatprep.mubr.f32.mxu0 0.0
        %4860 = vmatmul.mubr.f32.gmra.mxu0 %v4788
        %v4861 = vpop.f32.mrf.mxu0
        %v4862 = vadd.f32 0.0, %v4861
        %v4863 = vpop.f32.mrf.mxu0
        %4864 = vdwg.mxu0
        %v4865 = vadd.f32 %v4449, %v4776
        %v4866 = vadd.f32 %v4450, %v4781
        %v4867 = vadd.f32 %v4451, %v4857
        %v4868 = vadd.f32 %v4452, %v4862
        %v4869 = vld [vmem:[%s831] sm:$0xff]
        %v4870 = vld [vmem:[%s831 + $0x8] sm:$0xff]
        %v4871 = vld [vmem:[%s831 + $0x10] sm:$0xff]
        %v4872 = vld [vmem:[%s831 + $0x18] sm:$0xff]
        %v4873 = vld [vmem:[%s831 + $0x20] sm:$0xff]
        %v4874 = vld [vmem:[%s831 + $0x28] sm:$0xff]
        %v4875 = vld [vmem:[%s831 + $0x30] sm:$0xff]
        %v4876 = vld [vmem:[%s831 + $0x38] sm:$0xff]
        %v4877 = vld [vmem:[%s994] sm:$0x1]
        %v4879 = vlaneseq
        %v4880 = vshrl.u32 %v4879, 7
        %v4881 = vsub.s32 0, %v4880
        %v4882 = vrot.slane %v4877, %v4881
        %v4885 = vsel %vm1070, %v4865, 0
        %v4888 = vsel %vm1070, %v4866, 0
        %v4891 = vsel %vm1070, %v4867, 0
        %v4894 = vsel %vm1070, %v4868, 0
        %4896 = vmatprep.subr.mxu0 0.0
        %4897 = vmatpush1.msra.mxu0 0.0
        %4898 = vmatprep.subr.mxu0 0.0
        %4899 = vmatpush1.msra.mxu0 0.0
        %4900 = vmatprep.subr.mxu0 0.0
        %4901 = vmatpush1.msra.mxu0 0.0
        %4902 = vmatprep.subr.mxu0 0.0
        %4903 = vmatpush1.msra.mxu0 0.0
        %4904 = vmatprep.subr.mxu0 0.0
        %4905 = vmatpush1.msra.mxu0 0.0
        %4906 = vmatprep.subr.mxu0 0.0
        %4907 = vmatpush1.msra.mxu0 0.0
        %4908 = vmatprep.subr.mxu0 0.0
        %4909 = vmatpush1.msra.mxu0 0.0
        %4910 = vmatprep.subr.mxu0 0.0
        %4911 = vmatpush1.msra.mxu0 0.0
        %4912 = vmatprep.subr.mxu0 0.0
        %4913 = vmatpush1.msra.mxu0 %v4876
        %4914 = vmatprep.subr.mxu0 0.0
        %4915 = vmatpush1.msra.mxu0 %v4875
        %4916 = vmatprep.subr.mxu0 0.0
        %4917 = vmatpush1.msra.mxu0 %v4874
        %4918 = vmatprep.subr.mxu0 0.0
        %4919 = vmatpush1.msra.mxu0 %v4873
        %4920 = vmatprep.subr.mxu0 0.0
        %4921 = vmatpush1.msra.mxu0 %v4872
        %4922 = vmatprep.subr.mxu0 0.0
        %4923 = vmatpush1.msra.mxu0 %v4871
        %4924 = vmatprep.subr.mxu0 0.0
        %4925 = vmatpush1.msra.mxu0 %v4870
        %4926 = vmatprep.subr.mxu0 0.0
        %4927 = vmatpush1.msra.mxu0 %v4869
        %4928 = vmatprep.subr.mxu0 0.0
        %4929 = vmatpush2.msra.mxu0 0.0
        %4930 = vmatprep.subr.mxu0 0.0
        %4931 = vmatpush2.msra.mxu0 0.0
        %4932 = vmatprep.subr.mxu0 0.0
        %4933 = vmatpush2.msra.mxu0 0.0
        %4934 = vmatprep.subr.mxu0 0.0
        %4935 = vmatpush2.msra.mxu0 0.0
        %4936 = vmatprep.subr.mxu0 0.0
        %4937 = vmatpush2.msra.mxu0 0.0
        %4938 = vmatprep.subr.mxu0 0.0
        %4939 = vmatpush2.msra.mxu0 0.0
        %4940 = vmatprep.subr.mxu0 0.0
        %4941 = vmatpush2.msra.mxu0 0.0
        %4942 = vmatprep.subr.mxu0 0.0
        %4943 = vmatpush2.msra.mxu0 0.0
        %4944 = vmatprep.subr.mxu0 0.0
        %4945 = vmatpush2.msra.mxu0 0.0
        %4946 = vmatprep.subr.mxu0 0.0
        %4947 = vmatpush2.msra.mxu0 0.0
        %4948 = vmatprep.subr.mxu0 0.0
        %4949 = vmatpush2.msra.mxu0 0.0
        %4950 = vmatprep.subr.mxu0 0.0
        %4951 = vmatpush2.msra.mxu0 0.0
        %4952 = vmatprep.subr.mxu0 0.0
        %4953 = vmatpush2.msra.mxu0 0.0
        %4954 = vmatprep.subr.mxu0 0.0
        %4955 = vmatpush2.msra.mxu0 0.0
        %4956 = vmatprep.subr.mxu0 0.0
        %4957 = vmatpush2.msra.mxu0 0.0
        %4958 = vmatprep.subr.mxu0 0.0
        %4959 = vmatpush2.msra.mxu0 0.0
        %4960 = vmatprep.mubr.f32.mxu0 0.0
        %4961 = vmatmul.mubr.f32.gmra.mxu0 %v4885
        %v4962 = vpop.f32.mrf.mxu0
        %v4963 = vadd.f32 %v4882, %v4962
        %v4964 = vpop.f32.mrf.mxu0
        %4965 = vmatprep.mubr.f32.mxu0 0.0
        %4966 = vmatmul.mubr.f32.gmra.mxu0 %v4888
        %v4967 = vpop.f32.mrf.mxu0
        %v4968 = vadd.f32 %v4882, %v4967
        %v4969 = vpop.f32.mrf.mxu0
        %4970 = vmatprep.mubr.f32.mxu0 0.0
        %4971 = vmatmul.mubr.f32.gmra.mxu0 %v4891
        %v4972 = vpop.f32.mrf.mxu0
        %v4973 = vadd.f32 %v4882, %v4972
        %v4974 = vpop.f32.mrf.mxu0
        %4975 = vmatprep.mubr.f32.mxu0 0.0
        %4976 = vmatmul.mubr.f32.gmra.mxu0 %v4894
        %v4977 = vpop.f32.mrf.mxu0
        %v4978 = vadd.f32 %v4882, %v4977
        %v4979 = vpop.f32.mrf.mxu0
        %4980 = vdwg.mxu0
        %v4981 = vadd.f32 %v2940, %v4963
        %v4982 = vadd.f32 %v2941, %v4968
        %v4983 = vadd.f32 %v2942, %v4973
        %v4984 = vadd.f32 %v2943, %v4978
        %v4985 = vsel %vm1070, %v4981, 0.0
        %4986 = vadd.xlane.f32.xlu0 %v4985
        %v4987 = vpop.xlane.xlu0 %4986
        %v4988 = vsel %vm1070, %v4982, 0.0
        %4989 = vadd.xlane.f32.xlu0 %v4988
        %v4990 = vpop.xlane.xlu0 %4989
        %v4991 = vsel %vm1070, %v4983, 0.0
        %4992 = vadd.xlane.f32.xlu0 %v4991
        %v4993 = vpop.xlane.xlu0 %4992
        %v4994 = vsel %vm1070, %v4984, 0.0
        %4995 = vadd.xlane.f32.xlu0 %v4994
        %v4996 = vpop.xlane.xlu0 %4995
        %v4997 = vmul.f32 %v4987, %v2887
        %v4998 = vmul.f32 %v4990, %v2887
        %v4999 = vmul.f32 %v4993, %v2887
        %v5000 = vmul.f32 %v4996, %v2887
        %v5001 = vsub.f32 %v4981, %v4997
        %v5002 = vsub.f32 %v4982, %v4998
        %v5003 = vsub.f32 %v4983, %v4999
        %v5004 = vsub.f32 %v4984, %v5000
        %v5005 = vmul.f32 %v5001, %v5001
        %v5006 = vmul.f32 %v5002, %v5002
        %v5007 = vmul.f32 %v5003, %v5003
        %v5008 = vmul.f32 %v5004, %v5004
        %v5009 = vsel %vm1070, %v5005, 0.0
        %5010 = vadd.xlane.f32.xlu0 %v5009
        %v5011 = vpop.xlane.xlu0 %5010
        %v5012 = vsel %vm1070, %v5006, 0.0
        %5013 = vadd.xlane.f32.xlu0 %v5012
        %v5014 = vpop.xlane.xlu0 %5013
        %v5015 = vsel %vm1070, %v5007, 0.0
        %5016 = vadd.xlane.f32.xlu0 %v5015
        %v5017 = vpop.xlane.xlu0 %5016
        %v5018 = vsel %vm1070, %v5008, 0.0
        %5019 = vadd.xlane.f32.xlu0 %v5018
        %v5020 = vpop.xlane.xlu0 %5019
        %v5021 = vmul.f32 %v5011, %v2887
        %v5022 = vmul.f32 %v5014, %v2887
        %v5023 = vmul.f32 %v5017, %v2887
        %v5024 = vmul.f32 %v5020, %v2887
        %v5025 = vadd.f32 %v5021, 1e-05
        %v5026 = vadd.f32 %v5022, 1e-05
        %v5027 = vadd.f32 %v5023, 1e-05
        %v5028 = vadd.f32 %v5024, 1e-05
        %v5029 = vrsqrt.pop %v5025
        %v5030 = vrsqrt.pop %v5026
        %v5031 = vrsqrt.pop %v5027
        %v5032 = vrsqrt.pop %v5028
        %v5033 = vmul.f32 %v5001, %v5029
        %v5034 = vmul.f32 %v5002, %v5030
        %v5035 = vmul.f32 %v5003, %v5031
        %v5036 = vmul.f32 %v5004, %v5032
        %v5037 = vlaneseq
        %v5038 = vshrl.u32 %v5037, 7
        %v5039 = vsub.s32 2, %v5038
        %v5040 = vrot.slane %v1041, %v5039
        %v5041 = vmul.f32 %v5033, %v5040
        %v5042 = vmul.f32 %v5034, %v5040
        %v5043 = vmul.f32 %v5035, %v5040
        %v5044 = vmul.f32 %v5036, %v5040
        %v5045 = vlaneseq
        %v5046 = vshrl.u32 %v5045, 7
        %v5047 = vsub.s32 3, %v5046
        %v5048 = vrot.slane %v1041, %v5047
        %v5049 = vadd.f32 %v5041, %v5048
        %v5050 = vadd.f32 %v5042, %v5048
        %v5051 = vadd.f32 %v5043, %v5048
        %v5052 = vadd.f32 %v5044, %v5048
        %v5053 = vld [vmem:[%s1003] sm:$0xff]
        %v5054 = vld [vmem:[%s1003 + $0x8] sm:$0xff]
        %v5055 = vld [vmem:[%s1003 + $0x10] sm:$0xff]
        %v5056 = vld [vmem:[%s1003 + $0x18] sm:$0xff]
        %v5057 = vld [vmem:[%s1003 + $0x20] sm:$0xff]
        %v5058 = vld [vmem:[%s1003 + $0x28] sm:$0xff]
        %v5059 = vld [vmem:[%s1003 + $0x30] sm:$0xff]
        %v5060 = vld [vmem:[%s1003 + $0x38] sm:$0xff]
        %v5061 = vld [vmem:[%s1003 + $0x40] sm:$0xff]
        %v5062 = vld [vmem:[%s1003 + $0x48] sm:$0xff]
        %v5063 = vld [vmem:[%s1003 + $0x50] sm:$0xff]
        %v5064 = vld [vmem:[%s1003 + $0x58] sm:$0xff]
        %v5065 = vld [vmem:[%s1003 + $0x60] sm:$0xff]
        %v5066 = vld [vmem:[%s1003 + $0x68] sm:$0xff]
        %v5067 = vld [vmem:[%s1003 + $0x70] sm:$0xff]
        %v5068 = vld [vmem:[%s1003 + $0x78] sm:$0xff]
        %v5069 = vld [vmem:[%s1007] sm:$0x3]
        %v5071 = vlaneseq
        %v5072 = vshrl.u32 %v5071, 7
        %v5073 = vsub.s32 0, %v5072
        %v5074 = vrot.slane %v5069, %v5073
        %v5075 = vlaneseq
        %v5076 = vshrl.u32 %v5075, 7
        %v5077 = vsub.s32 1, %v5076
        %v5078 = vrot.slane %v5069, %v5077
        %v5082 = vsel %vm1070, %v5049, 0
        %v5085 = vsel %vm1070, %v5050, 0
        %v5088 = vsel %vm1070, %v5051, 0
        %v5091 = vsel %vm1070, %v5052, 0
        %5093 = vmatprep.subr.mxu0 0.0
        %5094 = vmatpush1.msra.mxu0 0.0
        %5095 = vmatprep.subr.mxu0 0.0
        %5096 = vmatpush1.msra.mxu0 0.0
        %5097 = vmatprep.subr.mxu0 0.0
        %5098 = vmatpush1.msra.mxu0 0.0
        %5099 = vmatprep.subr.mxu0 0.0
        %5100 = vmatpush1.msra.mxu0 0.0
        %5101 = vmatprep.subr.mxu0 0.0
        %5102 = vmatpush1.msra.mxu0 0.0
        %5103 = vmatprep.subr.mxu0 0.0
        %5104 = vmatpush1.msra.mxu0 0.0
        %5105 = vmatprep.subr.mxu0 0.0
        %5106 = vmatpush1.msra.mxu0 0.0
        %5107 = vmatprep.subr.mxu0 0.0
        %5108 = vmatpush1.msra.mxu0 0.0
        %5109 = vmatprep.subr.mxu0 %v5068
        %5110 = vmatpush1.msra.mxu0 %v5067
        %5111 = vmatprep.subr.mxu0 %v5066
        %5112 = vmatpush1.msra.mxu0 %v5065
        %5113 = vmatprep.subr.mxu0 %v5064
        %5114 = vmatpush1.msra.mxu0 %v5063
        %5115 = vmatprep.subr.mxu0 %v5062
        %5116 = vmatpush1.msra.mxu0 %v5061
        %5117 = vmatprep.subr.mxu0 %v5060
        %5118 = vmatpush1.msra.mxu0 %v5059
        %5119 = vmatprep.subr.mxu0 %v5058
        %5120 = vmatpush1.msra.mxu0 %v5057
        %5121 = vmatprep.subr.mxu0 %v5056
        %5122 = vmatpush1.msra.mxu0 %v5055
        %5123 = vmatprep.subr.mxu0 %v5054
        %5124 = vmatpush1.msra.mxu0 %v5053
        %5125 = vmatprep.subr.mxu0 0.0
        %5126 = vmatpush2.msra.mxu0 0.0
        %5127 = vmatprep.subr.mxu0 0.0
        %5128 = vmatpush2.msra.mxu0 0.0
        %5129 = vmatprep.subr.mxu0 0.0
        %5130 = vmatpush2.msra.mxu0 0.0
        %5131 = vmatprep.subr.mxu0 0.0
        %5132 = vmatpush2.msra.mxu0 0.0
        %5133 = vmatprep.subr.mxu0 0.0
        %5134 = vmatpush2.msra.mxu0 0.0
        %5135 = vmatprep.subr.mxu0 0.0
        %5136 = vmatpush2.msra.mxu0 0.0
        %5137 = vmatprep.subr.mxu0 0.0
        %5138 = vmatpush2.msra.mxu0 0.0
        %5139 = vmatprep.subr.mxu0 0.0
        %5140 = vmatpush2.msra.mxu0 0.0
        %5141 = vmatprep.subr.mxu0 0.0
        %5142 = vmatpush2.msra.mxu0 0.0
        %5143 = vmatprep.subr.mxu0 0.0
        %5144 = vmatpush2.msra.mxu0 0.0
        %5145 = vmatprep.subr.mxu0 0.0
        %5146 = vmatpush2.msra.mxu0 0.0
        %5147 = vmatprep.subr.mxu0 0.0
        %5148 = vmatpush2.msra.mxu0 0.0
        %5149 = vmatprep.subr.mxu0 0.0
        %5150 = vmatpush2.msra.mxu0 0.0
        %5151 = vmatprep.subr.mxu0 0.0
        %5152 = vmatpush2.msra.mxu0 0.0
        %5153 = vmatprep.subr.mxu0 0.0
        %5154 = vmatpush2.msra.mxu0 0.0
        %5155 = vmatprep.subr.mxu0 0.0
        %5156 = vmatpush2.msra.mxu0 0.0
        %5157 = vmatprep.mubr.f32.mxu0 0.0
        %5158 = vmatmul.mubr.f32.gmra.mxu0 %v5082
        %v5159 = vpop.f32.mrf.mxu0
        %v5160 = vadd.f32 %v5074, %v5159
        %v5161 = vpop.f32.mrf.mxu0
        %v5162 = vadd.f32 %v5078, %v5161
        %5163 = vmatprep.mubr.f32.mxu0 0.0
        %5164 = vmatmul.mubr.f32.gmra.mxu0 %v5085
        %v5165 = vpop.f32.mrf.mxu0
        %v5166 = vadd.f32 %v5074, %v5165
        %v5167 = vpop.f32.mrf.mxu0
        %v5168 = vadd.f32 %v5078, %v5167
        %5169 = vmatprep.mubr.f32.mxu0 0.0
        %5170 = vmatmul.mubr.f32.gmra.mxu0 %v5088
        %v5171 = vpop.f32.mrf.mxu0
        %v5172 = vadd.f32 %v5074, %v5171
        %v5173 = vpop.f32.mrf.mxu0
        %v5174 = vadd.f32 %v5078, %v5173
        %5175 = vmatprep.mubr.f32.mxu0 0.0
        %5176 = vmatmul.mubr.f32.gmra.mxu0 %v5091
        %v5177 = vpop.f32.mrf.mxu0
        %v5178 = vadd.f32 %v5074, %v5177
        %v5179 = vpop.f32.mrf.mxu0
        %v5180 = vadd.f32 %v5078, %v5179
        %5181 = vdwg.mxu0
        %v5182 = vmul.f32 %v5160, %v5160
        %v5183 = vmul.f32 %v5162, %v5162
        %v5184 = vmul.f32 %v5166, %v5166
        %v5185 = vmul.f32 %v5168, %v5168
        %v5186 = vmul.f32 %v5172, %v5172
        %v5187 = vmul.f32 %v5174, %v5174
        %v5188 = vmul.f32 %v5178, %v5178
        %v5189 = vmul.f32 %v5180, %v5180
        %v5190 = vmul.f32 %v5160, %v5182
        %v5191 = vmul.f32 %v5162, %v5183
        %v5192 = vmul.f32 %v5166, %v5184
        %v5193 = vmul.f32 %v5168, %v5185
        %v5194 = vmul.f32 %v5172, %v5186
        %v5195 = vmul.f32 %v5174, %v5187
        %v5196 = vmul.f32 %v5178, %v5188
        %v5197 = vmul.f32 %v5180, %v5189
        %v5198 = vmul.f32 %v5190, 0.044715
        %v5199 = vmul.f32 %v5191, 0.044715
        %v5200 = vmul.f32 %v5192, 0.044715
        %v5201 = vmul.f32 %v5193, 0.044715
        %v5202 = vmul.f32 %v5194, 0.044715
        %v5203 = vmul.f32 %v5195, 0.044715
        %v5204 = vmul.f32 %v5196, 0.044715
        %v5205 = vmul.f32 %v5197, 0.044715
        %v5206 = vadd.f32 %v5160, %v5198
        %v5207 = vadd.f32 %v5162, %v5199
        %v5208 = vadd.f32 %v5166, %v5200
        %v5209 = vadd.f32 %v5168, %v5201
        %v5210 = vadd.f32 %v5172, %v5202
        %v5211 = vadd.f32 %v5174, %v5203
        %v5212 = vadd.f32 %v5178, %v5204
        %v5213 = vadd.f32 %v5180, %v5205
        %v5214 = vmul.f32 %v5206, 0.7978846
        %v5215 = vmul.f32 %v5207, 0.7978846
        %v5216 = vmul.f32 %v5208, 0.7978846
        %v5217 = vmul.f32 %v5209, 0.7978846
        %v5218 = vmul.f32 %v5210, 0.7978846
        %v5219 = vmul.f32 %v5211, 0.7978846
        %v5220 = vmul.f32 %v5212, 0.7978846
        %v5221 = vmul.f32 %v5213, 0.7978846
        %v5222 = vtanh.pop %v5214
        %v5223 = vtanh.pop %v5215
        %v5224 = vtanh.pop %v5216
        %v5225 = vtanh.pop %v5217
        %v5226 = vtanh.pop %v5218
        %v5227 = vtanh.pop %v5219
        %v5228 = vtanh.pop %v5220
        %v5229 = vtanh.pop %v5221
        %v5230 = vadd.f32 %v5222, 1.0
        %v5231 = vadd.f32 %v5223, 1.0
        %v5232 = vadd.f32 %v5224, 1.0
        %v5233 = vadd.f32 %v5225, 1.0
        %v5234 = vadd.f32 %v5226, 1.0
        %v5235 = vadd.f32 %v5227, 1.0
        %v5236 = vadd.f32 %v5228, 1.0
        %v5237 = vadd.f32 %v5229, 1.0
        %v5238 = vmul.f32 %v5230, 0.5
        %v5239 = vmul.f32 %v5231, 0.5
        %v5240 = vmul.f32 %v5232, 0.5
        %v5241 = vmul.f32 %v5233, 0.5
        %v5242 = vmul.f32 %v5234, 0.5
        %v5243 = vmul.f32 %v5235, 0.5
        %v5244 = vmul.f32 %v5236, 0.5
        %v5245 = vmul.f32 %v5237, 0.5
        %v5246 = vmul.f32 %v5160, %v5238
        %v5247 = vmul.f32 %v5162, %v5239
        %v5248 = vmul.f32 %v5166, %v5240
        %v5249 = vmul.f32 %v5168, %v5241
        %v5250 = vmul.f32 %v5172, %v5242
        %v5251 = vmul.f32 %v5174, %v5243
        %v5252 = vmul.f32 %v5178, %v5244
        %v5253 = vmul.f32 %v5180, %v5245
        %v5254 = vld [vmem:[%s1012] sm:$0xff]
        %v5255 = vld [vmem:[%s1012 + $0x8] sm:$0xff]
        %v5256 = vld [vmem:[%s1012 + $0x10] sm:$0xff]
        %v5257 = vld [vmem:[%s1012 + $0x18] sm:$0xff]
        %v5258 = vld [vmem:[%s1012 + $0x20] sm:$0xff]
        %v5259 = vld [vmem:[%s1012 + $0x28] sm:$0xff]
        %v5260 = vld [vmem:[%s1012 + $0x30] sm:$0xff]
        %v5261 = vld [vmem:[%s1012 + $0x38] sm:$0xff]
        %v5262 = vld [vmem:[%s1012 + $0x40] sm:$0xff]
        %v5263 = vld [vmem:[%s1012 + $0x48] sm:$0xff]
        %v5264 = vld [vmem:[%s1012 + $0x50] sm:$0xff]
        %v5265 = vld [vmem:[%s1012 + $0x58] sm:$0xff]
        %v5266 = vld [vmem:[%s1012 + $0x60] sm:$0xff]
        %v5267 = vld [vmem:[%s1012 + $0x68] sm:$0xff]
        %v5268 = vld [vmem:[%s1012 + $0x70] sm:$0xff]
        %v5269 = vld [vmem:[%s1012 + $0x78] sm:$0xff]
        %v5270 = vld [vmem:[%s1012 + $0x80] sm:$0xff]
        %v5271 = vld [vmem:[%s1012 + $0x88] sm:$0xff]
        %v5272 = vld [vmem:[%s1012 + $0x90] sm:$0xff]
        %v5273 = vld [vmem:[%s1012 + $0x98] sm:$0xff]
        %v5274 = vld [vmem:[%s1012 + $0xa0] sm:$0xff]
        %v5275 = vld [vmem:[%s1012 + $0xa8] sm:$0xff]
        %v5276 = vld [vmem:[%s1012 + $0xb0] sm:$0xff]
        %v5277 = vld [vmem:[%s1012 + $0xb8] sm:$0xff]
        %v5278 = vld [vmem:[%s1012 + $0xc0] sm:$0xff]
        %v5279 = vld [vmem:[%s1012 + $0xc8] sm:$0xff]
        %v5280 = vld [vmem:[%s1012 + $0xd0] sm:$0xff]
        %v5281 = vld [vmem:[%s1012 + $0xd8] sm:$0xff]
        %v5282 = vld [vmem:[%s1012 + $0xe0] sm:$0xff]
        %v5283 = vld [vmem:[%s1012 + $0xe8] sm:$0xff]
        %v5284 = vld [vmem:[%s1012 + $0xf0] sm:$0xff]
        %v5285 = vld [vmem:[%s1012 + $0xf8] sm:$0xff]
        %v5286 = vld [vmem:[%s1015] sm:$0x1]
        %v5288 = vlaneseq
        %v5289 = vshrl.u32 %v5288, 7
        %v5290 = vsub.s32 0, %v5289
        %v5291 = vrot.slane %v5286, %v5290
        %5293 = vmatprep.subr.mxu0 0.0
        %5294 = vmatpush1.msra.mxu0 %v5269
        %5295 = vmatprep.subr.mxu0 0.0
        %5296 = vmatpush1.msra.mxu0 %v5268
        %5297 = vmatprep.subr.mxu0 0.0
        %5298 = vmatpush1.msra.mxu0 %v5267
        %5299 = vmatprep.subr.mxu0 0.0
        %5300 = vmatpush1.msra.mxu0 %v5266
        %5301 = vmatprep.subr.mxu0 0.0
        %5302 = vmatpush1.msra.mxu0 %v5265
        %5303 = vmatprep.subr.mxu0 0.0
        %5304 = vmatpush1.msra.mxu0 %v5264
        %5305 = vmatprep.subr.mxu0 0.0
        %5306 = vmatpush1.msra.mxu0 %v5263
        %5307 = vmatprep.subr.mxu0 0.0
        %5308 = vmatpush1.msra.mxu0 %v5262
        %5309 = vmatprep.subr.mxu0 0.0
        %5310 = vmatpush1.msra.mxu0 %v5261
        %5311 = vmatprep.subr.mxu0 0.0
        %5312 = vmatpush1.msra.mxu0 %v5260
        %5313 = vmatprep.subr.mxu0 0.0
        %5314 = vmatpush1.msra.mxu0 %v5259
        %5315 = vmatprep.subr.mxu0 0.0
        %5316 = vmatpush1.msra.mxu0 %v5258
        %5317 = vmatprep.subr.mxu0 0.0
        %5318 = vmatpush1.msra.mxu0 %v5257
        %5319 = vmatprep.subr.mxu0 0.0
        %5320 = vmatpush1.msra.mxu0 %v5256
        %5321 = vmatprep.subr.mxu0 0.0
        %5322 = vmatpush1.msra.mxu0 %v5255
        %5323 = vmatprep.subr.mxu0 0.0
        %5324 = vmatpush1.msra.mxu0 %v5254
        %5325 = vmatprep.subr.mxu0 0.0
        %5326 = vmatpush2.msra.mxu0 %v5285
        %5327 = vmatprep.subr.mxu0 0.0
        %5328 = vmatpush2.msra.mxu0 %v5284
        %5329 = vmatprep.subr.mxu0 0.0
        %5330 = vmatpush2.msra.mxu0 %v5283
        %5331 = vmatprep.subr.mxu0 0.0
        %5332 = vmatpush2.msra.mxu0 %v5282
        %5333 = vmatprep.subr.mxu0 0.0
        %5334 = vmatpush2.msra.mxu0 %v5281
        %5335 = vmatprep.subr.mxu0 0.0
        %5336 = vmatpush2.msra.mxu0 %v5280
        %5337 = vmatprep.subr.mxu0 0.0
        %5338 = vmatpush2.msra.mxu0 %v5279
        %5339 = vmatprep.subr.mxu0 0.0
        %5340 = vmatpush2.msra.mxu0 %v5278
        %5341 = vmatprep.subr.mxu0 0.0
        %5342 = vmatpush2.msra.mxu0 %v5277
        %5343 = vmatprep.subr.mxu0 0.0
        %5344 = vmatpush2.msra.mxu0 %v5276
        %5345 = vmatprep.subr.mxu0 0.0
        %5346 = vmatpush2.msra.mxu0 %v5275
        %5347 = vmatprep.subr.mxu0 0.0
        %5348 = vmatpush2.msra.mxu0 %v5274
        %5349 = vmatprep.subr.mxu0 0.0
        %5350 = vmatpush2.msra.mxu0 %v5273
        %5351 = vmatprep.subr.mxu0 0.0
        %5352 = vmatpush2.msra.mxu0 %v5272
        %5353 = vmatprep.subr.mxu0 0.0
        %5354 = vmatpush2.msra.mxu0 %v5271
        %5355 = vmatprep.subr.mxu0 0.0
        %5356 = vmatpush2.msra.mxu0 %v5270
        %5357 = vmatprep.mubr.f32.mxu0 %v5247
        %5358 = vmatmul.mubr.f32.gmra.mxu0 %v5246
        %v5359 = vpop.f32.mrf.mxu0
        %v5360 = vadd.f32 %v5291, %v5359
        %v5361 = vpop.f32.mrf.mxu0
        %5362 = vmatprep.mubr.f32.mxu0 %v5249
        %5363 = vmatmul.mubr.f32.gmra.mxu0 %v5248
        %v5364 = vpop.f32.mrf.mxu0
        %v5365 = vadd.f32 %v5291, %v5364
        %v5366 = vpop.f32.mrf.mxu0
        %5367 = vmatprep.mubr.f32.mxu0 %v5251
        %5368 = vmatmul.mubr.f32.gmra.mxu0 %v5250
        %v5369 = vpop.f32.mrf.mxu0
        %v5370 = vadd.f32 %v5291, %v5369
        %v5371 = vpop.f32.mrf.mxu0
        %5372 = vmatprep.mubr.f32.mxu0 %v5253
        %5373 = vmatmul.mubr.f32.gmra.mxu0 %v5252
        %v5374 = vpop.f32.mrf.mxu0
        %v5375 = vadd.f32 %v5291, %v5374
        %v5376 = vpop.f32.mrf.mxu0
        %5377 = vdwg.mxu0
        %v5378 = vadd.f32 %v5049, %v5360
        %v5379 = vadd.f32 %v5050, %v5365
        %v5380 = vadd.f32 %v5051, %v5370
        %v5381 = vadd.f32 %v5052, %v5375
        %v5382 = vsel %vm1070, %v5378, 0.0
        %5383 = vadd.xlane.f32.xlu0 %v5382
        %v5384 = vpop.xlane.xlu0 %5383
        %v5385 = vsel %vm1070, %v5379, 0.0
        %5386 = vadd.xlane.f32.xlu0 %v5385
        %v5387 = vpop.xlane.xlu0 %5386
        %v5388 = vsel %vm1070, %v5380, 0.0
        %5389 = vadd.xlane.f32.xlu0 %v5388
        %v5390 = vpop.xlane.xlu0 %5389
        %v5391 = vsel %vm1070, %v5381, 0.0
        %5392 = vadd.xlane.f32.xlu0 %v5391
        %v5393 = vpop.xlane.xlu0 %5392
        %v5394 = vmul.f32 %v5384, %v2887
        %v5395 = vmul.f32 %v5387, %v2887
        %v5396 = vmul.f32 %v5390, %v2887
        %v5397 = vmul.f32 %v5393, %v2887
        %v5398 = vsub.f32 %v5378, %v5394
        %v5399 = vsub.f32 %v5379, %v5395
        %v5400 = vsub.f32 %v5380, %v5396
        %v5401 = vsub.f32 %v5381, %v5397
        %v5402 = vmul.f32 %v5398, %v5398
        %v5403 = vmul.f32 %v5399, %v5399
        %v5404 = vmul.f32 %v5400, %v5400
        %v5405 = vmul.f32 %v5401, %v5401
        %v5406 = vsel %vm1070, %v5402, 0.0
        %5407 = vadd.xlane.f32.xlu0 %v5406
        %v5408 = vpop.xlane.xlu0 %5407
        %v5409 = vsel %vm1070, %v5403, 0.0
        %5410 = vadd.xlane.f32.xlu0 %v5409
        %v5411 = vpop.xlane.xlu0 %5410
        %v5412 = vsel %vm1070, %v5404, 0.0
        %5413 = vadd.xlane.f32.xlu0 %v5412
        %v5414 = vpop.xlane.xlu0 %5413
        %v5415 = vsel %vm1070, %v5405, 0.0
        %5416 = vadd.xlane.f32.xlu0 %v5415
        %v5417 = vpop.xlane.xlu0 %5416
        %v5418 = vmul.f32 %v5408, %v2887
        %v5419 = vmul.f32 %v5411, %v2887
        %v5420 = vmul.f32 %v5414, %v2887
        %v5421 = vmul.f32 %v5417, %v2887
        %v5422 = vadd.f32 %v5418, 1e-05
        %v5423 = vadd.f32 %v5419, 1e-05
        %v5424 = vadd.f32 %v5420, 1e-05
        %v5425 = vadd.f32 %v5421, 1e-05
        %v5426 = vrsqrt.pop %v5422
        %v5427 = vrsqrt.pop %v5423
        %v5428 = vrsqrt.pop %v5424
        %v5429 = vrsqrt.pop %v5425
        %v5430 = vmul.f32 %v5398, %v5426
        %v5431 = vmul.f32 %v5399, %v5427
        %v5432 = vmul.f32 %v5400, %v5428
        %v5433 = vmul.f32 %v5401, %v5429
        %v5434 = vlaneseq
        %v5435 = vshrl.u32 %v5434, 7
        %v5436 = vsub.s32 4, %v5435
        %v5437 = vrot.slane %v1041, %v5436
        %v5438 = vmul.f32 %v5430, %v5437
        %v5439 = vmul.f32 %v5431, %v5437
        %v5440 = vmul.f32 %v5432, %v5437
        %v5441 = vmul.f32 %v5433, %v5437
        %v5442 = vlaneseq
        %v5443 = vshrl.u32 %v5442, 7
        %v5444 = vsub.s32 5, %v5443
        %v5445 = vrot.slane %v1041, %v5444
        %v5446 = vadd.f32 %v5438, %v5445
        %v5447 = vadd.f32 %v5439, %v5445
        %v5448 = vadd.f32 %v5440, %v5445
        %v5449 = vadd.f32 %v5441, %v5445
        %5450 = vst.msk [vmem:[#allocation2] sm:$0xff] %vm1070, %v5446
        %5451 = vst.msk [vmem:[#allocation2 + $0x8] sm:$0xff] %vm1070, %v5447
        %5452 = vst.msk [vmem:[#allocation2 + $0x10] sm:$0xff] %vm1070, %v5448
        %5453 = vst.msk [vmem:[#allocation2 + $0x18] sm:$0xff] %vm1070, %v5449
        %p5454 = scmp.eq.s32.totalorder %s51, 1
        // Predicated region
        $region121: #{tpu_custom_call.1} parent=99 // pred_check
          %p5455 = pneg %p5454
        $region122: #{tpu_custom_call.1} parent=99 // pred_check_branch
          %5457 = sbr.rel (%p5455) target = $region124
        $region123: #{tpu_custom_call.1} parent=99 // pred_region
          %5458 = vst.msk [vmem:[%s954] sm:$0xff] %vm1070, %v5446
          %5459 = vst.msk [vmem:[%s954 + $0x8] sm:$0xff] %vm1070, %v5447
          %5460 = vst.msk [vmem:[%s954 + $0x10] sm:$0xff] %vm1070, %v5448
          %5461 = vst.msk [vmem:[%s954 + $0x18] sm:$0xff] %vm1070, %v5449
          %v5462 = vld [vmem:[%s17] sm:$0x3]
          %v5463 = vsel %vm1070, %v5446, 0.0
          %5464 = vadd.xlane.f32.xlu0 %v5463
          %v5465 = vpop.xlane.xlu0 %5464
          %v5466 = vsel %vm1070, %v5447, 0.0
          %5467 = vadd.xlane.f32.xlu0 %v5466
          %v5468 = vpop.xlane.xlu0 %5467
          %v5469 = vsel %vm1070, %v5448, 0.0
          %5470 = vadd.xlane.f32.xlu0 %v5469
          %v5471 = vpop.xlane.xlu0 %5470
          %v5472 = vsel %vm1070, %v5449, 0.0
          %5473 = vadd.xlane.f32.xlu0 %v5472
          %v5474 = vpop.xlane.xlu0 %5473
          %v5475 = vmul.f32 %v5465, %v2887
          %v5476 = vmul.f32 %v5468, %v2887
          %v5477 = vmul.f32 %v5471, %v2887
          %v5478 = vmul.f32 %v5474, %v2887
          %v5479 = vsub.f32 %v5446, %v5475
          %v5480 = vsub.f32 %v5447, %v5476
          %v5481 = vsub.f32 %v5448, %v5477
          %v5482 = vsub.f32 %v5449, %v5478
          %v5483 = vmul.f32 %v5479, %v5479
          %v5484 = vmul.f32 %v5480, %v5480
          %v5485 = vmul.f32 %v5481, %v5481
          %v5486 = vmul.f32 %v5482, %v5482
          %v5487 = vsel %vm1070, %v5483, 0.0
          %5488 = vadd.xlane.f32.xlu0 %v5487
          %v5489 = vpop.xlane.xlu0 %5488
          %v5490 = vsel %vm1070, %v5484, 0.0
          %5491 = vadd.xlane.f32.xlu0 %v5490
          %v5492 = vpop.xlane.xlu0 %5491
          %v5493 = vsel %vm1070, %v5485, 0.0
          %5494 = vadd.xlane.f32.xlu0 %v5493
          %v5495 = vpop.xlane.xlu0 %5494
          %v5496 = vsel %vm1070, %v5486, 0.0
          %5497 = vadd.xlane.f32.xlu0 %v5496
          %v5498 = vpop.xlane.xlu0 %5497
          %v5499 = vmul.f32 %v5489, %v2887
          %v5500 = vmul.f32 %v5492, %v2887
          %v5501 = vmul.f32 %v5495, %v2887
          %v5502 = vmul.f32 %v5498, %v2887
          %v5503 = vadd.f32 %v5499, 1e-05
          %v5504 = vadd.f32 %v5500, 1e-05
          %v5505 = vadd.f32 %v5501, 1e-05
          %v5506 = vadd.f32 %v5502, 1e-05
          %v5507 = vrsqrt.pop %v5503
          %v5508 = vrsqrt.pop %v5504
          %v5509 = vrsqrt.pop %v5505
          %v5510 = vrsqrt.pop %v5506
          %v5511 = vmul.f32 %v5479, %v5507
          %v5512 = vmul.f32 %v5480, %v5508
          %v5513 = vmul.f32 %v5481, %v5509
          %v5514 = vmul.f32 %v5482, %v5510
          %v5515 = vlaneseq
          %v5516 = vshrl.u32 %v5515, 7
          %v5517 = vsub.s32 0, %v5516
          %v5518 = vrot.slane %v5462, %v5517
          %v5519 = vmul.f32 %v5511, %v5518
          %v5520 = vmul.f32 %v5512, %v5518
          %v5521 = vmul.f32 %v5513, %v5518
          %v5522 = vmul.f32 %v5514, %v5518
          %v5523 = vlaneseq
          %v5524 = vshrl.u32 %v5523, 7
          %v5525 = vsub.s32 1, %v5524
          %v5526 = vrot.slane %v5462, %v5525
          %v5527 = vadd.f32 %v5519, %v5526
          %v5528 = vadd.f32 %v5520, %v5526
          %v5529 = vadd.f32 %v5521, %v5526
          %v5530 = vadd.f32 %v5522, %v5526
          %v5531 = vld [vmem:[#allocation9] sm:$0xff]
          %v5532 = vld [vmem:[#allocation9 + $0x8] sm:$0xff]
          %v5533 = vld [vmem:[#allocation9 + $0x10] sm:$0xff]
          %v5534 = vld [vmem:[#allocation9 + $0x18] sm:$0xff]
          %v5535 = vld [vmem:[#allocation9 + $0x20] sm:$0xff]
          %v5536 = vld [vmem:[#allocation9 + $0x28] sm:$0xff]
          %v5537 = vld [vmem:[#allocation9 + $0x30] sm:$0xff]
          %v5538 = vld [vmem:[#allocation9 + $0x38] sm:$0xff]
          %v5539 = vld [vmem:[%s19] sm:$0x1]
          %v5541 = vlaneseq
          %v5542 = vshrl.u32 %v5541, 7
          %v5543 = vsub.s32 0, %v5542
          %v5544 = vrot.slane %v5539, %v5543
          %v5547 = vsel %vm1070, %v5527, 0
          %v5550 = vsel %vm1070, %v5528, 0
          %v5553 = vsel %vm1070, %v5529, 0
          %v5556 = vsel %vm1070, %v5530, 0
          %5558 = vmatprep.subr.mxu0 0.0
          %5559 = vmatpush1.msra.mxu0 0.0
          %5560 = vmatprep.subr.mxu0 0.0
          %5561 = vmatpush1.msra.mxu0 0.0
          %5562 = vmatprep.subr.mxu0 0.0
          %5563 = vmatpush1.msra.mxu0 0.0
          %5564 = vmatprep.subr.mxu0 0.0
          %5565 = vmatpush1.msra.mxu0 0.0
          %5566 = vmatprep.subr.mxu0 0.0
          %5567 = vmatpush1.msra.mxu0 0.0
          %5568 = vmatprep.subr.mxu0 0.0
          %5569 = vmatpush1.msra.mxu0 0.0
          %5570 = vmatprep.subr.mxu0 0.0
          %5571 = vmatpush1.msra.mxu0 0.0
          %5572 = vmatprep.subr.mxu0 0.0
          %5573 = vmatpush1.msra.mxu0 0.0
          %5574 = vmatprep.subr.mxu0 0.0
          %5575 = vmatpush1.msra.mxu0 %v5538
          %5576 = vmatprep.subr.mxu0 0.0
          %5577 = vmatpush1.msra.mxu0 %v5537
          %5578 = vmatprep.subr.mxu0 0.0
          %5579 = vmatpush1.msra.mxu0 %v5536
          %5580 = vmatprep.subr.mxu0 0.0
          %5581 = vmatpush1.msra.mxu0 %v5535
          %5582 = vmatprep.subr.mxu0 0.0
          %5583 = vmatpush1.msra.mxu0 %v5534
          %5584 = vmatprep.subr.mxu0 0.0
          %5585 = vmatpush1.msra.mxu0 %v5533
          %5586 = vmatprep.subr.mxu0 0.0
          %5587 = vmatpush1.msra.mxu0 %v5532
          %5588 = vmatprep.subr.mxu0 0.0
          %5589 = vmatpush1.msra.mxu0 %v5531
          %5590 = vmatprep.subr.mxu0 0.0
          %5591 = vmatpush2.msra.mxu0 0.0
          %5592 = vmatprep.subr.mxu0 0.0
          %5593 = vmatpush2.msra.mxu0 0.0
          %5594 = vmatprep.subr.mxu0 0.0
          %5595 = vmatpush2.msra.mxu0 0.0
          %5596 = vmatprep.subr.mxu0 0.0
          %5597 = vmatpush2.msra.mxu0 0.0
          %5598 = vmatprep.subr.mxu0 0.0
          %5599 = vmatpush2.msra.mxu0 0.0
          %5600 = vmatprep.subr.mxu0 0.0
          %5601 = vmatpush2.msra.mxu0 0.0
          %5602 = vmatprep.subr.mxu0 0.0
          %5603 = vmatpush2.msra.mxu0 0.0
          %5604 = vmatprep.subr.mxu0 0.0
          %5605 = vmatpush2.msra.mxu0 0.0
          %5606 = vmatprep.subr.mxu0 0.0
          %5607 = vmatpush2.msra.mxu0 0.0
          %5608 = vmatprep.subr.mxu0 0.0
          %5609 = vmatpush2.msra.mxu0 0.0
          %5610 = vmatprep.subr.mxu0 0.0
          %5611 = vmatpush2.msra.mxu0 0.0
          %5612 = vmatprep.subr.mxu0 0.0
          %5613 = vmatpush2.msra.mxu0 0.0
          %5614 = vmatprep.subr.mxu0 0.0
          %5615 = vmatpush2.msra.mxu0 0.0
          %5616 = vmatprep.subr.mxu0 0.0
          %5617 = vmatpush2.msra.mxu0 0.0
          %5618 = vmatprep.subr.mxu0 0.0
          %5619 = vmatpush2.msra.mxu0 0.0
          %5620 = vmatprep.subr.mxu0 0.0
          %5621 = vmatpush2.msra.mxu0 0.0
          %5622 = vmatprep.mubr.f32.mxu0 0.0
          %5623 = vmatmul.mubr.f32.gmra.mxu0 %v5547
          %v5624 = vpop.f32.mrf.mxu0
          %v5625 = vadd.f32 %v5544, %v5624
          %v5626 = vpop.f32.mrf.mxu0
          %5627 = vmatprep.mubr.f32.mxu0 0.0
          %5628 = vmatmul.mubr.f32.gmra.mxu0 %v5550
          %v5629 = vpop.f32.mrf.mxu0
          %v5630 = vadd.f32 %v5544, %v5629
          %v5631 = vpop.f32.mrf.mxu0
          %5632 = vmatprep.mubr.f32.mxu0 0.0
          %5633 = vmatmul.mubr.f32.gmra.mxu0 %v5553
          %v5634 = vpop.f32.mrf.mxu0
          %v5635 = vadd.f32 %v5544, %v5634
          %v5636 = vpop.f32.mrf.mxu0
          %5637 = vmatprep.mubr.f32.mxu0 0.0
          %5638 = vmatmul.mubr.f32.gmra.mxu0 %v5556
          %v5639 = vpop.f32.mrf.mxu0
          %v5640 = vadd.f32 %v5544, %v5639
          %v5641 = vpop.f32.mrf.mxu0
          %5642 = vdwg.mxu0
          %vm5643 = vcmp.ge.s32.totalorder %v1173, 4
          %vm5644 = vcmp.lt.s32.totalorder %v1173, 9
          %vm5645 = vmand %vm5643, %vm5644
          %v5646 = vxor.u32 %v5625, 2147483648
          %v5647 = vxor.u32 %v5630, 2147483648
          %v5648 = vxor.u32 %v5635, 2147483648
          %v5649 = vxor.u32 %v5640, 2147483648
          %v5650 = vmul.f32 %v5646, 1.442695
          %v5651 = vpow.pop %v5650
          %v5652 = vmul.f32 %v5647, 1.442695
          %v5653 = vpow.pop %v5652
          %v5654 = vmul.f32 %v5648, 1.442695
          %v5655 = vpow.pop %v5654
          %v5656 = vmul.f32 %v5649, 1.442695
          %v5657 = vpow.pop %v5656
          %v5658 = vadd.f32 %v5651, 1.0
          %v5659 = vadd.f32 %v5653, 1.0
          %v5660 = vadd.f32 %v5655, 1.0
          %v5661 = vadd.f32 %v5657, 1.0
          %v5662 = vrcp.pop %v5658
          %v5663 = vmul.f32 1.0, %v5662
          %v5664 = vrcp.pop %v5659
          %v5665 = vmul.f32 1.0, %v5664
          %v5666 = vrcp.pop %v5660
          %v5667 = vmul.f32 1.0, %v5666
          %v5668 = vrcp.pop %v5661
          %v5669 = vmul.f32 1.0, %v5668
          %v5670 = vsel %vm5645, %v5663, %v5625
          %v5671 = vsel %vm5645, %v5665, %v5630
          %v5672 = vsel %vm5645, %v5667, %v5635
          %v5673 = vsel %vm5645, %v5669, %v5640
          %5674 = vst [vmem:[%s961] sm:$0xff] %v5670
          %5675 = vst [vmem:[%s961 + $0x8] sm:$0xff] %v5671
          %5676 = vst [vmem:[%s961 + $0x10] sm:$0xff] %v5672
          %5677 = vst [vmem:[%s961 + $0x18] sm:$0xff] %v5673
        $region124: #{tpu_custom_call.1} parent=99 // pred_fallthru
          _
        %s5678 = sand.u32 %s566, 1
        %s5679 = scalar_lea.sflag [#allocation5], %s5678
        %s5680 = sand.u32 %s566, 1
        %s5681 = smul.addr %s5680, 32
        %s5682 = scalar_lea.vmem [#allocation11], %s5681
        %s5683 = sand.u32 %s592, 1
        %s5684 = scalar_lea.sflag [#allocation13], %s5683
        %s5685 = sand.u32 %s592, 1
        %s5686 = smul.addr %s5685, 32
        %s5687 = scalar_lea.vmem [#allocation12], %s5686
        // Predicated region
        $region125: #{tpu_custom_call.1} parent=99 // pred_check
          %p5688 = pneg %p576
        $region126: #{tpu_custom_call.1} parent=99 // pred_check_branch
          %5690 = sbr.rel (%p5688) target = $region128
        $region127: #{tpu_custom_call.1} parent=99 // pred_region
          %s5691 = smul.u32 2, %s50
          %s5693 = ssub.s32 512, 512
          %5694 = vsyncadd %s5679, %s5693
          %s5695 = smul.addr %s5691, 2
          %s5696 = smul.addr %s5695, 128
          %s5697 = scalar_lea.hbm %s20, %s5696
          %s5698 = sshll.u32 %s5682, 4
          %s5699 = int_to_ptr.vmem [resolvable:$true] %s5698
          %5704 = dma.vmem_to_hbm [thread:$0]  %s5699, 512, %s5697, %s5679, 128, 128, 8
        $region128: #{tpu_custom_call.1} parent=99 // pred_fallthru
          _
        // Predicated region
        $region129: #{tpu_custom_call.1} parent=99 // pred_check
          %p5705 = pneg %p602
        $region130: #{tpu_custom_call.1} parent=99 // pred_check_branch
          %5707 = sbr.rel (%p5705) target = $region132
        $region131: #{tpu_custom_call.1} parent=99 // pred_region
          %s5708 = smul.u32 2, %s50
          %s5710 = ssub.s32 512, 512
          %5711 = vsyncadd %s5684, %s5710
          %s5712 = smul.addr %s5708, 2
          %s5713 = smul.addr %s5712, 128
          %s5714 = scalar_lea.hbm %s21, %s5713
          %s5715 = sshll.u32 %s5687, 4
          %s5716 = int_to_ptr.vmem [resolvable:$true] %s5715
          %5721 = dma.vmem_to_hbm [thread:$0]  %s5716, 512, %s5714, %s5684, 128, 128, 8
        $region132: #{tpu_custom_call.1} parent=99 // pred_fallthru
          _
      $region100: #{tpu_custom_call.1} parent=5 // pred_fallthru
        _
      %p5722 = scmp.le.s32.totalorder 2, %s41
      // Predicated region
      $region133: #{tpu_custom_call.1} parent=5 // pred_check
        %p5723 = pneg %p5722
      $region134: #{tpu_custom_call.1} parent=5 // pred_check_branch
        %5725 = sbr.rel (%p5723) target = $region136
      $region135: #{tpu_custom_call.1} parent=5 // pred_region
        %s5726 = ssub.s32 %s41, 2
        // Predicated region
        $region137: #{tpu_custom_call.1} parent=135 // pred_check
          %p5727 = pneg %p582
        $region138: #{tpu_custom_call.1} parent=135 // pred_check_branch
          %5729 = sbr.rel (%p5727) target = $region140
        $region139: #{tpu_custom_call.1} parent=135 // pred_region
          %s5730 = sand.u32 %s567, 1
          %s5731 = scalar_lea.sflag [#allocation5], %s5730
          %s5732 = sand.u32 %s567, 1
          %s5733 = smul.addr %s5732, 32
          %s5734 = scalar_lea.vmem [#allocation11], %s5733
          %5735 = dma.done %s5731, 512
        $region140: #{tpu_custom_call.1} parent=135 // pred_fallthru
          _
        // Predicated region
        $region141: #{tpu_custom_call.1} parent=135 // pred_check
          %p5736 = pneg %p608
        $region142: #{tpu_custom_call.1} parent=135 // pred_check_branch
          %5738 = sbr.rel (%p5736) target = $region144
        $region143: #{tpu_custom_call.1} parent=135 // pred_region
          %s5739 = sand.u32 %s593, 1
          %s5740 = scalar_lea.sflag [#allocation13], %s5739
          %s5741 = sand.u32 %s593, 1
          %s5742 = smul.addr %s5741, 32
          %s5743 = scalar_lea.vmem [#allocation12], %s5742
          %5744 = dma.done %s5740, 512
        $region144: #{tpu_custom_call.1} parent=135 // pred_fallthru
          _
      $region136: #{tpu_custom_call.1} parent=5 // pred_fallthru
        _
    $region6: #{tpu_custom_call.1} parent=1 // loop_footer
      %s45 = sadd.s32 1, %s41
    $region7: #{tpu_custom_call.1} parent=1 // loop_footer_branch
      %40 = sbr.rel target = $region3
    $region8: #{tpu_custom_call.1} parent=1 // loop_exit
      _
    %5745 = vsyncpa [#allocation4], 1
    %s5746 = scalar_lea.sflag [#allocation4], 1
    %5747 = vsyncpa %s5746, 1
    %5748 = vsyncpa [#allocation7], 1
    %s5749 = scalar_lea.sflag [#allocation7], 1
    %5750 = vsyncpa %s5749, 1
    %5751 = vsyncpa [#allocation10], 1
    %5752 = vsyncpa [#allocation5], 1
    %s5753 = scalar_lea.sflag [#allocation5], 1
    %5754 = vsyncpa %s5753, 1
    %5755 = vsyncpa [#allocation13], 1
    %s5756 = scalar_lea.sflag [#allocation13], 1
    %5757 = vsyncpa %s5756, 1

</llo_original>
